<compile_context>
chip_gen: v7x
topology: tpu7x:2x2x1
jax: 0.10.0
libtpu: 0.0.40
codegen_flags: <defaults>
</compile_context>

<pallas_src>
import functools

import jax
import jax.numpy as jnp
from jax.experimental import pallas as pl
from jax.experimental.pallas import tpu as pltpu

IMG = 32           # input image H = W
NUM_CLASSES = 5
NUM_ANCHORS = 12   # 4 sizes x 3 aspect ratios  (anchorgen())
TOPK = 16          # proposals kept per image (stand-in for RPN NMS/top-n)
POOL = 7           # MultiScaleRoIAlign output size
RPN_HEAD_PAD = 128  # lane-dense width for fused RPN cls+bbox head (>= 5*A = 60)
PRED_PAD = 128      # lane-dense width for fused cls+bbox predictor (>= 5*K = 25)

C1, C2, REP = 16, 32, 256   # stand-ins for ResNet-50 feature width / TwoMLPHead width


# ----------------------------------------------------------------------------
# Small helper: single-shot pallas_call with every operand a full VMEM block.
# ----------------------------------------------------------------------------
def _vmem_call(kernel, out_shape, *args):
    return pl.pallas_call(
        kernel,
        out_shape=out_shape,
        in_specs=[pl.BlockSpec(memory_space=pltpu.MemorySpace.VMEM) for _ in args],
        out_specs=pl.BlockSpec(memory_space=pltpu.MemorySpace.VMEM),
    )(*args)


# ----------------------------------------------------------------------------
# Kernel 1/2: 3x3 stride-2 conv (+bias, +ReLU).  The wrapper parity-decomposes
# the padded NHWC input (one cheap XLA strided-slice pass); in-kernel each of
# the 9 taps is a contiguous static slice of one parity phase, so no im2col is
# ever materialized in HBM.  bf16 MXU matmuls, f32 accumulate.
# ----------------------------------------------------------------------------
def _phase_conv3x3_kernel(x00_ref, x01_ref, x10_ref, x11_ref, w_ref, b_ref, o_ref,
                          *, ho, wo, activation):
    phases = ((x00_ref[...].astype(jnp.bfloat16), x01_ref[...].astype(jnp.bfloat16)),
              (x10_ref[...].astype(jnp.bfloat16), x11_ref[...].astype(jnp.bfloat16)))
    n = x00_ref.shape[0]
    cin = x00_ref.shape[-1]
    cout = w_ref.shape[-1]
    m = n * ho * wo
    acc = jnp.zeros((m, cout), jnp.float32)
    for i in range(3):          # static 3x3 tap loop, fully unrolled
        for j in range(3):
            xp = phases[i % 2][j % 2]
            tap = xp[:, i // 2:i // 2 + ho, j // 2:j // 2 + wo, :].reshape(m, cin)
            acc = acc + jnp.dot(tap, w_ref[i * 3 + j],
                                preferred_element_type=jnp.float32)
    acc = acc + b_ref[...]
    if activation == "relu":
        acc = jnp.maximum(acc, 0.0)
    o_ref[...] = acc.astype(o_ref.dtype)


def phase_conv3x3_s2(x_nhwc, w9, b, *, activation="relu", out_dtype=jnp.bfloat16):
    """3x3 / stride-2 / pad-1 conv.  w9: (9, Cin, Cout) bf16, b: (1, Cout) f32."""
    N, H, W, _ = x_nhwc.shape
    assert H % 2 == 0 and W % 2 == 0
    ho, wo = H // 2, W // 2
    cout = w9.shape[-1]
    xp = jnp.pad(x_nhwc, ((0, 0), (1, 1), (1, 1), (0, 0)))
    # parity ("space-to-depth") split: stride handled here once, kernel only
    # needs contiguous slices.
    ph = [xp[:, p::2, q::2, :] for p in (0, 1) for q in (0, 1)]
    out = _vmem_call(
        functools.partial(_phase_conv3x3_kernel, ho=ho, wo=wo, activation=activation),
        jax.ShapeDtypeStruct((N * ho * wo, cout), out_dtype),
        ph[0], ph[1], ph[2], ph[3], w9, b)
    return out.reshape(N, ho, wo, cout)


# ----------------------------------------------------------------------------
# Kernel 3: fused RPN head.  3x3 stride-1 conv (+bias, +ReLU) on the padded
# feature map, immediately followed by the fused 1x1 objectness/box-delta
# matmul -- the conv output never leaves VMEM.  Output is 128-lane padded.
# ----------------------------------------------------------------------------
def _rpn_fused_kernel(xp_ref, wc_ref, bc_ref, wh_ref, bh_ref, o_ref, *, ho, wo):
    xp = xp_ref[...].astype(jnp.bfloat16)
    n = xp_ref.shape[0]
    c = xp_ref.shape[-1]
    m = n * ho * wo
    acc = jnp.zeros((m, wc_ref.shape[-1]), jnp.float32)
    for i in range(3):
        for j in range(3):
            tap = xp[:, i:i + ho, j:j + wo, :].reshape(m, c)
            acc = acc + jnp.dot(tap, wc_ref[i * 3 + j],
                                preferred_element_type=jnp.float32)
    h = jnp.maximum(acc + bc_ref[...], 0.0).astype(jnp.bfloat16)
    o_ref[...] = jnp.dot(h, wh_ref[...], preferred_element_type=jnp.float32) + bh_ref[...]


# ----------------------------------------------------------------------------
# Kernel 4: fused box head.  TwoMLPHead (fc1 -> ReLU -> fc2 -> ReLU) chained
# with the FastRCNNPredictor cls/bbox matmul; the (R, 256) intermediates stay
# in VMEM.  Output is 128-lane padded.
# ----------------------------------------------------------------------------
def _box_head_kernel(x_ref, w1_ref, b1_ref, w2_ref, b2_ref, wp_ref, bp_ref, o_ref):
    x = x_ref[...].astype(jnp.bfloat16)
    h = jnp.dot(x, w1_ref[...], preferred_element_type=jnp.float32) + b1_ref[...]
    h = jnp.maximum(h, 0.0).astype(jnp.bfloat16)
    h = jnp.dot(h, w2_ref[...], preferred_element_type=jnp.float32) + b2_ref[...]
    h = jnp.maximum(h, 0.0).astype(jnp.bfloat16)
    o_ref[...] = jnp.dot(h, wp_ref[...], preferred_element_type=jnp.float32) + bp_ref[...]


# ----------------------------------------------------------------------------
# Anchors / box coding (glue; matches torchvision AnchorGenerator / BoxCoder).
# ----------------------------------------------------------------------------
def generate_anchors(fh, fw, stride):
    sizes = jnp.array([32.0, 64.0, 128.0, 256.0])
    ratios = jnp.array([0.5, 1.0, 2.0])
    h_ratios = jnp.sqrt(ratios)
    w_ratios = 1.0 / h_ratios
    ws = (w_ratios[:, None] * sizes[None, :]).reshape(-1)     # (12,)
    hs = (h_ratios[:, None] * sizes[None, :]).reshape(-1)
    base = jnp.stack([-ws, -hs, ws, hs], axis=1) / 2.0        # (12, 4)
    sx = jnp.arange(fw, dtype=jnp.float32) * stride
    sy = jnp.arange(fh, dtype=jnp.float32) * stride
    gy, gx = jnp.meshgrid(sy, sx, indexing="ij")
    shifts = jnp.stack([gx.reshape(-1), gy.reshape(-1),
                        gx.reshape(-1), gy.reshape(-1)], axis=1)   # (HW, 4)
    return (shifts[:, None, :] + base[None, :, :]).reshape(-1, 4)  # (HW*A, 4)


def decode_boxes(ref_boxes, deltas, weights=(1.0, 1.0, 1.0, 1.0)):
    wx, wy, ww, wh = weights
    wa = ref_boxes[..., 2] - ref_boxes[..., 0]
    ha = ref_boxes[..., 3] - ref_boxes[..., 1]
    cxa = ref_boxes[..., 0] + 0.5 * wa
    cya = ref_boxes[..., 1] + 0.5 * ha
    dx, dy = deltas[..., 0] / wx, deltas[..., 1] / wy
    dw, dh = deltas[..., 2] / ww, deltas[..., 3] / wh
    dw = jnp.minimum(dw, 4.135)   # log(1000/16) clamp, as in torchvision
    dh = jnp.minimum(dh, 4.135)
    cx = dx * wa + cxa
    cy = dy * ha + cya
    w = jnp.exp(dw) * wa
    h = jnp.exp(dh) * ha
    return jnp.stack([cx - 0.5 * w, cy - 0.5 * h,
                      cx + 0.5 * w, cy + 0.5 * h], axis=-1)


# ----------------------------------------------------------------------------
# RoIAlign as a dense bilinear interpolation matrix (one sample per bin).
# Replaces the gather-heavy vmap bilinear sampling with one MXU-friendly
# contraction against the flattened feature map.
# TODO(synk): fuse this contraction into the box-head kernel (scalar-prefetch the
#             box coords, keep the 8x8xC feature resident in VMEM).
# ----------------------------------------------------------------------------
def roi_interp_matrix(boxes, fh, fw, out_size, spatial_scale):
    """boxes (R,4) image coords -> (R, out_size*out_size, fh*fw) f32 weights."""
    b = boxes * spatial_scale
    x1, y1, x2, y2 = b[:, 0], b[:, 1], b[:, 2], b[:, 3]
    bw = jnp.maximum(x2 - x1, 1.0)
    bh = jnp.maximum(y2 - y1, 1.0)
    g = (jnp.arange(out_size, dtype=jnp.float32) + 0.5) / out_size
    ys = y1[:, None] + g[None, :] * bh[:, None] - 0.5           # (R, P)
    xs = x1[:, None] + g[None, :] * bw[:, None] - 0.5           # (R, P)
    y0 = jnp.floor(ys)
    x0 = jnp.floor(xs)
    wy = ys - y0
    wx = xs - x0
    y0i = jnp.clip(y0.astype(jnp.int32), 0, fh - 1)
    y1i = jnp.clip(y0.astype(jnp.int32) + 1, 0, fh - 1)
    x0i = jnp.clip(x0.astype(jnp.int32), 0, fw - 1)
    x1i = jnp.clip(x0.astype(jnp.int32) + 1, 0, fw - 1)
    row_w = (jax.nn.one_hot(y0i, fh) * (1.0 - wy)[..., None]
             + jax.nn.one_hot(y1i, fh) * wy[..., None])          # (R, P, fh)
    col_w = (jax.nn.one_hot(x0i, fw) * (1.0 - wx)[..., None]
             + jax.nn.one_hot(x1i, fw) * wx[..., None])          # (R, P, fw)
    a = row_w[:, :, None, :, None] * col_w[:, None, :, None, :]  # (R, P, P, fh, fw)
    return a.reshape(boxes.shape[0], out_size * out_size, fh * fw)


# ----------------------------------------------------------------------------
# Parameters: deterministic synthetic init, stored in the exact dtypes/layouts
# the kernels consume (bf16 weights once, (1, N) f32 biases, conv weights as
# (9, Cin, Cout), tiny-N heads zero-padded to 128 lane-dense columns).
# ----------------------------------------------------------------------------
def init_params(key, num_classes=NUM_CLASSES):
    def nrm(k, shape, scale=0.02):
        return scale * jax.random.normal(k, shape, jnp.float32)

    ks = jax.random.split(key, 9)
    A = NUM_ANCHORS
    rpn_head_w = jnp.concatenate(
        [nrm(ks[3], (C2, A)), nrm(ks[4], (C2, 4 * A)),
         jnp.zeros((C2, RPN_HEAD_PAD - 5 * A), jnp.float32)], axis=1)
    pred_w = jnp.concatenate(
        [nrm(ks[7], (REP, num_classes)), nrm(ks[8], (REP, 4 * num_classes)),
         jnp.zeros((REP, PRED_PAD - 5 * num_classes), jnp.float32)], axis=1)
    bf = jnp.bfloat16
    return {
        "conv1_w": nrm(ks[0], (9, 3, C1)).astype(bf),
        "conv1_b": jnp.zeros((1, C1), jnp.float32),
        "conv2_w": nrm(ks[1], (9, C1, C2)).astype(bf),
        "conv2_b": jnp.zeros((1, C2), jnp.float32),
        "rpn_conv_w": nrm(ks[2], (9, C2, C2)).astype(bf),
        "rpn_conv_b": jnp.zeros((1, C2), jnp.float32),
        # fused RPN head: cols [0:A) objectness logits, [A:5A) box deltas, rest zero pad
        "rpn_head_w": rpn_head_w.astype(bf),
        "rpn_head_b": jnp.zeros((1, RPN_HEAD_PAD), jnp.float32),
        "fc1_w": nrm(ks[5], (C2 * POOL * POOL, REP)).astype(bf),
        "fc1_b": jnp.zeros((1, REP), jnp.float32),
        "fc2_w": nrm(ks[6], (REP, REP)).astype(bf),
        "fc2_b": jnp.zeros((1, REP), jnp.float32),
        # fused predictor: cols [0:K) class logits, [K:5K) box regression, rest zero pad
        "pred_w": pred_w.astype(bf),
        "pred_b": jnp.zeros((1, PRED_PAD), jnp.float32),
    }


# ----------------------------------------------------------------------------
# Forward pass (inference path of torchvision FasterRCNN).
# ----------------------------------------------------------------------------
def fasterrcnn_forward(params, images_nchw, targets=None):
    # TODO(synk): `targets` only drive the training loss path (not implemented); ignored.
    del targets
    x = jnp.transpose(images_nchw, (0, 2, 3, 1)).astype(jnp.float32)  # NCHW -> NHWC

    # ---- backbone (ResNet stand-in): two stride-2 convs, stride 4 overall ----
    f1 = phase_conv3x3_s2(x, params["conv1_w"], params["conv1_b"])     # (N,16,16,C1) bf16
    feat = phase_conv3x3_s2(f1, params["conv2_w"], params["conv2_b"])  # (N, 8, 8,C2) bf16
    N, FH, FW, C = feat.shape
    stride = IMG // FH

    # ---- RPN: fused 3x3 conv + ReLU + 1x1 cls/bbox head (one Pallas kernel) ----
    featp = jnp.pad(feat, ((0, 0), (1, 1), (1, 1), (0, 0)))
    rpn_out = _vmem_call(
        functools.partial(_rpn_fused_kernel, ho=FH, wo=FW),
        jax.ShapeDtypeStruct((N * FH * FW, RPN_HEAD_PAD), jnp.float32),
        featp, params["rpn_conv_w"], params["rpn_conv_b"],
        params["rpn_head_w"], params["rpn_head_b"])
    obj = rpn_out[:, :NUM_ANCHORS].reshape(N, FH * FW * NUM_ANCHORS)
    deltas = rpn_out[:, NUM_ANCHORS:5 * NUM_ANCHORS].reshape(N, FH * FW * NUM_ANCHORS, 4)

    # ---- anchors, proposal decode, clip, top-k (glue) ----
    anchors = generate_anchors(FH, FW, float(stride))                  # (HW*A, 4)
    proposals = decode_boxes(anchors[None], deltas)                    # (N, HW*A, 4)
    proposals = jnp.clip(proposals, 0.0, float(IMG))
    _, top_idx = jax.lax.top_k(obj, TOPK)                              # (N, TOPK)
    proposals = jnp.take_along_axis(proposals, top_idx[..., None], axis=1)  # (N,TOPK,4)
    prop_flat = proposals.reshape(N * TOPK, 4)

    # ---- ROI pooling: bilinear interpolation matrix x feature (dense matmul) ----
    interp = roi_interp_matrix(prop_flat, FH, FW, POOL, 1.0 / stride)  # (R, 49, HW)
    interp = interp.reshape(N, TOPK * POOL * POOL, FH * FW)
    featflat = feat.reshape(N, FH * FW, C)
    pooled = jnp.einsum("nqf,nfc->nqc", interp, featflat)              # (N, TOPK*49, C) f32
    pooled = pooled.reshape(N * TOPK, POOL * POOL * C)                 # (R, 1568)

    # ---- fused TwoMLPHead + FastRCNNPredictor (one Pallas kernel) ----
    pred = _vmem_call(
        _box_head_kernel,
        jax.ShapeDtypeStruct((N * TOPK, PRED_PAD), jnp.float32),
        pooled, params["fc1_w"], params["fc1_b"],
        params["fc2_w"], params["fc2_b"],
        params["pred_w"], params["pred_b"])
    class_logits = pred[:, :NUM_CLASSES]                               # (R, K)
    box_regression = pred[:, NUM_CLASSES:5 * NUM_CLASSES]              # (R, 4K)

    # ---- post-processing (softmax, per-class box decode; NMS omitted) ----
    scores_all = jax.nn.softmax(class_logits, axis=-1)                 # (R, K)
    labels = jnp.argmax(scores_all[:, 1:], axis=-1) + 1                # skip background
    scores = jnp.take_along_axis(scores_all, labels[:, None], axis=1)[:, 0]
    box_reg = box_regression.reshape(-1, NUM_CLASSES, 4)
    sel_deltas = jnp.take_along_axis(box_reg, labels[:, None, None].repeat(4, -1),
                                     axis=1)[:, 0]                     # (R, 4)
    boxes = decode_boxes(prop_flat, sel_deltas, weights=(10.0, 10.0, 5.0, 5.0))
    boxes = jnp.clip(boxes, 0.0, float(IMG))
    # TODO(synk): score-threshold filtering + per-class NMS (dynamic shapes) not implemented.

    return {
        "boxes": boxes.reshape(N, TOPK, 4),
        "scores": scores.reshape(N, TOPK),
        "labels": labels.reshape(N, TOPK),
        "class_logits": class_logits.reshape(N, TOPK, NUM_CLASSES),
    }


if __name__ == "__main__":
    key = jax.random.PRNGKey(0)
    k_img, k_box, k_param = jax.random.split(key, 3)

    images = jax.random.normal(k_img, (2, 3, IMG, IMG), jnp.float32)   # NCHW like PyTorch
    # dummy targets (ignored by the inference path)
    tb = jnp.abs(jax.random.normal(k_box, (2, 3, 4), jnp.float32)) * 8.0
    targets = {"boxes": tb, "labels": jnp.ones((2, 3), jnp.int32)}

    params = init_params(k_param)
    out = jax.jit(lambda p, im: fasterrcnn_forward(p, im, targets))(params, images)
    jax.block_until_ready(out)

    assert out["boxes"].shape == (2, TOPK, 4)
    assert out["scores"].shape == (2, TOPK)
    assert out["labels"].shape == (2, TOPK)
    assert out["class_logits"].shape == (2, TOPK, NUM_CLASSES)
    print("KERNEL_OK")
</pallas_src>

<mosaic_0001>
module attributes {stable_mosaic.version = 11 : i64} {
  func.func @_phase_conv3x3_kernel(%arg0: memref<2x17x17x3xf32, #tpu.memory_space<vmem>>, %arg1: memref<2x17x17x3xf32, #tpu.memory_space<vmem>>, %arg2: memref<2x17x17x3xf32, #tpu.memory_space<vmem>>, %arg3: memref<2x17x17x3xf32, #tpu.memory_space<vmem>>, %arg4: memref<9x3x16xbf16, #tpu.memory_space<vmem>>, %arg5: memref<1x16xf32, #tpu.memory_space<vmem>>, %arg6: memref<512x16xbf16, #tpu.memory_space<vmem>>) attributes {dimension_semantics = [], scalar_prefetch = 0 : i64, scratch_operands = 0 : i64, tpu.core_type = #tpu.core_type<tc>} {
    %c0 = arith.constant 0 : index
    %c0_0 = arith.constant 0 : index
    %c0_1 = arith.constant 0 : index
    %c0_2 = arith.constant 0 : index
    %0 = vector.load %arg0[%c0, %c0_0, %c0_1, %c0_2] : memref<2x17x17x3xf32, #tpu.memory_space<vmem>>, vector<2x17x17x3xf32>
    %1 = arith.truncf %0 : vector<2x17x17x3xf32> to vector<2x17x17x3xbf16>
    %c0_3 = arith.constant 0 : index
    %c0_4 = arith.constant 0 : index
    %c0_5 = arith.constant 0 : index
    %c0_6 = arith.constant 0 : index
    %2 = vector.load %arg1[%c0_3, %c0_4, %c0_5, %c0_6] : memref<2x17x17x3xf32, #tpu.memory_space<vmem>>, vector<2x17x17x3xf32>
    %3 = arith.truncf %2 : vector<2x17x17x3xf32> to vector<2x17x17x3xbf16>
    %c0_7 = arith.constant 0 : index
    %c0_8 = arith.constant 0 : index
    %c0_9 = arith.constant 0 : index
    %c0_10 = arith.constant 0 : index
    %4 = vector.load %arg2[%c0_7, %c0_8, %c0_9, %c0_10] : memref<2x17x17x3xf32, #tpu.memory_space<vmem>>, vector<2x17x17x3xf32>
    %5 = arith.truncf %4 : vector<2x17x17x3xf32> to vector<2x17x17x3xbf16>
    %c0_11 = arith.constant 0 : index
    %c0_12 = arith.constant 0 : index
    %c0_13 = arith.constant 0 : index
    %c0_14 = arith.constant 0 : index
    %6 = vector.load %arg3[%c0_11, %c0_12, %c0_13, %c0_14] : memref<2x17x17x3xf32, #tpu.memory_space<vmem>>, vector<2x17x17x3xf32>
    %7 = arith.truncf %6 : vector<2x17x17x3xf32> to vector<2x17x17x3xbf16>
    %cst = arith.constant 0.000000e+00 : f32
    %8 = vector.broadcast %cst : f32 to vector<512x16xf32>
    %9 = vector.extract_strided_slice %1 {offsets = [0, 0, 0, 0], sizes = [2, 16, 16, 3], strides = [1, 1, 1, 1]} : vector<2x17x17x3xbf16> to vector<2x16x16x3xbf16>
    %10 = vector.shape_cast %9 : vector<2x16x16x3xbf16> to vector<512x3xbf16>
    %c0_15 = arith.constant 0 : index
    %c0_16 = arith.constant 0 : index
    %c0_17 = arith.constant 0 : index
    %11 = vector.load %arg4[%c0_15, %c0_16, %c0_17] : memref<9x3x16xbf16, #tpu.memory_space<vmem>>, vector<1x3x16xbf16>
    %12 = vector.shape_cast %11 : vector<1x3x16xbf16> to vector<3x16xbf16>
    %cst_18 = arith.constant dense<0.000000e+00> : vector<512x16xf32>
    %13 = tpu.matmul %10, %12, %cst_18 {dimension_numbers = #tpu.dot_dimension_numbers<[1], [0], [0], [1], [0, 0, 1, 1], [], []>} : vector<512x3xbf16>, vector<3x16xbf16>, vector<512x16xf32> -> vector<512x16xf32>
    %14 = arith.addf %8, %13 : vector<512x16xf32>
    %15 = vector.extract_strided_slice %3 {offsets = [0, 0, 0, 0], sizes = [2, 16, 16, 3], strides = [1, 1, 1, 1]} : vector<2x17x17x3xbf16> to vector<2x16x16x3xbf16>
    %16 = vector.shape_cast %15 : vector<2x16x16x3xbf16> to vector<512x3xbf16>
    %c1 = arith.constant 1 : index
    %c0_19 = arith.constant 0 : index
    %c0_20 = arith.constant 0 : index
    %17 = vector.load %arg4[%c1, %c0_19, %c0_20] : memref<9x3x16xbf16, #tpu.memory_space<vmem>>, vector<1x3x16xbf16>
    %18 = vector.shape_cast %17 : vector<1x3x16xbf16> to vector<3x16xbf16>
    %cst_21 = arith.constant dense<0.000000e+00> : vector<512x16xf32>
    %19 = tpu.matmul %16, %18, %cst_21 {dimension_numbers = #tpu.dot_dimension_numbers<[1], [0], [0], [1], [0, 0, 1, 1], [], []>} : vector<512x3xbf16>, vector<3x16xbf16>, vector<512x16xf32> -> vector<512x16xf32>
    %20 = arith.addf %14, %19 : vector<512x16xf32>
    %21 = vector.extract_strided_slice %1 {offsets = [0, 0, 1, 0], sizes = [2, 16, 16, 3], strides = [1, 1, 1, 1]} : vector<2x17x17x3xbf16> to vector<2x16x16x3xbf16>
    %22 = vector.shape_cast %21 : vector<2x16x16x3xbf16> to vector<512x3xbf16>
    %c2 = arith.constant 2 : index
    %c0_22 = arith.constant 0 : index
    %c0_23 = arith.constant 0 : index
    %23 = vector.load %arg4[%c2, %c0_22, %c0_23] : memref<9x3x16xbf16, #tpu.memory_space<vmem>>, vector<1x3x16xbf16>
    %24 = vector.shape_cast %23 : vector<1x3x16xbf16> to vector<3x16xbf16>
    %cst_24 = arith.constant dense<0.000000e+00> : vector<512x16xf32>
    %25 = tpu.matmul %22, %24, %cst_24 {dimension_numbers = #tpu.dot_dimension_numbers<[1], [0], [0], [1], [0, 0, 1, 1], [], []>} : vector<512x3xbf16>, vector<3x16xbf16>, vector<512x16xf32> -> vector<512x16xf32>
    %26 = arith.addf %20, %25 : vector<512x16xf32>
    %27 = vector.extract_strided_slice %5 {offsets = [0, 0, 0, 0], sizes = [2, 16, 16, 3], strides = [1, 1, 1, 1]} : vector<2x17x17x3xbf16> to vector<2x16x16x3xbf16>
    %28 = vector.shape_cast %27 : vector<2x16x16x3xbf16> to vector<512x3xbf16>
    %c3 = arith.constant 3 : index
    %c0_25 = arith.constant 0 : index
    %c0_26 = arith.constant 0 : index
    %29 = vector.load %arg4[%c3, %c0_25, %c0_26] : memref<9x3x16xbf16, #tpu.memory_space<vmem>>, vector<1x3x16xbf16>
    %30 = vector.shape_cast %29 : vector<1x3x16xbf16> to vector<3x16xbf16>
    %cst_27 = arith.constant dense<0.000000e+00> : vector<512x16xf32>
    %31 = tpu.matmul %28, %30, %cst_27 {dimension_numbers = #tpu.dot_dimension_numbers<[1], [0], [0], [1], [0, 0, 1, 1], [], []>} : vector<512x3xbf16>, vector<3x16xbf16>, vector<512x16xf32> -> vector<512x16xf32>
    %32 = arith.addf %26, %31 : vector<512x16xf32>
    %33 = vector.extract_strided_slice %7 {offsets = [0, 0, 0, 0], sizes = [2, 16, 16, 3], strides = [1, 1, 1, 1]} : vector<2x17x17x3xbf16> to vector<2x16x16x3xbf16>
    %34 = vector.shape_cast %33 : vector<2x16x16x3xbf16> to vector<512x3xbf16>
    %c4 = arith.constant 4 : index
    %c0_28 = arith.constant 0 : index
    %c0_29 = arith.constant 0 : index
    %35 = vector.load %arg4[%c4, %c0_28, %c0_29] : memref<9x3x16xbf16, #tpu.memory_space<vmem>>, vector<1x3x16xbf16>
    %36 = vector.shape_cast %35 : vector<1x3x16xbf16> to vector<3x16xbf16>
    %cst_30 = arith.constant dense<0.000000e+00> : vector<512x16xf32>
    %37 = tpu.matmul %34, %36, %cst_30 {dimension_numbers = #tpu.dot_dimension_numbers<[1], [0], [0], [1], [0, 0, 1, 1], [], []>} : vector<512x3xbf16>, vector<3x16xbf16>, vector<512x16xf32> -> vector<512x16xf32>
    %38 = arith.addf %32, %37 : vector<512x16xf32>
    %39 = vector.extract_strided_slice %5 {offsets = [0, 0, 1, 0], sizes = [2, 16, 16, 3], strides = [1, 1, 1, 1]} : vector<2x17x17x3xbf16> to vector<2x16x16x3xbf16>
    %40 = vector.shape_cast %39 : vector<2x16x16x3xbf16> to vector<512x3xbf16>
    %c5 = arith.constant 5 : index
    %c0_31 = arith.constant 0 : index
    %c0_32 = arith.constant 0 : index
    %41 = vector.load %arg4[%c5, %c0_31, %c0_32] : memref<9x3x16xbf16, #tpu.memory_space<vmem>>, vector<1x3x16xbf16>
    %42 = vector.shape_cast %41 : vector<1x3x16xbf16> to vector<3x16xbf16>
    %cst_33 = arith.constant dense<0.000000e+00> : vector<512x16xf32>
    %43 = tpu.matmul %40, %42, %cst_33 {dimension_numbers = #tpu.dot_dimension_numbers<[1], [0], [0], [1], [0, 0, 1, 1], [], []>} : vector<512x3xbf16>, vector<3x16xbf16>, vector<512x16xf32> -> vector<512x16xf32>
    %44 = arith.addf %38, %43 : vector<512x16xf32>
    %45 = vector.extract_strided_slice %1 {offsets = [0, 1, 0, 0], sizes = [2, 16, 16, 3], strides = [1, 1, 1, 1]} : vector<2x17x17x3xbf16> to vector<2x16x16x3xbf16>
    %46 = vector.shape_cast %45 : vector<2x16x16x3xbf16> to vector<512x3xbf16>
    %c6 = arith.constant 6 : index
    %c0_34 = arith.constant 0 : index
    %c0_35 = arith.constant 0 : index
    %47 = vector.load %arg4[%c6, %c0_34, %c0_35] : memref<9x3x16xbf16, #tpu.memory_space<vmem>>, vector<1x3x16xbf16>
    %48 = vector.shape_cast %47 : vector<1x3x16xbf16> to vector<3x16xbf16>
    %cst_36 = arith.constant dense<0.000000e+00> : vector<512x16xf32>
    %49 = tpu.matmul %46, %48, %cst_36 {dimension_numbers = #tpu.dot_dimension_numbers<[1], [0], [0], [1], [0, 0, 1, 1], [], []>} : vector<512x3xbf16>, vector<3x16xbf16>, vector<512x16xf32> -> vector<512x16xf32>
    %50 = arith.addf %44, %49 : vector<512x16xf32>
    %51 = vector.extract_strided_slice %3 {offsets = [0, 1, 0, 0], sizes = [2, 16, 16, 3], strides = [1, 1, 1, 1]} : vector<2x17x17x3xbf16> to vector<2x16x16x3xbf16>
    %52 = vector.shape_cast %51 : vector<2x16x16x3xbf16> to vector<512x3xbf16>
    %c7 = arith.constant 7 : index
    %c0_37 = arith.constant 0 : index
    %c0_38 = arith.constant 0 : index
    %53 = vector.load %arg4[%c7, %c0_37, %c0_38] : memref<9x3x16xbf16, #tpu.memory_space<vmem>>, vector<1x3x16xbf16>
    %54 = vector.shape_cast %53 : vector<1x3x16xbf16> to vector<3x16xbf16>
    %cst_39 = arith.constant dense<0.000000e+00> : vector<512x16xf32>
    %55 = tpu.matmul %52, %54, %cst_39 {dimension_numbers = #tpu.dot_dimension_numbers<[1], [0], [0], [1], [0, 0, 1, 1], [], []>} : vector<512x3xbf16>, vector<3x16xbf16>, vector<512x16xf32> -> vector<512x16xf32>
    %56 = arith.addf %50, %55 : vector<512x16xf32>
    %57 = vector.extract_strided_slice %1 {offsets = [0, 1, 1, 0], sizes = [2, 16, 16, 3], strides = [1, 1, 1, 1]} : vector<2x17x17x3xbf16> to vector<2x16x16x3xbf16>
    %58 = vector.shape_cast %57 : vector<2x16x16x3xbf16> to vector<512x3xbf16>
    %c8 = arith.constant 8 : index
    %c0_40 = arith.constant 0 : index
    %c0_41 = arith.constant 0 : index
    %59 = vector.load %arg4[%c8, %c0_40, %c0_41] : memref<9x3x16xbf16, #tpu.memory_space<vmem>>, vector<1x3x16xbf16>
    %60 = vector.shape_cast %59 : vector<1x3x16xbf16> to vector<3x16xbf16>
    %cst_42 = arith.constant dense<0.000000e+00> : vector<512x16xf32>
    %61 = tpu.matmul %58, %60, %cst_42 {dimension_numbers = #tpu.dot_dimension_numbers<[1], [0], [0], [1], [0, 0, 1, 1], [], []>} : vector<512x3xbf16>, vector<3x16xbf16>, vector<512x16xf32> -> vector<512x16xf32>
    %62 = arith.addf %56, %61 : vector<512x16xf32>
    %c0_43 = arith.constant 0 : index
    %c0_44 = arith.constant 0 : index
    %63 = vector.load %arg5[%c0_43, %c0_44] : memref<1x16xf32, #tpu.memory_space<vmem>>, vector<1x16xf32>
    %64 = vector.broadcast %63 : vector<1x16xf32> to vector<512x16xf32>
    %65 = arith.addf %62, %64 : vector<512x16xf32>
    %cst_45 = arith.constant 0.000000e+00 : f32
    %66 = vector.broadcast %cst_45 : f32 to vector<512x16xf32>
    %67 = arith.maximumf %65, %66 : vector<512x16xf32>
    %68 = arith.truncf %67 : vector<512x16xf32> to vector<512x16xbf16>
    %c0_46 = arith.constant 0 : index
    %c0_47 = arith.constant 0 : index
    %69 = vector.load %arg6[%c0_46, %c0_47] : memref<512x16xbf16, #tpu.memory_space<vmem>>, vector<512x16xbf16>
    tpu.vector_store %arg6[%c0_46, %c0_47], %68 {strides = array<i32>} : memref<512x16xbf16, #tpu.memory_space<vmem>>, vector<512x16xbf16>,
    return
  }
}

module attributes {stable_mosaic.version = 11 : i64} {
  func.func @_phase_conv3x3_kernel(%arg0: memref<2x9x9x16xbf16, #tpu.memory_space<vmem>>, %arg1: memref<2x9x9x16xbf16, #tpu.memory_space<vmem>>, %arg2: memref<2x9x9x16xbf16, #tpu.memory_space<vmem>>, %arg3: memref<2x9x9x16xbf16, #tpu.memory_space<vmem>>, %arg4: memref<9x16x32xbf16, #tpu.memory_space<vmem>>, %arg5: memref<1x32xf32, #tpu.memory_space<vmem>>, %arg6: memref<128x32xbf16, #tpu.memory_space<vmem>>) attributes {dimension_semantics = [], scalar_prefetch = 0 : i64, scratch_operands = 0 : i64, tpu.core_type = #tpu.core_type<tc>} {
    %c0 = arith.constant 0 : index
    %c0_0 = arith.constant 0 : index
    %c0_1 = arith.constant 0 : index
    %c0_2 = arith.constant 0 : index
    %0 = vector.load %arg0[%c0, %c0_0, %c0_1, %c0_2] : memref<2x9x9x16xbf16, #tpu.memory_space<vmem>>, vector<2x9x9x16xbf16>
    %c0_3 = arith.constant 0 : index
    %c0_4 = arith.constant 0 : index
    %c0_5 = arith.constant 0 : index
    %c0_6 = arith.constant 0 : index
    %1 = vector.load %arg1[%c0_3, %c0_4, %c0_5, %c0_6] : memref<2x9x9x16xbf16, #tpu.memory_space<vmem>>, vector<2x9x9x16xbf16>
    %c0_7 = arith.constant 0 : index
    %c0_8 = arith.constant 0 : index
    %c0_9 = arith.constant 0 : index
    %c0_10 = arith.constant 0 : index
    %2 = vector.load %arg2[%c0_7, %c0_8, %c0_9, %c0_10] : memref<2x9x9x16xbf16, #tpu.memory_space<vmem>>, vector<2x9x9x16xbf16>
    %c0_11 = arith.constant 0 : index
    %c0_12 = arith.constant 0 : index
    %c0_13 = arith.constant 0 : index
    %c0_14 = arith.constant 0 : index
    %3 = vector.load %arg3[%c0_11, %c0_12, %c0_13, %c0_14] : memref<2x9x9x16xbf16, #tpu.memory_space<vmem>>, vector<2x9x9x16xbf16>
    %cst = arith.constant 0.000000e+00 : f32
    %4 = vector.broadcast %cst : f32 to vector<128x32xf32>
    %5 = vector.extract_strided_slice %0 {offsets = [0, 0, 0, 0], sizes = [2, 8, 8, 16], strides = [1, 1, 1, 1]} : vector<2x9x9x16xbf16> to vector<2x8x8x16xbf16>
    %6 = vector.shape_cast %5 : vector<2x8x8x16xbf16> to vector<128x16xbf16>
    %c0_15 = arith.constant 0 : index
    %c0_16 = arith.constant 0 : index
    %c0_17 = arith.constant 0 : index
    %7 = vector.load %arg4[%c0_15, %c0_16, %c0_17] : memref<9x16x32xbf16, #tpu.memory_space<vmem>>, vector<1x16x32xbf16>
    %8 = vector.shape_cast %7 : vector<1x16x32xbf16> to vector<16x32xbf16>
    %cst_18 = arith.constant dense<0.000000e+00> : vector<128x32xf32>
    %9 = tpu.matmul %6, %8, %cst_18 {dimension_numbers = #tpu.dot_dimension_numbers<[1], [0], [0], [1], [0, 0, 1, 1], [], []>} : vector<128x16xbf16>, vector<16x32xbf16>, vector<128x32xf32> -> vector<128x32xf32>
    %10 = arith.addf %4, %9 : vector<128x32xf32>
    %11 = vector.extract_strided_slice %1 {offsets = [0, 0, 0, 0], sizes = [2, 8, 8, 16], strides = [1, 1, 1, 1]} : vector<2x9x9x16xbf16> to vector<2x8x8x16xbf16>
    %12 = vector.shape_cast %11 : vector<2x8x8x16xbf16> to vector<128x16xbf16>
    %c1 = arith.constant 1 : index
    %c0_19 = arith.constant 0 : index
    %c0_20 = arith.constant 0 : index
    %13 = vector.load %arg4[%c1, %c0_19, %c0_20] : memref<9x16x32xbf16, #tpu.memory_space<vmem>>, vector<1x16x32xbf16>
    %14 = vector.shape_cast %13 : vector<1x16x32xbf16> to vector<16x32xbf16>
    %cst_21 = arith.constant dense<0.000000e+00> : vector<128x32xf32>
    %15 = tpu.matmul %12, %14, %cst_21 {dimension_numbers = #tpu.dot_dimension_numbers<[1], [0], [0], [1], [0, 0, 1, 1], [], []>} : vector<128x16xbf16>, vector<16x32xbf16>, vector<128x32xf32> -> vector<128x32xf32>
    %16 = arith.addf %10, %15 : vector<128x32xf32>
    %17 = vector.extract_strided_slice %0 {offsets = [0, 0, 1, 0], sizes = [2, 8, 8, 16], strides = [1, 1, 1, 1]} : vector<2x9x9x16xbf16> to vector<2x8x8x16xbf16>
    %18 = vector.shape_cast %17 : vector<2x8x8x16xbf16> to vector<128x16xbf16>
    %c2 = arith.constant 2 : index
    %c0_22 = arith.constant 0 : index
    %c0_23 = arith.constant 0 : index
    %19 = vector.load %arg4[%c2, %c0_22, %c0_23] : memref<9x16x32xbf16, #tpu.memory_space<vmem>>, vector<1x16x32xbf16>
    %20 = vector.shape_cast %19 : vector<1x16x32xbf16> to vector<16x32xbf16>
    %cst_24 = arith.constant dense<0.000000e+00> : vector<128x32xf32>
    %21 = tpu.matmul %18, %20, %cst_24 {dimension_numbers = #tpu.dot_dimension_numbers<[1], [0], [0], [1], [0, 0, 1, 1], [], []>} : vector<128x16xbf16>, vector<16x32xbf16>, vector<128x32xf32> -> vector<128x32xf32>
    %22 = arith.addf %16, %21 : vector<128x32xf32>
    %23 = vector.extract_strided_slice %2 {offsets = [0, 0, 0, 0], sizes = [2, 8, 8, 16], strides = [1, 1, 1, 1]} : vector<2x9x9x16xbf16> to vector<2x8x8x16xbf16>
    %24 = vector.shape_cast %23 : vector<2x8x8x16xbf16> to vector<128x16xbf16>
    %c3 = arith.constant 3 : index
    %c0_25 = arith.constant 0 : index
    %c0_26 = arith.constant 0 : index
    %25 = vector.load %arg4[%c3, %c0_25, %c0_26] : memref<9x16x32xbf16, #tpu.memory_space<vmem>>, vector<1x16x32xbf16>
    %26 = vector.shape_cast %25 : vector<1x16x32xbf16> to vector<16x32xbf16>
    %cst_27 = arith.constant dense<0.000000e+00> : vector<128x32xf32>
    %27 = tpu.matmul %24, %26, %cst_27 {dimension_numbers = #tpu.dot_dimension_numbers<[1], [0], [0], [1], [0, 0, 1, 1], [], []>} : vector<128x16xbf16>, vector<16x32xbf16>, vector<128x32xf32> -> vector<128x32xf32>
    %28 = arith.addf %22, %27 : vector<128x32xf32>
    %29 = vector.extract_strided_slice %3 {offsets = [0, 0, 0, 0], sizes = [2, 8, 8, 16], strides = [1, 1, 1, 1]} : vector<2x9x9x16xbf16> to vector<2x8x8x16xbf16>
    %30 = vector.shape_cast %29 : vector<2x8x8x16xbf16> to vector<128x16xbf16>
    %c4 = arith.constant 4 : index
    %c0_28 = arith.constant 0 : index
    %c0_29 = arith.constant 0 : index
    %31 = vector.load %arg4[%c4, %c0_28, %c0_29] : memref<9x16x32xbf16, #tpu.memory_space<vmem>>, vector<1x16x32xbf16>
    %32 = vector.shape_cast %31 : vector<1x16x32xbf16> to vector<16x32xbf16>
    %cst_30 = arith.constant dense<0.000000e+00> : vector<128x32xf32>
    %33 = tpu.matmul %30, %32, %cst_30 {dimension_numbers = #tpu.dot_dimension_numbers<[1], [0], [0], [1], [0, 0, 1, 1], [], []>} : vector<128x16xbf16>, vector<16x32xbf16>, vector<128x32xf32> -> vector<128x32xf32>
    %34 = arith.addf %28, %33 : vector<128x32xf32>
    %35 = vector.extract_strided_slice %2 {offsets = [0, 0, 1, 0], sizes = [2, 8, 8, 16], strides = [1, 1, 1, 1]} : vector<2x9x9x16xbf16> to vector<2x8x8x16xbf16>
    %36 = vector.shape_cast %35 : vector<2x8x8x16xbf16> to vector<128x16xbf16>
    %c5 = arith.constant 5 : index
    %c0_31 = arith.constant 0 : index
    %c0_32 = arith.constant 0 : index
    %37 = vector.load %arg4[%c5, %c0_31, %c0_32] : memref<9x16x32xbf16, #tpu.memory_space<vmem>>, vector<1x16x32xbf16>
    %38 = vector.shape_cast %37 : vector<1x16x32xbf16> to vector<16x32xbf16>
    %cst_33 = arith.constant dense<0.000000e+00> : vector<128x32xf32>
    %39 = tpu.matmul %36, %38, %cst_33 {dimension_numbers = #tpu.dot_dimension_numbers<[1], [0], [0], [1], [0, 0, 1, 1], [], []>} : vector<128x16xbf16>, vector<16x32xbf16>, vector<128x32xf32> -> vector<128x32xf32>
    %40 = arith.addf %34, %39 : vector<128x32xf32>
    %41 = vector.extract_strided_slice %0 {offsets = [0, 1, 0, 0], sizes = [2, 8, 8, 16], strides = [1, 1, 1, 1]} : vector<2x9x9x16xbf16> to vector<2x8x8x16xbf16>
    %42 = vector.shape_cast %41 : vector<2x8x8x16xbf16> to vector<128x16xbf16>
    %c6 = arith.constant 6 : index
    %c0_34 = arith.constant 0 : index
    %c0_35 = arith.constant 0 : index
    %43 = vector.load %arg4[%c6, %c0_34, %c0_35] : memref<9x16x32xbf16, #tpu.memory_space<vmem>>, vector<1x16x32xbf16>
    %44 = vector.shape_cast %43 : vector<1x16x32xbf16> to vector<16x32xbf16>
    %cst_36 = arith.constant dense<0.000000e+00> : vector<128x32xf32>
    %45 = tpu.matmul %42, %44, %cst_36 {dimension_numbers = #tpu.dot_dimension_numbers<[1], [0], [0], [1], [0, 0, 1, 1], [], []>} : vector<128x16xbf16>, vector<16x32xbf16>, vector<128x32xf32> -> vector<128x32xf32>
    %46 = arith.addf %40, %45 : vector<128x32xf32>
    %47 = vector.extract_strided_slice %1 {offsets = [0, 1, 0, 0], sizes = [2, 8, 8, 16], strides = [1, 1, 1, 1]} : vector<2x9x9x16xbf16> to vector<2x8x8x16xbf16>
    %48 = vector.shape_cast %47 : vector<2x8x8x16xbf16> to vector<128x16xbf16>
    %c7 = arith.constant 7 : index
    %c0_37 = arith.constant 0 : index
    %c0_38 = arith.constant 0 : index
    %49 = vector.load %arg4[%c7, %c0_37, %c0_38] : memref<9x16x32xbf16, #tpu.memory_space<vmem>>, vector<1x16x32xbf16>
    %50 = vector.shape_cast %49 : vector<1x16x32xbf16> to vector<16x32xbf16>
    %cst_39 = arith.constant dense<0.000000e+00> : vector<128x32xf32>
    %51 = tpu.matmul %48, %50, %cst_39 {dimension_numbers = #tpu.dot_dimension_numbers<[1], [0], [0], [1], [0, 0, 1, 1], [], []>} : vector<128x16xbf16>, vector<16x32xbf16>, vector<128x32xf32> -> vector<128x32xf32>
    %52 = arith.addf %46, %51 : vector<128x32xf32>
    %53 = vector.extract_strided_slice %0 {offsets = [0, 1, 1, 0], sizes = [2, 8, 8, 16], strides = [1, 1, 1, 1]} : vector<2x9x9x16xbf16> to vector<2x8x8x16xbf16>
    %54 = vector.shape_cast %53 : vector<2x8x8x16xbf16> to vector<128x16xbf16>
    %c8 = arith.constant 8 : index
    %c0_40 = arith.constant 0 : index
    %c0_41 = arith.constant 0 : index
    %55 = vector.load %arg4[%c8, %c0_40, %c0_41] : memref<9x16x32xbf16, #tpu.memory_space<vmem>>, vector<1x16x32xbf16>
    %56 = vector.shape_cast %55 : vector<1x16x32xbf16> to vector<16x32xbf16>
    %cst_42 = arith.constant dense<0.000000e+00> : vector<128x32xf32>
    %57 = tpu.matmul %54, %56, %cst_42 {dimension_numbers = #tpu.dot_dimension_numbers<[1], [0], [0], [1], [0, 0, 1, 1], [], []>} : vector<128x16xbf16>, vector<16x32xbf16>, vector<128x32xf32> -> vector<128x32xf32>
    %58 = arith.addf %52, %57 : vector<128x32xf32>
    %c0_43 = arith.constant 0 : index
    %c0_44 = arith.constant 0 : index
    %59 = vector.load %arg5[%c0_43, %c0_44] : memref<1x32xf32, #tpu.memory_space<vmem>>, vector<1x32xf32>
    %60 = vector.broadcast %59 : vector<1x32xf32> to vector<128x32xf32>
    %61 = arith.addf %58, %60 : vector<128x32xf32>
    %cst_45 = arith.constant 0.000000e+00 : f32
    %62 = vector.broadcast %cst_45 : f32 to vector<128x32xf32>
    %63 = arith.maximumf %61, %62 : vector<128x32xf32>
    %64 = arith.truncf %63 : vector<128x32xf32> to vector<128x32xbf16>
    %c0_46 = arith.constant 0 : index
    %c0_47 = arith.constant 0 : index
    %65 = vector.load %arg6[%c0_46, %c0_47] : memref<128x32xbf16, #tpu.memory_space<vmem>>, vector<128x32xbf16>
    tpu.vector_store %arg6[%c0_46, %c0_47], %64 {strides = array<i32>} : memref<128x32xbf16, #tpu.memory_space<vmem>>, vector<128x32xbf16>,
    return
  }
}

module attributes {stable_mosaic.version = 11 : i64} {
  func.func @_rpn_fused_kernel(%arg0: memref<2x10x10x32xbf16, #tpu.memory_space<vmem>>, %arg1: memref<9x32x32xbf16, #tpu.memory_space<vmem>>, %arg2: memref<1x32xf32, #tpu.memory_space<vmem>>, %arg3: memref<32x128xbf16, #tpu.memory_space<vmem>>, %arg4: memref<1x128xf32, #tpu.memory_space<vmem>>, %arg5: memref<128x128xf32, #tpu.memory_space<vmem>>) attributes {dimension_semantics = [], scalar_prefetch = 0 : i64, scratch_operands = 0 : i64, tpu.core_type = #tpu.core_type<tc>} {
    %c0 = arith.constant 0 : index
    %c0_0 = arith.constant 0 : index
    %c0_1 = arith.constant 0 : index
    %c0_2 = arith.constant 0 : index
    %0 = vector.load %arg0[%c0, %c0_0, %c0_1, %c0_2] : memref<2x10x10x32xbf16, #tpu.memory_space<vmem>>, vector<2x10x10x32xbf16>
    %cst = arith.constant 0.000000e+00 : f32
    %1 = vector.broadcast %cst : f32 to vector<128x32xf32>
    %2 = vector.extract_strided_slice %0 {offsets = [0, 0, 0, 0], sizes = [2, 8, 8, 32], strides = [1, 1, 1, 1]} : vector<2x10x10x32xbf16> to vector<2x8x8x32xbf16>
    %3 = vector.shape_cast %2 : vector<2x8x8x32xbf16> to vector<128x32xbf16>
    %c0_3 = arith.constant 0 : index
    %c0_4 = arith.constant 0 : index
    %c0_5 = arith.constant 0 : index
    %4 = vector.load %arg1[%c0_3, %c0_4, %c0_5] : memref<9x32x32xbf16, #tpu.memory_space<vmem>>, vector<1x32x32xbf16>
    %5 = vector.shape_cast %4 : vector<1x32x32xbf16> to vector<32x32xbf16>
    %cst_6 = arith.constant dense<0.000000e+00> : vector<128x32xf32>
    %6 = tpu.matmul %3, %5, %cst_6 {dimension_numbers = #tpu.dot_dimension_numbers<[1], [0], [0], [1], [0, 0, 1, 1], [], []>} : vector<128x32xbf16>, vector<32x32xbf16>, vector<128x32xf32> -> vector<128x32xf32>
    %7 = arith.addf %1, %6 : vector<128x32xf32>
    %8 = vector.extract_strided_slice %0 {offsets = [0, 0, 1, 0], sizes = [2, 8, 8, 32], strides = [1, 1, 1, 1]} : vector<2x10x10x32xbf16> to vector<2x8x8x32xbf16>
    %9 = vector.shape_cast %8 : vector<2x8x8x32xbf16> to vector<128x32xbf16>
    %c1 = arith.constant 1 : index
    %c0_7 = arith.constant 0 : index
    %c0_8 = arith.constant 0 : index
    %10 = vector.load %arg1[%c1, %c0_7, %c0_8] : memref<9x32x32xbf16, #tpu.memory_space<vmem>>, vector<1x32x32xbf16>
    %11 = vector.shape_cast %10 : vector<1x32x32xbf16> to vector<32x32xbf16>
    %cst_9 = arith.constant dense<0.000000e+00> : vector<128x32xf32>
    %12 = tpu.matmul %9, %11, %cst_9 {dimension_numbers = #tpu.dot_dimension_numbers<[1], [0], [0], [1], [0, 0, 1, 1], [], []>} : vector<128x32xbf16>, vector<32x32xbf16>, vector<128x32xf32> -> vector<128x32xf32>
    %13 = arith.addf %7, %12 : vector<128x32xf32>
    %14 = vector.extract_strided_slice %0 {offsets = [0, 0, 2, 0], sizes = [2, 8, 8, 32], strides = [1, 1, 1, 1]} : vector<2x10x10x32xbf16> to vector<2x8x8x32xbf16>
    %15 = vector.shape_cast %14 : vector<2x8x8x32xbf16> to vector<128x32xbf16>
    %c2 = arith.constant 2 : index
    %c0_10 = arith.constant 0 : index
    %c0_11 = arith.constant 0 : index
    %16 = vector.load %arg1[%c2, %c0_10, %c0_11] : memref<9x32x32xbf16, #tpu.memory_space<vmem>>, vector<1x32x32xbf16>
    %17 = vector.shape_cast %16 : vector<1x32x32xbf16> to vector<32x32xbf16>
    %cst_12 = arith.constant dense<0.000000e+00> : vector<128x32xf32>
    %18 = tpu.matmul %15, %17, %cst_12 {dimension_numbers = #tpu.dot_dimension_numbers<[1], [0], [0], [1], [0, 0, 1, 1], [], []>} : vector<128x32xbf16>, vector<32x32xbf16>, vector<128x32xf32> -> vector<128x32xf32>
    %19 = arith.addf %13, %18 : vector<128x32xf32>
    %20 = vector.extract_strided_slice %0 {offsets = [0, 1, 0, 0], sizes = [2, 8, 8, 32], strides = [1, 1, 1, 1]} : vector<2x10x10x32xbf16> to vector<2x8x8x32xbf16>
    %21 = vector.shape_cast %20 : vector<2x8x8x32xbf16> to vector<128x32xbf16>
    %c3 = arith.constant 3 : index
    %c0_13 = arith.constant 0 : index
    %c0_14 = arith.constant 0 : index
    %22 = vector.load %arg1[%c3, %c0_13, %c0_14] : memref<9x32x32xbf16, #tpu.memory_space<vmem>>, vector<1x32x32xbf16>
    %23 = vector.shape_cast %22 : vector<1x32x32xbf16> to vector<32x32xbf16>
    %cst_15 = arith.constant dense<0.000000e+00> : vector<128x32xf32>
    %24 = tpu.matmul %21, %23, %cst_15 {dimension_numbers = #tpu.dot_dimension_numbers<[1], [0], [0], [1], [0, 0, 1, 1], [], []>} : vector<128x32xbf16>, vector<32x32xbf16>, vector<128x32xf32> -> vector<128x32xf32>
    %25 = arith.addf %19, %24 : vector<128x32xf32>
    %26 = vector.extract_strided_slice %0 {offsets = [0, 1, 1, 0], sizes = [2, 8, 8, 32], strides = [1, 1, 1, 1]} : vector<2x10x10x32xbf16> to vector<2x8x8x32xbf16>
    %27 = vector.shape_cast %26 : vector<2x8x8x32xbf16> to vector<128x32xbf16>
    %c4 = arith.constant 4 : index
    %c0_16 = arith.constant 0 : index
    %c0_17 = arith.constant 0 : index
    %28 = vector.load %arg1[%c4, %c0_16, %c0_17] : memref<9x32x32xbf16, #tpu.memory_space<vmem>>, vector<1x32x32xbf16>
    %29 = vector.shape_cast %28 : vector<1x32x32xbf16> to vector<32x32xbf16>
    %cst_18 = arith.constant dense<0.000000e+00> : vector<128x32xf32>
    %30 = tpu.matmul %27, %29, %cst_18 {dimension_numbers = #tpu.dot_dimension_numbers<[1], [0], [0], [1], [0, 0, 1, 1], [], []>} : vector<128x32xbf16>, vector<32x32xbf16>, vector<128x32xf32> -> vector<128x32xf32>
    %31 = arith.addf %25, %30 : vector<128x32xf32>
    %32 = vector.extract_strided_slice %0 {offsets = [0, 1, 2, 0], sizes = [2, 8, 8, 32], strides = [1, 1, 1, 1]} : vector<2x10x10x32xbf16> to vector<2x8x8x32xbf16>
    %33 = vector.shape_cast %32 : vector<2x8x8x32xbf16> to vector<128x32xbf16>
    %c5 = arith.constant 5 : index
    %c0_19 = arith.constant 0 : index
    %c0_20 = arith.constant 0 : index
    %34 = vector.load %arg1[%c5, %c0_19, %c0_20] : memref<9x32x32xbf16, #tpu.memory_space<vmem>>, vector<1x32x32xbf16>
    %35 = vector.shape_cast %34 : vector<1x32x32xbf16> to vector<32x32xbf16>
    %cst_21 = arith.constant dense<0.000000e+00> : vector<128x32xf32>
    %36 = tpu.matmul %33, %35, %cst_21 {dimension_numbers = #tpu.dot_dimension_numbers<[1], [0], [0], [1], [0, 0, 1, 1], [], []>} : vector<128x32xbf16>, vector<32x32xbf16>, vector<128x32xf32> -> vector<128x32xf32>
    %37 = arith.addf %31, %36 : vector<128x32xf32>
    %38 = vector.extract_strided_slice %0 {offsets = [0, 2, 0, 0], sizes = [2, 8, 8, 32], strides = [1, 1, 1, 1]} : vector<2x10x10x32xbf16> to vector<2x8x8x32xbf16>
    %39 = vector.shape_cast %38 : vector<2x8x8x32xbf16> to vector<128x32xbf16>
    %c6 = arith.constant 6 : index
    %c0_22 = arith.constant 0 : index
    %c0_23 = arith.constant 0 : index
    %40 = vector.load %arg1[%c6, %c0_22, %c0_23] : memref<9x32x32xbf16, #tpu.memory_space<vmem>>, vector<1x32x32xbf16>
    %41 = vector.shape_cast %40 : vector<1x32x32xbf16> to vector<32x32xbf16>
    %cst_24 = arith.constant dense<0.000000e+00> : vector<128x32xf32>
    %42 = tpu.matmul %39, %41, %cst_24 {dimension_numbers = #tpu.dot_dimension_numbers<[1], [0], [0], [1], [0, 0, 1, 1], [], []>} : vector<128x32xbf16>, vector<32x32xbf16>, vector<128x32xf32> -> vector<128x32xf32>
    %43 = arith.addf %37, %42 : vector<128x32xf32>
    %44 = vector.extract_strided_slice %0 {offsets = [0, 2, 1, 0], sizes = [2, 8, 8, 32], strides = [1, 1, 1, 1]} : vector<2x10x10x32xbf16> to vector<2x8x8x32xbf16>
    %45 = vector.shape_cast %44 : vector<2x8x8x32xbf16> to vector<128x32xbf16>
    %c7 = arith.constant 7 : index
    %c0_25 = arith.constant 0 : index
    %c0_26 = arith.constant 0 : index
    %46 = vector.load %arg1[%c7, %c0_25, %c0_26] : memref<9x32x32xbf16, #tpu.memory_space<vmem>>, vector<1x32x32xbf16>
    %47 = vector.shape_cast %46 : vector<1x32x32xbf16> to vector<32x32xbf16>
    %cst_27 = arith.constant dense<0.000000e+00> : vector<128x32xf32>
    %48 = tpu.matmul %45, %47, %cst_27 {dimension_numbers = #tpu.dot_dimension_numbers<[1], [0], [0], [1], [0, 0, 1, 1], [], []>} : vector<128x32xbf16>, vector<32x32xbf16>, vector<128x32xf32> -> vector<128x32xf32>
    %49 = arith.addf %43, %48 : vector<128x32xf32>
    %50 = vector.extract_strided_slice %0 {offsets = [0, 2, 2, 0], sizes = [2, 8, 8, 32], strides = [1, 1, 1, 1]} : vector<2x10x10x32xbf16> to vector<2x8x8x32xbf16>
    %51 = vector.shape_cast %50 : vector<2x8x8x32xbf16> to vector<128x32xbf16>
    %c8 = arith.constant 8 : index
    %c0_28 = arith.constant 0 : index
    %c0_29 = arith.constant 0 : index
    %52 = vector.load %arg1[%c8, %c0_28, %c0_29] : memref<9x32x32xbf16, #tpu.memory_space<vmem>>, vector<1x32x32xbf16>
    %53 = vector.shape_cast %52 : vector<1x32x32xbf16> to vector<32x32xbf16>
    %cst_30 = arith.constant dense<0.000000e+00> : vector<128x32xf32>
    %54 = tpu.matmul %51, %53, %cst_30 {dimension_numbers = #tpu.dot_dimension_numbers<[1], [0], [0], [1], [0, 0, 1, 1], [], []>} : vector<128x32xbf16>, vector<32x32xbf16>, vector<128x32xf32> -> vector<128x32xf32>
    %55 = arith.addf %49, %54 : vector<128x32xf32>
    %c0_31 = arith.constant 0 : index
    %c0_32 = arith.constant 0 : index
    %56 = vector.load %arg2[%c0_31, %c0_32] : memref<1x32xf32, #tpu.memory_space<vmem>>, vector<1x32xf32>
    %57 = vector.broadcast %56 : vector<1x32xf32> to vector<128x32xf32>
    %58 = arith.addf %55, %57 : vector<128x32xf32>
    %cst_33 = arith.constant 0.000000e+00 : f32
    %59 = vector.broadcast %cst_33 : f32 to vector<128x32xf32>
    %60 = arith.maximumf %58, %59 : vector<128x32xf32>
    %61 = arith.truncf %60 : vector<128x32xf32> to vector<128x32xbf16>
    %c0_34 = arith.constant 0 : index
    %c0_35 = arith.constant 0 : index
    %62 = vector.load %arg3[%c0_34, %c0_35] : memref<32x128xbf16, #tpu.memory_space<vmem>>, vector<32x128xbf16>
    %cst_36 = arith.constant dense<0.000000e+00> : vector<128x128xf32>
    %63 = tpu.matmul %61, %62, %cst_36 {dimension_numbers = #tpu.dot_dimension_numbers<[1], [0], [0], [1], [0, 0, 1, 1], [], []>} : vector<128x32xbf16>, vector<32x128xbf16>, vector<128x128xf32> -> vector<128x128xf32>
    %c0_37 = arith.constant 0 : index
    %c0_38 = arith.constant 0 : index
    %64 = vector.load %arg4[%c0_37, %c0_38] : memref<1x128xf32, #tpu.memory_space<vmem>>, vector<1x128xf32>
    %65 = vector.broadcast %64 : vector<1x128xf32> to vector<128x128xf32>
    %66 = arith.addf %63, %65 : vector<128x128xf32>
    %c0_39 = arith.constant 0 : index
    %c0_40 = arith.constant 0 : index
    %67 = vector.load %arg5[%c0_39, %c0_40] : memref<128x128xf32, #tpu.memory_space<vmem>>, vector<128x128xf32>
    tpu.vector_store %arg5[%c0_39, %c0_40], %66 {strides = array<i32>} : memref<128x128xf32, #tpu.memory_space<vmem>>, vector<128x128xf32>,
    return
  }
}

module attributes {stable_mosaic.version = 11 : i64} {
  func.func @_box_head_kernel(%arg0: memref<32x1568xf32, #tpu.memory_space<vmem>>, %arg1: memref<1568x256xbf16, #tpu.memory_space<vmem>>, %arg2: memref<1x256xf32, #tpu.memory_space<vmem>>, %arg3: memref<256x256xbf16, #tpu.memory_space<vmem>>, %arg4: memref<1x256xf32, #tpu.memory_space<vmem>>, %arg5: memref<256x128xbf16, #tpu.memory_space<vmem>>, %arg6: memref<1x128xf32, #tpu.memory_space<vmem>>, %arg7: memref<32x128xf32, #tpu.memory_space<vmem>>) attributes {dimension_semantics = [], scalar_prefetch = 0 : i64, scratch_operands = 0 : i64, tpu.core_type = #tpu.core_type<tc>} {
    %c0 = arith.constant 0 : index
    %c0_0 = arith.constant 0 : index
    %0 = vector.load %arg0[%c0, %c0_0] : memref<32x1568xf32, #tpu.memory_space<vmem>>, vector<32x1568xf32>
    %1 = arith.truncf %0 : vector<32x1568xf32> to vector<32x1568xbf16>
    %c0_1 = arith.constant 0 : index
    %c0_2 = arith.constant 0 : index
    %2 = vector.load %arg1[%c0_1, %c0_2] : memref<1568x256xbf16, #tpu.memory_space<vmem>>, vector<1568x256xbf16>
    %cst = arith.constant dense<0.000000e+00> : vector<32x256xf32>
    %3 = tpu.matmul %1, %2, %cst {dimension_numbers = #tpu.dot_dimension_numbers<[1], [0], [0], [1], [0, 0, 1, 1], [], []>} : vector<32x1568xbf16>, vector<1568x256xbf16>, vector<32x256xf32> -> vector<32x256xf32>
    %c0_3 = arith.constant 0 : index
    %c0_4 = arith.constant 0 : index
    %4 = vector.load %arg2[%c0_3, %c0_4] : memref<1x256xf32, #tpu.memory_space<vmem>>, vector<1x256xf32>
    %5 = vector.broadcast %4 : vector<1x256xf32> to vector<32x256xf32>
    %6 = arith.addf %3, %5 : vector<32x256xf32>
    %cst_5 = arith.constant 0.000000e+00 : f32
    %7 = vector.broadcast %cst_5 : f32 to vector<32x256xf32>
    %8 = arith.maximumf %6, %7 : vector<32x256xf32>
    %9 = arith.truncf %8 : vector<32x256xf32> to vector<32x256xbf16>
    %c0_6 = arith.constant 0 : index
    %c0_7 = arith.constant 0 : index
    %10 = vector.load %arg3[%c0_6, %c0_7] : memref<256x256xbf16, #tpu.memory_space<vmem>>, vector<256x256xbf16>
    %cst_8 = arith.constant dense<0.000000e+00> : vector<32x256xf32>
    %11 = tpu.matmul %9, %10, %cst_8 {dimension_numbers = #tpu.dot_dimension_numbers<[1], [0], [0], [1], [0, 0, 1, 1], [], []>} : vector<32x256xbf16>, vector<256x256xbf16>, vector<32x256xf32> -> vector<32x256xf32>
    %c0_9 = arith.constant 0 : index
    %c0_10 = arith.constant 0 : index
    %12 = vector.load %arg4[%c0_9, %c0_10] : memref<1x256xf32, #tpu.memory_space<vmem>>, vector<1x256xf32>
    %13 = vector.broadcast %12 : vector<1x256xf32> to vector<32x256xf32>
    %14 = arith.addf %11, %13 : vector<32x256xf32>
    %cst_11 = arith.constant 0.000000e+00 : f32
    %15 = vector.broadcast %cst_11 : f32 to vector<32x256xf32>
    %16 = arith.maximumf %14, %15 : vector<32x256xf32>
    %17 = arith.truncf %16 : vector<32x256xf32> to vector<32x256xbf16>
    %c0_12 = arith.constant 0 : index
    %c0_13 = arith.constant 0 : index
    %18 = vector.load %arg5[%c0_12, %c0_13] : memref<256x128xbf16, #tpu.memory_space<vmem>>, vector<256x128xbf16>
    %cst_14 = arith.constant dense<0.000000e+00> : vector<32x128xf32>
    %19 = tpu.matmul %17, %18, %cst_14 {dimension_numbers = #tpu.dot_dimension_numbers<[1], [0], [0], [1], [0, 0, 1, 1], [], []>} : vector<32x256xbf16>, vector<256x128xbf16>, vector<32x128xf32> -> vector<32x128xf32>
    %c0_15 = arith.constant 0 : index
    %c0_16 = arith.constant 0 : index
    %20 = vector.load %arg6[%c0_15, %c0_16] : memref<1x128xf32, #tpu.memory_space<vmem>>, vector<1x128xf32>
    %21 = vector.broadcast %20 : vector<1x128xf32> to vector<32x128xf32>
    %22 = arith.addf %19, %21 : vector<32x128xf32>
    %c0_17 = arith.constant 0 : index
    %c0_18 = arith.constant 0 : index
    %23 = vector.load %arg7[%c0_17, %c0_18] : memref<32x128xf32, #tpu.memory_space<vmem>>, vector<32x128xf32>
    tpu.vector_store %arg7[%c0_17, %c0_18], %22 {strides = array<i32>} : memref<32x128xf32, #tpu.memory_space<vmem>>, vector<32x128xf32>,
    return
  }
}

</mosaic_0001>

<llo_original>
// kernel: neg.19
$region0: #{neg.19}
  #allocation0 [shape = 's32[1]{0}', space=sflag, size = 0x4, scoped, tag = 'scoped memory for neg.19']
  %s0 = inlined_call_operand.vmem [shape: f32[12,1], index: 0, kind: input, shape index: {}]
  %s1 = inlined_call_operand.vmem [shape: f32[12,1], index: 1, kind: output, shape index: {}]
  %v2 = vld [vmem:[%s0] sm:$0x1]
  %3 = xla_tuple %v2
  %4 = xla_tuple %3
  %v5 = vxor.u32 %v2, 2147483648
  %6 = xla_tuple %v5
  %7 = vst [vmem:[%s1] sm:$0x1] %v5

// kernel: _lambda_.5
$region0: #{_lambda_.5}
  #allocation0 [shape = 'u32[]', space=smem, size = 0x4, offset = 0x4, fixed_abs, tag = 'smem constant byte address 0x4 - core index']
  #allocation1 [shape = 'u32[144,128]{1,0:T(1,128)}', space=vmem, size = 0x12000, scoped, tag = 'internal scratch']
  %s0 = inlined_call_operand.vmem [shape: bf16[2,9,9,16], index: 0, kind: input, shape index: {}]
  %s1 = inlined_call_operand.vmem [shape: bf16[2,9,9,16], index: 1, kind: input, shape index: {}]
  %s2 = inlined_call_operand.vmem [shape: bf16[2,9,9,16], index: 2, kind: input, shape index: {}]
  %s3 = inlined_call_operand.vmem [shape: bf16[2,9,9,16], index: 3, kind: input, shape index: {}]
  %s4 = inlined_call_operand.vmem [shape: bf16[9,16,32], index: 4, kind: input, shape index: {}]
  %s5 = inlined_call_operand.vmem [shape: f32[1,32], index: 5, kind: input, shape index: {}]
  %s6 = inlined_call_operand.vmem [shape: bf16[128,32], index: 6, kind: output, shape index: {}]
  %s7 = sld [smem:[#allocation0]]
  $region34: #{_lambda_.5} parent=0
    _
  %s9 = ssub.s32 1, %s7
  %s10 = scalar_select 0, %s9, %s7
  // Predicated region
  $region2: #{_lambda_.5} parent=0 // pred_check
    _
  $region3: #{_lambda_.5} parent=0 // pred_check_branch
    %12 = sbr.rel (0) target = $region5
  $region4: #{_lambda_.5} parent=0 // pred_region
    _
  $region5: #{_lambda_.5} parent=0 // pred_fallthru
    _
  // Predicated region
  $region6: #{_lambda_.5} parent=0 // pred_check
    _
  $region7: #{_lambda_.5} parent=0 // pred_check_branch
    %14 = sbr.rel (0) target = $region9
  $region8: #{_lambda_.5} parent=0 // pred_region
    _
  $region9: #{_lambda_.5} parent=0 // pred_fallthru
    _
  // Predicated region
  $region10: #{_lambda_.5} parent=0 // pred_check
    _
  $region11: #{_lambda_.5} parent=0 // pred_check_branch
    %16 = sbr.rel (0) target = $region13
  $region12: #{_lambda_.5} parent=0 // pred_region
    _
  $region13: #{_lambda_.5} parent=0 // pred_fallthru
    _
  // Predicated region
  $region14: #{_lambda_.5} parent=0 // pred_check
    _
  $region15: #{_lambda_.5} parent=0 // pred_check_branch
    %18 = sbr.rel (0) target = $region17
  $region16: #{_lambda_.5} parent=0 // pred_region
    _
  $region17: #{_lambda_.5} parent=0 // pred_fallthru
    _
  // Predicated region
  $region18: #{_lambda_.5} parent=0 // pred_check
    _
  $region19: #{_lambda_.5} parent=0 // pred_check_branch
    %20 = sbr.rel (0) target = $region21
  $region20: #{_lambda_.5} parent=0 // pred_region
    _
  $region21: #{_lambda_.5} parent=0 // pred_fallthru
    _
  // Predicated region
  $region22: #{_lambda_.5} parent=0 // pred_check
    _
  $region23: #{_lambda_.5} parent=0 // pred_check_branch
    %22 = sbr.rel (0) target = $region25
  $region24: #{_lambda_.5} parent=0 // pred_region
    _
  $region25: #{_lambda_.5} parent=0 // pred_fallthru
    _
  %v24 = vld [vmem:[%s0] sm:$0xf]
  %v25 = vld [vmem:[%s0 + $0x4] sm:$0x1]
  %v26 = vld [vmem:[%s0 + $0x8] sm:$0xf]
  %v27 = vld [vmem:[%s0 + $0xc] sm:$0x1]
  %v28 = vld [vmem:[%s0 + $0x10] sm:$0xf]
  %v29 = vld [vmem:[%s0 + $0x14] sm:$0x1]
  %v30 = vld [vmem:[%s0 + $0x18] sm:$0xf]
  %v31 = vld [vmem:[%s0 + $0x1c] sm:$0x1]
  %v32 = vld [vmem:[%s0 + $0x20] sm:$0xf]
  %v33 = vld [vmem:[%s0 + $0x24] sm:$0x1]
  %v34 = vld [vmem:[%s0 + $0x28] sm:$0xf]
  %v35 = vld [vmem:[%s0 + $0x2c] sm:$0x1]
  %v36 = vld [vmem:[%s0 + $0x30] sm:$0xf]
  %v37 = vld [vmem:[%s0 + $0x34] sm:$0x1]
  %v38 = vld [vmem:[%s0 + $0x38] sm:$0xf]
  %v39 = vld [vmem:[%s0 + $0x3c] sm:$0x1]
  %v40 = vld [vmem:[%s0 + $0x40] sm:$0xf]
  %v41 = vld [vmem:[%s0 + $0x44] sm:$0x1]
  %v42 = vld [vmem:[%s0 + $0x48] sm:$0xf]
  %v43 = vld [vmem:[%s0 + $0x4c] sm:$0x1]
  %v44 = vld [vmem:[%s0 + $0x50] sm:$0xf]
  %v45 = vld [vmem:[%s0 + $0x54] sm:$0x1]
  %v46 = vld [vmem:[%s0 + $0x58] sm:$0xf]
  %v47 = vld [vmem:[%s0 + $0x5c] sm:$0x1]
  %v48 = vld [vmem:[%s0 + $0x60] sm:$0xf]
  %v49 = vld [vmem:[%s0 + $0x64] sm:$0x1]
  %v50 = vld [vmem:[%s0 + $0x68] sm:$0xf]
  %v51 = vld [vmem:[%s0 + $0x6c] sm:$0x1]
  %v52 = vld [vmem:[%s0 + $0x70] sm:$0xf]
  %v53 = vld [vmem:[%s0 + $0x74] sm:$0x1]
  %v54 = vld [vmem:[%s0 + $0x78] sm:$0xf]
  %v55 = vld [vmem:[%s0 + $0x7c] sm:$0x1]
  %v56 = vld [vmem:[%s0 + $0x80] sm:$0xf]
  %v57 = vld [vmem:[%s0 + $0x84] sm:$0x1]
  %v58 = vld [vmem:[%s0 + $0x88] sm:$0xf]
  %v59 = vld [vmem:[%s0 + $0x8c] sm:$0x1]
  %v60 = vld [vmem:[%s1] sm:$0xf]
  %v61 = vld [vmem:[%s1 + $0x8] sm:$0xf]
  %v62 = vld [vmem:[%s1 + $0x10] sm:$0xf]
  %v63 = vld [vmem:[%s1 + $0x18] sm:$0xf]
  %v64 = vld [vmem:[%s1 + $0x20] sm:$0xf]
  %v65 = vld [vmem:[%s1 + $0x28] sm:$0xf]
  %v66 = vld [vmem:[%s1 + $0x30] sm:$0xf]
  %v67 = vld [vmem:[%s1 + $0x38] sm:$0xf]
  %v68 = vld [vmem:[%s1 + $0x40] sm:$0xf]
  %v69 = vld [vmem:[%s1 + $0x48] sm:$0xf]
  %v70 = vld [vmem:[%s1 + $0x50] sm:$0xf]
  %v71 = vld [vmem:[%s1 + $0x58] sm:$0xf]
  %v72 = vld [vmem:[%s1 + $0x60] sm:$0xf]
  %v73 = vld [vmem:[%s1 + $0x68] sm:$0xf]
  %v74 = vld [vmem:[%s1 + $0x70] sm:$0xf]
  %v75 = vld [vmem:[%s1 + $0x78] sm:$0xf]
  %v76 = vld [vmem:[%s1 + $0x80] sm:$0xf]
  %v77 = vld [vmem:[%s1 + $0x88] sm:$0xf]
  %v78 = vld [vmem:[%s2] sm:$0xf]
  %v79 = vld [vmem:[%s2 + $0x4] sm:$0x1]
  %v80 = vld [vmem:[%s2 + $0x8] sm:$0xf]
  %v81 = vld [vmem:[%s2 + $0xc] sm:$0x1]
  %v82 = vld [vmem:[%s2 + $0x10] sm:$0xf]
  %v83 = vld [vmem:[%s2 + $0x14] sm:$0x1]
  %v84 = vld [vmem:[%s2 + $0x18] sm:$0xf]
  %v85 = vld [vmem:[%s2 + $0x1c] sm:$0x1]
  %v86 = vld [vmem:[%s2 + $0x20] sm:$0xf]
  %v87 = vld [vmem:[%s2 + $0x24] sm:$0x1]
  %v88 = vld [vmem:[%s2 + $0x28] sm:$0xf]
  %v89 = vld [vmem:[%s2 + $0x2c] sm:$0x1]
  %v90 = vld [vmem:[%s2 + $0x30] sm:$0xf]
  %v91 = vld [vmem:[%s2 + $0x34] sm:$0x1]
  %v92 = vld [vmem:[%s2 + $0x38] sm:$0xf]
  %v93 = vld [vmem:[%s2 + $0x3c] sm:$0x1]
  %v94 = vld [vmem:[%s2 + $0x48] sm:$0xf]
  %v95 = vld [vmem:[%s2 + $0x4c] sm:$0x1]
  %v96 = vld [vmem:[%s2 + $0x50] sm:$0xf]
  %v97 = vld [vmem:[%s2 + $0x54] sm:$0x1]
  %v98 = vld [vmem:[%s2 + $0x58] sm:$0xf]
  %v99 = vld [vmem:[%s2 + $0x5c] sm:$0x1]
  %v100 = vld [vmem:[%s2 + $0x60] sm:$0xf]
  %v101 = vld [vmem:[%s2 + $0x64] sm:$0x1]
  %v102 = vld [vmem:[%s2 + $0x68] sm:$0xf]
  %v103 = vld [vmem:[%s2 + $0x6c] sm:$0x1]
  %v104 = vld [vmem:[%s2 + $0x70] sm:$0xf]
  %v105 = vld [vmem:[%s2 + $0x74] sm:$0x1]
  %v106 = vld [vmem:[%s2 + $0x78] sm:$0xf]
  %v107 = vld [vmem:[%s2 + $0x7c] sm:$0x1]
  %v108 = vld [vmem:[%s2 + $0x80] sm:$0xf]
  %v109 = vld [vmem:[%s2 + $0x84] sm:$0x1]
  %v110 = vld [vmem:[%s3] sm:$0xf]
  %v111 = vld [vmem:[%s3 + $0x8] sm:$0xf]
  %v112 = vld [vmem:[%s3 + $0x10] sm:$0xf]
  %v113 = vld [vmem:[%s3 + $0x18] sm:$0xf]
  %v114 = vld [vmem:[%s3 + $0x20] sm:$0xf]
  %v115 = vld [vmem:[%s3 + $0x28] sm:$0xf]
  %v116 = vld [vmem:[%s3 + $0x30] sm:$0xf]
  %v117 = vld [vmem:[%s3 + $0x38] sm:$0xf]
  %v118 = vld [vmem:[%s3 + $0x48] sm:$0xf]
  %v119 = vld [vmem:[%s3 + $0x50] sm:$0xf]
  %v120 = vld [vmem:[%s3 + $0x58] sm:$0xf]
  %v121 = vld [vmem:[%s3 + $0x60] sm:$0xf]
  %v122 = vld [vmem:[%s3 + $0x68] sm:$0xf]
  %v123 = vld [vmem:[%s3 + $0x70] sm:$0xf]
  %v124 = vld [vmem:[%s3 + $0x78] sm:$0xf]
  %v125 = vld [vmem:[%s3 + $0x80] sm:$0xf]
  %v126 = vld [vmem:[%s4] sm:$0xf]
  %v127 = vld [vmem:[%s4 + $0x4] sm:$0xf]
  %s128 = scalar_lea.vmem %s4, 8
  %v129 = vld [vmem:[%s128] sm:$0xf]
  %v130 = vld [vmem:[%s128 + $0x4] sm:$0xf]
  %v147 = vunpack.c.l.b16 %v60
  %v148 = vunpack.c.l.b16 %v61
  %v149 = vunpack.c.l.b16 %v62
  %v150 = vunpack.c.l.b16 %v63
  %v151 = vunpack.c.l.b16 %v64
  %v152 = vunpack.c.l.b16 %v65
  %v153 = vunpack.c.l.b16 %v66
  %v154 = vunpack.c.l.b16 %v67
  %v155 = vunpack.c.l.b16 %v69
  %v156 = vunpack.c.l.b16 %v70
  %v157 = vunpack.c.l.b16 %v71
  %v158 = vunpack.c.l.b16 %v72
  %v159 = vunpack.c.l.b16 %v73
  %v160 = vunpack.c.l.b16 %v74
  %v161 = vunpack.c.l.b16 %v75
  %v162 = vunpack.c.l.b16 %v76
  %v163 = vpack.c.b16 %v148, %v147
  %v164 = vpack.c.b16 %v150, %v149
  %v165 = vpack.c.b16 %v152, %v151
  %v166 = vpack.c.b16 %v154, %v153
  %v167 = vpack.c.b16 %v156, %v155
  %v168 = vpack.c.b16 %v158, %v157
  %v169 = vpack.c.b16 %v160, %v159
  %v170 = vpack.c.b16 %v162, %v161
  %v173 = vunpack.c.l.b16 %v129
  %v174 = vunpack.c.l.b16 %v130
  %v175 = vpack.c.b16 %v174, %v173
  %vm177 = vcmask 130048
  %v179 = vsel %vm177, %v163, 0
  %v182 = vsel %vm177, %v164, 0
  %v185 = vsel %vm177, %v165, 0
  %v188 = vsel %vm177, %v166, 0
  %v191 = vsel %vm177, %v167, 0
  %v194 = vsel %vm177, %v168, 0
  %v197 = vsel %vm177, %v169, 0
  %v200 = vsel %vm177, %v170, 0
  %202 = vmatprep.subr.bf16.mxu0 0
  %203 = vmatpush1.bf16.msra.mxu0 %v175
  %204 = vmatprep.subr.bf16.mxu0 0
  %205 = vmatpush1.bf16.msra.mxu0 0
  %206 = vmatprep.subr.bf16.mxu0 0
  %207 = vmatpush1.bf16.msra.mxu0 0
  %208 = vmatprep.subr.bf16.mxu0 0
  %209 = vmatpush1.bf16.msra.mxu0 0
  %210 = vmatprep.subr.bf16.mxu0 0
  %211 = vmatpush1.bf16.msra.mxu0 0
  %212 = vmatprep.subr.bf16.mxu0 0
  %213 = vmatpush1.bf16.msra.mxu0 0
  %214 = vmatprep.subr.bf16.mxu0 0
  %215 = vmatpush1.bf16.msra.mxu0 0
  %216 = vmatprep.subr.bf16.mxu0 0
  %217 = vmatpush1.bf16.msra.mxu0 0
  %218 = vmatprep.subr.bf16.mxu0 0
  %219 = vmatpush1.bf16.msra.mxu0 0
  %220 = vmatprep.subr.bf16.mxu0 0
  %221 = vmatpush1.bf16.msra.mxu0 0
  %222 = vmatprep.subr.bf16.mxu0 0
  %223 = vmatpush1.bf16.msra.mxu0 0
  %224 = vmatprep.subr.bf16.mxu0 0
  %225 = vmatpush1.bf16.msra.mxu0 0
  %226 = vmatprep.subr.bf16.mxu0 0
  %227 = vmatpush1.bf16.msra.mxu0 0
  %228 = vmatprep.subr.bf16.mxu0 0
  %229 = vmatpush1.bf16.msra.mxu0 0
  %230 = vmatprep.subr.bf16.mxu0 0
  %231 = vmatpush1.bf16.msra.mxu0 0
  %232 = vmatprep.subr.bf16.mxu0 0
  %233 = vmatpush1.bf16.msra.mxu0 0
  %234 = vmatprep.mubr.bf16.mxu0 0
  %235 = vmatmul.mubr.bf16.gmra.mrb[0].mxu0 %v179
  %v236 = vpop.f32.mrb[0].mxu0
  %v237 = vadd.f32 0.0, %v236
  %v238 = vpop.f32.mrb[0].mxu0
  %v239 = vpop.f32.mrb[0].mxu0
  %v240 = vadd.f32 0.0, %v239
  %v241 = vpop.f32.mrb[0].mxu0
  %242 = vmatprep.mubr.bf16.mxu0 0
  %243 = vmatmul.mubr.bf16.gmra.mrb[0].mxu0 %v182
  %v244 = vpop.f32.mrb[0].mxu0
  %v245 = vadd.f32 0.0, %v244
  %v246 = vpop.f32.mrb[0].mxu0
  %v247 = vpop.f32.mrb[0].mxu0
  %v248 = vadd.f32 0.0, %v247
  %v249 = vpop.f32.mrb[0].mxu0
  %250 = vmatprep.mubr.bf16.mxu0 0
  %251 = vmatmul.mubr.bf16.gmra.mrb[0].mxu0 %v185
  %v252 = vpop.f32.mrb[0].mxu0
  %v253 = vadd.f32 0.0, %v252
  %v254 = vpop.f32.mrb[0].mxu0
  %v255 = vpop.f32.mrb[0].mxu0
  %v256 = vadd.f32 0.0, %v255
  %v257 = vpop.f32.mrb[0].mxu0
  %258 = vmatprep.mubr.bf16.mxu0 0
  %259 = vmatmul.mubr.bf16.gmra.mrb[0].mxu0 %v188
  %v260 = vpop.f32.mrb[0].mxu0
  %v261 = vadd.f32 0.0, %v260
  %v262 = vpop.f32.mrb[0].mxu0
  %v263 = vpop.f32.mrb[0].mxu0
  %v264 = vadd.f32 0.0, %v263
  %v265 = vpop.f32.mrb[0].mxu0
  %266 = vmatprep.mubr.bf16.mxu0 0
  %267 = vmatmul.mubr.bf16.gmra.mrb[0].mxu0 %v191
  %v268 = vpop.f32.mrb[0].mxu0
  %v269 = vadd.f32 0.0, %v268
  %v270 = vpop.f32.mrb[0].mxu0
  %v271 = vpop.f32.mrb[0].mxu0
  %v272 = vadd.f32 0.0, %v271
  %v273 = vpop.f32.mrb[0].mxu0
  %274 = vmatprep.mubr.bf16.mxu0 0
  %275 = vmatmul.mubr.bf16.gmra.mrb[0].mxu0 %v194
  %v276 = vpop.f32.mrb[0].mxu0
  %v277 = vadd.f32 0.0, %v276
  %v278 = vpop.f32.mrb[0].mxu0
  %v279 = vpop.f32.mrb[0].mxu0
  %v280 = vadd.f32 0.0, %v279
  %v281 = vpop.f32.mrb[0].mxu0
  %282 = vmatprep.mubr.bf16.mxu0 0
  %283 = vmatmul.mubr.bf16.gmra.mrb[0].mxu0 %v197
  %v284 = vpop.f32.mrb[0].mxu0
  %v285 = vadd.f32 0.0, %v284
  %v286 = vpop.f32.mrb[0].mxu0
  %v287 = vpop.f32.mrb[0].mxu0
  %v288 = vadd.f32 0.0, %v287
  %v289 = vpop.f32.mrb[0].mxu0
  %290 = vmatprep.mubr.bf16.mxu0 0
  %291 = vmatmul.mubr.bf16.gmra.mrb[0].mxu0 %v200
  %v292 = vpop.f32.mrb[0].mxu0
  %v293 = vadd.f32 0.0, %v292
  %v294 = vpop.f32.mrb[0].mxu0
  %v295 = vpop.f32.mrb[0].mxu0
  %v296 = vadd.f32 0.0, %v295
  %v297 = vpop.f32.mrb[0].mxu0
  %298 = vdwg.mxu0
  %v315 = vunpack.c.l.b16 %v24
  %v316 = vunpack.c.l.b16 %v26
  %v317 = vunpack.c.l.b16 %v28
  %v318 = vunpack.c.l.b16 %v30
  %v319 = vunpack.c.l.b16 %v32
  %v320 = vunpack.c.l.b16 %v34
  %v321 = vunpack.c.l.b16 %v36
  %v322 = vunpack.c.l.b16 %v38
  %v323 = vunpack.c.l.b16 %v42
  %v324 = vunpack.c.l.b16 %v44
  %v325 = vunpack.c.l.b16 %v46
  %v326 = vunpack.c.l.b16 %v48
  %v327 = vunpack.c.l.b16 %v50
  %v328 = vunpack.c.l.b16 %v52
  %v329 = vunpack.c.l.b16 %v54
  %v330 = vunpack.c.l.b16 %v56
  %v331 = vpack.c.b16 %v316, %v315
  %v332 = vpack.c.b16 %v318, %v317
  %v333 = vpack.c.b16 %v320, %v319
  %v334 = vpack.c.b16 %v322, %v321
  %v335 = vpack.c.b16 %v324, %v323
  %v336 = vpack.c.b16 %v326, %v325
  %v337 = vpack.c.b16 %v328, %v327
  %v338 = vpack.c.b16 %v330, %v329
  %v341 = vunpack.c.l.b16 %v126
  %v342 = vunpack.c.l.b16 %v127
  %v343 = vpack.c.b16 %v342, %v341
  %v346 = vsel %vm177, %v331, 0
  %v349 = vsel %vm177, %v332, 0
  %v352 = vsel %vm177, %v333, 0
  %v355 = vsel %vm177, %v334, 0
  %v358 = vsel %vm177, %v335, 0
  %v361 = vsel %vm177, %v336, 0
  %v364 = vsel %vm177, %v337, 0
  %v367 = vsel %vm177, %v338, 0
  %369 = vmatprep.subr.bf16.mxu0 0
  %370 = vmatpush1.bf16.msra.mxu0 %v343
  %371 = vmatprep.subr.bf16.mxu0 0
  %372 = vmatpush1.bf16.msra.mxu0 0
  %373 = vmatprep.subr.bf16.mxu0 0
  %374 = vmatpush1.bf16.msra.mxu0 0
  %375 = vmatprep.subr.bf16.mxu0 0
  %376 = vmatpush1.bf16.msra.mxu0 0
  %377 = vmatprep.subr.bf16.mxu0 0
  %378 = vmatpush1.bf16.msra.mxu0 0
  %379 = vmatprep.subr.bf16.mxu0 0
  %380 = vmatpush1.bf16.msra.mxu0 0
  %381 = vmatprep.subr.bf16.mxu0 0
  %382 = vmatpush1.bf16.msra.mxu0 0
  %383 = vmatprep.subr.bf16.mxu0 0
  %384 = vmatpush1.bf16.msra.mxu0 0
  %385 = vmatprep.subr.bf16.mxu0 0
  %386 = vmatpush1.bf16.msra.mxu0 0
  %387 = vmatprep.subr.bf16.mxu0 0
  %388 = vmatpush1.bf16.msra.mxu0 0
  %389 = vmatprep.subr.bf16.mxu0 0
  %390 = vmatpush1.bf16.msra.mxu0 0
  %391 = vmatprep.subr.bf16.mxu0 0
  %392 = vmatpush1.bf16.msra.mxu0 0
  %393 = vmatprep.subr.bf16.mxu0 0
  %394 = vmatpush1.bf16.msra.mxu0 0
  %395 = vmatprep.subr.bf16.mxu0 0
  %396 = vmatpush1.bf16.msra.mxu0 0
  %397 = vmatprep.subr.bf16.mxu0 0
  %398 = vmatpush1.bf16.msra.mxu0 0
  %399 = vmatprep.subr.bf16.mxu0 0
  %400 = vmatpush1.bf16.msra.mxu0 0
  %401 = vmatprep.mubr.bf16.mxu0 0
  %402 = vmatmul.mubr.bf16.gmra.mrb[0].mxu0 %v346
  %v403 = vpop.f32.mrb[0].mxu0
  %v404 = vadd.f32 %v237, %v403
  %v405 = vpop.f32.mrb[0].mxu0
  %v406 = vpop.f32.mrb[0].mxu0
  %v407 = vadd.f32 %v240, %v406
  %v408 = vpop.f32.mrb[0].mxu0
  %409 = vmatprep.mubr.bf16.mxu0 0
  %410 = vmatmul.mubr.bf16.gmra.mrb[0].mxu0 %v349
  %v411 = vpop.f32.mrb[0].mxu0
  %v412 = vadd.f32 %v245, %v411
  %v413 = vpop.f32.mrb[0].mxu0
  %v414 = vpop.f32.mrb[0].mxu0
  %v415 = vadd.f32 %v248, %v414
  %v416 = vpop.f32.mrb[0].mxu0
  %417 = vmatprep.mubr.bf16.mxu0 0
  %418 = vmatmul.mubr.bf16.gmra.mrb[0].mxu0 %v352
  %v419 = vpop.f32.mrb[0].mxu0
  %v420 = vadd.f32 %v253, %v419
  %v421 = vpop.f32.mrb[0].mxu0
  %v422 = vpop.f32.mrb[0].mxu0
  %v423 = vadd.f32 %v256, %v422
  %v424 = vpop.f32.mrb[0].mxu0
  %425 = vmatprep.mubr.bf16.mxu0 0
  %426 = vmatmul.mubr.bf16.gmra.mrb[0].mxu0 %v355
  %v427 = vpop.f32.mrb[0].mxu0
  %v428 = vadd.f32 %v261, %v427
  %v429 = vpop.f32.mrb[0].mxu0
  %v430 = vpop.f32.mrb[0].mxu0
  %v431 = vadd.f32 %v264, %v430
  %v432 = vpop.f32.mrb[0].mxu0
  %433 = vmatprep.mubr.bf16.mxu0 0
  %434 = vmatmul.mubr.bf16.gmra.mrb[0].mxu0 %v358
  %v435 = vpop.f32.mrb[0].mxu0
  %v436 = vadd.f32 %v269, %v435
  %v437 = vpop.f32.mrb[0].mxu0
  %v438 = vpop.f32.mrb[0].mxu0
  %v439 = vadd.f32 %v272, %v438
  %v440 = vpop.f32.mrb[0].mxu0
  %441 = vmatprep.mubr.bf16.mxu0 0
  %442 = vmatmul.mubr.bf16.gmra.mrb[0].mxu0 %v361
  %v443 = vpop.f32.mrb[0].mxu0
  %v444 = vadd.f32 %v277, %v443
  %v445 = vpop.f32.mrb[0].mxu0
  %v446 = vpop.f32.mrb[0].mxu0
  %v447 = vadd.f32 %v280, %v446
  %v448 = vpop.f32.mrb[0].mxu0
  %449 = vmatprep.mubr.bf16.mxu0 0
  %450 = vmatmul.mubr.bf16.gmra.mrb[0].mxu0 %v364
  %v451 = vpop.f32.mrb[0].mxu0
  %v452 = vadd.f32 %v285, %v451
  %v453 = vpop.f32.mrb[0].mxu0
  %v454 = vpop.f32.mrb[0].mxu0
  %v455 = vadd.f32 %v288, %v454
  %v456 = vpop.f32.mrb[0].mxu0
  %457 = vmatprep.mubr.bf16.mxu0 0
  %458 = vmatmul.mubr.bf16.gmra.mrb[0].mxu0 %v367
  %v459 = vpop.f32.mrb[0].mxu0
  %v460 = vadd.f32 %v293, %v459
  %v461 = vpop.f32.mrb[0].mxu0
  %v462 = vpop.f32.mrb[0].mxu0
  %v463 = vadd.f32 %v296, %v462
  %v464 = vpop.f32.mrb[0].mxu0
  %465 = vdwg.mxu0
  %vm466 = vsmask.f32 3328
  %vm467 = vsmask.f32 7440
  %vm468 = vmor %vm466, %vm467
  %v470 = vshrl.u32 %v24, 16
  %v472 = vrot.slane %v470, 4
  %v473 = vshll.u32 %v24, 16
  %v475 = vrot.slane %v473, 5
  %v476 = vor.u32 %v472, %v475
  %v477 = vrot.slane %v476, 4
  %v479 = vshll.u32 %v25, 16
  %v481 = vrot.slane %v479, 5
  %v482 = vsel %vm468, %v477, %v481
  %v484 = vshrl.u32 %v26, 16
  %v486 = vrot.slane %v484, 4
  %v487 = vshll.u32 %v26, 16
  %v489 = vrot.slane %v487, 5
  %v490 = vor.u32 %v486, %v489
  %v491 = vrot.slane %v490, 4
  %v493 = vshll.u32 %v27, 16
  %v495 = vrot.slane %v493, 5
  %v496 = vsel %vm468, %v491, %v495
  %v498 = vshrl.u32 %v28, 16
  %v500 = vrot.slane %v498, 4
  %v501 = vshll.u32 %v28, 16
  %v503 = vrot.slane %v501, 5
  %v504 = vor.u32 %v500, %v503
  %v505 = vrot.slane %v504, 4
  %v507 = vshll.u32 %v29, 16
  %v509 = vrot.slane %v507, 5
  %v510 = vsel %vm468, %v505, %v509
  %v512 = vshrl.u32 %v30, 16
  %v514 = vrot.slane %v512, 4
  %v515 = vshll.u32 %v30, 16
  %v517 = vrot.slane %v515, 5
  %v518 = vor.u32 %v514, %v517
  %v519 = vrot.slane %v518, 4
  %v521 = vshll.u32 %v31, 16
  %v523 = vrot.slane %v521, 5
  %v524 = vsel %vm468, %v519, %v523
  %v526 = vshrl.u32 %v32, 16
  %v528 = vrot.slane %v526, 4
  %v529 = vshll.u32 %v32, 16
  %v531 = vrot.slane %v529, 5
  %v532 = vor.u32 %v528, %v531
  %v533 = vrot.slane %v532, 4
  %v535 = vshll.u32 %v33, 16
  %v537 = vrot.slane %v535, 5
  %v538 = vsel %vm468, %v533, %v537
  %v540 = vshrl.u32 %v34, 16
  %v542 = vrot.slane %v540, 4
  %v543 = vshll.u32 %v34, 16
  %v545 = vrot.slane %v543, 5
  %v546 = vor.u32 %v542, %v545
  %v547 = vrot.slane %v546, 4
  %v549 = vshll.u32 %v35, 16
  %v551 = vrot.slane %v549, 5
  %v552 = vsel %vm468, %v547, %v551
  %v554 = vshrl.u32 %v36, 16
  %v556 = vrot.slane %v554, 4
  %v557 = vshll.u32 %v36, 16
  %v559 = vrot.slane %v557, 5
  %v560 = vor.u32 %v556, %v559
  %v561 = vrot.slane %v560, 4
  %v563 = vshll.u32 %v37, 16
  %v565 = vrot.slane %v563, 5
  %v566 = vsel %vm468, %v561, %v565
  %v568 = vshrl.u32 %v38, 16
  %v570 = vrot.slane %v568, 4
  %v571 = vshll.u32 %v38, 16
  %v573 = vrot.slane %v571, 5
  %v574 = vor.u32 %v570, %v573
  %v575 = vrot.slane %v574, 4
  %v577 = vshll.u32 %v39, 16
  %v579 = vrot.slane %v577, 5
  %v580 = vsel %vm468, %v575, %v579
  %v582 = vshrl.u32 %v42, 16
  %v584 = vrot.slane %v582, 4
  %v585 = vshll.u32 %v42, 16
  %v587 = vrot.slane %v585, 5
  %v588 = vor.u32 %v584, %v587
  %v589 = vrot.slane %v588, 4
  %v591 = vshll.u32 %v43, 16
  %v593 = vrot.slane %v591, 5
  %v594 = vsel %vm468, %v589, %v593
  %v596 = vshrl.u32 %v44, 16
  %v598 = vrot.slane %v596, 4
  %v599 = vshll.u32 %v44, 16
  %v601 = vrot.slane %v599, 5
  %v602 = vor.u32 %v598, %v601
  %v603 = vrot.slane %v602, 4
  %v605 = vshll.u32 %v45, 16
  %v607 = vrot.slane %v605, 5
  %v608 = vsel %vm468, %v603, %v607
  %v610 = vshrl.u32 %v46, 16
  %v612 = vrot.slane %v610, 4
  %v613 = vshll.u32 %v46, 16
  %v615 = vrot.slane %v613, 5
  %v616 = vor.u32 %v612, %v615
  %v617 = vrot.slane %v616, 4
  %v619 = vshll.u32 %v47, 16
  %v621 = vrot.slane %v619, 5
  %v622 = vsel %vm468, %v617, %v621
  %v624 = vshrl.u32 %v48, 16
  %v626 = vrot.slane %v624, 4
  %v627 = vshll.u32 %v48, 16
  %v629 = vrot.slane %v627, 5
  %v630 = vor.u32 %v626, %v629
  %v631 = vrot.slane %v630, 4
  %v633 = vshll.u32 %v49, 16
  %v635 = vrot.slane %v633, 5
  %v636 = vsel %vm468, %v631, %v635
  %v638 = vshrl.u32 %v50, 16
  %v640 = vrot.slane %v638, 4
  %v641 = vshll.u32 %v50, 16
  %v643 = vrot.slane %v641, 5
  %v644 = vor.u32 %v640, %v643
  %v645 = vrot.slane %v644, 4
  %v647 = vshll.u32 %v51, 16
  %v649 = vrot.slane %v647, 5
  %v650 = vsel %vm468, %v645, %v649
  %v652 = vshrl.u32 %v52, 16
  %v654 = vrot.slane %v652, 4
  %v655 = vshll.u32 %v52, 16
  %v657 = vrot.slane %v655, 5
  %v658 = vor.u32 %v654, %v657
  %v659 = vrot.slane %v658, 4
  %v661 = vshll.u32 %v53, 16
  %v663 = vrot.slane %v661, 5
  %v664 = vsel %vm468, %v659, %v663
  %v666 = vshrl.u32 %v54, 16
  %v668 = vrot.slane %v666, 4
  %v669 = vshll.u32 %v54, 16
  %v671 = vrot.slane %v669, 5
  %v672 = vor.u32 %v668, %v671
  %v673 = vrot.slane %v672, 4
  %v675 = vshll.u32 %v55, 16
  %v677 = vrot.slane %v675, 5
  %v678 = vsel %vm468, %v673, %v677
  %v680 = vshrl.u32 %v56, 16
  %v682 = vrot.slane %v680, 4
  %v683 = vshll.u32 %v56, 16
  %v685 = vrot.slane %v683, 5
  %v686 = vor.u32 %v682, %v685
  %v687 = vrot.slane %v686, 4
  %v689 = vshll.u32 %v57, 16
  %v691 = vrot.slane %v689, 5
  %v692 = vsel %vm468, %v687, %v691
  %s693 = scalar_lea.vmem %s4, 16
  %v694 = vld [vmem:[%s693] sm:$0xf]
  %v695 = vld [vmem:[%s693 + $0x4] sm:$0xf]
  %v696 = vunpack.c.l.b16 %v482
  %v697 = vunpack.c.l.b16 %v496
  %v698 = vunpack.c.l.b16 %v510
  %v699 = vunpack.c.l.b16 %v524
  %v700 = vunpack.c.l.b16 %v538
  %v701 = vunpack.c.l.b16 %v552
  %v702 = vunpack.c.l.b16 %v566
  %v703 = vunpack.c.l.b16 %v580
  %v704 = vunpack.c.l.b16 %v594
  %v705 = vunpack.c.l.b16 %v608
  %v706 = vunpack.c.l.b16 %v622
  %v707 = vunpack.c.l.b16 %v636
  %v708 = vunpack.c.l.b16 %v650
  %v709 = vunpack.c.l.b16 %v664
  %v710 = vunpack.c.l.b16 %v678
  %v711 = vunpack.c.l.b16 %v692
  %v712 = vpack.c.b16 %v697, %v696
  %v713 = vpack.c.b16 %v699, %v698
  %v714 = vpack.c.b16 %v701, %v700
  %v715 = vpack.c.b16 %v703, %v702
  %v716 = vpack.c.b16 %v705, %v704
  %v717 = vpack.c.b16 %v707, %v706
  %v718 = vpack.c.b16 %v709, %v708
  %v719 = vpack.c.b16 %v711, %v710
  %v722 = vunpack.c.l.b16 %v694
  %v723 = vunpack.c.l.b16 %v695
  %v724 = vpack.c.b16 %v723, %v722
  %v727 = vsel %vm177, %v712, 0
  %v730 = vsel %vm177, %v713, 0
  %v733 = vsel %vm177, %v714, 0
  %v736 = vsel %vm177, %v715, 0
  %v739 = vsel %vm177, %v716, 0
  %v742 = vsel %vm177, %v717, 0
  %v745 = vsel %vm177, %v718, 0
  %v748 = vsel %vm177, %v719, 0
  %750 = vmatprep.subr.bf16.mxu0 0
  %751 = vmatpush1.bf16.msra.mxu0 %v724
  %752 = vmatprep.subr.bf16.mxu0 0
  %753 = vmatpush1.bf16.msra.mxu0 0
  %754 = vmatprep.subr.bf16.mxu0 0
  %755 = vmatpush1.bf16.msra.mxu0 0
  %756 = vmatprep.subr.bf16.mxu0 0
  %757 = vmatpush1.bf16.msra.mxu0 0
  %758 = vmatprep.subr.bf16.mxu0 0
  %759 = vmatpush1.bf16.msra.mxu0 0
  %760 = vmatprep.subr.bf16.mxu0 0
  %761 = vmatpush1.bf16.msra.mxu0 0
  %762 = vmatprep.subr.bf16.mxu0 0
  %763 = vmatpush1.bf16.msra.mxu0 0
  %764 = vmatprep.subr.bf16.mxu0 0
  %765 = vmatpush1.bf16.msra.mxu0 0
  %766 = vmatprep.subr.bf16.mxu0 0
  %767 = vmatpush1.bf16.msra.mxu0 0
  %768 = vmatprep.subr.bf16.mxu0 0
  %769 = vmatpush1.bf16.msra.mxu0 0
  %770 = vmatprep.subr.bf16.mxu0 0
  %771 = vmatpush1.bf16.msra.mxu0 0
  %772 = vmatprep.subr.bf16.mxu0 0
  %773 = vmatpush1.bf16.msra.mxu0 0
  %774 = vmatprep.subr.bf16.mxu0 0
  %775 = vmatpush1.bf16.msra.mxu0 0
  %776 = vmatprep.subr.bf16.mxu0 0
  %777 = vmatpush1.bf16.msra.mxu0 0
  %778 = vmatprep.subr.bf16.mxu0 0
  %779 = vmatpush1.bf16.msra.mxu0 0
  %780 = vmatprep.subr.bf16.mxu0 0
  %781 = vmatpush1.bf16.msra.mxu0 0
  %782 = vmatprep.mubr.bf16.mxu0 0
  %783 = vmatmul.mubr.bf16.gmra.mrb[0].mxu0 %v727
  %v784 = vpop.f32.mrb[0].mxu0
  %v785 = vadd.f32 0.0, %v784
  %v786 = vpop.f32.mrb[0].mxu0
  %v787 = vpop.f32.mrb[0].mxu0
  %v788 = vadd.f32 0.0, %v787
  %v789 = vpop.f32.mrb[0].mxu0
  %790 = vmatprep.mubr.bf16.mxu0 0
  %791 = vmatmul.mubr.bf16.gmra.mrb[0].mxu0 %v730
  %v792 = vpop.f32.mrb[0].mxu0
  %v793 = vadd.f32 0.0, %v792
  %v794 = vpop.f32.mrb[0].mxu0
  %v795 = vpop.f32.mrb[0].mxu0
  %v796 = vadd.f32 0.0, %v795
  %v797 = vpop.f32.mrb[0].mxu0
  %798 = vmatprep.mubr.bf16.mxu0 0
  %799 = vmatmul.mubr.bf16.gmra.mrb[0].mxu0 %v733
  %v800 = vpop.f32.mrb[0].mxu0
  %v801 = vadd.f32 0.0, %v800
  %v802 = vpop.f32.mrb[0].mxu0
  %v803 = vpop.f32.mrb[0].mxu0
  %v804 = vadd.f32 0.0, %v803
  %v805 = vpop.f32.mrb[0].mxu0
  %806 = vmatprep.mubr.bf16.mxu0 0
  %807 = vmatmul.mubr.bf16.gmra.mrb[0].mxu0 %v736
  %v808 = vpop.f32.mrb[0].mxu0
  %v809 = vadd.f32 0.0, %v808
  %v810 = vpop.f32.mrb[0].mxu0
  %v811 = vpop.f32.mrb[0].mxu0
  %v812 = vadd.f32 0.0, %v811
  %v813 = vpop.f32.mrb[0].mxu0
  %814 = vmatprep.mubr.bf16.mxu0 0
  %815 = vmatmul.mubr.bf16.gmra.mrb[0].mxu0 %v739
  %v816 = vpop.f32.mrb[0].mxu0
  %v817 = vadd.f32 0.0, %v816
  %v818 = vpop.f32.mrb[0].mxu0
  %v819 = vpop.f32.mrb[0].mxu0
  %v820 = vadd.f32 0.0, %v819
  %v821 = vpop.f32.mrb[0].mxu0
  %822 = vmatprep.mubr.bf16.mxu0 0
  %823 = vmatmul.mubr.bf16.gmra.mrb[0].mxu0 %v742
  %v824 = vpop.f32.mrb[0].mxu0
  %v825 = vadd.f32 0.0, %v824
  %v826 = vpop.f32.mrb[0].mxu0
  %v827 = vpop.f32.mrb[0].mxu0
  %v828 = vadd.f32 0.0, %v827
  %v829 = vpop.f32.mrb[0].mxu0
  %830 = vmatprep.mubr.bf16.mxu0 0
  %831 = vmatmul.mubr.bf16.gmra.mrb[0].mxu0 %v745
  %v832 = vpop.f32.mrb[0].mxu0
  %v833 = vadd.f32 0.0, %v832
  %v834 = vpop.f32.mrb[0].mxu0
  %v835 = vpop.f32.mrb[0].mxu0
  %v836 = vadd.f32 0.0, %v835
  %v837 = vpop.f32.mrb[0].mxu0
  %838 = vmatprep.mubr.bf16.mxu0 0
  %839 = vmatmul.mubr.bf16.gmra.mrb[0].mxu0 %v748
  %v840 = vpop.f32.mrb[0].mxu0
  %v841 = vadd.f32 0.0, %v840
  %v842 = vpop.f32.mrb[0].mxu0
  %v843 = vpop.f32.mrb[0].mxu0
  %v844 = vadd.f32 0.0, %v843
  %v845 = vpop.f32.mrb[0].mxu0
  %846 = vdwg.mxu0
  %v847 = vadd.f32 %v404, %v785
  %v848 = vadd.f32 %v407, %v788
  %v849 = vadd.f32 %v412, %v793
  %v850 = vadd.f32 %v415, %v796
  %v851 = vadd.f32 %v420, %v801
  %v852 = vadd.f32 %v423, %v804
  %v853 = vadd.f32 %v428, %v809
  %v854 = vadd.f32 %v431, %v812
  %v855 = vadd.f32 %v436, %v817
  %v856 = vadd.f32 %v439, %v820
  %v857 = vadd.f32 %v444, %v825
  %v858 = vadd.f32 %v447, %v828
  %v859 = vadd.f32 %v452, %v833
  %v860 = vadd.f32 %v455, %v836
  %v861 = vadd.f32 %v460, %v841
  %v862 = vadd.f32 %v463, %v844
  %s863 = scalar_lea.vmem %s4, 24
  %v864 = vld [vmem:[%s863] sm:$0xf]
  %v865 = vld [vmem:[%s863 + $0x4] sm:$0xf]
  %v882 = vunpack.c.l.b16 %v78
  %v883 = vunpack.c.l.b16 %v80
  %v884 = vunpack.c.l.b16 %v82
  %v885 = vunpack.c.l.b16 %v84
  %v886 = vunpack.c.l.b16 %v86
  %v887 = vunpack.c.l.b16 %v88
  %v888 = vunpack.c.l.b16 %v90
  %v889 = vunpack.c.l.b16 %v92
  %v890 = vunpack.c.l.b16 %v94
  %v891 = vunpack.c.l.b16 %v96
  %v892 = vunpack.c.l.b16 %v98
  %v893 = vunpack.c.l.b16 %v100
  %v894 = vunpack.c.l.b16 %v102
  %v895 = vunpack.c.l.b16 %v104
  %v896 = vunpack.c.l.b16 %v106
  %v897 = vunpack.c.l.b16 %v108
  %v898 = vpack.c.b16 %v883, %v882
  %v899 = vpack.c.b16 %v885, %v884
  %v900 = vpack.c.b16 %v887, %v886
  %v901 = vpack.c.b16 %v889, %v888
  %v902 = vpack.c.b16 %v891, %v890
  %v903 = vpack.c.b16 %v893, %v892
  %v904 = vpack.c.b16 %v895, %v894
  %v905 = vpack.c.b16 %v897, %v896
  %v908 = vunpack.c.l.b16 %v864
  %v909 = vunpack.c.l.b16 %v865
  %v910 = vpack.c.b16 %v909, %v908
  %v913 = vsel %vm177, %v898, 0
  %v916 = vsel %vm177, %v899, 0
  %v919 = vsel %vm177, %v900, 0
  %v922 = vsel %vm177, %v901, 0
  %v925 = vsel %vm177, %v902, 0
  %v928 = vsel %vm177, %v903, 0
  %v931 = vsel %vm177, %v904, 0
  %v934 = vsel %vm177, %v905, 0
  %936 = vmatprep.subr.bf16.mxu0 0
  %937 = vmatpush1.bf16.msra.mxu0 %v910
  %938 = vmatprep.subr.bf16.mxu0 0
  %939 = vmatpush1.bf16.msra.mxu0 0
  %940 = vmatprep.subr.bf16.mxu0 0
  %941 = vmatpush1.bf16.msra.mxu0 0
  %942 = vmatprep.subr.bf16.mxu0 0
  %943 = vmatpush1.bf16.msra.mxu0 0
  %944 = vmatprep.subr.bf16.mxu0 0
  %945 = vmatpush1.bf16.msra.mxu0 0
  %946 = vmatprep.subr.bf16.mxu0 0
  %947 = vmatpush1.bf16.msra.mxu0 0
  %948 = vmatprep.subr.bf16.mxu0 0
  %949 = vmatpush1.bf16.msra.mxu0 0
  %950 = vmatprep.subr.bf16.mxu0 0
  %951 = vmatpush1.bf16.msra.mxu0 0
  %952 = vmatprep.subr.bf16.mxu0 0
  %953 = vmatpush1.bf16.msra.mxu0 0
  %954 = vmatprep.subr.bf16.mxu0 0
  %955 = vmatpush1.bf16.msra.mxu0 0
  %956 = vmatprep.subr.bf16.mxu0 0
  %957 = vmatpush1.bf16.msra.mxu0 0
  %958 = vmatprep.subr.bf16.mxu0 0
  %959 = vmatpush1.bf16.msra.mxu0 0
  %960 = vmatprep.subr.bf16.mxu0 0
  %961 = vmatpush1.bf16.msra.mxu0 0
  %962 = vmatprep.subr.bf16.mxu0 0
  %963 = vmatpush1.bf16.msra.mxu0 0
  %964 = vmatprep.subr.bf16.mxu0 0
  %965 = vmatpush1.bf16.msra.mxu0 0
  %966 = vmatprep.subr.bf16.mxu0 0
  %967 = vmatpush1.bf16.msra.mxu0 0
  %968 = vmatprep.mubr.bf16.mxu0 0
  %969 = vmatmul.mubr.bf16.gmra.mrb[0].mxu0 %v913
  %v970 = vpop.f32.mrb[0].mxu0
  %v971 = vadd.f32 0.0, %v970
  %v972 = vpop.f32.mrb[0].mxu0
  %v973 = vpop.f32.mrb[0].mxu0
  %v974 = vadd.f32 0.0, %v973
  %v975 = vpop.f32.mrb[0].mxu0
  %976 = vmatprep.mubr.bf16.mxu0 0
  %977 = vmatmul.mubr.bf16.gmra.mrb[0].mxu0 %v916
  %v978 = vpop.f32.mrb[0].mxu0
  %v979 = vadd.f32 0.0, %v978
  %v980 = vpop.f32.mrb[0].mxu0
  %v981 = vpop.f32.mrb[0].mxu0
  %v982 = vadd.f32 0.0, %v981
  %v983 = vpop.f32.mrb[0].mxu0
  %984 = vmatprep.mubr.bf16.mxu0 0
  %985 = vmatmul.mubr.bf16.gmra.mrb[0].mxu0 %v919
  %v986 = vpop.f32.mrb[0].mxu0
  %v987 = vadd.f32 0.0, %v986
  %v988 = vpop.f32.mrb[0].mxu0
  %v989 = vpop.f32.mrb[0].mxu0
  %v990 = vadd.f32 0.0, %v989
  %v991 = vpop.f32.mrb[0].mxu0
  %992 = vmatprep.mubr.bf16.mxu0 0
  %993 = vmatmul.mubr.bf16.gmra.mrb[0].mxu0 %v922
  %v994 = vpop.f32.mrb[0].mxu0
  %v995 = vadd.f32 0.0, %v994
  %v996 = vpop.f32.mrb[0].mxu0
  %v997 = vpop.f32.mrb[0].mxu0
  %v998 = vadd.f32 0.0, %v997
  %v999 = vpop.f32.mrb[0].mxu0
  %1000 = vmatprep.mubr.bf16.mxu0 0
  %1001 = vmatmul.mubr.bf16.gmra.mrb[0].mxu0 %v925
  %v1002 = vpop.f32.mrb[0].mxu0
  %v1003 = vadd.f32 0.0, %v1002
  %v1004 = vpop.f32.mrb[0].mxu0
  %v1005 = vpop.f32.mrb[0].mxu0
  %v1006 = vadd.f32 0.0, %v1005
  %v1007 = vpop.f32.mrb[0].mxu0
  %1008 = vmatprep.mubr.bf16.mxu0 0
  %1009 = vmatmul.mubr.bf16.gmra.mrb[0].mxu0 %v928
  %v1010 = vpop.f32.mrb[0].mxu0
  %v1011 = vadd.f32 0.0, %v1010
  %v1012 = vpop.f32.mrb[0].mxu0
  %v1013 = vpop.f32.mrb[0].mxu0
  %v1014 = vadd.f32 0.0, %v1013
  %v1015 = vpop.f32.mrb[0].mxu0
  %1016 = vmatprep.mubr.bf16.mxu0 0
  %1017 = vmatmul.mubr.bf16.gmra.mrb[0].mxu0 %v931
  %v1018 = vpop.f32.mrb[0].mxu0
  %v1019 = vadd.f32 0.0, %v1018
  %v1020 = vpop.f32.mrb[0].mxu0
  %v1021 = vpop.f32.mrb[0].mxu0
  %v1022 = vadd.f32 0.0, %v1021
  %v1023 = vpop.f32.mrb[0].mxu0
  %1024 = vmatprep.mubr.bf16.mxu0 0
  %1025 = vmatmul.mubr.bf16.gmra.mrb[0].mxu0 %v934
  %v1026 = vpop.f32.mrb[0].mxu0
  %v1027 = vadd.f32 0.0, %v1026
  %v1028 = vpop.f32.mrb[0].mxu0
  %v1029 = vpop.f32.mrb[0].mxu0
  %v1030 = vadd.f32 0.0, %v1029
  %v1031 = vpop.f32.mrb[0].mxu0
  %1032 = vdwg.mxu0
  %v1033 = vadd.f32 %v847, %v971
  %v1034 = vadd.f32 %v848, %v974
  %v1035 = vadd.f32 %v849, %v979
  %v1036 = vadd.f32 %v850, %v982
  %v1037 = vadd.f32 %v851, %v987
  %v1038 = vadd.f32 %v852, %v990
  %v1039 = vadd.f32 %v853, %v995
  %v1040 = vadd.f32 %v854, %v998
  %v1041 = vadd.f32 %v855, %v1003
  %v1042 = vadd.f32 %v856, %v1006
  %v1043 = vadd.f32 %v857, %v1011
  %v1044 = vadd.f32 %v858, %v1014
  %v1045 = vadd.f32 %v859, %v1019
  %v1046 = vadd.f32 %v860, %v1022
  %v1047 = vadd.f32 %v861, %v1027
  %v1048 = vadd.f32 %v862, %v1030
  %s1049 = scalar_lea.vmem %s4, 32
  %v1050 = vld [vmem:[%s1049] sm:$0xf]
  %v1051 = vld [vmem:[%s1049 + $0x4] sm:$0xf]
  %v1068 = vunpack.c.l.b16 %v110
  %v1069 = vunpack.c.l.b16 %v111
  %v1070 = vunpack.c.l.b16 %v112
  %v1071 = vunpack.c.l.b16 %v113
  %v1072 = vunpack.c.l.b16 %v114
  %v1073 = vunpack.c.l.b16 %v115
  %v1074 = vunpack.c.l.b16 %v116
  %v1075 = vunpack.c.l.b16 %v117
  %v1076 = vunpack.c.l.b16 %v118
  %v1077 = vunpack.c.l.b16 %v119
  %v1078 = vunpack.c.l.b16 %v120
  %v1079 = vunpack.c.l.b16 %v121
  %v1080 = vunpack.c.l.b16 %v122
  %v1081 = vunpack.c.l.b16 %v123
  %v1082 = vunpack.c.l.b16 %v124
  %v1083 = vunpack.c.l.b16 %v125
  %v1084 = vpack.c.b16 %v1069, %v1068
  %v1085 = vpack.c.b16 %v1071, %v1070
  %v1086 = vpack.c.b16 %v1073, %v1072
  %v1087 = vpack.c.b16 %v1075, %v1074
  %v1088 = vpack.c.b16 %v1077, %v1076
  %v1089 = vpack.c.b16 %v1079, %v1078
  %v1090 = vpack.c.b16 %v1081, %v1080
  %v1091 = vpack.c.b16 %v1083, %v1082
  %v1094 = vunpack.c.l.b16 %v1050
  %v1095 = vunpack.c.l.b16 %v1051
  %v1096 = vpack.c.b16 %v1095, %v1094
  %v1099 = vsel %vm177, %v1084, 0
  %v1102 = vsel %vm177, %v1085, 0
  %v1105 = vsel %vm177, %v1086, 0
  %v1108 = vsel %vm177, %v1087, 0
  %v1111 = vsel %vm177, %v1088, 0
  %v1114 = vsel %vm177, %v1089, 0
  %v1117 = vsel %vm177, %v1090, 0
  %v1120 = vsel %vm177, %v1091, 0
  %1122 = vmatprep.subr.bf16.mxu0 0
  %1123 = vmatpush1.bf16.msra.mxu0 %v1096
  %1124 = vmatprep.subr.bf16.mxu0 0
  %1125 = vmatpush1.bf16.msra.mxu0 0
  %1126 = vmatprep.subr.bf16.mxu0 0
  %1127 = vmatpush1.bf16.msra.mxu0 0
  %1128 = vmatprep.subr.bf16.mxu0 0
  %1129 = vmatpush1.bf16.msra.mxu0 0
  %1130 = vmatprep.subr.bf16.mxu0 0
  %1131 = vmatpush1.bf16.msra.mxu0 0
  %1132 = vmatprep.subr.bf16.mxu0 0
  %1133 = vmatpush1.bf16.msra.mxu0 0
  %1134 = vmatprep.subr.bf16.mxu0 0
  %1135 = vmatpush1.bf16.msra.mxu0 0
  %1136 = vmatprep.subr.bf16.mxu0 0
  %1137 = vmatpush1.bf16.msra.mxu0 0
  %1138 = vmatprep.subr.bf16.mxu0 0
  %1139 = vmatpush1.bf16.msra.mxu0 0
  %1140 = vmatprep.subr.bf16.mxu0 0
  %1141 = vmatpush1.bf16.msra.mxu0 0
  %1142 = vmatprep.subr.bf16.mxu0 0
  %1143 = vmatpush1.bf16.msra.mxu0 0
  %1144 = vmatprep.subr.bf16.mxu0 0
  %1145 = vmatpush1.bf16.msra.mxu0 0
  %1146 = vmatprep.subr.bf16.mxu0 0
  %1147 = vmatpush1.bf16.msra.mxu0 0
  %1148 = vmatprep.subr.bf16.mxu0 0
  %1149 = vmatpush1.bf16.msra.mxu0 0
  %1150 = vmatprep.subr.bf16.mxu0 0
  %1151 = vmatpush1.bf16.msra.mxu0 0
  %1152 = vmatprep.subr.bf16.mxu0 0
  %1153 = vmatpush1.bf16.msra.mxu0 0
  %1154 = vmatprep.mubr.bf16.mxu0 0
  %1155 = vmatmul.mubr.bf16.gmra.mrb[0].mxu0 %v1099
  %v1156 = vpop.f32.mrb[0].mxu0
  %v1157 = vadd.f32 0.0, %v1156
  %v1158 = vpop.f32.mrb[0].mxu0
  %v1159 = vpop.f32.mrb[0].mxu0
  %v1160 = vadd.f32 0.0, %v1159
  %v1161 = vpop.f32.mrb[0].mxu0
  %1162 = vmatprep.mubr.bf16.mxu0 0
  %1163 = vmatmul.mubr.bf16.gmra.mrb[0].mxu0 %v1102
  %v1164 = vpop.f32.mrb[0].mxu0
  %v1165 = vadd.f32 0.0, %v1164
  %v1166 = vpop.f32.mrb[0].mxu0
  %v1167 = vpop.f32.mrb[0].mxu0
  %v1168 = vadd.f32 0.0, %v1167
  %v1169 = vpop.f32.mrb[0].mxu0
  %1170 = vmatprep.mubr.bf16.mxu0 0
  %1171 = vmatmul.mubr.bf16.gmra.mrb[0].mxu0 %v1105
  %v1172 = vpop.f32.mrb[0].mxu0
  %v1173 = vadd.f32 0.0, %v1172
  %v1174 = vpop.f32.mrb[0].mxu0
  %v1175 = vpop.f32.mrb[0].mxu0
  %v1176 = vadd.f32 0.0, %v1175
  %v1177 = vpop.f32.mrb[0].mxu0
  %1178 = vmatprep.mubr.bf16.mxu0 0
  %1179 = vmatmul.mubr.bf16.gmra.mrb[0].mxu0 %v1108
  %v1180 = vpop.f32.mrb[0].mxu0
  %v1181 = vadd.f32 0.0, %v1180
  %v1182 = vpop.f32.mrb[0].mxu0
  %v1183 = vpop.f32.mrb[0].mxu0
  %v1184 = vadd.f32 0.0, %v1183
  %v1185 = vpop.f32.mrb[0].mxu0
  %1186 = vmatprep.mubr.bf16.mxu0 0
  %1187 = vmatmul.mubr.bf16.gmra.mrb[0].mxu0 %v1111
  %v1188 = vpop.f32.mrb[0].mxu0
  %v1189 = vadd.f32 0.0, %v1188
  %v1190 = vpop.f32.mrb[0].mxu0
  %v1191 = vpop.f32.mrb[0].mxu0
  %v1192 = vadd.f32 0.0, %v1191
  %v1193 = vpop.f32.mrb[0].mxu0
  %1194 = vmatprep.mubr.bf16.mxu0 0
  %1195 = vmatmul.mubr.bf16.gmra.mrb[0].mxu0 %v1114
  %v1196 = vpop.f32.mrb[0].mxu0
  %v1197 = vadd.f32 0.0, %v1196
  %v1198 = vpop.f32.mrb[0].mxu0
  %v1199 = vpop.f32.mrb[0].mxu0
  %v1200 = vadd.f32 0.0, %v1199
  %v1201 = vpop.f32.mrb[0].mxu0
  %1202 = vmatprep.mubr.bf16.mxu0 0
  %1203 = vmatmul.mubr.bf16.gmra.mrb[0].mxu0 %v1117
  %v1204 = vpop.f32.mrb[0].mxu0
  %v1205 = vadd.f32 0.0, %v1204
  %v1206 = vpop.f32.mrb[0].mxu0
  %v1207 = vpop.f32.mrb[0].mxu0
  %v1208 = vadd.f32 0.0, %v1207
  %v1209 = vpop.f32.mrb[0].mxu0
  %1210 = vmatprep.mubr.bf16.mxu0 0
  %1211 = vmatmul.mubr.bf16.gmra.mrb[0].mxu0 %v1120
  %v1212 = vpop.f32.mrb[0].mxu0
  %v1213 = vadd.f32 0.0, %v1212
  %v1214 = vpop.f32.mrb[0].mxu0
  %v1215 = vpop.f32.mrb[0].mxu0
  %v1216 = vadd.f32 0.0, %v1215
  %v1217 = vpop.f32.mrb[0].mxu0
  %1218 = vdwg.mxu0
  %v1219 = vadd.f32 %v1033, %v1157
  %v1220 = vadd.f32 %v1034, %v1160
  %v1221 = vadd.f32 %v1035, %v1165
  %v1222 = vadd.f32 %v1036, %v1168
  %v1223 = vadd.f32 %v1037, %v1173
  %v1224 = vadd.f32 %v1038, %v1176
  %v1225 = vadd.f32 %v1039, %v1181
  %v1226 = vadd.f32 %v1040, %v1184
  %v1227 = vadd.f32 %v1041, %v1189
  %v1228 = vadd.f32 %v1042, %v1192
  %v1229 = vadd.f32 %v1043, %v1197
  %v1230 = vadd.f32 %v1044, %v1200
  %v1231 = vadd.f32 %v1045, %v1205
  %v1232 = vadd.f32 %v1046, %v1208
  %v1233 = vadd.f32 %v1047, %v1213
  %v1234 = vadd.f32 %v1048, %v1216
  %v1236 = vshrl.u32 %v78, 16
  %v1238 = vrot.slane %v1236, 4
  %v1239 = vshll.u32 %v78, 16
  %v1241 = vrot.slane %v1239, 5
  %v1242 = vor.u32 %v1238, %v1241
  %v1243 = vrot.slane %v1242, 4
  %v1245 = vshll.u32 %v79, 16
  %v1247 = vrot.slane %v1245, 5
  %v1248 = vsel %vm468, %v1243, %v1247
  %v1250 = vshrl.u32 %v80, 16
  %v1252 = vrot.slane %v1250, 4
  %v1253 = vshll.u32 %v80, 16
  %v1255 = vrot.slane %v1253, 5
  %v1256 = vor.u32 %v1252, %v1255
  %v1257 = vrot.slane %v1256, 4
  %v1259 = vshll.u32 %v81, 16
  %v1261 = vrot.slane %v1259, 5
  %v1262 = vsel %vm468, %v1257, %v1261
  %v1264 = vshrl.u32 %v82, 16
  %v1266 = vrot.slane %v1264, 4
  %v1267 = vshll.u32 %v82, 16
  %v1269 = vrot.slane %v1267, 5
  %v1270 = vor.u32 %v1266, %v1269
  %v1271 = vrot.slane %v1270, 4
  %v1273 = vshll.u32 %v83, 16
  %v1275 = vrot.slane %v1273, 5
  %v1276 = vsel %vm468, %v1271, %v1275
  %v1278 = vshrl.u32 %v84, 16
  %v1280 = vrot.slane %v1278, 4
  %v1281 = vshll.u32 %v84, 16
  %v1283 = vrot.slane %v1281, 5
  %v1284 = vor.u32 %v1280, %v1283
  %v1285 = vrot.slane %v1284, 4
  %v1287 = vshll.u32 %v85, 16
  %v1289 = vrot.slane %v1287, 5
  %v1290 = vsel %vm468, %v1285, %v1289
  %v1292 = vshrl.u32 %v86, 16
  %v1294 = vrot.slane %v1292, 4
  %v1295 = vshll.u32 %v86, 16
  %v1297 = vrot.slane %v1295, 5
  %v1298 = vor.u32 %v1294, %v1297
  %v1299 = vrot.slane %v1298, 4
  %v1301 = vshll.u32 %v87, 16
  %v1303 = vrot.slane %v1301, 5
  %v1304 = vsel %vm468, %v1299, %v1303
  %v1306 = vshrl.u32 %v88, 16
  %v1308 = vrot.slane %v1306, 4
  %v1309 = vshll.u32 %v88, 16
  %v1311 = vrot.slane %v1309, 5
  %v1312 = vor.u32 %v1308, %v1311
  %v1313 = vrot.slane %v1312, 4
  %v1315 = vshll.u32 %v89, 16
  %v1317 = vrot.slane %v1315, 5
  %v1318 = vsel %vm468, %v1313, %v1317
  %v1320 = vshrl.u32 %v90, 16
  %v1322 = vrot.slane %v1320, 4
  %v1323 = vshll.u32 %v90, 16
  %v1325 = vrot.slane %v1323, 5
  %v1326 = vor.u32 %v1322, %v1325
  %v1327 = vrot.slane %v1326, 4
  %v1329 = vshll.u32 %v91, 16
  %v1331 = vrot.slane %v1329, 5
  %v1332 = vsel %vm468, %v1327, %v1331
  %v1334 = vshrl.u32 %v92, 16
  %v1336 = vrot.slane %v1334, 4
  %v1337 = vshll.u32 %v92, 16
  %v1339 = vrot.slane %v1337, 5
  %v1340 = vor.u32 %v1336, %v1339
  %v1341 = vrot.slane %v1340, 4
  %v1343 = vshll.u32 %v93, 16
  %v1345 = vrot.slane %v1343, 5
  %v1346 = vsel %vm468, %v1341, %v1345
  %v1348 = vshrl.u32 %v94, 16
  %v1350 = vrot.slane %v1348, 4
  %v1351 = vshll.u32 %v94, 16
  %v1353 = vrot.slane %v1351, 5
  %v1354 = vor.u32 %v1350, %v1353
  %v1355 = vrot.slane %v1354, 4
  %v1357 = vshll.u32 %v95, 16
  %v1359 = vrot.slane %v1357, 5
  %v1360 = vsel %vm468, %v1355, %v1359
  %v1362 = vshrl.u32 %v96, 16
  %v1364 = vrot.slane %v1362, 4
  %v1365 = vshll.u32 %v96, 16
  %v1367 = vrot.slane %v1365, 5
  %v1368 = vor.u32 %v1364, %v1367
  %v1369 = vrot.slane %v1368, 4
  %v1371 = vshll.u32 %v97, 16
  %v1373 = vrot.slane %v1371, 5
  %v1374 = vsel %vm468, %v1369, %v1373
  %v1376 = vshrl.u32 %v98, 16
  %v1378 = vrot.slane %v1376, 4
  %v1379 = vshll.u32 %v98, 16
  %v1381 = vrot.slane %v1379, 5
  %v1382 = vor.u32 %v1378, %v1381
  %v1383 = vrot.slane %v1382, 4
  %v1385 = vshll.u32 %v99, 16
  %v1387 = vrot.slane %v1385, 5
  %v1388 = vsel %vm468, %v1383, %v1387
  %v1390 = vshrl.u32 %v100, 16
  %v1392 = vrot.slane %v1390, 4
  %v1393 = vshll.u32 %v100, 16
  %v1395 = vrot.slane %v1393, 5
  %v1396 = vor.u32 %v1392, %v1395
  %v1397 = vrot.slane %v1396, 4
  %v1399 = vshll.u32 %v101, 16
  %v1401 = vrot.slane %v1399, 5
  %v1402 = vsel %vm468, %v1397, %v1401
  %v1404 = vshrl.u32 %v102, 16
  %v1406 = vrot.slane %v1404, 4
  %v1407 = vshll.u32 %v102, 16
  %v1409 = vrot.slane %v1407, 5
  %v1410 = vor.u32 %v1406, %v1409
  %v1411 = vrot.slane %v1410, 4
  %v1413 = vshll.u32 %v103, 16
  %v1415 = vrot.slane %v1413, 5
  %v1416 = vsel %vm468, %v1411, %v1415
  %v1418 = vshrl.u32 %v104, 16
  %v1420 = vrot.slane %v1418, 4
  %v1421 = vshll.u32 %v104, 16
  %v1423 = vrot.slane %v1421, 5
  %v1424 = vor.u32 %v1420, %v1423
  %v1425 = vrot.slane %v1424, 4
  %v1427 = vshll.u32 %v105, 16
  %v1429 = vrot.slane %v1427, 5
  %v1430 = vsel %vm468, %v1425, %v1429
  %v1432 = vshrl.u32 %v106, 16
  %v1434 = vrot.slane %v1432, 4
  %v1435 = vshll.u32 %v106, 16
  %v1437 = vrot.slane %v1435, 5
  %v1438 = vor.u32 %v1434, %v1437
  %v1439 = vrot.slane %v1438, 4
  %v1441 = vshll.u32 %v107, 16
  %v1443 = vrot.slane %v1441, 5
  %v1444 = vsel %vm468, %v1439, %v1443
  %v1446 = vshrl.u32 %v108, 16
  %v1448 = vrot.slane %v1446, 4
  %v1449 = vshll.u32 %v108, 16
  %v1451 = vrot.slane %v1449, 5
  %v1452 = vor.u32 %v1448, %v1451
  %v1453 = vrot.slane %v1452, 4
  %v1455 = vshll.u32 %v109, 16
  %v1457 = vrot.slane %v1455, 5
  %v1458 = vsel %vm468, %v1453, %v1457
  %s1459 = scalar_lea.vmem %s4, 40
  %v1460 = vld [vmem:[%s1459] sm:$0xf]
  %v1461 = vld [vmem:[%s1459 + $0x4] sm:$0xf]
  %v1462 = vunpack.c.l.b16 %v1248
  %v1463 = vunpack.c.l.b16 %v1262
  %v1464 = vunpack.c.l.b16 %v1276
  %v1465 = vunpack.c.l.b16 %v1290
  %v1466 = vunpack.c.l.b16 %v1304
  %v1467 = vunpack.c.l.b16 %v1318
  %v1468 = vunpack.c.l.b16 %v1332
  %v1469 = vunpack.c.l.b16 %v1346
  %v1470 = vunpack.c.l.b16 %v1360
  %v1471 = vunpack.c.l.b16 %v1374
  %v1472 = vunpack.c.l.b16 %v1388
  %v1473 = vunpack.c.l.b16 %v1402
  %v1474 = vunpack.c.l.b16 %v1416
  %v1475 = vunpack.c.l.b16 %v1430
  %v1476 = vunpack.c.l.b16 %v1444
  %v1477 = vunpack.c.l.b16 %v1458
  %v1478 = vpack.c.b16 %v1463, %v1462
  %v1479 = vpack.c.b16 %v1465, %v1464
  %v1480 = vpack.c.b16 %v1467, %v1466
  %v1481 = vpack.c.b16 %v1469, %v1468
  %v1482 = vpack.c.b16 %v1471, %v1470
  %v1483 = vpack.c.b16 %v1473, %v1472
  %v1484 = vpack.c.b16 %v1475, %v1474
  %v1485 = vpack.c.b16 %v1477, %v1476
  %v1488 = vunpack.c.l.b16 %v1460
  %v1489 = vunpack.c.l.b16 %v1461
  %v1490 = vpack.c.b16 %v1489, %v1488
  %v1493 = vsel %vm177, %v1478, 0
  %v1496 = vsel %vm177, %v1479, 0
  %v1499 = vsel %vm177, %v1480, 0
  %v1502 = vsel %vm177, %v1481, 0
  %v1505 = vsel %vm177, %v1482, 0
  %v1508 = vsel %vm177, %v1483, 0
  %v1511 = vsel %vm177, %v1484, 0
  %v1514 = vsel %vm177, %v1485, 0
  %1516 = vmatprep.subr.bf16.mxu0 0
  %1517 = vmatpush1.bf16.msra.mxu0 %v1490
  %1518 = vmatprep.subr.bf16.mxu0 0
  %1519 = vmatpush1.bf16.msra.mxu0 0
  %1520 = vmatprep.subr.bf16.mxu0 0
  %1521 = vmatpush1.bf16.msra.mxu0 0
  %1522 = vmatprep.subr.bf16.mxu0 0
  %1523 = vmatpush1.bf16.msra.mxu0 0
  %1524 = vmatprep.subr.bf16.mxu0 0
  %1525 = vmatpush1.bf16.msra.mxu0 0
  %1526 = vmatprep.subr.bf16.mxu0 0
  %1527 = vmatpush1.bf16.msra.mxu0 0
  %1528 = vmatprep.subr.bf16.mxu0 0
  %1529 = vmatpush1.bf16.msra.mxu0 0
  %1530 = vmatprep.subr.bf16.mxu0 0
  %1531 = vmatpush1.bf16.msra.mxu0 0
  %1532 = vmatprep.subr.bf16.mxu0 0
  %1533 = vmatpush1.bf16.msra.mxu0 0
  %1534 = vmatprep.subr.bf16.mxu0 0
  %1535 = vmatpush1.bf16.msra.mxu0 0
  %1536 = vmatprep.subr.bf16.mxu0 0
  %1537 = vmatpush1.bf16.msra.mxu0 0
  %1538 = vmatprep.subr.bf16.mxu0 0
  %1539 = vmatpush1.bf16.msra.mxu0 0
  %1540 = vmatprep.subr.bf16.mxu0 0
  %1541 = vmatpush1.bf16.msra.mxu0 0
  %1542 = vmatprep.subr.bf16.mxu0 0
  %1543 = vmatpush1.bf16.msra.mxu0 0
  %1544 = vmatprep.subr.bf16.mxu0 0
  %1545 = vmatpush1.bf16.msra.mxu0 0
  %1546 = vmatprep.subr.bf16.mxu0 0
  %1547 = vmatpush1.bf16.msra.mxu0 0
  %1548 = vmatprep.mubr.bf16.mxu0 0
  %1549 = vmatmul.mubr.bf16.gmra.mrb[0].mxu0 %v1493
  %v1550 = vpop.f32.mrb[0].mxu0
  %v1551 = vadd.f32 0.0, %v1550
  %v1552 = vpop.f32.mrb[0].mxu0
  %v1553 = vpop.f32.mrb[0].mxu0
  %v1554 = vadd.f32 0.0, %v1553
  %v1555 = vpop.f32.mrb[0].mxu0
  %1556 = vmatprep.mubr.bf16.mxu0 0
  %1557 = vmatmul.mubr.bf16.gmra.mrb[0].mxu0 %v1496
  %v1558 = vpop.f32.mrb[0].mxu0
  %v1559 = vadd.f32 0.0, %v1558
  %v1560 = vpop.f32.mrb[0].mxu0
  %v1561 = vpop.f32.mrb[0].mxu0
  %v1562 = vadd.f32 0.0, %v1561
  %v1563 = vpop.f32.mrb[0].mxu0
  %1564 = vmatprep.mubr.bf16.mxu0 0
  %1565 = vmatmul.mubr.bf16.gmra.mrb[0].mxu0 %v1499
  %v1566 = vpop.f32.mrb[0].mxu0
  %v1567 = vadd.f32 0.0, %v1566
  %v1568 = vpop.f32.mrb[0].mxu0
  %v1569 = vpop.f32.mrb[0].mxu0
  %v1570 = vadd.f32 0.0, %v1569
  %v1571 = vpop.f32.mrb[0].mxu0
  %1572 = vmatprep.mubr.bf16.mxu0 0
  %1573 = vmatmul.mubr.bf16.gmra.mrb[0].mxu0 %v1502
  %v1574 = vpop.f32.mrb[0].mxu0
  %v1575 = vadd.f32 0.0, %v1574
  %v1576 = vpop.f32.mrb[0].mxu0
  %v1577 = vpop.f32.mrb[0].mxu0
  %v1578 = vadd.f32 0.0, %v1577
  %v1579 = vpop.f32.mrb[0].mxu0
  %1580 = vmatprep.mubr.bf16.mxu0 0
  %1581 = vmatmul.mubr.bf16.gmra.mrb[0].mxu0 %v1505
  %v1582 = vpop.f32.mrb[0].mxu0
  %v1583 = vadd.f32 0.0, %v1582
  %v1584 = vpop.f32.mrb[0].mxu0
  %v1585 = vpop.f32.mrb[0].mxu0
  %v1586 = vadd.f32 0.0, %v1585
  %v1587 = vpop.f32.mrb[0].mxu0
  %1588 = vmatprep.mubr.bf16.mxu0 0
  %1589 = vmatmul.mubr.bf16.gmra.mrb[0].mxu0 %v1508
  %v1590 = vpop.f32.mrb[0].mxu0
  %v1591 = vadd.f32 0.0, %v1590
  %v1592 = vpop.f32.mrb[0].mxu0
  %v1593 = vpop.f32.mrb[0].mxu0
  %v1594 = vadd.f32 0.0, %v1593
  %v1595 = vpop.f32.mrb[0].mxu0
  %1596 = vmatprep.mubr.bf16.mxu0 0
  %1597 = vmatmul.mubr.bf16.gmra.mrb[0].mxu0 %v1511
  %v1598 = vpop.f32.mrb[0].mxu0
  %v1599 = vadd.f32 0.0, %v1598
  %v1600 = vpop.f32.mrb[0].mxu0
  %v1601 = vpop.f32.mrb[0].mxu0
  %v1602 = vadd.f32 0.0, %v1601
  %v1603 = vpop.f32.mrb[0].mxu0
  %1604 = vmatprep.mubr.bf16.mxu0 0
  %1605 = vmatmul.mubr.bf16.gmra.mrb[0].mxu0 %v1514
  %v1606 = vpop.f32.mrb[0].mxu0
  %v1607 = vadd.f32 0.0, %v1606
  %v1608 = vpop.f32.mrb[0].mxu0
  %v1609 = vpop.f32.mrb[0].mxu0
  %v1610 = vadd.f32 0.0, %v1609
  %v1611 = vpop.f32.mrb[0].mxu0
  %1612 = vdwg.mxu0
  %v1613 = vadd.f32 %v1219, %v1551
  %v1614 = vadd.f32 %v1220, %v1554
  %v1615 = vadd.f32 %v1221, %v1559
  %v1616 = vadd.f32 %v1222, %v1562
  %v1617 = vadd.f32 %v1223, %v1567
  %v1618 = vadd.f32 %v1224, %v1570
  %v1619 = vadd.f32 %v1225, %v1575
  %v1620 = vadd.f32 %v1226, %v1578
  %v1621 = vadd.f32 %v1227, %v1583
  %v1622 = vadd.f32 %v1228, %v1586
  %v1623 = vadd.f32 %v1229, %v1591
  %v1624 = vadd.f32 %v1230, %v1594
  %v1625 = vadd.f32 %v1231, %v1599
  %v1626 = vadd.f32 %v1232, %v1602
  %v1627 = vadd.f32 %v1233, %v1607
  %v1628 = vadd.f32 %v1234, %v1610
  %s1629 = scalar_lea.vmem %s4, 48
  %v1630 = vld [vmem:[%s1629] sm:$0xf]
  %v1631 = vld [vmem:[%s1629 + $0x4] sm:$0xf]
  %v1634 = vunpack.c.l.b16 %v40
  %v1635 = vunpack.c.l.b16 %v58
  %v1636 = vpack.c.b16 %v317, %v316
  %v1637 = vpack.c.b16 %v319, %v318
  %v1638 = vpack.c.b16 %v321, %v320
  %v1639 = vpack.c.b16 %v1634, %v322
  %v1640 = vpack.c.b16 %v325, %v324
  %v1641 = vpack.c.b16 %v327, %v326
  %v1642 = vpack.c.b16 %v329, %v328
  %v1643 = vpack.c.b16 %v1635, %v330
  %v1646 = vunpack.c.l.b16 %v1630
  %v1647 = vunpack.c.l.b16 %v1631
  %v1648 = vpack.c.b16 %v1647, %v1646
  %v1651 = vsel %vm177, %v1636, 0
  %v1654 = vsel %vm177, %v1637, 0
  %v1657 = vsel %vm177, %v1638, 0
  %v1660 = vsel %vm177, %v1639, 0
  %v1663 = vsel %vm177, %v1640, 0
  %v1666 = vsel %vm177, %v1641, 0
  %v1669 = vsel %vm177, %v1642, 0
  %v1672 = vsel %vm177, %v1643, 0
  %1674 = vmatprep.subr.bf16.mxu0 0
  %1675 = vmatpush1.bf16.msra.mxu0 %v1648
  %1676 = vmatprep.subr.bf16.mxu0 0
  %1677 = vmatpush1.bf16.msra.mxu0 0
  %1678 = vmatprep.subr.bf16.mxu0 0
  %1679 = vmatpush1.bf16.msra.mxu0 0
  %1680 = vmatprep.subr.bf16.mxu0 0
  %1681 = vmatpush1.bf16.msra.mxu0 0
  %1682 = vmatprep.subr.bf16.mxu0 0
  %1683 = vmatpush1.bf16.msra.mxu0 0
  %1684 = vmatprep.subr.bf16.mxu0 0
  %1685 = vmatpush1.bf16.msra.mxu0 0
  %1686 = vmatprep.subr.bf16.mxu0 0
  %1687 = vmatpush1.bf16.msra.mxu0 0
  %1688 = vmatprep.subr.bf16.mxu0 0
  %1689 = vmatpush1.bf16.msra.mxu0 0
  %1690 = vmatprep.subr.bf16.mxu0 0
  %1691 = vmatpush1.bf16.msra.mxu0 0
  %1692 = vmatprep.subr.bf16.mxu0 0
  %1693 = vmatpush1.bf16.msra.mxu0 0
  %1694 = vmatprep.subr.bf16.mxu0 0
  %1695 = vmatpush1.bf16.msra.mxu0 0
  %1696 = vmatprep.subr.bf16.mxu0 0
  %1697 = vmatpush1.bf16.msra.mxu0 0
  %1698 = vmatprep.subr.bf16.mxu0 0
  %1699 = vmatpush1.bf16.msra.mxu0 0
  %1700 = vmatprep.subr.bf16.mxu0 0
  %1701 = vmatpush1.bf16.msra.mxu0 0
  %1702 = vmatprep.subr.bf16.mxu0 0
  %1703 = vmatpush1.bf16.msra.mxu0 0
  %1704 = vmatprep.subr.bf16.mxu0 0
  %1705 = vmatpush1.bf16.msra.mxu0 0
  %1706 = vmatprep.mubr.bf16.mxu0 0
  %1707 = vmatmul.mubr.bf16.gmra.mrb[0].mxu0 %v1651
  %v1708 = vpop.f32.mrb[0].mxu0
  %v1709 = vadd.f32 0.0, %v1708
  %v1710 = vpop.f32.mrb[0].mxu0
  %v1711 = vpop.f32.mrb[0].mxu0
  %v1712 = vadd.f32 0.0, %v1711
  %v1713 = vpop.f32.mrb[0].mxu0
  %1714 = vmatprep.mubr.bf16.mxu0 0
  %1715 = vmatmul.mubr.bf16.gmra.mrb[0].mxu0 %v1654
  %v1716 = vpop.f32.mrb[0].mxu0
  %v1717 = vadd.f32 0.0, %v1716
  %v1718 = vpop.f32.mrb[0].mxu0
  %v1719 = vpop.f32.mrb[0].mxu0
  %v1720 = vadd.f32 0.0, %v1719
  %v1721 = vpop.f32.mrb[0].mxu0
  %1722 = vmatprep.mubr.bf16.mxu0 0
  %1723 = vmatmul.mubr.bf16.gmra.mrb[0].mxu0 %v1657
  %v1724 = vpop.f32.mrb[0].mxu0
  %v1725 = vadd.f32 0.0, %v1724
  %v1726 = vpop.f32.mrb[0].mxu0
  %v1727 = vpop.f32.mrb[0].mxu0
  %v1728 = vadd.f32 0.0, %v1727
  %v1729 = vpop.f32.mrb[0].mxu0
  %1730 = vmatprep.mubr.bf16.mxu0 0
  %1731 = vmatmul.mubr.bf16.gmra.mrb[0].mxu0 %v1660
  %v1732 = vpop.f32.mrb[0].mxu0
  %v1733 = vadd.f32 0.0, %v1732
  %v1734 = vpop.f32.mrb[0].mxu0
  %v1735 = vpop.f32.mrb[0].mxu0
  %v1736 = vadd.f32 0.0, %v1735
  %v1737 = vpop.f32.mrb[0].mxu0
  %1738 = vmatprep.mubr.bf16.mxu0 0
  %1739 = vmatmul.mubr.bf16.gmra.mrb[0].mxu0 %v1663
  %v1740 = vpop.f32.mrb[0].mxu0
  %v1741 = vadd.f32 0.0, %v1740
  %v1742 = vpop.f32.mrb[0].mxu0
  %v1743 = vpop.f32.mrb[0].mxu0
  %v1744 = vadd.f32 0.0, %v1743
  %v1745 = vpop.f32.mrb[0].mxu0
  %1746 = vmatprep.mubr.bf16.mxu0 0
  %1747 = vmatmul.mubr.bf16.gmra.mrb[0].mxu0 %v1666
  %v1748 = vpop.f32.mrb[0].mxu0
  %v1749 = vadd.f32 0.0, %v1748
  %v1750 = vpop.f32.mrb[0].mxu0
  %v1751 = vpop.f32.mrb[0].mxu0
  %v1752 = vadd.f32 0.0, %v1751
  %v1753 = vpop.f32.mrb[0].mxu0
  %1754 = vmatprep.mubr.bf16.mxu0 0
  %1755 = vmatmul.mubr.bf16.gmra.mrb[0].mxu0 %v1669
  %v1756 = vpop.f32.mrb[0].mxu0
  %v1757 = vadd.f32 0.0, %v1756
  %v1758 = vpop.f32.mrb[0].mxu0
  %v1759 = vpop.f32.mrb[0].mxu0
  %v1760 = vadd.f32 0.0, %v1759
  %v1761 = vpop.f32.mrb[0].mxu0
  %1762 = vmatprep.mubr.bf16.mxu0 0
  %1763 = vmatmul.mubr.bf16.gmra.mrb[0].mxu0 %v1672
  %v1764 = vpop.f32.mrb[0].mxu0
  %v1765 = vadd.f32 0.0, %v1764
  %v1766 = vpop.f32.mrb[0].mxu0
  %v1767 = vpop.f32.mrb[0].mxu0
  %v1768 = vadd.f32 0.0, %v1767
  %v1769 = vpop.f32.mrb[0].mxu0
  %1770 = vdwg.mxu0
  %v1771 = vadd.f32 %v1613, %v1709
  %v1772 = vadd.f32 %v1614, %v1712
  %v1773 = vadd.f32 %v1615, %v1717
  %v1774 = vadd.f32 %v1616, %v1720
  %v1775 = vadd.f32 %v1617, %v1725
  %v1776 = vadd.f32 %v1618, %v1728
  %v1777 = vadd.f32 %v1619, %v1733
  %v1778 = vadd.f32 %v1620, %v1736
  %v1779 = vadd.f32 %v1621, %v1741
  %v1780 = vadd.f32 %v1622, %v1744
  %v1781 = vadd.f32 %v1623, %v1749
  %v1782 = vadd.f32 %v1624, %v1752
  %v1783 = vadd.f32 %v1625, %v1757
  %v1784 = vadd.f32 %v1626, %v1760
  %v1785 = vadd.f32 %v1627, %v1765
  %v1786 = vadd.f32 %v1628, %v1768
  %s1787 = scalar_lea.vmem %s4, 56
  %v1788 = vld [vmem:[%s1787] sm:$0xf]
  %v1789 = vld [vmem:[%s1787 + $0x4] sm:$0xf]
  %v1792 = vunpack.c.l.b16 %v68
  %v1793 = vunpack.c.l.b16 %v77
  %v1794 = vpack.c.b16 %v149, %v148
  %v1795 = vpack.c.b16 %v151, %v150
  %v1796 = vpack.c.b16 %v153, %v152
  %v1797 = vpack.c.b16 %v1792, %v154
  %v1798 = vpack.c.b16 %v157, %v156
  %v1799 = vpack.c.b16 %v159, %v158
  %v1800 = vpack.c.b16 %v161, %v160
  %v1801 = vpack.c.b16 %v1793, %v162
  %v1804 = vunpack.c.l.b16 %v1788
  %v1805 = vunpack.c.l.b16 %v1789
  %v1806 = vpack.c.b16 %v1805, %v1804
  %v1809 = vsel %vm177, %v1794, 0
  %v1812 = vsel %vm177, %v1795, 0
  %v1815 = vsel %vm177, %v1796, 0
  %v1818 = vsel %vm177, %v1797, 0
  %v1821 = vsel %vm177, %v1798, 0
  %v1824 = vsel %vm177, %v1799, 0
  %v1827 = vsel %vm177, %v1800, 0
  %v1830 = vsel %vm177, %v1801, 0
  %1832 = vmatprep.subr.bf16.mxu0 0
  %1833 = vmatpush1.bf16.msra.mxu0 %v1806
  %1834 = vmatprep.subr.bf16.mxu0 0
  %1835 = vmatpush1.bf16.msra.mxu0 0
  %1836 = vmatprep.subr.bf16.mxu0 0
  %1837 = vmatpush1.bf16.msra.mxu0 0
  %1838 = vmatprep.subr.bf16.mxu0 0
  %1839 = vmatpush1.bf16.msra.mxu0 0
  %1840 = vmatprep.subr.bf16.mxu0 0
  %1841 = vmatpush1.bf16.msra.mxu0 0
  %1842 = vmatprep.subr.bf16.mxu0 0
  %1843 = vmatpush1.bf16.msra.mxu0 0
  %1844 = vmatprep.subr.bf16.mxu0 0
  %1845 = vmatpush1.bf16.msra.mxu0 0
  %1846 = vmatprep.subr.bf16.mxu0 0
  %1847 = vmatpush1.bf16.msra.mxu0 0
  %1848 = vmatprep.subr.bf16.mxu0 0
  %1849 = vmatpush1.bf16.msra.mxu0 0
  %1850 = vmatprep.subr.bf16.mxu0 0
  %1851 = vmatpush1.bf16.msra.mxu0 0
  %1852 = vmatprep.subr.bf16.mxu0 0
  %1853 = vmatpush1.bf16.msra.mxu0 0
  %1854 = vmatprep.subr.bf16.mxu0 0
  %1855 = vmatpush1.bf16.msra.mxu0 0
  %1856 = vmatprep.subr.bf16.mxu0 0
  %1857 = vmatpush1.bf16.msra.mxu0 0
  %1858 = vmatprep.subr.bf16.mxu0 0
  %1859 = vmatpush1.bf16.msra.mxu0 0
  %1860 = vmatprep.subr.bf16.mxu0 0
  %1861 = vmatpush1.bf16.msra.mxu0 0
  %1862 = vmatprep.subr.bf16.mxu0 0
  %1863 = vmatpush1.bf16.msra.mxu0 0
  %1864 = vmatprep.mubr.bf16.mxu0 0
  %1865 = vmatmul.mubr.bf16.gmra.mrb[0].mxu0 %v1809
  %v1866 = vpop.f32.mrb[0].mxu0
  %v1867 = vadd.f32 0.0, %v1866
  %v1868 = vpop.f32.mrb[0].mxu0
  %v1869 = vpop.f32.mrb[0].mxu0
  %v1870 = vadd.f32 0.0, %v1869
  %v1871 = vpop.f32.mrb[0].mxu0
  %1872 = vmatprep.mubr.bf16.mxu0 0
  %1873 = vmatmul.mubr.bf16.gmra.mrb[0].mxu0 %v1812
  %v1874 = vpop.f32.mrb[0].mxu0
  %v1875 = vadd.f32 0.0, %v1874
  %v1876 = vpop.f32.mrb[0].mxu0
  %v1877 = vpop.f32.mrb[0].mxu0
  %v1878 = vadd.f32 0.0, %v1877
  %v1879 = vpop.f32.mrb[0].mxu0
  %1880 = vmatprep.mubr.bf16.mxu0 0
  %1881 = vmatmul.mubr.bf16.gmra.mrb[0].mxu0 %v1815
  %v1882 = vpop.f32.mrb[0].mxu0
  %v1883 = vadd.f32 0.0, %v1882
  %v1884 = vpop.f32.mrb[0].mxu0
  %v1885 = vpop.f32.mrb[0].mxu0
  %v1886 = vadd.f32 0.0, %v1885
  %v1887 = vpop.f32.mrb[0].mxu0
  %1888 = vmatprep.mubr.bf16.mxu0 0
  %1889 = vmatmul.mubr.bf16.gmra.mrb[0].mxu0 %v1818
  %v1890 = vpop.f32.mrb[0].mxu0
  %v1891 = vadd.f32 0.0, %v1890
  %v1892 = vpop.f32.mrb[0].mxu0
  %v1893 = vpop.f32.mrb[0].mxu0
  %v1894 = vadd.f32 0.0, %v1893
  %v1895 = vpop.f32.mrb[0].mxu0
  %1896 = vmatprep.mubr.bf16.mxu0 0
  %1897 = vmatmul.mubr.bf16.gmra.mrb[0].mxu0 %v1821
  %v1898 = vpop.f32.mrb[0].mxu0
  %v1899 = vadd.f32 0.0, %v1898
  %v1900 = vpop.f32.mrb[0].mxu0
  %v1901 = vpop.f32.mrb[0].mxu0
  %v1902 = vadd.f32 0.0, %v1901
  %v1903 = vpop.f32.mrb[0].mxu0
  %1904 = vmatprep.mubr.bf16.mxu0 0
  %1905 = vmatmul.mubr.bf16.gmra.mrb[0].mxu0 %v1824
  %v1906 = vpop.f32.mrb[0].mxu0
  %v1907 = vadd.f32 0.0, %v1906
  %v1908 = vpop.f32.mrb[0].mxu0
  %v1909 = vpop.f32.mrb[0].mxu0
  %v1910 = vadd.f32 0.0, %v1909
  %v1911 = vpop.f32.mrb[0].mxu0
  %1912 = vmatprep.mubr.bf16.mxu0 0
  %1913 = vmatmul.mubr.bf16.gmra.mrb[0].mxu0 %v1827
  %v1914 = vpop.f32.mrb[0].mxu0
  %v1915 = vadd.f32 0.0, %v1914
  %v1916 = vpop.f32.mrb[0].mxu0
  %v1917 = vpop.f32.mrb[0].mxu0
  %v1918 = vadd.f32 0.0, %v1917
  %v1919 = vpop.f32.mrb[0].mxu0
  %1920 = vmatprep.mubr.bf16.mxu0 0
  %1921 = vmatmul.mubr.bf16.gmra.mrb[0].mxu0 %v1830
  %v1922 = vpop.f32.mrb[0].mxu0
  %v1923 = vadd.f32 0.0, %v1922
  %v1924 = vpop.f32.mrb[0].mxu0
  %v1925 = vpop.f32.mrb[0].mxu0
  %v1926 = vadd.f32 0.0, %v1925
  %v1927 = vpop.f32.mrb[0].mxu0
  %1928 = vdwg.mxu0
  %v1929 = vadd.f32 %v1771, %v1867
  %v1930 = vadd.f32 %v1772, %v1870
  %v1931 = vadd.f32 %v1773, %v1875
  %v1932 = vadd.f32 %v1774, %v1878
  %v1933 = vadd.f32 %v1775, %v1883
  %v1934 = vadd.f32 %v1776, %v1886
  %v1935 = vadd.f32 %v1777, %v1891
  %v1936 = vadd.f32 %v1778, %v1894
  %v1937 = vadd.f32 %v1779, %v1899
  %v1938 = vadd.f32 %v1780, %v1902
  %v1939 = vadd.f32 %v1781, %v1907
  %v1940 = vadd.f32 %v1782, %v1910
  %v1941 = vadd.f32 %v1783, %v1915
  %v1942 = vadd.f32 %v1784, %v1918
  %v1943 = vadd.f32 %v1785, %v1923
  %v1944 = vadd.f32 %v1786, %v1926
  %v1946 = vshrl.u32 %v40, 16
  %v1948 = vrot.slane %v1946, 4
  %v1949 = vshll.u32 %v40, 16
  %v1951 = vrot.slane %v1949, 5
  %v1952 = vor.u32 %v1948, %v1951
  %v1953 = vrot.slane %v1952, 4
  %v1955 = vshll.u32 %v41, 16
  %v1957 = vrot.slane %v1955, 5
  %v1958 = vsel %vm468, %v1953, %v1957
  %v1960 = vshrl.u32 %v58, 16
  %v1962 = vrot.slane %v1960, 4
  %v1963 = vshll.u32 %v58, 16
  %v1965 = vrot.slane %v1963, 5
  %v1966 = vor.u32 %v1962, %v1965
  %v1967 = vrot.slane %v1966, 4
  %v1969 = vshll.u32 %v59, 16
  %v1971 = vrot.slane %v1969, 5
  %v1972 = vsel %vm468, %v1967, %v1971
  %s1973 = scalar_lea.vmem %s4, 64
  %v1974 = vld [vmem:[%s1973] sm:$0xf]
  %v1975 = vld [vmem:[%s1973 + $0x4] sm:$0xf]
  %v1976 = vunpack.c.l.b16 %v1958
  %v1977 = vunpack.c.l.b16 %v1972
  %v1978 = vpack.c.b16 %v698, %v697
  %v1979 = vpack.c.b16 %v700, %v699
  %v1980 = vpack.c.b16 %v702, %v701
  %v1981 = vpack.c.b16 %v1976, %v703
  %v1982 = vpack.c.b16 %v706, %v705
  %v1983 = vpack.c.b16 %v708, %v707
  %v1984 = vpack.c.b16 %v710, %v709
  %v1985 = vpack.c.b16 %v1977, %v711
  %v1988 = vunpack.c.l.b16 %v1974
  %v1989 = vunpack.c.l.b16 %v1975
  %v1990 = vpack.c.b16 %v1989, %v1988
  %v1993 = vsel %vm177, %v1978, 0
  %v1996 = vsel %vm177, %v1979, 0
  %v1999 = vsel %vm177, %v1980, 0
  %v2002 = vsel %vm177, %v1981, 0
  %v2005 = vsel %vm177, %v1982, 0
  %v2008 = vsel %vm177, %v1983, 0
  %v2011 = vsel %vm177, %v1984, 0
  %v2014 = vsel %vm177, %v1985, 0
  %2016 = vmatprep.subr.bf16.mxu0 0
  %2017 = vmatpush1.bf16.msra.mxu0 %v1990
  %2018 = vmatprep.subr.bf16.mxu0 0
  %2019 = vmatpush1.bf16.msra.mxu0 0
  %2020 = vmatprep.subr.bf16.mxu0 0
  %2021 = vmatpush1.bf16.msra.mxu0 0
  %2022 = vmatprep.subr.bf16.mxu0 0
  %2023 = vmatpush1.bf16.msra.mxu0 0
  %2024 = vmatprep.subr.bf16.mxu0 0
  %2025 = vmatpush1.bf16.msra.mxu0 0
  %2026 = vmatprep.subr.bf16.mxu0 0
  %2027 = vmatpush1.bf16.msra.mxu0 0
  %2028 = vmatprep.subr.bf16.mxu0 0
  %2029 = vmatpush1.bf16.msra.mxu0 0
  %2030 = vmatprep.subr.bf16.mxu0 0
  %2031 = vmatpush1.bf16.msra.mxu0 0
  %2032 = vmatprep.subr.bf16.mxu0 0
  %2033 = vmatpush1.bf16.msra.mxu0 0
  %2034 = vmatprep.subr.bf16.mxu0 0
  %2035 = vmatpush1.bf16.msra.mxu0 0
  %2036 = vmatprep.subr.bf16.mxu0 0
  %2037 = vmatpush1.bf16.msra.mxu0 0
  %2038 = vmatprep.subr.bf16.mxu0 0
  %2039 = vmatpush1.bf16.msra.mxu0 0
  %2040 = vmatprep.subr.bf16.mxu0 0
  %2041 = vmatpush1.bf16.msra.mxu0 0
  %2042 = vmatprep.subr.bf16.mxu0 0
  %2043 = vmatpush1.bf16.msra.mxu0 0
  %2044 = vmatprep.subr.bf16.mxu0 0
  %2045 = vmatpush1.bf16.msra.mxu0 0
  %2046 = vmatprep.subr.bf16.mxu0 0
  %2047 = vmatpush1.bf16.msra.mxu0 0
  %2048 = vmatprep.mubr.bf16.mxu0 0
  %2049 = vmatmul.mubr.bf16.gmra.mrb[0].mxu0 %v1993
  %v2050 = vpop.f32.mrb[0].mxu0
  %v2051 = vadd.f32 0.0, %v2050
  %v2052 = vpop.f32.mrb[0].mxu0
  %v2053 = vpop.f32.mrb[0].mxu0
  %v2054 = vadd.f32 0.0, %v2053
  %v2055 = vpop.f32.mrb[0].mxu0
  %2056 = vmatprep.mubr.bf16.mxu0 0
  %2057 = vmatmul.mubr.bf16.gmra.mrb[0].mxu0 %v1996
  %v2058 = vpop.f32.mrb[0].mxu0
  %v2059 = vadd.f32 0.0, %v2058
  %v2060 = vpop.f32.mrb[0].mxu0
  %v2061 = vpop.f32.mrb[0].mxu0
  %v2062 = vadd.f32 0.0, %v2061
  %v2063 = vpop.f32.mrb[0].mxu0
  %2064 = vmatprep.mubr.bf16.mxu0 0
  %2065 = vmatmul.mubr.bf16.gmra.mrb[0].mxu0 %v1999
  %v2066 = vpop.f32.mrb[0].mxu0
  %v2067 = vadd.f32 0.0, %v2066
  %v2068 = vpop.f32.mrb[0].mxu0
  %v2069 = vpop.f32.mrb[0].mxu0
  %v2070 = vadd.f32 0.0, %v2069
  %v2071 = vpop.f32.mrb[0].mxu0
  %2072 = vmatprep.mubr.bf16.mxu0 0
  %2073 = vmatmul.mubr.bf16.gmra.mrb[0].mxu0 %v2002
  %v2074 = vpop.f32.mrb[0].mxu0
  %v2075 = vadd.f32 0.0, %v2074
  %v2076 = vpop.f32.mrb[0].mxu0
  %v2077 = vpop.f32.mrb[0].mxu0
  %v2078 = vadd.f32 0.0, %v2077
  %v2079 = vpop.f32.mrb[0].mxu0
  %2080 = vmatprep.mubr.bf16.mxu0 0
  %2081 = vmatmul.mubr.bf16.gmra.mrb[0].mxu0 %v2005
  %v2082 = vpop.f32.mrb[0].mxu0
  %v2083 = vadd.f32 0.0, %v2082
  %v2084 = vpop.f32.mrb[0].mxu0
  %v2085 = vpop.f32.mrb[0].mxu0
  %v2086 = vadd.f32 0.0, %v2085
  %v2087 = vpop.f32.mrb[0].mxu0
  %2088 = vmatprep.mubr.bf16.mxu0 0
  %2089 = vmatmul.mubr.bf16.gmra.mrb[0].mxu0 %v2008
  %v2090 = vpop.f32.mrb[0].mxu0
  %v2091 = vadd.f32 0.0, %v2090
  %v2092 = vpop.f32.mrb[0].mxu0
  %v2093 = vpop.f32.mrb[0].mxu0
  %v2094 = vadd.f32 0.0, %v2093
  %v2095 = vpop.f32.mrb[0].mxu0
  %2096 = vmatprep.mubr.bf16.mxu0 0
  %2097 = vmatmul.mubr.bf16.gmra.mrb[0].mxu0 %v2011
  %v2098 = vpop.f32.mrb[0].mxu0
  %v2099 = vadd.f32 0.0, %v2098
  %v2100 = vpop.f32.mrb[0].mxu0
  %v2101 = vpop.f32.mrb[0].mxu0
  %v2102 = vadd.f32 0.0, %v2101
  %v2103 = vpop.f32.mrb[0].mxu0
  %2104 = vmatprep.mubr.bf16.mxu0 0
  %2105 = vmatmul.mubr.bf16.gmra.mrb[0].mxu0 %v2014
  %v2106 = vpop.f32.mrb[0].mxu0
  %v2107 = vadd.f32 0.0, %v2106
  %v2108 = vpop.f32.mrb[0].mxu0
  %v2109 = vpop.f32.mrb[0].mxu0
  %v2110 = vadd.f32 0.0, %v2109
  %v2111 = vpop.f32.mrb[0].mxu0
  %2112 = vdwg.mxu0
  %v2113 = vadd.f32 %v1929, %v2051
  %v2114 = vadd.f32 %v1930, %v2054
  %v2115 = vadd.f32 %v1931, %v2059
  %v2116 = vadd.f32 %v1932, %v2062
  %v2117 = vadd.f32 %v1933, %v2067
  %v2118 = vadd.f32 %v1934, %v2070
  %v2119 = vadd.f32 %v1935, %v2075
  %v2120 = vadd.f32 %v1936, %v2078
  %v2121 = vadd.f32 %v1937, %v2083
  %v2122 = vadd.f32 %v1938, %v2086
  %v2123 = vadd.f32 %v1939, %v2091
  %v2124 = vadd.f32 %v1940, %v2094
  %v2125 = vadd.f32 %v1941, %v2099
  %v2126 = vadd.f32 %v1942, %v2102
  %v2127 = vadd.f32 %v1943, %v2107
  %v2128 = vadd.f32 %v1944, %v2110
  %v2129 = vld [vmem:[%s5] sm:$0x1]
  %v2131 = vlaneseq
  %v2132 = vshrl.u32 %v2131, 7
  %v2133 = vsub.s32 0, %v2132
  %v2134 = vrot.slane %v2129, %v2133
  %v2136 = vadd.f32 %v2113, %v2134
  %v2137 = vadd.f32 %v2114, %v2134
  %v2138 = vadd.f32 %v2115, %v2134
  %v2139 = vadd.f32 %v2116, %v2134
  %v2140 = vadd.f32 %v2117, %v2134
  %v2141 = vadd.f32 %v2118, %v2134
  %v2142 = vadd.f32 %v2119, %v2134
  %v2143 = vadd.f32 %v2120, %v2134
  %v2144 = vadd.f32 %v2121, %v2134
  %v2145 = vadd.f32 %v2122, %v2134
  %v2146 = vadd.f32 %v2123, %v2134
  %v2147 = vadd.f32 %v2124, %v2134
  %v2148 = vadd.f32 %v2125, %v2134
  %v2149 = vadd.f32 %v2126, %v2134
  %v2150 = vadd.f32 %v2127, %v2134
  %v2151 = vadd.f32 %v2128, %v2134
  %v2152 = vmax.f32 %v2136, 0.0
  %v2153 = vmax.f32 %v2137, 0.0
  %v2154 = vmax.f32 %v2138, 0.0
  %v2155 = vmax.f32 %v2139, 0.0
  %v2156 = vmax.f32 %v2140, 0.0
  %v2157 = vmax.f32 %v2141, 0.0
  %v2158 = vmax.f32 %v2142, 0.0
  %v2159 = vmax.f32 %v2143, 0.0
  %v2160 = vmax.f32 %v2144, 0.0
  %v2161 = vmax.f32 %v2145, 0.0
  %v2162 = vmax.f32 %v2146, 0.0
  %v2163 = vmax.f32 %v2147, 0.0
  %v2164 = vmax.f32 %v2148, 0.0
  %v2165 = vmax.f32 %v2149, 0.0
  %v2166 = vmax.f32 %v2150, 0.0
  %v2167 = vmax.f32 %v2151, 0.0
  %v2168 = vpack.c.bf16 %v2153, %v2152
  %v2169 = vpack.c.bf16 %v2155, %v2154
  %v2170 = vpack.c.bf16 %v2157, %v2156
  %v2171 = vpack.c.bf16 %v2159, %v2158
  %v2172 = vpack.c.bf16 %v2161, %v2160
  %v2173 = vpack.c.bf16 %v2163, %v2162
  %v2174 = vpack.c.bf16 %v2165, %v2164
  %v2175 = vpack.c.bf16 %v2167, %v2166
  %v2184 = vunpack.c.l.b16 %v2168
  %v2185 = vunpack.c.h.b16 %v2168
  %v2186 = vunpack.c.l.b16 %v2169
  %v2187 = vunpack.c.h.b16 %v2169
  %v2188 = vunpack.c.l.b16 %v2170
  %v2189 = vunpack.c.h.b16 %v2170
  %v2190 = vunpack.c.l.b16 %v2171
  %v2191 = vunpack.c.h.b16 %v2171
  %v2192 = vunpack.c.l.b16 %v2172
  %v2193 = vunpack.c.h.b16 %v2172
  %v2194 = vunpack.c.l.b16 %v2173
  %v2195 = vunpack.c.h.b16 %v2173
  %v2196 = vunpack.c.l.b16 %v2174
  %v2197 = vunpack.c.h.b16 %v2174
  %v2198 = vunpack.c.l.b16 %v2175
  %v2199 = vunpack.c.h.b16 %v2175
  %v2200 = vpack.c.b16 %v2184, %v2184
  %v2201 = vpack.c.b16 %v2185, %v2185
  %v2202 = vpack.c.b16 %v2186, %v2186
  %v2203 = vpack.c.b16 %v2187, %v2187
  %v2204 = vpack.c.b16 %v2188, %v2188
  %v2205 = vpack.c.b16 %v2189, %v2189
  %v2206 = vpack.c.b16 %v2190, %v2190
  %v2207 = vpack.c.b16 %v2191, %v2191
  %v2208 = vpack.c.b16 %v2192, %v2192
  %v2209 = vpack.c.b16 %v2193, %v2193
  %v2210 = vpack.c.b16 %v2194, %v2194
  %v2211 = vpack.c.b16 %v2195, %v2195
  %v2212 = vpack.c.b16 %v2196, %v2196
  %v2213 = vpack.c.b16 %v2197, %v2197
  %v2214 = vpack.c.b16 %v2198, %v2198
  %v2215 = vpack.c.b16 %v2199, %v2199
  %vm2232 = vcmask 257024
  %2233 = vst.msk [vmem:[%s6] sm:$0xf] %vm2232, %v2200
  %2234 = vst.msk [vmem:[%s6 + $0x4] sm:$0xf] %vm2232, %v2201
  %2235 = vst.msk [vmem:[%s6 + $0x8] sm:$0xf] %vm2232, %v2202
  %2236 = vst.msk [vmem:[%s6 + $0xc] sm:$0xf] %vm2232, %v2203
  %2237 = vst.msk [vmem:[%s6 + $0x10] sm:$0xf] %vm2232, %v2204
  %2238 = vst.msk [vmem:[%s6 + $0x14] sm:$0xf] %vm2232, %v2205
  %2239 = vst.msk [vmem:[%s6 + $0x18] sm:$0xf] %vm2232, %v2206
  %2240 = vst.msk [vmem:[%s6 + $0x1c] sm:$0xf] %vm2232, %v2207
  %2241 = vst.msk [vmem:[%s6 + $0x20] sm:$0xf] %vm2232, %v2208
  %2242 = vst.msk [vmem:[%s6 + $0x24] sm:$0xf] %vm2232, %v2209
  %2243 = vst.msk [vmem:[%s6 + $0x28] sm:$0xf] %vm2232, %v2210
  %2244 = vst.msk [vmem:[%s6 + $0x2c] sm:$0xf] %vm2232, %v2211
  %2245 = vst.msk [vmem:[%s6 + $0x30] sm:$0xf] %vm2232, %v2212
  %2246 = vst.msk [vmem:[%s6 + $0x34] sm:$0xf] %vm2232, %v2213
  %2247 = vst.msk [vmem:[%s6 + $0x38] sm:$0xf] %vm2232, %v2214
  %2248 = vst.msk [vmem:[%s6 + $0x3c] sm:$0xf] %vm2232, %v2215
  // Predicated region
  $region26: #{_lambda_.5} parent=0 // pred_check
    _
  $region27: #{_lambda_.5} parent=0 // pred_check_branch
    %2250 = sbr.rel (0) target = $region29
  $region28: #{_lambda_.5} parent=0 // pred_region
    _
  $region29: #{_lambda_.5} parent=0 // pred_fallthru
    _
  // Predicated region
  $region30: #{_lambda_.5} parent=0 // pred_check
    _
  $region31: #{_lambda_.5} parent=0 // pred_check_branch
    %2252 = sbr.rel (0) target = $region33
  $region32: #{_lambda_.5} parent=0 // pred_region
    _
  $region33: #{_lambda_.5} parent=0 // pred_fallthru
    _

// kernel: _lambda_.6
$region0: #{_lambda_.6}
  #allocation0 [shape = 'u32[]', space=smem, size = 0x4, offset = 0x4, fixed_abs, tag = 'smem constant byte address 0x4 - core index']
  #allocation1 [shape = 'u32[144,128]{1,0:T(1,128)}', space=vmem, size = 0x12000, scoped, tag = 'internal scratch']
  %s0 = inlined_call_operand.vmem [shape: bf16[2,10,10,32], index: 0, kind: input, shape index: {}]
  %s1 = inlined_call_operand.vmem [shape: bf16[9,32,32], index: 1, kind: input, shape index: {}]
  %s2 = inlined_call_operand.vmem [shape: f32[1,32], index: 2, kind: input, shape index: {}]
  %s3 = inlined_call_operand.vmem [shape: bf16[32,128], index: 3, kind: input, shape index: {}]
  %s4 = inlined_call_operand.vmem [shape: f32[1,128], index: 4, kind: input, shape index: {}]
  %s5 = inlined_call_operand.vmem [shape: f32[128,128], index: 5, kind: output, shape index: {}]
  %s6 = sld [smem:[#allocation0]]
  $region30: #{_lambda_.6} parent=0
    _
  %s8 = ssub.s32 1, %s6
  %s9 = scalar_select 0, %s8, %s6
  // Predicated region
  $region2: #{_lambda_.6} parent=0 // pred_check
    _
  $region3: #{_lambda_.6} parent=0 // pred_check_branch
    %11 = sbr.rel (0) target = $region5
  $region4: #{_lambda_.6} parent=0 // pred_region
    _
  $region5: #{_lambda_.6} parent=0 // pred_fallthru
    _
  // Predicated region
  $region6: #{_lambda_.6} parent=0 // pred_check
    _
  $region7: #{_lambda_.6} parent=0 // pred_check_branch
    %13 = sbr.rel (0) target = $region9
  $region8: #{_lambda_.6} parent=0 // pred_region
    _
  $region9: #{_lambda_.6} parent=0 // pred_fallthru
    _
  // Predicated region
  $region10: #{_lambda_.6} parent=0 // pred_check
    _
  $region11: #{_lambda_.6} parent=0 // pred_check_branch
    %15 = sbr.rel (0) target = $region13
  $region12: #{_lambda_.6} parent=0 // pred_region
    _
  $region13: #{_lambda_.6} parent=0 // pred_fallthru
    _
  // Predicated region
  $region14: #{_lambda_.6} parent=0 // pred_check
    _
  $region15: #{_lambda_.6} parent=0 // pred_check_branch
    %17 = sbr.rel (0) target = $region17
  $region16: #{_lambda_.6} parent=0 // pred_region
    _
  $region17: #{_lambda_.6} parent=0 // pred_fallthru
    _
  // Predicated region
  $region18: #{_lambda_.6} parent=0 // pred_check
    _
  $region19: #{_lambda_.6} parent=0 // pred_check_branch
    %19 = sbr.rel (0) target = $region21
  $region20: #{_lambda_.6} parent=0 // pred_region
    _
  $region21: #{_lambda_.6} parent=0 // pred_fallthru
    _
  %v21 = vld [vmem:[%s0] sm:$0xf]
  %v22 = vld [vmem:[%s0 + $0x4] sm:$0x1]
  %v23 = vld [vmem:[%s0 + $0x8] sm:$0xf]
  %v24 = vld [vmem:[%s0 + $0xc] sm:$0x1]
  %v25 = vld [vmem:[%s0 + $0x10] sm:$0xf]
  %v26 = vld [vmem:[%s0 + $0x14] sm:$0x1]
  %v27 = vld [vmem:[%s0 + $0x18] sm:$0xf]
  %v28 = vld [vmem:[%s0 + $0x1c] sm:$0x1]
  %v29 = vld [vmem:[%s0 + $0x20] sm:$0xf]
  %v30 = vld [vmem:[%s0 + $0x24] sm:$0x1]
  %v31 = vld [vmem:[%s0 + $0x28] sm:$0xf]
  %v32 = vld [vmem:[%s0 + $0x2c] sm:$0x1]
  %v33 = vld [vmem:[%s0 + $0x30] sm:$0xf]
  %v34 = vld [vmem:[%s0 + $0x34] sm:$0x1]
  %v35 = vld [vmem:[%s0 + $0x38] sm:$0xf]
  %v36 = vld [vmem:[%s0 + $0x3c] sm:$0x1]
  %v37 = vld [vmem:[%s0 + $0x40] sm:$0xf]
  %v38 = vld [vmem:[%s0 + $0x44] sm:$0x1]
  %v39 = vld [vmem:[%s0 + $0x48] sm:$0xf]
  %v40 = vld [vmem:[%s0 + $0x4c] sm:$0x1]
  %v41 = vld [vmem:[%s0 + $0x50] sm:$0xf]
  %v42 = vld [vmem:[%s0 + $0x54] sm:$0x1]
  %v43 = vld [vmem:[%s0 + $0x58] sm:$0xf]
  %v44 = vld [vmem:[%s0 + $0x5c] sm:$0x1]
  %v45 = vld [vmem:[%s0 + $0x60] sm:$0xf]
  %v46 = vld [vmem:[%s0 + $0x64] sm:$0x1]
  %v47 = vld [vmem:[%s0 + $0x68] sm:$0xf]
  %v48 = vld [vmem:[%s0 + $0x6c] sm:$0x1]
  %v49 = vld [vmem:[%s0 + $0x70] sm:$0xf]
  %v50 = vld [vmem:[%s0 + $0x74] sm:$0x1]
  %v51 = vld [vmem:[%s0 + $0x78] sm:$0xf]
  %v52 = vld [vmem:[%s0 + $0x7c] sm:$0x1]
  %v53 = vld [vmem:[%s0 + $0x80] sm:$0xf]
  %v54 = vld [vmem:[%s0 + $0x84] sm:$0x1]
  %v55 = vld [vmem:[%s0 + $0x88] sm:$0xf]
  %v56 = vld [vmem:[%s0 + $0x8c] sm:$0x1]
  %v57 = vld [vmem:[%s0 + $0x90] sm:$0xf]
  %v58 = vld [vmem:[%s0 + $0x94] sm:$0x1]
  %v59 = vld [vmem:[%s0 + $0x98] sm:$0xf]
  %v60 = vld [vmem:[%s0 + $0x9c] sm:$0x1]
  %v61 = vld [vmem:[%s1] sm:$0xf]
  %v62 = vld [vmem:[%s1 + $0x4] sm:$0xf]
  %v63 = vld [vmem:[%s1 + $0x8] sm:$0xf]
  %v64 = vld [vmem:[%s1 + $0xc] sm:$0xf]
  %vm65 = vsmask.f32 3328
  %vm66 = vsmask.f32 7440
  %vm67 = vmor %vm65, %vm66
  %v69 = vshrl.u32 %v21, 16
  %v71 = vrot.slane %v69, 4
  %v72 = vshll.u32 %v21, 16
  %v74 = vrot.slane %v72, 5
  %v75 = vor.u32 %v71, %v74
  %v76 = vrot.slane %v75, 4
  %v78 = vshll.u32 %v22, 16
  %v80 = vrot.slane %v78, 5
  %v81 = vsel %vm67, %v76, %v80
  %v83 = vshrl.u32 %v23, 16
  %v85 = vrot.slane %v83, 4
  %v86 = vshll.u32 %v23, 16
  %v88 = vrot.slane %v86, 5
  %v89 = vor.u32 %v85, %v88
  %v90 = vrot.slane %v89, 4
  %v92 = vshll.u32 %v24, 16
  %v94 = vrot.slane %v92, 5
  %v95 = vsel %vm67, %v90, %v94
  %v97 = vshrl.u32 %v25, 16
  %v99 = vrot.slane %v97, 4
  %v100 = vshll.u32 %v25, 16
  %v102 = vrot.slane %v100, 5
  %v103 = vor.u32 %v99, %v102
  %v104 = vrot.slane %v103, 4
  %v106 = vshll.u32 %v26, 16
  %v108 = vrot.slane %v106, 5
  %v109 = vsel %vm67, %v104, %v108
  %v111 = vshrl.u32 %v27, 16
  %v113 = vrot.slane %v111, 4
  %v114 = vshll.u32 %v27, 16
  %v116 = vrot.slane %v114, 5
  %v117 = vor.u32 %v113, %v116
  %v118 = vrot.slane %v117, 4
  %v120 = vshll.u32 %v28, 16
  %v122 = vrot.slane %v120, 5
  %v123 = vsel %vm67, %v118, %v122
  %v125 = vshrl.u32 %v29, 16
  %v127 = vrot.slane %v125, 4
  %v128 = vshll.u32 %v29, 16
  %v130 = vrot.slane %v128, 5
  %v131 = vor.u32 %v127, %v130
  %v132 = vrot.slane %v131, 4
  %v134 = vshll.u32 %v30, 16
  %v136 = vrot.slane %v134, 5
  %v137 = vsel %vm67, %v132, %v136
  %v139 = vshrl.u32 %v31, 16
  %v141 = vrot.slane %v139, 4
  %v142 = vshll.u32 %v31, 16
  %v144 = vrot.slane %v142, 5
  %v145 = vor.u32 %v141, %v144
  %v146 = vrot.slane %v145, 4
  %v148 = vshll.u32 %v32, 16
  %v150 = vrot.slane %v148, 5
  %v151 = vsel %vm67, %v146, %v150
  %v153 = vshrl.u32 %v33, 16
  %v155 = vrot.slane %v153, 4
  %v156 = vshll.u32 %v33, 16
  %v158 = vrot.slane %v156, 5
  %v159 = vor.u32 %v155, %v158
  %v160 = vrot.slane %v159, 4
  %v162 = vshll.u32 %v34, 16
  %v164 = vrot.slane %v162, 5
  %v165 = vsel %vm67, %v160, %v164
  %v167 = vshrl.u32 %v35, 16
  %v169 = vrot.slane %v167, 4
  %v170 = vshll.u32 %v35, 16
  %v172 = vrot.slane %v170, 5
  %v173 = vor.u32 %v169, %v172
  %v174 = vrot.slane %v173, 4
  %v176 = vshll.u32 %v36, 16
  %v178 = vrot.slane %v176, 5
  %v179 = vsel %vm67, %v174, %v178
  %v181 = vshrl.u32 %v41, 16
  %v183 = vrot.slane %v181, 4
  %v184 = vshll.u32 %v41, 16
  %v186 = vrot.slane %v184, 5
  %v187 = vor.u32 %v183, %v186
  %v188 = vrot.slane %v187, 4
  %v190 = vshll.u32 %v42, 16
  %v192 = vrot.slane %v190, 5
  %v193 = vsel %vm67, %v188, %v192
  %v195 = vshrl.u32 %v43, 16
  %v197 = vrot.slane %v195, 4
  %v198 = vshll.u32 %v43, 16
  %v200 = vrot.slane %v198, 5
  %v201 = vor.u32 %v197, %v200
  %v202 = vrot.slane %v201, 4
  %v204 = vshll.u32 %v44, 16
  %v206 = vrot.slane %v204, 5
  %v207 = vsel %vm67, %v202, %v206
  %v209 = vshrl.u32 %v45, 16
  %v211 = vrot.slane %v209, 4
  %v212 = vshll.u32 %v45, 16
  %v214 = vrot.slane %v212, 5
  %v215 = vor.u32 %v211, %v214
  %v216 = vrot.slane %v215, 4
  %v218 = vshll.u32 %v46, 16
  %v220 = vrot.slane %v218, 5
  %v221 = vsel %vm67, %v216, %v220
  %v223 = vshrl.u32 %v47, 16
  %v225 = vrot.slane %v223, 4
  %v226 = vshll.u32 %v47, 16
  %v228 = vrot.slane %v226, 5
  %v229 = vor.u32 %v225, %v228
  %v230 = vrot.slane %v229, 4
  %v232 = vshll.u32 %v48, 16
  %v234 = vrot.slane %v232, 5
  %v235 = vsel %vm67, %v230, %v234
  %v237 = vshrl.u32 %v49, 16
  %v239 = vrot.slane %v237, 4
  %v240 = vshll.u32 %v49, 16
  %v242 = vrot.slane %v240, 5
  %v243 = vor.u32 %v239, %v242
  %v244 = vrot.slane %v243, 4
  %v246 = vshll.u32 %v50, 16
  %v248 = vrot.slane %v246, 5
  %v249 = vsel %vm67, %v244, %v248
  %v251 = vshrl.u32 %v51, 16
  %v253 = vrot.slane %v251, 4
  %v254 = vshll.u32 %v51, 16
  %v256 = vrot.slane %v254, 5
  %v257 = vor.u32 %v253, %v256
  %v258 = vrot.slane %v257, 4
  %v260 = vshll.u32 %v52, 16
  %v262 = vrot.slane %v260, 5
  %v263 = vsel %vm67, %v258, %v262
  %v265 = vshrl.u32 %v53, 16
  %v267 = vrot.slane %v265, 4
  %v268 = vshll.u32 %v53, 16
  %v270 = vrot.slane %v268, 5
  %v271 = vor.u32 %v267, %v270
  %v272 = vrot.slane %v271, 4
  %v274 = vshll.u32 %v54, 16
  %v276 = vrot.slane %v274, 5
  %v277 = vsel %vm67, %v272, %v276
  %v279 = vshrl.u32 %v55, 16
  %v281 = vrot.slane %v279, 4
  %v282 = vshll.u32 %v55, 16
  %v284 = vrot.slane %v282, 5
  %v285 = vor.u32 %v281, %v284
  %v286 = vrot.slane %v285, 4
  %v288 = vshll.u32 %v56, 16
  %v290 = vrot.slane %v288, 5
  %v291 = vsel %vm67, %v286, %v290
  %s292 = scalar_lea.vmem %s1, 16
  %v293 = vld [vmem:[%s292] sm:$0xf]
  %v294 = vld [vmem:[%s292 + $0x4] sm:$0xf]
  %v295 = vld [vmem:[%s292 + $0x8] sm:$0xf]
  %v296 = vld [vmem:[%s292 + $0xc] sm:$0xf]
  %v297 = vunpack.c.l.b16 %v81
  %v298 = vunpack.c.l.b16 %v95
  %v299 = vunpack.c.l.b16 %v109
  %v300 = vunpack.c.l.b16 %v123
  %v301 = vunpack.c.l.b16 %v137
  %v302 = vunpack.c.l.b16 %v151
  %v303 = vunpack.c.l.b16 %v165
  %v304 = vunpack.c.l.b16 %v179
  %v305 = vunpack.c.l.b16 %v193
  %v306 = vunpack.c.l.b16 %v207
  %v307 = vunpack.c.l.b16 %v221
  %v308 = vunpack.c.l.b16 %v235
  %v309 = vunpack.c.l.b16 %v249
  %v310 = vunpack.c.l.b16 %v263
  %v311 = vunpack.c.l.b16 %v277
  %v312 = vunpack.c.l.b16 %v291
  %v313 = vpack.c.b16 %v298, %v297
  %v314 = vpack.c.b16 %v300, %v299
  %v315 = vpack.c.b16 %v302, %v301
  %v316 = vpack.c.b16 %v304, %v303
  %v317 = vpack.c.b16 %v306, %v305
  %v318 = vpack.c.b16 %v308, %v307
  %v319 = vpack.c.b16 %v310, %v309
  %v320 = vpack.c.b16 %v312, %v311
  %v325 = vunpack.c.l.b16 %v293
  %v326 = vunpack.c.l.b16 %v294
  %v327 = vunpack.c.l.b16 %v295
  %v328 = vunpack.c.l.b16 %v296
  %v329 = vpack.c.b16 %v326, %v325
  %v330 = vpack.c.b16 %v328, %v327
  %vm333 = vcmask 261120
  %v335 = vsel %vm333, %v313, 0
  %v338 = vsel %vm333, %v314, 0
  %v341 = vsel %vm333, %v315, 0
  %v344 = vsel %vm333, %v316, 0
  %v347 = vsel %vm333, %v317, 0
  %v350 = vsel %vm333, %v318, 0
  %v353 = vsel %vm333, %v319, 0
  %v356 = vsel %vm333, %v320, 0
  %358 = vmatprep.subr.bf16.mxu0 0
  %359 = vmatpush1.bf16.msra.mxu0 %v329
  %360 = vmatprep.subr.bf16.mxu0 0
  %361 = vmatpush1.bf16.msra.mxu0 %v330
  %362 = vmatprep.subr.bf16.mxu0 0
  %363 = vmatpush1.bf16.msra.mxu0 0
  %364 = vmatprep.subr.bf16.mxu0 0
  %365 = vmatpush1.bf16.msra.mxu0 0
  %366 = vmatprep.subr.bf16.mxu0 0
  %367 = vmatpush1.bf16.msra.mxu0 0
  %368 = vmatprep.subr.bf16.mxu0 0
  %369 = vmatpush1.bf16.msra.mxu0 0
  %370 = vmatprep.subr.bf16.mxu0 0
  %371 = vmatpush1.bf16.msra.mxu0 0
  %372 = vmatprep.subr.bf16.mxu0 0
  %373 = vmatpush1.bf16.msra.mxu0 0
  %374 = vmatprep.subr.bf16.mxu0 0
  %375 = vmatpush1.bf16.msra.mxu0 0
  %376 = vmatprep.subr.bf16.mxu0 0
  %377 = vmatpush1.bf16.msra.mxu0 0
  %378 = vmatprep.subr.bf16.mxu0 0
  %379 = vmatpush1.bf16.msra.mxu0 0
  %380 = vmatprep.subr.bf16.mxu0 0
  %381 = vmatpush1.bf16.msra.mxu0 0
  %382 = vmatprep.subr.bf16.mxu0 0
  %383 = vmatpush1.bf16.msra.mxu0 0
  %384 = vmatprep.subr.bf16.mxu0 0
  %385 = vmatpush1.bf16.msra.mxu0 0
  %386 = vmatprep.subr.bf16.mxu0 0
  %387 = vmatpush1.bf16.msra.mxu0 0
  %388 = vmatprep.subr.bf16.mxu0 0
  %389 = vmatpush1.bf16.msra.mxu0 0
  %390 = vmatprep.mubr.bf16.mxu0 0
  %391 = vmatmul.mubr.bf16.gmra.mrb[0].mxu0 %v335
  %v392 = vpop.f32.mrb[0].mxu0
  %v393 = vadd.f32 0.0, %v392
  %v394 = vpop.f32.mrb[0].mxu0
  %v395 = vpop.f32.mrb[0].mxu0
  %v396 = vadd.f32 0.0, %v395
  %v397 = vpop.f32.mrb[0].mxu0
  %398 = vmatprep.mubr.bf16.mxu0 0
  %399 = vmatmul.mubr.bf16.gmra.mrb[0].mxu0 %v338
  %v400 = vpop.f32.mrb[0].mxu0
  %v401 = vadd.f32 0.0, %v400
  %v402 = vpop.f32.mrb[0].mxu0
  %v403 = vpop.f32.mrb[0].mxu0
  %v404 = vadd.f32 0.0, %v403
  %v405 = vpop.f32.mrb[0].mxu0
  %406 = vmatprep.mubr.bf16.mxu0 0
  %407 = vmatmul.mubr.bf16.gmra.mrb[0].mxu0 %v341
  %v408 = vpop.f32.mrb[0].mxu0
  %v409 = vadd.f32 0.0, %v408
  %v410 = vpop.f32.mrb[0].mxu0
  %v411 = vpop.f32.mrb[0].mxu0
  %v412 = vadd.f32 0.0, %v411
  %v413 = vpop.f32.mrb[0].mxu0
  %414 = vmatprep.mubr.bf16.mxu0 0
  %415 = vmatmul.mubr.bf16.gmra.mrb[0].mxu0 %v344
  %v416 = vpop.f32.mrb[0].mxu0
  %v417 = vadd.f32 0.0, %v416
  %v418 = vpop.f32.mrb[0].mxu0
  %v419 = vpop.f32.mrb[0].mxu0
  %v420 = vadd.f32 0.0, %v419
  %v421 = vpop.f32.mrb[0].mxu0
  %422 = vmatprep.mubr.bf16.mxu0 0
  %423 = vmatmul.mubr.bf16.gmra.mrb[0].mxu0 %v347
  %v424 = vpop.f32.mrb[0].mxu0
  %v425 = vadd.f32 0.0, %v424
  %v426 = vpop.f32.mrb[0].mxu0
  %v427 = vpop.f32.mrb[0].mxu0
  %v428 = vadd.f32 0.0, %v427
  %v429 = vpop.f32.mrb[0].mxu0
  %430 = vmatprep.mubr.bf16.mxu0 0
  %431 = vmatmul.mubr.bf16.gmra.mrb[0].mxu0 %v350
  %v432 = vpop.f32.mrb[0].mxu0
  %v433 = vadd.f32 0.0, %v432
  %v434 = vpop.f32.mrb[0].mxu0
  %v435 = vpop.f32.mrb[0].mxu0
  %v436 = vadd.f32 0.0, %v435
  %v437 = vpop.f32.mrb[0].mxu0
  %438 = vmatprep.mubr.bf16.mxu0 0
  %439 = vmatmul.mubr.bf16.gmra.mrb[0].mxu0 %v353
  %v440 = vpop.f32.mrb[0].mxu0
  %v441 = vadd.f32 0.0, %v440
  %v442 = vpop.f32.mrb[0].mxu0
  %v443 = vpop.f32.mrb[0].mxu0
  %v444 = vadd.f32 0.0, %v443
  %v445 = vpop.f32.mrb[0].mxu0
  %446 = vmatprep.mubr.bf16.mxu0 0
  %447 = vmatmul.mubr.bf16.gmra.mrb[0].mxu0 %v356
  %v448 = vpop.f32.mrb[0].mxu0
  %v449 = vadd.f32 0.0, %v448
  %v450 = vpop.f32.mrb[0].mxu0
  %v451 = vpop.f32.mrb[0].mxu0
  %v452 = vadd.f32 0.0, %v451
  %v453 = vpop.f32.mrb[0].mxu0
  %454 = vdwg.mxu0
  %v471 = vunpack.c.l.b16 %v21
  %v472 = vunpack.c.l.b16 %v23
  %v473 = vunpack.c.l.b16 %v25
  %v474 = vunpack.c.l.b16 %v27
  %v475 = vunpack.c.l.b16 %v29
  %v476 = vunpack.c.l.b16 %v31
  %v477 = vunpack.c.l.b16 %v33
  %v478 = vunpack.c.l.b16 %v35
  %v479 = vunpack.c.l.b16 %v41
  %v480 = vunpack.c.l.b16 %v43
  %v481 = vunpack.c.l.b16 %v45
  %v482 = vunpack.c.l.b16 %v47
  %v483 = vunpack.c.l.b16 %v49
  %v484 = vunpack.c.l.b16 %v51
  %v485 = vunpack.c.l.b16 %v53
  %v486 = vunpack.c.l.b16 %v55
  %v487 = vpack.c.b16 %v472, %v471
  %v488 = vpack.c.b16 %v474, %v473
  %v489 = vpack.c.b16 %v476, %v475
  %v490 = vpack.c.b16 %v478, %v477
  %v491 = vpack.c.b16 %v480, %v479
  %v492 = vpack.c.b16 %v482, %v481
  %v493 = vpack.c.b16 %v484, %v483
  %v494 = vpack.c.b16 %v486, %v485
  %v499 = vunpack.c.l.b16 %v61
  %v500 = vunpack.c.l.b16 %v62
  %v501 = vunpack.c.l.b16 %v63
  %v502 = vunpack.c.l.b16 %v64
  %v503 = vpack.c.b16 %v500, %v499
  %v504 = vpack.c.b16 %v502, %v501
  %v508 = vsel %vm333, %v487, 0
  %v511 = vsel %vm333, %v488, 0
  %v514 = vsel %vm333, %v489, 0
  %v517 = vsel %vm333, %v490, 0
  %v520 = vsel %vm333, %v491, 0
  %v523 = vsel %vm333, %v492, 0
  %v526 = vsel %vm333, %v493, 0
  %v529 = vsel %vm333, %v494, 0
  %531 = vmatprep.subr.bf16.mxu0 0
  %532 = vmatpush1.bf16.msra.mxu0 %v503
  %533 = vmatprep.subr.bf16.mxu0 0
  %534 = vmatpush1.bf16.msra.mxu0 %v504
  %535 = vmatprep.subr.bf16.mxu0 0
  %536 = vmatpush1.bf16.msra.mxu0 0
  %537 = vmatprep.subr.bf16.mxu0 0
  %538 = vmatpush1.bf16.msra.mxu0 0
  %539 = vmatprep.subr.bf16.mxu0 0
  %540 = vmatpush1.bf16.msra.mxu0 0
  %541 = vmatprep.subr.bf16.mxu0 0
  %542 = vmatpush1.bf16.msra.mxu0 0
  %543 = vmatprep.subr.bf16.mxu0 0
  %544 = vmatpush1.bf16.msra.mxu0 0
  %545 = vmatprep.subr.bf16.mxu0 0
  %546 = vmatpush1.bf16.msra.mxu0 0
  %547 = vmatprep.subr.bf16.mxu0 0
  %548 = vmatpush1.bf16.msra.mxu0 0
  %549 = vmatprep.subr.bf16.mxu0 0
  %550 = vmatpush1.bf16.msra.mxu0 0
  %551 = vmatprep.subr.bf16.mxu0 0
  %552 = vmatpush1.bf16.msra.mxu0 0
  %553 = vmatprep.subr.bf16.mxu0 0
  %554 = vmatpush1.bf16.msra.mxu0 0
  %555 = vmatprep.subr.bf16.mxu0 0
  %556 = vmatpush1.bf16.msra.mxu0 0
  %557 = vmatprep.subr.bf16.mxu0 0
  %558 = vmatpush1.bf16.msra.mxu0 0
  %559 = vmatprep.subr.bf16.mxu0 0
  %560 = vmatpush1.bf16.msra.mxu0 0
  %561 = vmatprep.subr.bf16.mxu0 0
  %562 = vmatpush1.bf16.msra.mxu0 0
  %563 = vmatprep.mubr.bf16.mxu0 0
  %564 = vmatmul.mubr.bf16.gmra.mrb[0].mxu0 %v508
  %v565 = vpop.f32.mrb[0].mxu0
  %v566 = vadd.f32 %v393, %v565
  %v567 = vpop.f32.mrb[0].mxu0
  %v568 = vpop.f32.mrb[0].mxu0
  %v569 = vadd.f32 %v396, %v568
  %v570 = vpop.f32.mrb[0].mxu0
  %571 = vmatprep.mubr.bf16.mxu0 0
  %572 = vmatmul.mubr.bf16.gmra.mrb[0].mxu0 %v511
  %v573 = vpop.f32.mrb[0].mxu0
  %v574 = vadd.f32 %v401, %v573
  %v575 = vpop.f32.mrb[0].mxu0
  %v576 = vpop.f32.mrb[0].mxu0
  %v577 = vadd.f32 %v404, %v576
  %v578 = vpop.f32.mrb[0].mxu0
  %579 = vmatprep.mubr.bf16.mxu0 0
  %580 = vmatmul.mubr.bf16.gmra.mrb[0].mxu0 %v514
  %v581 = vpop.f32.mrb[0].mxu0
  %v582 = vadd.f32 %v409, %v581
  %v583 = vpop.f32.mrb[0].mxu0
  %v584 = vpop.f32.mrb[0].mxu0
  %v585 = vadd.f32 %v412, %v584
  %v586 = vpop.f32.mrb[0].mxu0
  %587 = vmatprep.mubr.bf16.mxu0 0
  %588 = vmatmul.mubr.bf16.gmra.mrb[0].mxu0 %v517
  %v589 = vpop.f32.mrb[0].mxu0
  %v590 = vadd.f32 %v417, %v589
  %v591 = vpop.f32.mrb[0].mxu0
  %v592 = vpop.f32.mrb[0].mxu0
  %v593 = vadd.f32 %v420, %v592
  %v594 = vpop.f32.mrb[0].mxu0
  %595 = vmatprep.mubr.bf16.mxu0 0
  %596 = vmatmul.mubr.bf16.gmra.mrb[0].mxu0 %v520
  %v597 = vpop.f32.mrb[0].mxu0
  %v598 = vadd.f32 %v425, %v597
  %v599 = vpop.f32.mrb[0].mxu0
  %v600 = vpop.f32.mrb[0].mxu0
  %v601 = vadd.f32 %v428, %v600
  %v602 = vpop.f32.mrb[0].mxu0
  %603 = vmatprep.mubr.bf16.mxu0 0
  %604 = vmatmul.mubr.bf16.gmra.mrb[0].mxu0 %v523
  %v605 = vpop.f32.mrb[0].mxu0
  %v606 = vadd.f32 %v433, %v605
  %v607 = vpop.f32.mrb[0].mxu0
  %v608 = vpop.f32.mrb[0].mxu0
  %v609 = vadd.f32 %v436, %v608
  %v610 = vpop.f32.mrb[0].mxu0
  %611 = vmatprep.mubr.bf16.mxu0 0
  %612 = vmatmul.mubr.bf16.gmra.mrb[0].mxu0 %v526
  %v613 = vpop.f32.mrb[0].mxu0
  %v614 = vadd.f32 %v441, %v613
  %v615 = vpop.f32.mrb[0].mxu0
  %v616 = vpop.f32.mrb[0].mxu0
  %v617 = vadd.f32 %v444, %v616
  %v618 = vpop.f32.mrb[0].mxu0
  %619 = vmatprep.mubr.bf16.mxu0 0
  %620 = vmatmul.mubr.bf16.gmra.mrb[0].mxu0 %v529
  %v621 = vpop.f32.mrb[0].mxu0
  %v622 = vadd.f32 %v449, %v621
  %v623 = vpop.f32.mrb[0].mxu0
  %v624 = vpop.f32.mrb[0].mxu0
  %v625 = vadd.f32 %v452, %v624
  %v626 = vpop.f32.mrb[0].mxu0
  %627 = vdwg.mxu0
  %vm644 = vcmask 1042432
  %vm645 = vcmask 1046532
  %vm646 = vmor %vm644, %vm645
  %v647 = vrot.slane %v21, 5
  %v648 = vrot.slane %v647, 4
  %v649 = vrot.slane %v22, 5
  %v650 = vsel %vm646, %v648, %v649
  %v651 = vrot.slane %v23, 5
  %v652 = vrot.slane %v651, 4
  %v653 = vrot.slane %v24, 5
  %v654 = vsel %vm646, %v652, %v653
  %v655 = vrot.slane %v25, 5
  %v656 = vrot.slane %v655, 4
  %v657 = vrot.slane %v26, 5
  %v658 = vsel %vm646, %v656, %v657
  %v659 = vrot.slane %v27, 5
  %v660 = vrot.slane %v659, 4
  %v661 = vrot.slane %v28, 5
  %v662 = vsel %vm646, %v660, %v661
  %v663 = vrot.slane %v29, 5
  %v664 = vrot.slane %v663, 4
  %v665 = vrot.slane %v30, 5
  %v666 = vsel %vm646, %v664, %v665
  %v667 = vrot.slane %v31, 5
  %v668 = vrot.slane %v667, 4
  %v669 = vrot.slane %v32, 5
  %v670 = vsel %vm646, %v668, %v669
  %v671 = vrot.slane %v33, 5
  %v672 = vrot.slane %v671, 4
  %v673 = vrot.slane %v34, 5
  %v674 = vsel %vm646, %v672, %v673
  %v675 = vrot.slane %v35, 5
  %v676 = vrot.slane %v675, 4
  %v677 = vrot.slane %v36, 5
  %v678 = vsel %vm646, %v676, %v677
  %v679 = vrot.slane %v41, 5
  %v680 = vrot.slane %v679, 4
  %v681 = vrot.slane %v42, 5
  %v682 = vsel %vm646, %v680, %v681
  %v683 = vrot.slane %v43, 5
  %v684 = vrot.slane %v683, 4
  %v685 = vrot.slane %v44, 5
  %v686 = vsel %vm646, %v684, %v685
  %v687 = vrot.slane %v45, 5
  %v688 = vrot.slane %v687, 4
  %v689 = vrot.slane %v46, 5
  %v690 = vsel %vm646, %v688, %v689
  %v691 = vrot.slane %v47, 5
  %v692 = vrot.slane %v691, 4
  %v693 = vrot.slane %v48, 5
  %v694 = vsel %vm646, %v692, %v693
  %v695 = vrot.slane %v49, 5
  %v696 = vrot.slane %v695, 4
  %v697 = vrot.slane %v50, 5
  %v698 = vsel %vm646, %v696, %v697
  %v699 = vrot.slane %v51, 5
  %v700 = vrot.slane %v699, 4
  %v701 = vrot.slane %v52, 5
  %v702 = vsel %vm646, %v700, %v701
  %v703 = vrot.slane %v53, 5
  %v704 = vrot.slane %v703, 4
  %v705 = vrot.slane %v54, 5
  %v706 = vsel %vm646, %v704, %v705
  %v707 = vrot.slane %v55, 5
  %v708 = vrot.slane %v707, 4
  %v709 = vrot.slane %v56, 5
  %v710 = vsel %vm646, %v708, %v709
  %s711 = scalar_lea.vmem %s1, 32
  %v712 = vld [vmem:[%s711] sm:$0xf]
  %v713 = vld [vmem:[%s711 + $0x4] sm:$0xf]
  %v714 = vld [vmem:[%s711 + $0x8] sm:$0xf]
  %v715 = vld [vmem:[%s711 + $0xc] sm:$0xf]
  %v716 = vunpack.c.l.b16 %v650
  %v717 = vunpack.c.l.b16 %v654
  %v718 = vunpack.c.l.b16 %v658
  %v719 = vunpack.c.l.b16 %v662
  %v720 = vunpack.c.l.b16 %v666
  %v721 = vunpack.c.l.b16 %v670
  %v722 = vunpack.c.l.b16 %v674
  %v723 = vunpack.c.l.b16 %v678
  %v724 = vunpack.c.l.b16 %v682
  %v725 = vunpack.c.l.b16 %v686
  %v726 = vunpack.c.l.b16 %v690
  %v727 = vunpack.c.l.b16 %v694
  %v728 = vunpack.c.l.b16 %v698
  %v729 = vunpack.c.l.b16 %v702
  %v730 = vunpack.c.l.b16 %v706
  %v731 = vunpack.c.l.b16 %v710
  %v732 = vpack.c.b16 %v717, %v716
  %v733 = vpack.c.b16 %v719, %v718
  %v734 = vpack.c.b16 %v721, %v720
  %v735 = vpack.c.b16 %v723, %v722
  %v736 = vpack.c.b16 %v725, %v724
  %v737 = vpack.c.b16 %v727, %v726
  %v738 = vpack.c.b16 %v729, %v728
  %v739 = vpack.c.b16 %v731, %v730
  %v744 = vunpack.c.l.b16 %v712
  %v745 = vunpack.c.l.b16 %v713
  %v746 = vunpack.c.l.b16 %v714
  %v747 = vunpack.c.l.b16 %v715
  %v748 = vpack.c.b16 %v745, %v744
  %v749 = vpack.c.b16 %v747, %v746
  %v753 = vsel %vm333, %v732, 0
  %v756 = vsel %vm333, %v733, 0
  %v759 = vsel %vm333, %v734, 0
  %v762 = vsel %vm333, %v735, 0
  %v765 = vsel %vm333, %v736, 0
  %v768 = vsel %vm333, %v737, 0
  %v771 = vsel %vm333, %v738, 0
  %v774 = vsel %vm333, %v739, 0
  %776 = vmatprep.subr.bf16.mxu0 0
  %777 = vmatpush1.bf16.msra.mxu0 %v748
  %778 = vmatprep.subr.bf16.mxu0 0
  %779 = vmatpush1.bf16.msra.mxu0 %v749
  %780 = vmatprep.subr.bf16.mxu0 0
  %781 = vmatpush1.bf16.msra.mxu0 0
  %782 = vmatprep.subr.bf16.mxu0 0
  %783 = vmatpush1.bf16.msra.mxu0 0
  %784 = vmatprep.subr.bf16.mxu0 0
  %785 = vmatpush1.bf16.msra.mxu0 0
  %786 = vmatprep.subr.bf16.mxu0 0
  %787 = vmatpush1.bf16.msra.mxu0 0
  %788 = vmatprep.subr.bf16.mxu0 0
  %789 = vmatpush1.bf16.msra.mxu0 0
  %790 = vmatprep.subr.bf16.mxu0 0
  %791 = vmatpush1.bf16.msra.mxu0 0
  %792 = vmatprep.subr.bf16.mxu0 0
  %793 = vmatpush1.bf16.msra.mxu0 0
  %794 = vmatprep.subr.bf16.mxu0 0
  %795 = vmatpush1.bf16.msra.mxu0 0
  %796 = vmatprep.subr.bf16.mxu0 0
  %797 = vmatpush1.bf16.msra.mxu0 0
  %798 = vmatprep.subr.bf16.mxu0 0
  %799 = vmatpush1.bf16.msra.mxu0 0
  %800 = vmatprep.subr.bf16.mxu0 0
  %801 = vmatpush1.bf16.msra.mxu0 0
  %802 = vmatprep.subr.bf16.mxu0 0
  %803 = vmatpush1.bf16.msra.mxu0 0
  %804 = vmatprep.subr.bf16.mxu0 0
  %805 = vmatpush1.bf16.msra.mxu0 0
  %806 = vmatprep.subr.bf16.mxu0 0
  %807 = vmatpush1.bf16.msra.mxu0 0
  %808 = vmatprep.mubr.bf16.mxu0 0
  %809 = vmatmul.mubr.bf16.gmra.mrb[0].mxu0 %v753
  %v810 = vpop.f32.mrb[0].mxu0
  %v811 = vadd.f32 0.0, %v810
  %v812 = vpop.f32.mrb[0].mxu0
  %v813 = vpop.f32.mrb[0].mxu0
  %v814 = vadd.f32 0.0, %v813
  %v815 = vpop.f32.mrb[0].mxu0
  %816 = vmatprep.mubr.bf16.mxu0 0
  %817 = vmatmul.mubr.bf16.gmra.mrb[0].mxu0 %v756
  %v818 = vpop.f32.mrb[0].mxu0
  %v819 = vadd.f32 0.0, %v818
  %v820 = vpop.f32.mrb[0].mxu0
  %v821 = vpop.f32.mrb[0].mxu0
  %v822 = vadd.f32 0.0, %v821
  %v823 = vpop.f32.mrb[0].mxu0
  %824 = vmatprep.mubr.bf16.mxu0 0
  %825 = vmatmul.mubr.bf16.gmra.mrb[0].mxu0 %v759
  %v826 = vpop.f32.mrb[0].mxu0
  %v827 = vadd.f32 0.0, %v826
  %v828 = vpop.f32.mrb[0].mxu0
  %v829 = vpop.f32.mrb[0].mxu0
  %v830 = vadd.f32 0.0, %v829
  %v831 = vpop.f32.mrb[0].mxu0
  %832 = vmatprep.mubr.bf16.mxu0 0
  %833 = vmatmul.mubr.bf16.gmra.mrb[0].mxu0 %v762
  %v834 = vpop.f32.mrb[0].mxu0
  %v835 = vadd.f32 0.0, %v834
  %v836 = vpop.f32.mrb[0].mxu0
  %v837 = vpop.f32.mrb[0].mxu0
  %v838 = vadd.f32 0.0, %v837
  %v839 = vpop.f32.mrb[0].mxu0
  %840 = vmatprep.mubr.bf16.mxu0 0
  %841 = vmatmul.mubr.bf16.gmra.mrb[0].mxu0 %v765
  %v842 = vpop.f32.mrb[0].mxu0
  %v843 = vadd.f32 0.0, %v842
  %v844 = vpop.f32.mrb[0].mxu0
  %v845 = vpop.f32.mrb[0].mxu0
  %v846 = vadd.f32 0.0, %v845
  %v847 = vpop.f32.mrb[0].mxu0
  %848 = vmatprep.mubr.bf16.mxu0 0
  %849 = vmatmul.mubr.bf16.gmra.mrb[0].mxu0 %v768
  %v850 = vpop.f32.mrb[0].mxu0
  %v851 = vadd.f32 0.0, %v850
  %v852 = vpop.f32.mrb[0].mxu0
  %v853 = vpop.f32.mrb[0].mxu0
  %v854 = vadd.f32 0.0, %v853
  %v855 = vpop.f32.mrb[0].mxu0
  %856 = vmatprep.mubr.bf16.mxu0 0
  %857 = vmatmul.mubr.bf16.gmra.mrb[0].mxu0 %v771
  %v858 = vpop.f32.mrb[0].mxu0
  %v859 = vadd.f32 0.0, %v858
  %v860 = vpop.f32.mrb[0].mxu0
  %v861 = vpop.f32.mrb[0].mxu0
  %v862 = vadd.f32 0.0, %v861
  %v863 = vpop.f32.mrb[0].mxu0
  %864 = vmatprep.mubr.bf16.mxu0 0
  %865 = vmatmul.mubr.bf16.gmra.mrb[0].mxu0 %v774
  %v866 = vpop.f32.mrb[0].mxu0
  %v867 = vadd.f32 0.0, %v866
  %v868 = vpop.f32.mrb[0].mxu0
  %v869 = vpop.f32.mrb[0].mxu0
  %v870 = vadd.f32 0.0, %v869
  %v871 = vpop.f32.mrb[0].mxu0
  %872 = vdwg.mxu0
  %v873 = vadd.f32 %v566, %v811
  %v874 = vadd.f32 %v569, %v814
  %v875 = vadd.f32 %v574, %v819
  %v876 = vadd.f32 %v577, %v822
  %v877 = vadd.f32 %v582, %v827
  %v878 = vadd.f32 %v585, %v830
  %v879 = vadd.f32 %v590, %v835
  %v880 = vadd.f32 %v593, %v838
  %v881 = vadd.f32 %v598, %v843
  %v882 = vadd.f32 %v601, %v846
  %v883 = vadd.f32 %v606, %v851
  %v884 = vadd.f32 %v609, %v854
  %v885 = vadd.f32 %v614, %v859
  %v886 = vadd.f32 %v617, %v862
  %v887 = vadd.f32 %v622, %v867
  %v888 = vadd.f32 %v625, %v870
  %s889 = scalar_lea.vmem %s1, 48
  %v890 = vld [vmem:[%s889] sm:$0xf]
  %v891 = vld [vmem:[%s889 + $0x4] sm:$0xf]
  %v892 = vld [vmem:[%s889 + $0x8] sm:$0xf]
  %v893 = vld [vmem:[%s889 + $0xc] sm:$0xf]
  %v896 = vunpack.c.l.b16 %v37
  %v897 = vunpack.c.l.b16 %v57
  %v898 = vpack.c.b16 %v473, %v472
  %v899 = vpack.c.b16 %v475, %v474
  %v900 = vpack.c.b16 %v477, %v476
  %v901 = vpack.c.b16 %v896, %v478
  %v902 = vpack.c.b16 %v481, %v480
  %v903 = vpack.c.b16 %v483, %v482
  %v904 = vpack.c.b16 %v485, %v484
  %v905 = vpack.c.b16 %v897, %v486
  %v910 = vunpack.c.l.b16 %v890
  %v911 = vunpack.c.l.b16 %v891
  %v912 = vunpack.c.l.b16 %v892
  %v913 = vunpack.c.l.b16 %v893
  %v914 = vpack.c.b16 %v911, %v910
  %v915 = vpack.c.b16 %v913, %v912
  %v919 = vsel %vm333, %v898, 0
  %v922 = vsel %vm333, %v899, 0
  %v925 = vsel %vm333, %v900, 0
  %v928 = vsel %vm333, %v901, 0
  %v931 = vsel %vm333, %v902, 0
  %v934 = vsel %vm333, %v903, 0
  %v937 = vsel %vm333, %v904, 0
  %v940 = vsel %vm333, %v905, 0
  %942 = vmatprep.subr.bf16.mxu0 0
  %943 = vmatpush1.bf16.msra.mxu0 %v914
  %944 = vmatprep.subr.bf16.mxu0 0
  %945 = vmatpush1.bf16.msra.mxu0 %v915
  %946 = vmatprep.subr.bf16.mxu0 0
  %947 = vmatpush1.bf16.msra.mxu0 0
  %948 = vmatprep.subr.bf16.mxu0 0
  %949 = vmatpush1.bf16.msra.mxu0 0
  %950 = vmatprep.subr.bf16.mxu0 0
  %951 = vmatpush1.bf16.msra.mxu0 0
  %952 = vmatprep.subr.bf16.mxu0 0
  %953 = vmatpush1.bf16.msra.mxu0 0
  %954 = vmatprep.subr.bf16.mxu0 0
  %955 = vmatpush1.bf16.msra.mxu0 0
  %956 = vmatprep.subr.bf16.mxu0 0
  %957 = vmatpush1.bf16.msra.mxu0 0
  %958 = vmatprep.subr.bf16.mxu0 0
  %959 = vmatpush1.bf16.msra.mxu0 0
  %960 = vmatprep.subr.bf16.mxu0 0
  %961 = vmatpush1.bf16.msra.mxu0 0
  %962 = vmatprep.subr.bf16.mxu0 0
  %963 = vmatpush1.bf16.msra.mxu0 0
  %964 = vmatprep.subr.bf16.mxu0 0
  %965 = vmatpush1.bf16.msra.mxu0 0
  %966 = vmatprep.subr.bf16.mxu0 0
  %967 = vmatpush1.bf16.msra.mxu0 0
  %968 = vmatprep.subr.bf16.mxu0 0
  %969 = vmatpush1.bf16.msra.mxu0 0
  %970 = vmatprep.subr.bf16.mxu0 0
  %971 = vmatpush1.bf16.msra.mxu0 0
  %972 = vmatprep.subr.bf16.mxu0 0
  %973 = vmatpush1.bf16.msra.mxu0 0
  %974 = vmatprep.mubr.bf16.mxu0 0
  %975 = vmatmul.mubr.bf16.gmra.mrb[0].mxu0 %v919
  %v976 = vpop.f32.mrb[0].mxu0
  %v977 = vadd.f32 0.0, %v976
  %v978 = vpop.f32.mrb[0].mxu0
  %v979 = vpop.f32.mrb[0].mxu0
  %v980 = vadd.f32 0.0, %v979
  %v981 = vpop.f32.mrb[0].mxu0
  %982 = vmatprep.mubr.bf16.mxu0 0
  %983 = vmatmul.mubr.bf16.gmra.mrb[0].mxu0 %v922
  %v984 = vpop.f32.mrb[0].mxu0
  %v985 = vadd.f32 0.0, %v984
  %v986 = vpop.f32.mrb[0].mxu0
  %v987 = vpop.f32.mrb[0].mxu0
  %v988 = vadd.f32 0.0, %v987
  %v989 = vpop.f32.mrb[0].mxu0
  %990 = vmatprep.mubr.bf16.mxu0 0
  %991 = vmatmul.mubr.bf16.gmra.mrb[0].mxu0 %v925
  %v992 = vpop.f32.mrb[0].mxu0
  %v993 = vadd.f32 0.0, %v992
  %v994 = vpop.f32.mrb[0].mxu0
  %v995 = vpop.f32.mrb[0].mxu0
  %v996 = vadd.f32 0.0, %v995
  %v997 = vpop.f32.mrb[0].mxu0
  %998 = vmatprep.mubr.bf16.mxu0 0
  %999 = vmatmul.mubr.bf16.gmra.mrb[0].mxu0 %v928
  %v1000 = vpop.f32.mrb[0].mxu0
  %v1001 = vadd.f32 0.0, %v1000
  %v1002 = vpop.f32.mrb[0].mxu0
  %v1003 = vpop.f32.mrb[0].mxu0
  %v1004 = vadd.f32 0.0, %v1003
  %v1005 = vpop.f32.mrb[0].mxu0
  %1006 = vmatprep.mubr.bf16.mxu0 0
  %1007 = vmatmul.mubr.bf16.gmra.mrb[0].mxu0 %v931
  %v1008 = vpop.f32.mrb[0].mxu0
  %v1009 = vadd.f32 0.0, %v1008
  %v1010 = vpop.f32.mrb[0].mxu0
  %v1011 = vpop.f32.mrb[0].mxu0
  %v1012 = vadd.f32 0.0, %v1011
  %v1013 = vpop.f32.mrb[0].mxu0
  %1014 = vmatprep.mubr.bf16.mxu0 0
  %1015 = vmatmul.mubr.bf16.gmra.mrb[0].mxu0 %v934
  %v1016 = vpop.f32.mrb[0].mxu0
  %v1017 = vadd.f32 0.0, %v1016
  %v1018 = vpop.f32.mrb[0].mxu0
  %v1019 = vpop.f32.mrb[0].mxu0
  %v1020 = vadd.f32 0.0, %v1019
  %v1021 = vpop.f32.mrb[0].mxu0
  %1022 = vmatprep.mubr.bf16.mxu0 0
  %1023 = vmatmul.mubr.bf16.gmra.mrb[0].mxu0 %v937
  %v1024 = vpop.f32.mrb[0].mxu0
  %v1025 = vadd.f32 0.0, %v1024
  %v1026 = vpop.f32.mrb[0].mxu0
  %v1027 = vpop.f32.mrb[0].mxu0
  %v1028 = vadd.f32 0.0, %v1027
  %v1029 = vpop.f32.mrb[0].mxu0
  %1030 = vmatprep.mubr.bf16.mxu0 0
  %1031 = vmatmul.mubr.bf16.gmra.mrb[0].mxu0 %v940
  %v1032 = vpop.f32.mrb[0].mxu0
  %v1033 = vadd.f32 0.0, %v1032
  %v1034 = vpop.f32.mrb[0].mxu0
  %v1035 = vpop.f32.mrb[0].mxu0
  %v1036 = vadd.f32 0.0, %v1035
  %v1037 = vpop.f32.mrb[0].mxu0
  %1038 = vdwg.mxu0
  %v1039 = vadd.f32 %v873, %v977
  %v1040 = vadd.f32 %v874, %v980
  %v1041 = vadd.f32 %v875, %v985
  %v1042 = vadd.f32 %v876, %v988
  %v1043 = vadd.f32 %v877, %v993
  %v1044 = vadd.f32 %v878, %v996
  %v1045 = vadd.f32 %v879, %v1001
  %v1046 = vadd.f32 %v880, %v1004
  %v1047 = vadd.f32 %v881, %v1009
  %v1048 = vadd.f32 %v882, %v1012
  %v1049 = vadd.f32 %v883, %v1017
  %v1050 = vadd.f32 %v884, %v1020
  %v1051 = vadd.f32 %v885, %v1025
  %v1052 = vadd.f32 %v886, %v1028
  %v1053 = vadd.f32 %v887, %v1033
  %v1054 = vadd.f32 %v888, %v1036
  %v1056 = vshrl.u32 %v37, 16
  %v1058 = vrot.slane %v1056, 4
  %v1059 = vshll.u32 %v37, 16
  %v1061 = vrot.slane %v1059, 5
  %v1062 = vor.u32 %v1058, %v1061
  %v1063 = vrot.slane %v1062, 4
  %v1065 = vshll.u32 %v38, 16
  %v1067 = vrot.slane %v1065, 5
  %v1068 = vsel %vm67, %v1063, %v1067
  %v1070 = vshrl.u32 %v57, 16
  %v1072 = vrot.slane %v1070, 4
  %v1073 = vshll.u32 %v57, 16
  %v1075 = vrot.slane %v1073, 5
  %v1076 = vor.u32 %v1072, %v1075
  %v1077 = vrot.slane %v1076, 4
  %v1079 = vshll.u32 %v58, 16
  %v1081 = vrot.slane %v1079, 5
  %v1082 = vsel %vm67, %v1077, %v1081
  %s1083 = scalar_lea.vmem %s1, 64
  %v1084 = vld [vmem:[%s1083] sm:$0xf]
  %v1085 = vld [vmem:[%s1083 + $0x4] sm:$0xf]
  %v1086 = vld [vmem:[%s1083 + $0x8] sm:$0xf]
  %v1087 = vld [vmem:[%s1083 + $0xc] sm:$0xf]
  %v1088 = vunpack.c.l.b16 %v1068
  %v1089 = vunpack.c.l.b16 %v1082
  %v1090 = vpack.c.b16 %v299, %v298
  %v1091 = vpack.c.b16 %v301, %v300
  %v1092 = vpack.c.b16 %v303, %v302
  %v1093 = vpack.c.b16 %v1088, %v304
  %v1094 = vpack.c.b16 %v307, %v306
  %v1095 = vpack.c.b16 %v309, %v308
  %v1096 = vpack.c.b16 %v311, %v310
  %v1097 = vpack.c.b16 %v1089, %v312
  %v1102 = vunpack.c.l.b16 %v1084
  %v1103 = vunpack.c.l.b16 %v1085
  %v1104 = vunpack.c.l.b16 %v1086
  %v1105 = vunpack.c.l.b16 %v1087
  %v1106 = vpack.c.b16 %v1103, %v1102
  %v1107 = vpack.c.b16 %v1105, %v1104
  %v1111 = vsel %vm333, %v1090, 0
  %v1114 = vsel %vm333, %v1091, 0
  %v1117 = vsel %vm333, %v1092, 0
  %v1120 = vsel %vm333, %v1093, 0
  %v1123 = vsel %vm333, %v1094, 0
  %v1126 = vsel %vm333, %v1095, 0
  %v1129 = vsel %vm333, %v1096, 0
  %v1132 = vsel %vm333, %v1097, 0
  %1134 = vmatprep.subr.bf16.mxu0 0
  %1135 = vmatpush1.bf16.msra.mxu0 %v1106
  %1136 = vmatprep.subr.bf16.mxu0 0
  %1137 = vmatpush1.bf16.msra.mxu0 %v1107
  %1138 = vmatprep.subr.bf16.mxu0 0
  %1139 = vmatpush1.bf16.msra.mxu0 0
  %1140 = vmatprep.subr.bf16.mxu0 0
  %1141 = vmatpush1.bf16.msra.mxu0 0
  %1142 = vmatprep.subr.bf16.mxu0 0
  %1143 = vmatpush1.bf16.msra.mxu0 0
  %1144 = vmatprep.subr.bf16.mxu0 0
  %1145 = vmatpush1.bf16.msra.mxu0 0
  %1146 = vmatprep.subr.bf16.mxu0 0
  %1147 = vmatpush1.bf16.msra.mxu0 0
  %1148 = vmatprep.subr.bf16.mxu0 0
  %1149 = vmatpush1.bf16.msra.mxu0 0
  %1150 = vmatprep.subr.bf16.mxu0 0
  %1151 = vmatpush1.bf16.msra.mxu0 0
  %1152 = vmatprep.subr.bf16.mxu0 0
  %1153 = vmatpush1.bf16.msra.mxu0 0
  %1154 = vmatprep.subr.bf16.mxu0 0
  %1155 = vmatpush1.bf16.msra.mxu0 0
  %1156 = vmatprep.subr.bf16.mxu0 0
  %1157 = vmatpush1.bf16.msra.mxu0 0
  %1158 = vmatprep.subr.bf16.mxu0 0
  %1159 = vmatpush1.bf16.msra.mxu0 0
  %1160 = vmatprep.subr.bf16.mxu0 0
  %1161 = vmatpush1.bf16.msra.mxu0 0
  %1162 = vmatprep.subr.bf16.mxu0 0
  %1163 = vmatpush1.bf16.msra.mxu0 0
  %1164 = vmatprep.subr.bf16.mxu0 0
  %1165 = vmatpush1.bf16.msra.mxu0 0
  %1166 = vmatprep.mubr.bf16.mxu0 0
  %1167 = vmatmul.mubr.bf16.gmra.mrb[0].mxu0 %v1111
  %v1168 = vpop.f32.mrb[0].mxu0
  %v1169 = vadd.f32 0.0, %v1168
  %v1170 = vpop.f32.mrb[0].mxu0
  %v1171 = vpop.f32.mrb[0].mxu0
  %v1172 = vadd.f32 0.0, %v1171
  %v1173 = vpop.f32.mrb[0].mxu0
  %1174 = vmatprep.mubr.bf16.mxu0 0
  %1175 = vmatmul.mubr.bf16.gmra.mrb[0].mxu0 %v1114
  %v1176 = vpop.f32.mrb[0].mxu0
  %v1177 = vadd.f32 0.0, %v1176
  %v1178 = vpop.f32.mrb[0].mxu0
  %v1179 = vpop.f32.mrb[0].mxu0
  %v1180 = vadd.f32 0.0, %v1179
  %v1181 = vpop.f32.mrb[0].mxu0
  %1182 = vmatprep.mubr.bf16.mxu0 0
  %1183 = vmatmul.mubr.bf16.gmra.mrb[0].mxu0 %v1117
  %v1184 = vpop.f32.mrb[0].mxu0
  %v1185 = vadd.f32 0.0, %v1184
  %v1186 = vpop.f32.mrb[0].mxu0
  %v1187 = vpop.f32.mrb[0].mxu0
  %v1188 = vadd.f32 0.0, %v1187
  %v1189 = vpop.f32.mrb[0].mxu0
  %1190 = vmatprep.mubr.bf16.mxu0 0
  %1191 = vmatmul.mubr.bf16.gmra.mrb[0].mxu0 %v1120
  %v1192 = vpop.f32.mrb[0].mxu0
  %v1193 = vadd.f32 0.0, %v1192
  %v1194 = vpop.f32.mrb[0].mxu0
  %v1195 = vpop.f32.mrb[0].mxu0
  %v1196 = vadd.f32 0.0, %v1195
  %v1197 = vpop.f32.mrb[0].mxu0
  %1198 = vmatprep.mubr.bf16.mxu0 0
  %1199 = vmatmul.mubr.bf16.gmra.mrb[0].mxu0 %v1123
  %v1200 = vpop.f32.mrb[0].mxu0
  %v1201 = vadd.f32 0.0, %v1200
  %v1202 = vpop.f32.mrb[0].mxu0
  %v1203 = vpop.f32.mrb[0].mxu0
  %v1204 = vadd.f32 0.0, %v1203
  %v1205 = vpop.f32.mrb[0].mxu0
  %1206 = vmatprep.mubr.bf16.mxu0 0
  %1207 = vmatmul.mubr.bf16.gmra.mrb[0].mxu0 %v1126
  %v1208 = vpop.f32.mrb[0].mxu0
  %v1209 = vadd.f32 0.0, %v1208
  %v1210 = vpop.f32.mrb[0].mxu0
  %v1211 = vpop.f32.mrb[0].mxu0
  %v1212 = vadd.f32 0.0, %v1211
  %v1213 = vpop.f32.mrb[0].mxu0
  %1214 = vmatprep.mubr.bf16.mxu0 0
  %1215 = vmatmul.mubr.bf16.gmra.mrb[0].mxu0 %v1129
  %v1216 = vpop.f32.mrb[0].mxu0
  %v1217 = vadd.f32 0.0, %v1216
  %v1218 = vpop.f32.mrb[0].mxu0
  %v1219 = vpop.f32.mrb[0].mxu0
  %v1220 = vadd.f32 0.0, %v1219
  %v1221 = vpop.f32.mrb[0].mxu0
  %1222 = vmatprep.mubr.bf16.mxu0 0
  %1223 = vmatmul.mubr.bf16.gmra.mrb[0].mxu0 %v1132
  %v1224 = vpop.f32.mrb[0].mxu0
  %v1225 = vadd.f32 0.0, %v1224
  %v1226 = vpop.f32.mrb[0].mxu0
  %v1227 = vpop.f32.mrb[0].mxu0
  %v1228 = vadd.f32 0.0, %v1227
  %v1229 = vpop.f32.mrb[0].mxu0
  %1230 = vdwg.mxu0
  %v1231 = vadd.f32 %v1039, %v1169
  %v1232 = vadd.f32 %v1040, %v1172
  %v1233 = vadd.f32 %v1041, %v1177
  %v1234 = vadd.f32 %v1042, %v1180
  %v1235 = vadd.f32 %v1043, %v1185
  %v1236 = vadd.f32 %v1044, %v1188
  %v1237 = vadd.f32 %v1045, %v1193
  %v1238 = vadd.f32 %v1046, %v1196
  %v1239 = vadd.f32 %v1047, %v1201
  %v1240 = vadd.f32 %v1048, %v1204
  %v1241 = vadd.f32 %v1049, %v1209
  %v1242 = vadd.f32 %v1050, %v1212
  %v1243 = vadd.f32 %v1051, %v1217
  %v1244 = vadd.f32 %v1052, %v1220
  %v1245 = vadd.f32 %v1053, %v1225
  %v1246 = vadd.f32 %v1054, %v1228
  %v1249 = vrot.slane %v37, 5
  %v1250 = vrot.slane %v1249, 4
  %v1251 = vrot.slane %v38, 5
  %v1252 = vsel %vm646, %v1250, %v1251
  %v1253 = vrot.slane %v57, 5
  %v1254 = vrot.slane %v1253, 4
  %v1255 = vrot.slane %v58, 5
  %v1256 = vsel %vm646, %v1254, %v1255
  %s1257 = scalar_lea.vmem %s1, 80
  %v1258 = vld [vmem:[%s1257] sm:$0xf]
  %v1259 = vld [vmem:[%s1257 + $0x4] sm:$0xf]
  %v1260 = vld [vmem:[%s1257 + $0x8] sm:$0xf]
  %v1261 = vld [vmem:[%s1257 + $0xc] sm:$0xf]
  %v1262 = vunpack.c.l.b16 %v1252
  %v1263 = vunpack.c.l.b16 %v1256
  %v1264 = vpack.c.b16 %v718, %v717
  %v1265 = vpack.c.b16 %v720, %v719
  %v1266 = vpack.c.b16 %v722, %v721
  %v1267 = vpack.c.b16 %v1262, %v723
  %v1268 = vpack.c.b16 %v726, %v725
  %v1269 = vpack.c.b16 %v728, %v727
  %v1270 = vpack.c.b16 %v730, %v729
  %v1271 = vpack.c.b16 %v1263, %v731
  %v1276 = vunpack.c.l.b16 %v1258
  %v1277 = vunpack.c.l.b16 %v1259
  %v1278 = vunpack.c.l.b16 %v1260
  %v1279 = vunpack.c.l.b16 %v1261
  %v1280 = vpack.c.b16 %v1277, %v1276
  %v1281 = vpack.c.b16 %v1279, %v1278
  %v1285 = vsel %vm333, %v1264, 0
  %v1288 = vsel %vm333, %v1265, 0
  %v1291 = vsel %vm333, %v1266, 0
  %v1294 = vsel %vm333, %v1267, 0
  %v1297 = vsel %vm333, %v1268, 0
  %v1300 = vsel %vm333, %v1269, 0
  %v1303 = vsel %vm333, %v1270, 0
  %v1306 = vsel %vm333, %v1271, 0
  %1308 = vmatprep.subr.bf16.mxu0 0
  %1309 = vmatpush1.bf16.msra.mxu0 %v1280
  %1310 = vmatprep.subr.bf16.mxu0 0
  %1311 = vmatpush1.bf16.msra.mxu0 %v1281
  %1312 = vmatprep.subr.bf16.mxu0 0
  %1313 = vmatpush1.bf16.msra.mxu0 0
  %1314 = vmatprep.subr.bf16.mxu0 0
  %1315 = vmatpush1.bf16.msra.mxu0 0
  %1316 = vmatprep.subr.bf16.mxu0 0
  %1317 = vmatpush1.bf16.msra.mxu0 0
  %1318 = vmatprep.subr.bf16.mxu0 0
  %1319 = vmatpush1.bf16.msra.mxu0 0
  %1320 = vmatprep.subr.bf16.mxu0 0
  %1321 = vmatpush1.bf16.msra.mxu0 0
  %1322 = vmatprep.subr.bf16.mxu0 0
  %1323 = vmatpush1.bf16.msra.mxu0 0
  %1324 = vmatprep.subr.bf16.mxu0 0
  %1325 = vmatpush1.bf16.msra.mxu0 0
  %1326 = vmatprep.subr.bf16.mxu0 0
  %1327 = vmatpush1.bf16.msra.mxu0 0
  %1328 = vmatprep.subr.bf16.mxu0 0
  %1329 = vmatpush1.bf16.msra.mxu0 0
  %1330 = vmatprep.subr.bf16.mxu0 0
  %1331 = vmatpush1.bf16.msra.mxu0 0
  %1332 = vmatprep.subr.bf16.mxu0 0
  %1333 = vmatpush1.bf16.msra.mxu0 0
  %1334 = vmatprep.subr.bf16.mxu0 0
  %1335 = vmatpush1.bf16.msra.mxu0 0
  %1336 = vmatprep.subr.bf16.mxu0 0
  %1337 = vmatpush1.bf16.msra.mxu0 0
  %1338 = vmatprep.subr.bf16.mxu0 0
  %1339 = vmatpush1.bf16.msra.mxu0 0
  %1340 = vmatprep.mubr.bf16.mxu0 0
  %1341 = vmatmul.mubr.bf16.gmra.mrb[0].mxu0 %v1285
  %v1342 = vpop.f32.mrb[0].mxu0
  %v1343 = vadd.f32 0.0, %v1342
  %v1344 = vpop.f32.mrb[0].mxu0
  %v1345 = vpop.f32.mrb[0].mxu0
  %v1346 = vadd.f32 0.0, %v1345
  %v1347 = vpop.f32.mrb[0].mxu0
  %1348 = vmatprep.mubr.bf16.mxu0 0
  %1349 = vmatmul.mubr.bf16.gmra.mrb[0].mxu0 %v1288
  %v1350 = vpop.f32.mrb[0].mxu0
  %v1351 = vadd.f32 0.0, %v1350
  %v1352 = vpop.f32.mrb[0].mxu0
  %v1353 = vpop.f32.mrb[0].mxu0
  %v1354 = vadd.f32 0.0, %v1353
  %v1355 = vpop.f32.mrb[0].mxu0
  %1356 = vmatprep.mubr.bf16.mxu0 0
  %1357 = vmatmul.mubr.bf16.gmra.mrb[0].mxu0 %v1291
  %v1358 = vpop.f32.mrb[0].mxu0
  %v1359 = vadd.f32 0.0, %v1358
  %v1360 = vpop.f32.mrb[0].mxu0
  %v1361 = vpop.f32.mrb[0].mxu0
  %v1362 = vadd.f32 0.0, %v1361
  %v1363 = vpop.f32.mrb[0].mxu0
  %1364 = vmatprep.mubr.bf16.mxu0 0
  %1365 = vmatmul.mubr.bf16.gmra.mrb[0].mxu0 %v1294
  %v1366 = vpop.f32.mrb[0].mxu0
  %v1367 = vadd.f32 0.0, %v1366
  %v1368 = vpop.f32.mrb[0].mxu0
  %v1369 = vpop.f32.mrb[0].mxu0
  %v1370 = vadd.f32 0.0, %v1369
  %v1371 = vpop.f32.mrb[0].mxu0
  %1372 = vmatprep.mubr.bf16.mxu0 0
  %1373 = vmatmul.mubr.bf16.gmra.mrb[0].mxu0 %v1297
  %v1374 = vpop.f32.mrb[0].mxu0
  %v1375 = vadd.f32 0.0, %v1374
  %v1376 = vpop.f32.mrb[0].mxu0
  %v1377 = vpop.f32.mrb[0].mxu0
  %v1378 = vadd.f32 0.0, %v1377
  %v1379 = vpop.f32.mrb[0].mxu0
  %1380 = vmatprep.mubr.bf16.mxu0 0
  %1381 = vmatmul.mubr.bf16.gmra.mrb[0].mxu0 %v1300
  %v1382 = vpop.f32.mrb[0].mxu0
  %v1383 = vadd.f32 0.0, %v1382
  %v1384 = vpop.f32.mrb[0].mxu0
  %v1385 = vpop.f32.mrb[0].mxu0
  %v1386 = vadd.f32 0.0, %v1385
  %v1387 = vpop.f32.mrb[0].mxu0
  %1388 = vmatprep.mubr.bf16.mxu0 0
  %1389 = vmatmul.mubr.bf16.gmra.mrb[0].mxu0 %v1303
  %v1390 = vpop.f32.mrb[0].mxu0
  %v1391 = vadd.f32 0.0, %v1390
  %v1392 = vpop.f32.mrb[0].mxu0
  %v1393 = vpop.f32.mrb[0].mxu0
  %v1394 = vadd.f32 0.0, %v1393
  %v1395 = vpop.f32.mrb[0].mxu0
  %1396 = vmatprep.mubr.bf16.mxu0 0
  %1397 = vmatmul.mubr.bf16.gmra.mrb[0].mxu0 %v1306
  %v1398 = vpop.f32.mrb[0].mxu0
  %v1399 = vadd.f32 0.0, %v1398
  %v1400 = vpop.f32.mrb[0].mxu0
  %v1401 = vpop.f32.mrb[0].mxu0
  %v1402 = vadd.f32 0.0, %v1401
  %v1403 = vpop.f32.mrb[0].mxu0
  %1404 = vdwg.mxu0
  %v1405 = vadd.f32 %v1231, %v1343
  %v1406 = vadd.f32 %v1232, %v1346
  %v1407 = vadd.f32 %v1233, %v1351
  %v1408 = vadd.f32 %v1234, %v1354
  %v1409 = vadd.f32 %v1235, %v1359
  %v1410 = vadd.f32 %v1236, %v1362
  %v1411 = vadd.f32 %v1237, %v1367
  %v1412 = vadd.f32 %v1238, %v1370
  %v1413 = vadd.f32 %v1239, %v1375
  %v1414 = vadd.f32 %v1240, %v1378
  %v1415 = vadd.f32 %v1241, %v1383
  %v1416 = vadd.f32 %v1242, %v1386
  %v1417 = vadd.f32 %v1243, %v1391
  %v1418 = vadd.f32 %v1244, %v1394
  %v1419 = vadd.f32 %v1245, %v1399
  %v1420 = vadd.f32 %v1246, %v1402
  %s1421 = scalar_lea.vmem %s1, 96
  %v1422 = vld [vmem:[%s1421] sm:$0xf]
  %v1423 = vld [vmem:[%s1421 + $0x4] sm:$0xf]
  %v1424 = vld [vmem:[%s1421 + $0x8] sm:$0xf]
  %v1425 = vld [vmem:[%s1421 + $0xc] sm:$0xf]
  %v1428 = vunpack.c.l.b16 %v39
  %v1429 = vunpack.c.l.b16 %v59
  %v1430 = vpack.c.b16 %v1428, %v896
  %v1431 = vpack.c.b16 %v1429, %v897
  %v1436 = vunpack.c.l.b16 %v1422
  %v1437 = vunpack.c.l.b16 %v1423
  %v1438 = vunpack.c.l.b16 %v1424
  %v1439 = vunpack.c.l.b16 %v1425
  %v1440 = vpack.c.b16 %v1437, %v1436
  %v1441 = vpack.c.b16 %v1439, %v1438
  %v1445 = vsel %vm333, %v1430, 0
  %v1448 = vsel %vm333, %v1431, 0
  %1450 = vmatprep.subr.bf16.mxu0 0
  %1451 = vmatpush1.bf16.msra.mxu0 %v1440
  %1452 = vmatprep.subr.bf16.mxu0 0
  %1453 = vmatpush1.bf16.msra.mxu0 %v1441
  %1454 = vmatprep.subr.bf16.mxu0 0
  %1455 = vmatpush1.bf16.msra.mxu0 0
  %1456 = vmatprep.subr.bf16.mxu0 0
  %1457 = vmatpush1.bf16.msra.mxu0 0
  %1458 = vmatprep.subr.bf16.mxu0 0
  %1459 = vmatpush1.bf16.msra.mxu0 0
  %1460 = vmatprep.subr.bf16.mxu0 0
  %1461 = vmatpush1.bf16.msra.mxu0 0
  %1462 = vmatprep.subr.bf16.mxu0 0
  %1463 = vmatpush1.bf16.msra.mxu0 0
  %1464 = vmatprep.subr.bf16.mxu0 0
  %1465 = vmatpush1.bf16.msra.mxu0 0
  %1466 = vmatprep.subr.bf16.mxu0 0
  %1467 = vmatpush1.bf16.msra.mxu0 0
  %1468 = vmatprep.subr.bf16.mxu0 0
  %1469 = vmatpush1.bf16.msra.mxu0 0
  %1470 = vmatprep.subr.bf16.mxu0 0
  %1471 = vmatpush1.bf16.msra.mxu0 0
  %1472 = vmatprep.subr.bf16.mxu0 0
  %1473 = vmatpush1.bf16.msra.mxu0 0
  %1474 = vmatprep.subr.bf16.mxu0 0
  %1475 = vmatpush1.bf16.msra.mxu0 0
  %1476 = vmatprep.subr.bf16.mxu0 0
  %1477 = vmatpush1.bf16.msra.mxu0 0
  %1478 = vmatprep.subr.bf16.mxu0 0
  %1479 = vmatpush1.bf16.msra.mxu0 0
  %1480 = vmatprep.subr.bf16.mxu0 0
  %1481 = vmatpush1.bf16.msra.mxu0 0
  %1482 = vmatprep.mubr.bf16.mxu0 0
  %1483 = vmatmul.mubr.bf16.gmra.mrb[0].mxu0 %v511
  %v1484 = vpop.f32.mrb[0].mxu0
  %v1485 = vadd.f32 0.0, %v1484
  %v1486 = vpop.f32.mrb[0].mxu0
  %v1487 = vpop.f32.mrb[0].mxu0
  %v1488 = vadd.f32 0.0, %v1487
  %v1489 = vpop.f32.mrb[0].mxu0
  %1490 = vmatprep.mubr.bf16.mxu0 0
  %1491 = vmatmul.mubr.bf16.gmra.mrb[0].mxu0 %v514
  %v1492 = vpop.f32.mrb[0].mxu0
  %v1493 = vadd.f32 0.0, %v1492
  %v1494 = vpop.f32.mrb[0].mxu0
  %v1495 = vpop.f32.mrb[0].mxu0
  %v1496 = vadd.f32 0.0, %v1495
  %v1497 = vpop.f32.mrb[0].mxu0
  %1498 = vmatprep.mubr.bf16.mxu0 0
  %1499 = vmatmul.mubr.bf16.gmra.mrb[0].mxu0 %v517
  %v1500 = vpop.f32.mrb[0].mxu0
  %v1501 = vadd.f32 0.0, %v1500
  %v1502 = vpop.f32.mrb[0].mxu0
  %v1503 = vpop.f32.mrb[0].mxu0
  %v1504 = vadd.f32 0.0, %v1503
  %v1505 = vpop.f32.mrb[0].mxu0
  %1506 = vmatprep.mubr.bf16.mxu0 0
  %1507 = vmatmul.mubr.bf16.gmra.mrb[0].mxu0 %v1445
  %v1508 = vpop.f32.mrb[0].mxu0
  %v1509 = vadd.f32 0.0, %v1508
  %v1510 = vpop.f32.mrb[0].mxu0
  %v1511 = vpop.f32.mrb[0].mxu0
  %v1512 = vadd.f32 0.0, %v1511
  %v1513 = vpop.f32.mrb[0].mxu0
  %1514 = vmatprep.mubr.bf16.mxu0 0
  %1515 = vmatmul.mubr.bf16.gmra.mrb[0].mxu0 %v523
  %v1516 = vpop.f32.mrb[0].mxu0
  %v1517 = vadd.f32 0.0, %v1516
  %v1518 = vpop.f32.mrb[0].mxu0
  %v1519 = vpop.f32.mrb[0].mxu0
  %v1520 = vadd.f32 0.0, %v1519
  %v1521 = vpop.f32.mrb[0].mxu0
  %1522 = vmatprep.mubr.bf16.mxu0 0
  %1523 = vmatmul.mubr.bf16.gmra.mrb[0].mxu0 %v526
  %v1524 = vpop.f32.mrb[0].mxu0
  %v1525 = vadd.f32 0.0, %v1524
  %v1526 = vpop.f32.mrb[0].mxu0
  %v1527 = vpop.f32.mrb[0].mxu0
  %v1528 = vadd.f32 0.0, %v1527
  %v1529 = vpop.f32.mrb[0].mxu0
  %1530 = vmatprep.mubr.bf16.mxu0 0
  %1531 = vmatmul.mubr.bf16.gmra.mrb[0].mxu0 %v529
  %v1532 = vpop.f32.mrb[0].mxu0
  %v1533 = vadd.f32 0.0, %v1532
  %v1534 = vpop.f32.mrb[0].mxu0
  %v1535 = vpop.f32.mrb[0].mxu0
  %v1536 = vadd.f32 0.0, %v1535
  %v1537 = vpop.f32.mrb[0].mxu0
  %1538 = vmatprep.mubr.bf16.mxu0 0
  %1539 = vmatmul.mubr.bf16.gmra.mrb[0].mxu0 %v1448
  %v1540 = vpop.f32.mrb[0].mxu0
  %v1541 = vadd.f32 0.0, %v1540
  %v1542 = vpop.f32.mrb[0].mxu0
  %v1543 = vpop.f32.mrb[0].mxu0
  %v1544 = vadd.f32 0.0, %v1543
  %v1545 = vpop.f32.mrb[0].mxu0
  %1546 = vdwg.mxu0
  %v1547 = vadd.f32 %v1405, %v1485
  %v1548 = vadd.f32 %v1406, %v1488
  %v1549 = vadd.f32 %v1407, %v1493
  %v1550 = vadd.f32 %v1408, %v1496
  %v1551 = vadd.f32 %v1409, %v1501
  %v1552 = vadd.f32 %v1410, %v1504
  %v1553 = vadd.f32 %v1411, %v1509
  %v1554 = vadd.f32 %v1412, %v1512
  %v1555 = vadd.f32 %v1413, %v1517
  %v1556 = vadd.f32 %v1414, %v1520
  %v1557 = vadd.f32 %v1415, %v1525
  %v1558 = vadd.f32 %v1416, %v1528
  %v1559 = vadd.f32 %v1417, %v1533
  %v1560 = vadd.f32 %v1418, %v1536
  %v1561 = vadd.f32 %v1419, %v1541
  %v1562 = vadd.f32 %v1420, %v1544
  %v1564 = vshrl.u32 %v39, 16
  %v1566 = vrot.slane %v1564, 4
  %v1567 = vshll.u32 %v39, 16
  %v1569 = vrot.slane %v1567, 5
  %v1570 = vor.u32 %v1566, %v1569
  %v1571 = vrot.slane %v1570, 4
  %v1573 = vshll.u32 %v40, 16
  %v1575 = vrot.slane %v1573, 5
  %v1576 = vsel %vm67, %v1571, %v1575
  %v1578 = vshrl.u32 %v59, 16
  %v1580 = vrot.slane %v1578, 4
  %v1581 = vshll.u32 %v59, 16
  %v1583 = vrot.slane %v1581, 5
  %v1584 = vor.u32 %v1580, %v1583
  %v1585 = vrot.slane %v1584, 4
  %v1587 = vshll.u32 %v60, 16
  %v1589 = vrot.slane %v1587, 5
  %v1590 = vsel %vm67, %v1585, %v1589
  %s1591 = scalar_lea.vmem %s1, 112
  %v1592 = vld [vmem:[%s1591] sm:$0xf]
  %v1593 = vld [vmem:[%s1591 + $0x4] sm:$0xf]
  %v1594 = vld [vmem:[%s1591 + $0x8] sm:$0xf]
  %v1595 = vld [vmem:[%s1591 + $0xc] sm:$0xf]
  %v1596 = vunpack.c.l.b16 %v1576
  %v1597 = vunpack.c.l.b16 %v1590
  %v1598 = vpack.c.b16 %v1596, %v1088
  %v1599 = vpack.c.b16 %v1597, %v1089
  %v1604 = vunpack.c.l.b16 %v1592
  %v1605 = vunpack.c.l.b16 %v1593
  %v1606 = vunpack.c.l.b16 %v1594
  %v1607 = vunpack.c.l.b16 %v1595
  %v1608 = vpack.c.b16 %v1605, %v1604
  %v1609 = vpack.c.b16 %v1607, %v1606
  %v1613 = vsel %vm333, %v1598, 0
  %v1616 = vsel %vm333, %v1599, 0
  %1618 = vmatprep.subr.bf16.mxu0 0
  %1619 = vmatpush1.bf16.msra.mxu0 %v1608
  %1620 = vmatprep.subr.bf16.mxu0 0
  %1621 = vmatpush1.bf16.msra.mxu0 %v1609
  %1622 = vmatprep.subr.bf16.mxu0 0
  %1623 = vmatpush1.bf16.msra.mxu0 0
  %1624 = vmatprep.subr.bf16.mxu0 0
  %1625 = vmatpush1.bf16.msra.mxu0 0
  %1626 = vmatprep.subr.bf16.mxu0 0
  %1627 = vmatpush1.bf16.msra.mxu0 0
  %1628 = vmatprep.subr.bf16.mxu0 0
  %1629 = vmatpush1.bf16.msra.mxu0 0
  %1630 = vmatprep.subr.bf16.mxu0 0
  %1631 = vmatpush1.bf16.msra.mxu0 0
  %1632 = vmatprep.subr.bf16.mxu0 0
  %1633 = vmatpush1.bf16.msra.mxu0 0
  %1634 = vmatprep.subr.bf16.mxu0 0
  %1635 = vmatpush1.bf16.msra.mxu0 0
  %1636 = vmatprep.subr.bf16.mxu0 0
  %1637 = vmatpush1.bf16.msra.mxu0 0
  %1638 = vmatprep.subr.bf16.mxu0 0
  %1639 = vmatpush1.bf16.msra.mxu0 0
  %1640 = vmatprep.subr.bf16.mxu0 0
  %1641 = vmatpush1.bf16.msra.mxu0 0
  %1642 = vmatprep.subr.bf16.mxu0 0
  %1643 = vmatpush1.bf16.msra.mxu0 0
  %1644 = vmatprep.subr.bf16.mxu0 0
  %1645 = vmatpush1.bf16.msra.mxu0 0
  %1646 = vmatprep.subr.bf16.mxu0 0
  %1647 = vmatpush1.bf16.msra.mxu0 0
  %1648 = vmatprep.subr.bf16.mxu0 0
  %1649 = vmatpush1.bf16.msra.mxu0 0
  %1650 = vmatprep.mubr.bf16.mxu0 0
  %1651 = vmatmul.mubr.bf16.gmra.mrb[0].mxu0 %v338
  %v1652 = vpop.f32.mrb[0].mxu0
  %v1653 = vadd.f32 0.0, %v1652
  %v1654 = vpop.f32.mrb[0].mxu0
  %v1655 = vpop.f32.mrb[0].mxu0
  %v1656 = vadd.f32 0.0, %v1655
  %v1657 = vpop.f32.mrb[0].mxu0
  %1658 = vmatprep.mubr.bf16.mxu0 0
  %1659 = vmatmul.mubr.bf16.gmra.mrb[0].mxu0 %v341
  %v1660 = vpop.f32.mrb[0].mxu0
  %v1661 = vadd.f32 0.0, %v1660
  %v1662 = vpop.f32.mrb[0].mxu0
  %v1663 = vpop.f32.mrb[0].mxu0
  %v1664 = vadd.f32 0.0, %v1663
  %v1665 = vpop.f32.mrb[0].mxu0
  %1666 = vmatprep.mubr.bf16.mxu0 0
  %1667 = vmatmul.mubr.bf16.gmra.mrb[0].mxu0 %v344
  %v1668 = vpop.f32.mrb[0].mxu0
  %v1669 = vadd.f32 0.0, %v1668
  %v1670 = vpop.f32.mrb[0].mxu0
  %v1671 = vpop.f32.mrb[0].mxu0
  %v1672 = vadd.f32 0.0, %v1671
  %v1673 = vpop.f32.mrb[0].mxu0
  %1674 = vmatprep.mubr.bf16.mxu0 0
  %1675 = vmatmul.mubr.bf16.gmra.mrb[0].mxu0 %v1613
  %v1676 = vpop.f32.mrb[0].mxu0
  %v1677 = vadd.f32 0.0, %v1676
  %v1678 = vpop.f32.mrb[0].mxu0
  %v1679 = vpop.f32.mrb[0].mxu0
  %v1680 = vadd.f32 0.0, %v1679
  %v1681 = vpop.f32.mrb[0].mxu0
  %1682 = vmatprep.mubr.bf16.mxu0 0
  %1683 = vmatmul.mubr.bf16.gmra.mrb[0].mxu0 %v350
  %v1684 = vpop.f32.mrb[0].mxu0
  %v1685 = vadd.f32 0.0, %v1684
  %v1686 = vpop.f32.mrb[0].mxu0
  %v1687 = vpop.f32.mrb[0].mxu0
  %v1688 = vadd.f32 0.0, %v1687
  %v1689 = vpop.f32.mrb[0].mxu0
  %1690 = vmatprep.mubr.bf16.mxu0 0
  %1691 = vmatmul.mubr.bf16.gmra.mrb[0].mxu0 %v353
  %v1692 = vpop.f32.mrb[0].mxu0
  %v1693 = vadd.f32 0.0, %v1692
  %v1694 = vpop.f32.mrb[0].mxu0
  %v1695 = vpop.f32.mrb[0].mxu0
  %v1696 = vadd.f32 0.0, %v1695
  %v1697 = vpop.f32.mrb[0].mxu0
  %1698 = vmatprep.mubr.bf16.mxu0 0
  %1699 = vmatmul.mubr.bf16.gmra.mrb[0].mxu0 %v356
  %v1700 = vpop.f32.mrb[0].mxu0
  %v1701 = vadd.f32 0.0, %v1700
  %v1702 = vpop.f32.mrb[0].mxu0
  %v1703 = vpop.f32.mrb[0].mxu0
  %v1704 = vadd.f32 0.0, %v1703
  %v1705 = vpop.f32.mrb[0].mxu0
  %1706 = vmatprep.mubr.bf16.mxu0 0
  %1707 = vmatmul.mubr.bf16.gmra.mrb[0].mxu0 %v1616
  %v1708 = vpop.f32.mrb[0].mxu0
  %v1709 = vadd.f32 0.0, %v1708
  %v1710 = vpop.f32.mrb[0].mxu0
  %v1711 = vpop.f32.mrb[0].mxu0
  %v1712 = vadd.f32 0.0, %v1711
  %v1713 = vpop.f32.mrb[0].mxu0
  %1714 = vdwg.mxu0
  %v1715 = vadd.f32 %v1547, %v1653
  %v1716 = vadd.f32 %v1548, %v1656
  %v1717 = vadd.f32 %v1549, %v1661
  %v1718 = vadd.f32 %v1550, %v1664
  %v1719 = vadd.f32 %v1551, %v1669
  %v1720 = vadd.f32 %v1552, %v1672
  %v1721 = vadd.f32 %v1553, %v1677
  %v1722 = vadd.f32 %v1554, %v1680
  %v1723 = vadd.f32 %v1555, %v1685
  %v1724 = vadd.f32 %v1556, %v1688
  %v1725 = vadd.f32 %v1557, %v1693
  %v1726 = vadd.f32 %v1558, %v1696
  %v1727 = vadd.f32 %v1559, %v1701
  %v1728 = vadd.f32 %v1560, %v1704
  %v1729 = vadd.f32 %v1561, %v1709
  %v1730 = vadd.f32 %v1562, %v1712
  %v1733 = vrot.slane %v39, 5
  %v1734 = vrot.slane %v1733, 4
  %v1735 = vrot.slane %v40, 5
  %v1736 = vsel %vm646, %v1734, %v1735
  %v1737 = vrot.slane %v59, 5
  %v1738 = vrot.slane %v1737, 4
  %v1739 = vrot.slane %v60, 5
  %v1740 = vsel %vm646, %v1738, %v1739
  %s1741 = scalar_lea.vmem %s1, 128
  %v1742 = vld [vmem:[%s1741] sm:$0xf]
  %v1743 = vld [vmem:[%s1741 + $0x4] sm:$0xf]
  %v1744 = vld [vmem:[%s1741 + $0x8] sm:$0xf]
  %v1745 = vld [vmem:[%s1741 + $0xc] sm:$0xf]
  %v1746 = vunpack.c.l.b16 %v1736
  %v1747 = vunpack.c.l.b16 %v1740
  %v1748 = vpack.c.b16 %v1746, %v1262
  %v1749 = vpack.c.b16 %v1747, %v1263
  %v1754 = vunpack.c.l.b16 %v1742
  %v1755 = vunpack.c.l.b16 %v1743
  %v1756 = vunpack.c.l.b16 %v1744
  %v1757 = vunpack.c.l.b16 %v1745
  %v1758 = vpack.c.b16 %v1755, %v1754
  %v1759 = vpack.c.b16 %v1757, %v1756
  %v1763 = vsel %vm333, %v1748, 0
  %v1766 = vsel %vm333, %v1749, 0
  %1768 = vmatprep.subr.bf16.mxu0 0
  %1769 = vmatpush1.bf16.msra.mxu0 %v1758
  %1770 = vmatprep.subr.bf16.mxu0 0
  %1771 = vmatpush1.bf16.msra.mxu0 %v1759
  %1772 = vmatprep.subr.bf16.mxu0 0
  %1773 = vmatpush1.bf16.msra.mxu0 0
  %1774 = vmatprep.subr.bf16.mxu0 0
  %1775 = vmatpush1.bf16.msra.mxu0 0
  %1776 = vmatprep.subr.bf16.mxu0 0
  %1777 = vmatpush1.bf16.msra.mxu0 0
  %1778 = vmatprep.subr.bf16.mxu0 0
  %1779 = vmatpush1.bf16.msra.mxu0 0
  %1780 = vmatprep.subr.bf16.mxu0 0
  %1781 = vmatpush1.bf16.msra.mxu0 0
  %1782 = vmatprep.subr.bf16.mxu0 0
  %1783 = vmatpush1.bf16.msra.mxu0 0
  %1784 = vmatprep.subr.bf16.mxu0 0
  %1785 = vmatpush1.bf16.msra.mxu0 0
  %1786 = vmatprep.subr.bf16.mxu0 0
  %1787 = vmatpush1.bf16.msra.mxu0 0
  %1788 = vmatprep.subr.bf16.mxu0 0
  %1789 = vmatpush1.bf16.msra.mxu0 0
  %1790 = vmatprep.subr.bf16.mxu0 0
  %1791 = vmatpush1.bf16.msra.mxu0 0
  %1792 = vmatprep.subr.bf16.mxu0 0
  %1793 = vmatpush1.bf16.msra.mxu0 0
  %1794 = vmatprep.subr.bf16.mxu0 0
  %1795 = vmatpush1.bf16.msra.mxu0 0
  %1796 = vmatprep.subr.bf16.mxu0 0
  %1797 = vmatpush1.bf16.msra.mxu0 0
  %1798 = vmatprep.subr.bf16.mxu0 0
  %1799 = vmatpush1.bf16.msra.mxu0 0
  %1800 = vmatprep.mubr.bf16.mxu0 0
  %1801 = vmatmul.mubr.bf16.gmra.mrb[0].mxu0 %v756
  %v1802 = vpop.f32.mrb[0].mxu0
  %v1803 = vadd.f32 0.0, %v1802
  %v1804 = vpop.f32.mrb[0].mxu0
  %v1805 = vpop.f32.mrb[0].mxu0
  %v1806 = vadd.f32 0.0, %v1805
  %v1807 = vpop.f32.mrb[0].mxu0
  %1808 = vmatprep.mubr.bf16.mxu0 0
  %1809 = vmatmul.mubr.bf16.gmra.mrb[0].mxu0 %v759
  %v1810 = vpop.f32.mrb[0].mxu0
  %v1811 = vadd.f32 0.0, %v1810
  %v1812 = vpop.f32.mrb[0].mxu0
  %v1813 = vpop.f32.mrb[0].mxu0
  %v1814 = vadd.f32 0.0, %v1813
  %v1815 = vpop.f32.mrb[0].mxu0
  %1816 = vmatprep.mubr.bf16.mxu0 0
  %1817 = vmatmul.mubr.bf16.gmra.mrb[0].mxu0 %v762
  %v1818 = vpop.f32.mrb[0].mxu0
  %v1819 = vadd.f32 0.0, %v1818
  %v1820 = vpop.f32.mrb[0].mxu0
  %v1821 = vpop.f32.mrb[0].mxu0
  %v1822 = vadd.f32 0.0, %v1821
  %v1823 = vpop.f32.mrb[0].mxu0
  %1824 = vmatprep.mubr.bf16.mxu0 0
  %1825 = vmatmul.mubr.bf16.gmra.mrb[0].mxu0 %v1763
  %v1826 = vpop.f32.mrb[0].mxu0
  %v1827 = vadd.f32 0.0, %v1826
  %v1828 = vpop.f32.mrb[0].mxu0
  %v1829 = vpop.f32.mrb[0].mxu0
  %v1830 = vadd.f32 0.0, %v1829
  %v1831 = vpop.f32.mrb[0].mxu0
  %1832 = vmatprep.mubr.bf16.mxu0 0
  %1833 = vmatmul.mubr.bf16.gmra.mrb[0].mxu0 %v768
  %v1834 = vpop.f32.mrb[0].mxu0
  %v1835 = vadd.f32 0.0, %v1834
  %v1836 = vpop.f32.mrb[0].mxu0
  %v1837 = vpop.f32.mrb[0].mxu0
  %v1838 = vadd.f32 0.0, %v1837
  %v1839 = vpop.f32.mrb[0].mxu0
  %1840 = vmatprep.mubr.bf16.mxu0 0
  %1841 = vmatmul.mubr.bf16.gmra.mrb[0].mxu0 %v771
  %v1842 = vpop.f32.mrb[0].mxu0
  %v1843 = vadd.f32 0.0, %v1842
  %v1844 = vpop.f32.mrb[0].mxu0
  %v1845 = vpop.f32.mrb[0].mxu0
  %v1846 = vadd.f32 0.0, %v1845
  %v1847 = vpop.f32.mrb[0].mxu0
  %1848 = vmatprep.mubr.bf16.mxu0 0
  %1849 = vmatmul.mubr.bf16.gmra.mrb[0].mxu0 %v774
  %v1850 = vpop.f32.mrb[0].mxu0
  %v1851 = vadd.f32 0.0, %v1850
  %v1852 = vpop.f32.mrb[0].mxu0
  %v1853 = vpop.f32.mrb[0].mxu0
  %v1854 = vadd.f32 0.0, %v1853
  %v1855 = vpop.f32.mrb[0].mxu0
  %1856 = vmatprep.mubr.bf16.mxu0 0
  %1857 = vmatmul.mubr.bf16.gmra.mrb[0].mxu0 %v1766
  %v1858 = vpop.f32.mrb[0].mxu0
  %v1859 = vadd.f32 0.0, %v1858
  %v1860 = vpop.f32.mrb[0].mxu0
  %v1861 = vpop.f32.mrb[0].mxu0
  %v1862 = vadd.f32 0.0, %v1861
  %v1863 = vpop.f32.mrb[0].mxu0
  %1864 = vdwg.mxu0
  %v1865 = vadd.f32 %v1715, %v1803
  %v1866 = vadd.f32 %v1716, %v1806
  %v1867 = vadd.f32 %v1717, %v1811
  %v1868 = vadd.f32 %v1718, %v1814
  %v1869 = vadd.f32 %v1719, %v1819
  %v1870 = vadd.f32 %v1720, %v1822
  %v1871 = vadd.f32 %v1721, %v1827
  %v1872 = vadd.f32 %v1722, %v1830
  %v1873 = vadd.f32 %v1723, %v1835
  %v1874 = vadd.f32 %v1724, %v1838
  %v1875 = vadd.f32 %v1725, %v1843
  %v1876 = vadd.f32 %v1726, %v1846
  %v1877 = vadd.f32 %v1727, %v1851
  %v1878 = vadd.f32 %v1728, %v1854
  %v1879 = vadd.f32 %v1729, %v1859
  %v1880 = vadd.f32 %v1730, %v1862
  %v1881 = vld [vmem:[%s2] sm:$0x1]
  %v1883 = vlaneseq
  %v1884 = vshrl.u32 %v1883, 7
  %v1885 = vsub.s32 0, %v1884
  %v1886 = vrot.slane %v1881, %v1885
  %v1888 = vadd.f32 %v1865, %v1886
  %v1889 = vadd.f32 %v1866, %v1886
  %v1890 = vadd.f32 %v1867, %v1886
  %v1891 = vadd.f32 %v1868, %v1886
  %v1892 = vadd.f32 %v1869, %v1886
  %v1893 = vadd.f32 %v1870, %v1886
  %v1894 = vadd.f32 %v1871, %v1886
  %v1895 = vadd.f32 %v1872, %v1886
  %v1896 = vadd.f32 %v1873, %v1886
  %v1897 = vadd.f32 %v1874, %v1886
  %v1898 = vadd.f32 %v1875, %v1886
  %v1899 = vadd.f32 %v1876, %v1886
  %v1900 = vadd.f32 %v1877, %v1886
  %v1901 = vadd.f32 %v1878, %v1886
  %v1902 = vadd.f32 %v1879, %v1886
  %v1903 = vadd.f32 %v1880, %v1886
  %v1904 = vmax.f32 %v1888, 0.0
  %v1905 = vmax.f32 %v1889, 0.0
  %v1906 = vmax.f32 %v1890, 0.0
  %v1907 = vmax.f32 %v1891, 0.0
  %v1908 = vmax.f32 %v1892, 0.0
  %v1909 = vmax.f32 %v1893, 0.0
  %v1910 = vmax.f32 %v1894, 0.0
  %v1911 = vmax.f32 %v1895, 0.0
  %v1912 = vmax.f32 %v1896, 0.0
  %v1913 = vmax.f32 %v1897, 0.0
  %v1914 = vmax.f32 %v1898, 0.0
  %v1915 = vmax.f32 %v1899, 0.0
  %v1916 = vmax.f32 %v1900, 0.0
  %v1917 = vmax.f32 %v1901, 0.0
  %v1918 = vmax.f32 %v1902, 0.0
  %v1919 = vmax.f32 %v1903, 0.0
  %v1920 = vpack.c.bf16 %v1905, %v1904
  %v1921 = vpack.c.bf16 %v1907, %v1906
  %v1922 = vpack.c.bf16 %v1909, %v1908
  %v1923 = vpack.c.bf16 %v1911, %v1910
  %v1924 = vpack.c.bf16 %v1913, %v1912
  %v1925 = vpack.c.bf16 %v1915, %v1914
  %v1926 = vpack.c.bf16 %v1917, %v1916
  %v1927 = vpack.c.bf16 %v1919, %v1918
  %v1928 = vld [vmem:[%s3] sm:$0xf]
  %v1929 = vld [vmem:[%s3 + $0x4] sm:$0xf]
  %v1930 = vld [vmem:[%s3 + $0x8] sm:$0xf]
  %v1931 = vld [vmem:[%s3 + $0xc] sm:$0xf]
  %v1932 = vld [vmem:[%s4] sm:$0x1]
  %v1934 = vlaneseq
  %v1935 = vshrl.u32 %v1934, 7
  %v1936 = vsub.s32 0, %v1935
  %v1937 = vrot.slane %v1932, %v1936
  %v1943 = vunpack.c.l.b16 %v1928
  %v1944 = vunpack.c.l.b16 %v1929
  %v1945 = vunpack.c.l.b16 %v1930
  %v1946 = vunpack.c.l.b16 %v1931
  %v1947 = vpack.c.b16 %v1944, %v1943
  %v1948 = vpack.c.b16 %v1946, %v1945
  %v1952 = vsel %vm333, %v1920, 0
  %v1955 = vsel %vm333, %v1921, 0
  %v1958 = vsel %vm333, %v1922, 0
  %v1961 = vsel %vm333, %v1923, 0
  %v1964 = vsel %vm333, %v1924, 0
  %v1967 = vsel %vm333, %v1925, 0
  %v1970 = vsel %vm333, %v1926, 0
  %v1973 = vsel %vm333, %v1927, 0
  %1975 = vmatprep.subr.bf16.mxu0 0
  %1976 = vmatpush1.bf16.msra.mxu0 %v1947
  %1977 = vmatprep.subr.bf16.mxu0 0
  %1978 = vmatpush1.bf16.msra.mxu0 %v1948
  %1979 = vmatprep.subr.bf16.mxu0 0
  %1980 = vmatpush1.bf16.msra.mxu0 0
  %1981 = vmatprep.subr.bf16.mxu0 0
  %1982 = vmatpush1.bf16.msra.mxu0 0
  %1983 = vmatprep.subr.bf16.mxu0 0
  %1984 = vmatpush1.bf16.msra.mxu0 0
  %1985 = vmatprep.subr.bf16.mxu0 0
  %1986 = vmatpush1.bf16.msra.mxu0 0
  %1987 = vmatprep.subr.bf16.mxu0 0
  %1988 = vmatpush1.bf16.msra.mxu0 0
  %1989 = vmatprep.subr.bf16.mxu0 0
  %1990 = vmatpush1.bf16.msra.mxu0 0
  %1991 = vmatprep.subr.bf16.mxu0 0
  %1992 = vmatpush1.bf16.msra.mxu0 0
  %1993 = vmatprep.subr.bf16.mxu0 0
  %1994 = vmatpush1.bf16.msra.mxu0 0
  %1995 = vmatprep.subr.bf16.mxu0 0
  %1996 = vmatpush1.bf16.msra.mxu0 0
  %1997 = vmatprep.subr.bf16.mxu0 0
  %1998 = vmatpush1.bf16.msra.mxu0 0
  %1999 = vmatprep.subr.bf16.mxu0 0
  %2000 = vmatpush1.bf16.msra.mxu0 0
  %2001 = vmatprep.subr.bf16.mxu0 0
  %2002 = vmatpush1.bf16.msra.mxu0 0
  %2003 = vmatprep.subr.bf16.mxu0 0
  %2004 = vmatpush1.bf16.msra.mxu0 0
  %2005 = vmatprep.subr.bf16.mxu0 0
  %2006 = vmatpush1.bf16.msra.mxu0 0
  %2007 = vmatprep.mubr.bf16.mxu0 0
  %2008 = vmatmul.mubr.bf16.gmra.mrb[0].mxu0 %v1952
  %v2009 = vpop.f32.mrb[0].mxu0
  %v2010 = vadd.f32 %v1937, %v2009
  %v2011 = vpop.f32.mrb[0].mxu0
  %v2012 = vpop.f32.mrb[0].mxu0
  %v2013 = vadd.f32 %v1937, %v2012
  %v2014 = vpop.f32.mrb[0].mxu0
  %2015 = vmatprep.mubr.bf16.mxu0 0
  %2016 = vmatmul.mubr.bf16.gmra.mrb[0].mxu0 %v1955
  %v2017 = vpop.f32.mrb[0].mxu0
  %v2018 = vadd.f32 %v1937, %v2017
  %v2019 = vpop.f32.mrb[0].mxu0
  %v2020 = vpop.f32.mrb[0].mxu0
  %v2021 = vadd.f32 %v1937, %v2020
  %v2022 = vpop.f32.mrb[0].mxu0
  %2023 = vmatprep.mubr.bf16.mxu0 0
  %2024 = vmatmul.mubr.bf16.gmra.mrb[0].mxu0 %v1958
  %v2025 = vpop.f32.mrb[0].mxu0
  %v2026 = vadd.f32 %v1937, %v2025
  %v2027 = vpop.f32.mrb[0].mxu0
  %v2028 = vpop.f32.mrb[0].mxu0
  %v2029 = vadd.f32 %v1937, %v2028
  %v2030 = vpop.f32.mrb[0].mxu0
  %2031 = vmatprep.mubr.bf16.mxu0 0
  %2032 = vmatmul.mubr.bf16.gmra.mrb[0].mxu0 %v1961
  %v2033 = vpop.f32.mrb[0].mxu0
  %v2034 = vadd.f32 %v1937, %v2033
  %v2035 = vpop.f32.mrb[0].mxu0
  %v2036 = vpop.f32.mrb[0].mxu0
  %v2037 = vadd.f32 %v1937, %v2036
  %v2038 = vpop.f32.mrb[0].mxu0
  %2039 = vmatprep.mubr.bf16.mxu0 0
  %2040 = vmatmul.mubr.bf16.gmra.mrb[0].mxu0 %v1964
  %v2041 = vpop.f32.mrb[0].mxu0
  %v2042 = vadd.f32 %v1937, %v2041
  %v2043 = vpop.f32.mrb[0].mxu0
  %v2044 = vpop.f32.mrb[0].mxu0
  %v2045 = vadd.f32 %v1937, %v2044
  %v2046 = vpop.f32.mrb[0].mxu0
  %2047 = vmatprep.mubr.bf16.mxu0 0
  %2048 = vmatmul.mubr.bf16.gmra.mrb[0].mxu0 %v1967
  %v2049 = vpop.f32.mrb[0].mxu0
  %v2050 = vadd.f32 %v1937, %v2049
  %v2051 = vpop.f32.mrb[0].mxu0
  %v2052 = vpop.f32.mrb[0].mxu0
  %v2053 = vadd.f32 %v1937, %v2052
  %v2054 = vpop.f32.mrb[0].mxu0
  %2055 = vmatprep.mubr.bf16.mxu0 0
  %2056 = vmatmul.mubr.bf16.gmra.mrb[0].mxu0 %v1970
  %v2057 = vpop.f32.mrb[0].mxu0
  %v2058 = vadd.f32 %v1937, %v2057
  %v2059 = vpop.f32.mrb[0].mxu0
  %v2060 = vpop.f32.mrb[0].mxu0
  %v2061 = vadd.f32 %v1937, %v2060
  %v2062 = vpop.f32.mrb[0].mxu0
  %2063 = vmatprep.mubr.bf16.mxu0 0
  %2064 = vmatmul.mubr.bf16.gmra.mrb[0].mxu0 %v1973
  %v2065 = vpop.f32.mrb[0].mxu0
  %v2066 = vadd.f32 %v1937, %v2065
  %v2067 = vpop.f32.mrb[0].mxu0
  %v2068 = vpop.f32.mrb[0].mxu0
  %v2069 = vadd.f32 %v1937, %v2068
  %v2070 = vpop.f32.mrb[0].mxu0
  %2071 = vdwg.mxu0
  %2072 = vst [vmem:[%s5] sm:$0xff] %v2010
  %2073 = vst [vmem:[%s5 + $0x8] sm:$0xff] %v2013
  %2074 = vst [vmem:[%s5 + $0x10] sm:$0xff] %v2018
  %2075 = vst [vmem:[%s5 + $0x18] sm:$0xff] %v2021
  %2076 = vst [vmem:[%s5 + $0x20] sm:$0xff] %v2026
  %2077 = vst [vmem:[%s5 + $0x28] sm:$0xff] %v2029
  %2078 = vst [vmem:[%s5 + $0x30] sm:$0xff] %v2034
  %2079 = vst [vmem:[%s5 + $0x38] sm:$0xff] %v2037
  %2080 = vst [vmem:[%s5 + $0x40] sm:$0xff] %v2042
  %2081 = vst [vmem:[%s5 + $0x48] sm:$0xff] %v2045
  %2082 = vst [vmem:[%s5 + $0x50] sm:$0xff] %v2050
  %2083 = vst [vmem:[%s5 + $0x58] sm:$0xff] %v2053
  %2084 = vst [vmem:[%s5 + $0x60] sm:$0xff] %v2058
  %2085 = vst [vmem:[%s5 + $0x68] sm:$0xff] %v2061
  %2086 = vst [vmem:[%s5 + $0x70] sm:$0xff] %v2066
  %2087 = vst [vmem:[%s5 + $0x78] sm:$0xff] %v2069
  // Predicated region
  $region22: #{_lambda_.6} parent=0 // pred_check
    _
  $region23: #{_lambda_.6} parent=0 // pred_check_branch
    %2089 = sbr.rel (0) target = $region25
  $region24: #{_lambda_.6} parent=0 // pred_region
    _
  $region25: #{_lambda_.6} parent=0 // pred_fallthru
    _
  // Predicated region
  $region26: #{_lambda_.6} parent=0 // pred_check
    _
  $region27: #{_lambda_.6} parent=0 // pred_check_branch
    %2091 = sbr.rel (0) target = $region29
  $region28: #{_lambda_.6} parent=0 // pred_region
    _
  $region29: #{_lambda_.6} parent=0 // pred_fallthru
    _

// kernel: _lambda_.4
$region0: #{_lambda_.4}
  #allocation0 [shape = 'u32[]', space=smem, size = 0x4, offset = 0x4, fixed_abs, tag = 'smem constant byte address 0x4 - core index']
  #allocation1 [shape = 'u32[144,128]{1,0:T(1,128)}', space=vmem, size = 0x12000, scoped, tag = 'internal scratch']
  %s0 = inlined_call_operand.vmem [shape: f32[2,17,17,3], index: 0, kind: input, shape index: {}]
  %s1 = inlined_call_operand.vmem [shape: f32[2,17,17,3], index: 1, kind: input, shape index: {}]
  %s2 = inlined_call_operand.vmem [shape: f32[2,17,17,3], index: 2, kind: input, shape index: {}]
  %s3 = inlined_call_operand.vmem [shape: f32[2,17,17,3], index: 3, kind: input, shape index: {}]
  %s4 = inlined_call_operand.vmem [shape: bf16[9,3,16], index: 4, kind: input, shape index: {}]
  %s5 = inlined_call_operand.vmem [shape: f32[1,16], index: 5, kind: input, shape index: {}]
  %s6 = inlined_call_operand.vmem [shape: bf16[512,16], index: 6, kind: output, shape index: {}]
  %s7 = sld [smem:[#allocation0]]
  $region34: #{_lambda_.4} parent=0
    _
  %s9 = ssub.s32 1, %s7
  %s10 = scalar_select 0, %s9, %s7
  // Predicated region
  $region2: #{_lambda_.4} parent=0 // pred_check
    _
  $region3: #{_lambda_.4} parent=0 // pred_check_branch
    %12 = sbr.rel (0) target = $region5
  $region4: #{_lambda_.4} parent=0 // pred_region
    _
  $region5: #{_lambda_.4} parent=0 // pred_fallthru
    _
  // Predicated region
  $region6: #{_lambda_.4} parent=0 // pred_check
    _
  $region7: #{_lambda_.4} parent=0 // pred_check_branch
    %14 = sbr.rel (0) target = $region9
  $region8: #{_lambda_.4} parent=0 // pred_region
    _
  $region9: #{_lambda_.4} parent=0 // pred_fallthru
    _
  // Predicated region
  $region10: #{_lambda_.4} parent=0 // pred_check
    _
  $region11: #{_lambda_.4} parent=0 // pred_check_branch
    %16 = sbr.rel (0) target = $region13
  $region12: #{_lambda_.4} parent=0 // pred_region
    _
  $region13: #{_lambda_.4} parent=0 // pred_fallthru
    _
  // Predicated region
  $region14: #{_lambda_.4} parent=0 // pred_check
    _
  $region15: #{_lambda_.4} parent=0 // pred_check_branch
    %18 = sbr.rel (0) target = $region17
  $region16: #{_lambda_.4} parent=0 // pred_region
    _
  $region17: #{_lambda_.4} parent=0 // pred_fallthru
    _
  // Predicated region
  $region18: #{_lambda_.4} parent=0 // pred_check
    _
  $region19: #{_lambda_.4} parent=0 // pred_check_branch
    %20 = sbr.rel (0) target = $region21
  $region20: #{_lambda_.4} parent=0 // pred_region
    _
  $region21: #{_lambda_.4} parent=0 // pred_fallthru
    _
  // Predicated region
  $region22: #{_lambda_.4} parent=0 // pred_check
    _
  $region23: #{_lambda_.4} parent=0 // pred_check_branch
    %22 = sbr.rel (0) target = $region25
  $region24: #{_lambda_.4} parent=0 // pred_region
    _
  $region25: #{_lambda_.4} parent=0 // pred_fallthru
    _
  %v24 = vld [vmem:[%s0] sm:$0xff]
  %v25 = vld [vmem:[%s0 + $0x8] sm:$0xff]
  %v26 = vld [vmem:[%s0 + $0x10] sm:$0x1]
  %v27 = vld [vmem:[%s0 + $0x18] sm:$0xff]
  %v28 = vld [vmem:[%s0 + $0x20] sm:$0xff]
  %v29 = vld [vmem:[%s0 + $0x28] sm:$0x1]
  %v30 = vld [vmem:[%s0 + $0x30] sm:$0xff]
  %v31 = vld [vmem:[%s0 + $0x38] sm:$0xff]
  %v32 = vld [vmem:[%s0 + $0x40] sm:$0x1]
  %v33 = vld [vmem:[%s0 + $0x48] sm:$0xff]
  %v34 = vld [vmem:[%s0 + $0x50] sm:$0xff]
  %v35 = vld [vmem:[%s0 + $0x58] sm:$0x1]
  %v36 = vld [vmem:[%s0 + $0x60] sm:$0xff]
  %v37 = vld [vmem:[%s0 + $0x68] sm:$0xff]
  %v38 = vld [vmem:[%s0 + $0x70] sm:$0x1]
  %v39 = vld [vmem:[%s0 + $0x78] sm:$0xff]
  %v40 = vld [vmem:[%s0 + $0x80] sm:$0xff]
  %v41 = vld [vmem:[%s0 + $0x88] sm:$0x1]
  %v42 = vld [vmem:[%s0 + $0x90] sm:$0xff]
  %v43 = vld [vmem:[%s0 + $0x98] sm:$0xff]
  %v44 = vld [vmem:[%s0 + $0xa0] sm:$0x1]
  %v45 = vld [vmem:[%s0 + $0xa8] sm:$0xff]
  %v46 = vld [vmem:[%s0 + $0xb0] sm:$0xff]
  %v47 = vld [vmem:[%s0 + $0xb8] sm:$0x1]
  %v48 = vld [vmem:[%s0 + $0xc0] sm:$0xff]
  %v49 = vld [vmem:[%s0 + $0xc8] sm:$0xff]
  %v50 = vld [vmem:[%s0 + $0xd0] sm:$0x1]
  %v51 = vld [vmem:[%s0 + $0xd8] sm:$0xff]
  %v52 = vld [vmem:[%s0 + $0xe0] sm:$0xff]
  %v53 = vld [vmem:[%s0 + $0xe8] sm:$0x1]
  %v54 = vld [vmem:[%s0 + $0xf0] sm:$0xff]
  %v55 = vld [vmem:[%s0 + $0xf8] sm:$0xff]
  %v56 = vld [vmem:[%s0 + $0x100] sm:$0x1]
  %v57 = vld [vmem:[%s0 + $0x108] sm:$0xff]
  %v58 = vld [vmem:[%s0 + $0x110] sm:$0xff]
  %v59 = vld [vmem:[%s0 + $0x118] sm:$0x1]
  %v60 = vld [vmem:[%s0 + $0x120] sm:$0xff]
  %v61 = vld [vmem:[%s0 + $0x128] sm:$0xff]
  %v62 = vld [vmem:[%s0 + $0x130] sm:$0x1]
  %v63 = vld [vmem:[%s0 + $0x138] sm:$0xff]
  %v64 = vld [vmem:[%s0 + $0x140] sm:$0xff]
  %v65 = vld [vmem:[%s0 + $0x148] sm:$0x1]
  %v66 = vld [vmem:[%s0 + $0x150] sm:$0xff]
  %v67 = vld [vmem:[%s0 + $0x158] sm:$0xff]
  %v68 = vld [vmem:[%s0 + $0x160] sm:$0x1]
  %v69 = vld [vmem:[%s0 + $0x168] sm:$0xff]
  %v70 = vld [vmem:[%s0 + $0x170] sm:$0xff]
  %v71 = vld [vmem:[%s0 + $0x178] sm:$0x1]
  %v72 = vld [vmem:[%s0 + $0x180] sm:$0xff]
  %v73 = vld [vmem:[%s0 + $0x188] sm:$0xff]
  %v74 = vld [vmem:[%s0 + $0x190] sm:$0x1]
  %v75 = vld [vmem:[%s0 + $0x198] sm:$0xff]
  %v76 = vld [vmem:[%s0 + $0x1a0] sm:$0xff]
  %v77 = vld [vmem:[%s0 + $0x1a8] sm:$0x1]
  %v78 = vld [vmem:[%s0 + $0x1b0] sm:$0xff]
  %v79 = vld [vmem:[%s0 + $0x1b8] sm:$0xff]
  %v80 = vld [vmem:[%s0 + $0x1c0] sm:$0x1]
  %v81 = vld [vmem:[%s0 + $0x1c8] sm:$0xff]
  %v82 = vld [vmem:[%s0 + $0x1d0] sm:$0xff]
  %v83 = vld [vmem:[%s0 + $0x1d8] sm:$0x1]
  %v84 = vld [vmem:[%s0 + $0x1e0] sm:$0xff]
  %v85 = vld [vmem:[%s0 + $0x1e8] sm:$0xff]
  %v86 = vld [vmem:[%s0 + $0x1f0] sm:$0x1]
  %v87 = vld [vmem:[%s0 + $0x1f8] sm:$0xff]
  %v88 = vld [vmem:[%s0 + $0x200] sm:$0xff]
  %v89 = vld [vmem:[%s0 + $0x208] sm:$0x1]
  %v90 = vld [vmem:[%s0 + $0x210] sm:$0xff]
  %v91 = vld [vmem:[%s0 + $0x218] sm:$0xff]
  %v92 = vld [vmem:[%s0 + $0x220] sm:$0x1]
  %v93 = vld [vmem:[%s0 + $0x228] sm:$0xff]
  %v94 = vld [vmem:[%s0 + $0x230] sm:$0xff]
  %v95 = vld [vmem:[%s0 + $0x238] sm:$0x1]
  %v96 = vld [vmem:[%s0 + $0x240] sm:$0xff]
  %v97 = vld [vmem:[%s0 + $0x248] sm:$0xff]
  %v98 = vld [vmem:[%s0 + $0x250] sm:$0x1]
  %v99 = vld [vmem:[%s0 + $0x258] sm:$0xff]
  %v100 = vld [vmem:[%s0 + $0x260] sm:$0xff]
  %v101 = vld [vmem:[%s0 + $0x268] sm:$0x1]
  %v102 = vld [vmem:[%s0 + $0x270] sm:$0xff]
  %v103 = vld [vmem:[%s0 + $0x278] sm:$0xff]
  %v104 = vld [vmem:[%s0 + $0x280] sm:$0x1]
  %v105 = vld [vmem:[%s0 + $0x288] sm:$0xff]
  %v106 = vld [vmem:[%s0 + $0x290] sm:$0xff]
  %v107 = vld [vmem:[%s0 + $0x298] sm:$0x1]
  %v108 = vld [vmem:[%s0 + $0x2a0] sm:$0xff]
  %v109 = vld [vmem:[%s0 + $0x2a8] sm:$0xff]
  %v110 = vld [vmem:[%s0 + $0x2b0] sm:$0x1]
  %v111 = vld [vmem:[%s0 + $0x2b8] sm:$0xff]
  %v112 = vld [vmem:[%s0 + $0x2c0] sm:$0xff]
  %v113 = vld [vmem:[%s0 + $0x2c8] sm:$0x1]
  %v114 = vld [vmem:[%s0 + $0x2d0] sm:$0xff]
  %v115 = vld [vmem:[%s0 + $0x2d8] sm:$0xff]
  %v116 = vld [vmem:[%s0 + $0x2e0] sm:$0x1]
  %v117 = vld [vmem:[%s0 + $0x2e8] sm:$0xff]
  %v118 = vld [vmem:[%s0 + $0x2f0] sm:$0xff]
  %v119 = vld [vmem:[%s0 + $0x2f8] sm:$0x1]
  %v120 = vld [vmem:[%s0 + $0x300] sm:$0xff]
  %v121 = vld [vmem:[%s0 + $0x308] sm:$0xff]
  %v122 = vld [vmem:[%s0 + $0x310] sm:$0x1]
  %v123 = vld [vmem:[%s0 + $0x318] sm:$0xff]
  %v124 = vld [vmem:[%s0 + $0x320] sm:$0xff]
  %v125 = vld [vmem:[%s0 + $0x328] sm:$0x1]
  %v126 = vpack.c.bf16 %v25, %v24
  %v127 = vpack.c.bf16 %v26, %v26
  %v128 = vpack.c.bf16 %v28, %v27
  %v129 = vpack.c.bf16 %v29, %v29
  %v130 = vpack.c.bf16 %v31, %v30
  %v131 = vpack.c.bf16 %v32, %v32
  %v132 = vpack.c.bf16 %v34, %v33
  %v133 = vpack.c.bf16 %v35, %v35
  %v134 = vpack.c.bf16 %v37, %v36
  %v135 = vpack.c.bf16 %v38, %v38
  %v136 = vpack.c.bf16 %v40, %v39
  %v137 = vpack.c.bf16 %v41, %v41
  %v138 = vpack.c.bf16 %v43, %v42
  %v139 = vpack.c.bf16 %v44, %v44
  %v140 = vpack.c.bf16 %v46, %v45
  %v141 = vpack.c.bf16 %v47, %v47
  %v142 = vpack.c.bf16 %v49, %v48
  %v143 = vpack.c.bf16 %v50, %v50
  %v144 = vpack.c.bf16 %v52, %v51
  %v145 = vpack.c.bf16 %v53, %v53
  %v146 = vpack.c.bf16 %v55, %v54
  %v147 = vpack.c.bf16 %v56, %v56
  %v148 = vpack.c.bf16 %v58, %v57
  %v149 = vpack.c.bf16 %v59, %v59
  %v150 = vpack.c.bf16 %v61, %v60
  %v151 = vpack.c.bf16 %v62, %v62
  %v152 = vpack.c.bf16 %v64, %v63
  %v153 = vpack.c.bf16 %v65, %v65
  %v154 = vpack.c.bf16 %v67, %v66
  %v155 = vpack.c.bf16 %v68, %v68
  %v156 = vpack.c.bf16 %v70, %v69
  %v157 = vpack.c.bf16 %v71, %v71
  %v158 = vpack.c.bf16 %v73, %v72
  %v159 = vpack.c.bf16 %v74, %v74
  %v160 = vpack.c.bf16 %v76, %v75
  %v161 = vpack.c.bf16 %v77, %v77
  %v162 = vpack.c.bf16 %v79, %v78
  %v163 = vpack.c.bf16 %v80, %v80
  %v164 = vpack.c.bf16 %v82, %v81
  %v165 = vpack.c.bf16 %v83, %v83
  %v166 = vpack.c.bf16 %v85, %v84
  %v167 = vpack.c.bf16 %v86, %v86
  %v168 = vpack.c.bf16 %v88, %v87
  %v169 = vpack.c.bf16 %v89, %v89
  %v170 = vpack.c.bf16 %v91, %v90
  %v171 = vpack.c.bf16 %v92, %v92
  %v172 = vpack.c.bf16 %v94, %v93
  %v173 = vpack.c.bf16 %v95, %v95
  %v174 = vpack.c.bf16 %v97, %v96
  %v175 = vpack.c.bf16 %v98, %v98
  %v176 = vpack.c.bf16 %v100, %v99
  %v177 = vpack.c.bf16 %v101, %v101
  %v178 = vpack.c.bf16 %v103, %v102
  %v179 = vpack.c.bf16 %v104, %v104
  %v180 = vpack.c.bf16 %v106, %v105
  %v181 = vpack.c.bf16 %v107, %v107
  %v182 = vpack.c.bf16 %v109, %v108
  %v183 = vpack.c.bf16 %v110, %v110
  %v184 = vpack.c.bf16 %v112, %v111
  %v185 = vpack.c.bf16 %v113, %v113
  %v186 = vpack.c.bf16 %v115, %v114
  %v187 = vpack.c.bf16 %v116, %v116
  %v188 = vpack.c.bf16 %v118, %v117
  %v189 = vpack.c.bf16 %v119, %v119
  %v190 = vpack.c.bf16 %v121, %v120
  %v191 = vpack.c.bf16 %v122, %v122
  %v192 = vpack.c.bf16 %v124, %v123
  %v193 = vpack.c.bf16 %v125, %v125
  %v194 = vld [vmem:[%s1] sm:$0xff]
  %v195 = vld [vmem:[%s1 + $0x8] sm:$0xff]
  %v196 = vld [vmem:[%s1 + $0x18] sm:$0xff]
  %v197 = vld [vmem:[%s1 + $0x20] sm:$0xff]
  %v198 = vld [vmem:[%s1 + $0x30] sm:$0xff]
  %v199 = vld [vmem:[%s1 + $0x38] sm:$0xff]
  %v200 = vld [vmem:[%s1 + $0x48] sm:$0xff]
  %v201 = vld [vmem:[%s1 + $0x50] sm:$0xff]
  %v202 = vld [vmem:[%s1 + $0x60] sm:$0xff]
  %v203 = vld [vmem:[%s1 + $0x68] sm:$0xff]
  %v204 = vld [vmem:[%s1 + $0x78] sm:$0xff]
  %v205 = vld [vmem:[%s1 + $0x80] sm:$0xff]
  %v206 = vld [vmem:[%s1 + $0x90] sm:$0xff]
  %v207 = vld [vmem:[%s1 + $0x98] sm:$0xff]
  %v208 = vld [vmem:[%s1 + $0xa8] sm:$0xff]
  %v209 = vld [vmem:[%s1 + $0xb0] sm:$0xff]
  %v210 = vld [vmem:[%s1 + $0xc0] sm:$0xff]
  %v211 = vld [vmem:[%s1 + $0xc8] sm:$0xff]
  %v212 = vld [vmem:[%s1 + $0xd8] sm:$0xff]
  %v213 = vld [vmem:[%s1 + $0xe0] sm:$0xff]
  %v214 = vld [vmem:[%s1 + $0xf0] sm:$0xff]
  %v215 = vld [vmem:[%s1 + $0xf8] sm:$0xff]
  %v216 = vld [vmem:[%s1 + $0x108] sm:$0xff]
  %v217 = vld [vmem:[%s1 + $0x110] sm:$0xff]
  %v218 = vld [vmem:[%s1 + $0x120] sm:$0xff]
  %v219 = vld [vmem:[%s1 + $0x128] sm:$0xff]
  %v220 = vld [vmem:[%s1 + $0x138] sm:$0xff]
  %v221 = vld [vmem:[%s1 + $0x140] sm:$0xff]
  %v222 = vld [vmem:[%s1 + $0x150] sm:$0xff]
  %v223 = vld [vmem:[%s1 + $0x158] sm:$0xff]
  %v224 = vld [vmem:[%s1 + $0x168] sm:$0xff]
  %v225 = vld [vmem:[%s1 + $0x170] sm:$0xff]
  %v226 = vld [vmem:[%s1 + $0x180] sm:$0xff]
  %v227 = vld [vmem:[%s1 + $0x188] sm:$0xff]
  %v228 = vld [vmem:[%s1 + $0x198] sm:$0xff]
  %v229 = vld [vmem:[%s1 + $0x1a0] sm:$0xff]
  %v230 = vld [vmem:[%s1 + $0x1b0] sm:$0xff]
  %v231 = vld [vmem:[%s1 + $0x1b8] sm:$0xff]
  %v232 = vld [vmem:[%s1 + $0x1c8] sm:$0xff]
  %v233 = vld [vmem:[%s1 + $0x1d0] sm:$0xff]
  %v234 = vld [vmem:[%s1 + $0x1e0] sm:$0xff]
  %v235 = vld [vmem:[%s1 + $0x1e8] sm:$0xff]
  %v236 = vld [vmem:[%s1 + $0x1f8] sm:$0xff]
  %v237 = vld [vmem:[%s1 + $0x200] sm:$0xff]
  %v238 = vld [vmem:[%s1 + $0x210] sm:$0xff]
  %v239 = vld [vmem:[%s1 + $0x218] sm:$0xff]
  %v240 = vld [vmem:[%s1 + $0x228] sm:$0xff]
  %v241 = vld [vmem:[%s1 + $0x230] sm:$0xff]
  %v242 = vld [vmem:[%s1 + $0x240] sm:$0xff]
  %v243 = vld [vmem:[%s1 + $0x248] sm:$0xff]
  %v244 = vld [vmem:[%s1 + $0x258] sm:$0xff]
  %v245 = vld [vmem:[%s1 + $0x260] sm:$0xff]
  %v246 = vld [vmem:[%s1 + $0x270] sm:$0xff]
  %v247 = vld [vmem:[%s1 + $0x278] sm:$0xff]
  %v248 = vld [vmem:[%s1 + $0x288] sm:$0xff]
  %v249 = vld [vmem:[%s1 + $0x290] sm:$0xff]
  %v250 = vld [vmem:[%s1 + $0x2a0] sm:$0xff]
  %v251 = vld [vmem:[%s1 + $0x2a8] sm:$0xff]
  %v252 = vld [vmem:[%s1 + $0x2b8] sm:$0xff]
  %v253 = vld [vmem:[%s1 + $0x2c0] sm:$0xff]
  %v254 = vld [vmem:[%s1 + $0x2d0] sm:$0xff]
  %v255 = vld [vmem:[%s1 + $0x2d8] sm:$0xff]
  %v256 = vld [vmem:[%s1 + $0x2e8] sm:$0xff]
  %v257 = vld [vmem:[%s1 + $0x2f0] sm:$0xff]
  %v258 = vld [vmem:[%s1 + $0x300] sm:$0xff]
  %v259 = vld [vmem:[%s1 + $0x308] sm:$0xff]
  %v260 = vld [vmem:[%s1 + $0x318] sm:$0xff]
  %v261 = vld [vmem:[%s1 + $0x320] sm:$0xff]
  %v262 = vpack.c.bf16 %v195, %v194
  %v263 = vpack.c.bf16 %v197, %v196
  %v264 = vpack.c.bf16 %v199, %v198
  %v265 = vpack.c.bf16 %v201, %v200
  %v266 = vpack.c.bf16 %v203, %v202
  %v267 = vpack.c.bf16 %v205, %v204
  %v268 = vpack.c.bf16 %v207, %v206
  %v269 = vpack.c.bf16 %v209, %v208
  %v270 = vpack.c.bf16 %v211, %v210
  %v271 = vpack.c.bf16 %v213, %v212
  %v272 = vpack.c.bf16 %v215, %v214
  %v273 = vpack.c.bf16 %v217, %v216
  %v274 = vpack.c.bf16 %v219, %v218
  %v275 = vpack.c.bf16 %v221, %v220
  %v276 = vpack.c.bf16 %v223, %v222
  %v277 = vpack.c.bf16 %v225, %v224
  %v278 = vpack.c.bf16 %v227, %v226
  %v279 = vpack.c.bf16 %v229, %v228
  %v280 = vpack.c.bf16 %v231, %v230
  %v281 = vpack.c.bf16 %v233, %v232
  %v282 = vpack.c.bf16 %v235, %v234
  %v283 = vpack.c.bf16 %v237, %v236
  %v284 = vpack.c.bf16 %v239, %v238
  %v285 = vpack.c.bf16 %v241, %v240
  %v286 = vpack.c.bf16 %v243, %v242
  %v287 = vpack.c.bf16 %v245, %v244
  %v288 = vpack.c.bf16 %v247, %v246
  %v289 = vpack.c.bf16 %v249, %v248
  %v290 = vpack.c.bf16 %v251, %v250
  %v291 = vpack.c.bf16 %v253, %v252
  %v292 = vpack.c.bf16 %v255, %v254
  %v293 = vpack.c.bf16 %v257, %v256
  %v294 = vpack.c.bf16 %v259, %v258
  %v295 = vpack.c.bf16 %v261, %v260
  %v296 = vld [vmem:[%s2] sm:$0xff]
  %v297 = vld [vmem:[%s2 + $0x8] sm:$0xff]
  %v298 = vld [vmem:[%s2 + $0x10] sm:$0x1]
  %v299 = vld [vmem:[%s2 + $0x18] sm:$0xff]
  %v300 = vld [vmem:[%s2 + $0x20] sm:$0xff]
  %v301 = vld [vmem:[%s2 + $0x28] sm:$0x1]
  %v302 = vld [vmem:[%s2 + $0x30] sm:$0xff]
  %v303 = vld [vmem:[%s2 + $0x38] sm:$0xff]
  %v304 = vld [vmem:[%s2 + $0x40] sm:$0x1]
  %v305 = vld [vmem:[%s2 + $0x48] sm:$0xff]
  %v306 = vld [vmem:[%s2 + $0x50] sm:$0xff]
  %v307 = vld [vmem:[%s2 + $0x58] sm:$0x1]
  %v308 = vld [vmem:[%s2 + $0x60] sm:$0xff]
  %v309 = vld [vmem:[%s2 + $0x68] sm:$0xff]
  %v310 = vld [vmem:[%s2 + $0x70] sm:$0x1]
  %v311 = vld [vmem:[%s2 + $0x78] sm:$0xff]
  %v312 = vld [vmem:[%s2 + $0x80] sm:$0xff]
  %v313 = vld [vmem:[%s2 + $0x88] sm:$0x1]
  %v314 = vld [vmem:[%s2 + $0x90] sm:$0xff]
  %v315 = vld [vmem:[%s2 + $0x98] sm:$0xff]
  %v316 = vld [vmem:[%s2 + $0xa0] sm:$0x1]
  %v317 = vld [vmem:[%s2 + $0xa8] sm:$0xff]
  %v318 = vld [vmem:[%s2 + $0xb0] sm:$0xff]
  %v319 = vld [vmem:[%s2 + $0xb8] sm:$0x1]
  %v320 = vld [vmem:[%s2 + $0xc0] sm:$0xff]
  %v321 = vld [vmem:[%s2 + $0xc8] sm:$0xff]
  %v322 = vld [vmem:[%s2 + $0xd0] sm:$0x1]
  %v323 = vld [vmem:[%s2 + $0xd8] sm:$0xff]
  %v324 = vld [vmem:[%s2 + $0xe0] sm:$0xff]
  %v325 = vld [vmem:[%s2 + $0xe8] sm:$0x1]
  %v326 = vld [vmem:[%s2 + $0xf0] sm:$0xff]
  %v327 = vld [vmem:[%s2 + $0xf8] sm:$0xff]
  %v328 = vld [vmem:[%s2 + $0x100] sm:$0x1]
  %v329 = vld [vmem:[%s2 + $0x108] sm:$0xff]
  %v330 = vld [vmem:[%s2 + $0x110] sm:$0xff]
  %v331 = vld [vmem:[%s2 + $0x118] sm:$0x1]
  %v332 = vld [vmem:[%s2 + $0x120] sm:$0xff]
  %v333 = vld [vmem:[%s2 + $0x128] sm:$0xff]
  %v334 = vld [vmem:[%s2 + $0x130] sm:$0x1]
  %v335 = vld [vmem:[%s2 + $0x138] sm:$0xff]
  %v336 = vld [vmem:[%s2 + $0x140] sm:$0xff]
  %v337 = vld [vmem:[%s2 + $0x148] sm:$0x1]
  %v338 = vld [vmem:[%s2 + $0x150] sm:$0xff]
  %v339 = vld [vmem:[%s2 + $0x158] sm:$0xff]
  %v340 = vld [vmem:[%s2 + $0x160] sm:$0x1]
  %v341 = vld [vmem:[%s2 + $0x168] sm:$0xff]
  %v342 = vld [vmem:[%s2 + $0x170] sm:$0xff]
  %v343 = vld [vmem:[%s2 + $0x178] sm:$0x1]
  %v344 = vld [vmem:[%s2 + $0x198] sm:$0xff]
  %v345 = vld [vmem:[%s2 + $0x1a0] sm:$0xff]
  %v346 = vld [vmem:[%s2 + $0x1a8] sm:$0x1]
  %v347 = vld [vmem:[%s2 + $0x1b0] sm:$0xff]
  %v348 = vld [vmem:[%s2 + $0x1b8] sm:$0xff]
  %v349 = vld [vmem:[%s2 + $0x1c0] sm:$0x1]
  %v350 = vld [vmem:[%s2 + $0x1c8] sm:$0xff]
  %v351 = vld [vmem:[%s2 + $0x1d0] sm:$0xff]
  %v352 = vld [vmem:[%s2 + $0x1d8] sm:$0x1]
  %v353 = vld [vmem:[%s2 + $0x1e0] sm:$0xff]
  %v354 = vld [vmem:[%s2 + $0x1e8] sm:$0xff]
  %v355 = vld [vmem:[%s2 + $0x1f0] sm:$0x1]
  %v356 = vld [vmem:[%s2 + $0x1f8] sm:$0xff]
  %v357 = vld [vmem:[%s2 + $0x200] sm:$0xff]
  %v358 = vld [vmem:[%s2 + $0x208] sm:$0x1]
  %v359 = vld [vmem:[%s2 + $0x210] sm:$0xff]
  %v360 = vld [vmem:[%s2 + $0x218] sm:$0xff]
  %v361 = vld [vmem:[%s2 + $0x220] sm:$0x1]
  %v362 = vld [vmem:[%s2 + $0x228] sm:$0xff]
  %v363 = vld [vmem:[%s2 + $0x230] sm:$0xff]
  %v364 = vld [vmem:[%s2 + $0x238] sm:$0x1]
  %v365 = vld [vmem:[%s2 + $0x240] sm:$0xff]
  %v366 = vld [vmem:[%s2 + $0x248] sm:$0xff]
  %v367 = vld [vmem:[%s2 + $0x250] sm:$0x1]
  %v368 = vld [vmem:[%s2 + $0x258] sm:$0xff]
  %v369 = vld [vmem:[%s2 + $0x260] sm:$0xff]
  %v370 = vld [vmem:[%s2 + $0x268] sm:$0x1]
  %v371 = vld [vmem:[%s2 + $0x270] sm:$0xff]
  %v372 = vld [vmem:[%s2 + $0x278] sm:$0xff]
  %v373 = vld [vmem:[%s2 + $0x280] sm:$0x1]
  %v374 = vld [vmem:[%s2 + $0x288] sm:$0xff]
  %v375 = vld [vmem:[%s2 + $0x290] sm:$0xff]
  %v376 = vld [vmem:[%s2 + $0x298] sm:$0x1]
  %v377 = vld [vmem:[%s2 + $0x2a0] sm:$0xff]
  %v378 = vld [vmem:[%s2 + $0x2a8] sm:$0xff]
  %v379 = vld [vmem:[%s2 + $0x2b0] sm:$0x1]
  %v380 = vld [vmem:[%s2 + $0x2b8] sm:$0xff]
  %v381 = vld [vmem:[%s2 + $0x2c0] sm:$0xff]
  %v382 = vld [vmem:[%s2 + $0x2c8] sm:$0x1]
  %v383 = vld [vmem:[%s2 + $0x2d0] sm:$0xff]
  %v384 = vld [vmem:[%s2 + $0x2d8] sm:$0xff]
  %v385 = vld [vmem:[%s2 + $0x2e0] sm:$0x1]
  %v386 = vld [vmem:[%s2 + $0x2e8] sm:$0xff]
  %v387 = vld [vmem:[%s2 + $0x2f0] sm:$0xff]
  %v388 = vld [vmem:[%s2 + $0x2f8] sm:$0x1]
  %v389 = vld [vmem:[%s2 + $0x300] sm:$0xff]
  %v390 = vld [vmem:[%s2 + $0x308] sm:$0xff]
  %v391 = vld [vmem:[%s2 + $0x310] sm:$0x1]
  %v392 = vpack.c.bf16 %v297, %v296
  %v393 = vpack.c.bf16 %v298, %v298
  %v394 = vpack.c.bf16 %v300, %v299
  %v395 = vpack.c.bf16 %v301, %v301
  %v396 = vpack.c.bf16 %v303, %v302
  %v397 = vpack.c.bf16 %v304, %v304
  %v398 = vpack.c.bf16 %v306, %v305
  %v399 = vpack.c.bf16 %v307, %v307
  %v400 = vpack.c.bf16 %v309, %v308
  %v401 = vpack.c.bf16 %v310, %v310
  %v402 = vpack.c.bf16 %v312, %v311
  %v403 = vpack.c.bf16 %v313, %v313
  %v404 = vpack.c.bf16 %v315, %v314
  %v405 = vpack.c.bf16 %v316, %v316
  %v406 = vpack.c.bf16 %v318, %v317
  %v407 = vpack.c.bf16 %v319, %v319
  %v408 = vpack.c.bf16 %v321, %v320
  %v409 = vpack.c.bf16 %v322, %v322
  %v410 = vpack.c.bf16 %v324, %v323
  %v411 = vpack.c.bf16 %v325, %v325
  %v412 = vpack.c.bf16 %v327, %v326
  %v413 = vpack.c.bf16 %v328, %v328
  %v414 = vpack.c.bf16 %v330, %v329
  %v415 = vpack.c.bf16 %v331, %v331
  %v416 = vpack.c.bf16 %v333, %v332
  %v417 = vpack.c.bf16 %v334, %v334
  %v418 = vpack.c.bf16 %v336, %v335
  %v419 = vpack.c.bf16 %v337, %v337
  %v420 = vpack.c.bf16 %v339, %v338
  %v421 = vpack.c.bf16 %v340, %v340
  %v422 = vpack.c.bf16 %v342, %v341
  %v423 = vpack.c.bf16 %v343, %v343
  %v424 = vpack.c.bf16 %v345, %v344
  %v425 = vpack.c.bf16 %v346, %v346
  %v426 = vpack.c.bf16 %v348, %v347
  %v427 = vpack.c.bf16 %v349, %v349
  %v428 = vpack.c.bf16 %v351, %v350
  %v429 = vpack.c.bf16 %v352, %v352
  %v430 = vpack.c.bf16 %v354, %v353
  %v431 = vpack.c.bf16 %v355, %v355
  %v432 = vpack.c.bf16 %v357, %v356
  %v433 = vpack.c.bf16 %v358, %v358
  %v434 = vpack.c.bf16 %v360, %v359
  %v435 = vpack.c.bf16 %v361, %v361
  %v436 = vpack.c.bf16 %v363, %v362
  %v437 = vpack.c.bf16 %v364, %v364
  %v438 = vpack.c.bf16 %v366, %v365
  %v439 = vpack.c.bf16 %v367, %v367
  %v440 = vpack.c.bf16 %v369, %v368
  %v441 = vpack.c.bf16 %v370, %v370
  %v442 = vpack.c.bf16 %v372, %v371
  %v443 = vpack.c.bf16 %v373, %v373
  %v444 = vpack.c.bf16 %v375, %v374
  %v445 = vpack.c.bf16 %v376, %v376
  %v446 = vpack.c.bf16 %v378, %v377
  %v447 = vpack.c.bf16 %v379, %v379
  %v448 = vpack.c.bf16 %v381, %v380
  %v449 = vpack.c.bf16 %v382, %v382
  %v450 = vpack.c.bf16 %v384, %v383
  %v451 = vpack.c.bf16 %v385, %v385
  %v452 = vpack.c.bf16 %v387, %v386
  %v453 = vpack.c.bf16 %v388, %v388
  %v454 = vpack.c.bf16 %v390, %v389
  %v455 = vpack.c.bf16 %v391, %v391
  %v456 = vld [vmem:[%s3] sm:$0xff]
  %v457 = vld [vmem:[%s3 + $0x8] sm:$0xff]
  %v458 = vld [vmem:[%s3 + $0x18] sm:$0xff]
  %v459 = vld [vmem:[%s3 + $0x20] sm:$0xff]
  %v460 = vld [vmem:[%s3 + $0x30] sm:$0xff]
  %v461 = vld [vmem:[%s3 + $0x38] sm:$0xff]
  %v462 = vld [vmem:[%s3 + $0x48] sm:$0xff]
  %v463 = vld [vmem:[%s3 + $0x50] sm:$0xff]
  %v464 = vld [vmem:[%s3 + $0x60] sm:$0xff]
  %v465 = vld [vmem:[%s3 + $0x68] sm:$0xff]
  %v466 = vld [vmem:[%s3 + $0x78] sm:$0xff]
  %v467 = vld [vmem:[%s3 + $0x80] sm:$0xff]
  %v468 = vld [vmem:[%s3 + $0x90] sm:$0xff]
  %v469 = vld [vmem:[%s3 + $0x98] sm:$0xff]
  %v470 = vld [vmem:[%s3 + $0xa8] sm:$0xff]
  %v471 = vld [vmem:[%s3 + $0xb0] sm:$0xff]
  %v472 = vld [vmem:[%s3 + $0xc0] sm:$0xff]
  %v473 = vld [vmem:[%s3 + $0xc8] sm:$0xff]
  %v474 = vld [vmem:[%s3 + $0xd8] sm:$0xff]
  %v475 = vld [vmem:[%s3 + $0xe0] sm:$0xff]
  %v476 = vld [vmem:[%s3 + $0xf0] sm:$0xff]
  %v477 = vld [vmem:[%s3 + $0xf8] sm:$0xff]
  %v478 = vld [vmem:[%s3 + $0x108] sm:$0xff]
  %v479 = vld [vmem:[%s3 + $0x110] sm:$0xff]
  %v480 = vld [vmem:[%s3 + $0x120] sm:$0xff]
  %v481 = vld [vmem:[%s3 + $0x128] sm:$0xff]
  %v482 = vld [vmem:[%s3 + $0x138] sm:$0xff]
  %v483 = vld [vmem:[%s3 + $0x140] sm:$0xff]
  %v484 = vld [vmem:[%s3 + $0x150] sm:$0xff]
  %v485 = vld [vmem:[%s3 + $0x158] sm:$0xff]
  %v486 = vld [vmem:[%s3 + $0x168] sm:$0xff]
  %v487 = vld [vmem:[%s3 + $0x170] sm:$0xff]
  %v488 = vld [vmem:[%s3 + $0x198] sm:$0xff]
  %v489 = vld [vmem:[%s3 + $0x1a0] sm:$0xff]
  %v490 = vld [vmem:[%s3 + $0x1b0] sm:$0xff]
  %v491 = vld [vmem:[%s3 + $0x1b8] sm:$0xff]
  %v492 = vld [vmem:[%s3 + $0x1c8] sm:$0xff]
  %v493 = vld [vmem:[%s3 + $0x1d0] sm:$0xff]
  %v494 = vld [vmem:[%s3 + $0x1e0] sm:$0xff]
  %v495 = vld [vmem:[%s3 + $0x1e8] sm:$0xff]
  %v496 = vld [vmem:[%s3 + $0x1f8] sm:$0xff]
  %v497 = vld [vmem:[%s3 + $0x200] sm:$0xff]
  %v498 = vld [vmem:[%s3 + $0x210] sm:$0xff]
  %v499 = vld [vmem:[%s3 + $0x218] sm:$0xff]
  %v500 = vld [vmem:[%s3 + $0x228] sm:$0xff]
  %v501 = vld [vmem:[%s3 + $0x230] sm:$0xff]
  %v502 = vld [vmem:[%s3 + $0x240] sm:$0xff]
  %v503 = vld [vmem:[%s3 + $0x248] sm:$0xff]
  %v504 = vld [vmem:[%s3 + $0x258] sm:$0xff]
  %v505 = vld [vmem:[%s3 + $0x260] sm:$0xff]
  %v506 = vld [vmem:[%s3 + $0x270] sm:$0xff]
  %v507 = vld [vmem:[%s3 + $0x278] sm:$0xff]
  %v508 = vld [vmem:[%s3 + $0x288] sm:$0xff]
  %v509 = vld [vmem:[%s3 + $0x290] sm:$0xff]
  %v510 = vld [vmem:[%s3 + $0x2a0] sm:$0xff]
  %v511 = vld [vmem:[%s3 + $0x2a8] sm:$0xff]
  %v512 = vld [vmem:[%s3 + $0x2b8] sm:$0xff]
  %v513 = vld [vmem:[%s3 + $0x2c0] sm:$0xff]
  %v514 = vld [vmem:[%s3 + $0x2d0] sm:$0xff]
  %v515 = vld [vmem:[%s3 + $0x2d8] sm:$0xff]
  %v516 = vld [vmem:[%s3 + $0x2e8] sm:$0xff]
  %v517 = vld [vmem:[%s3 + $0x2f0] sm:$0xff]
  %v518 = vld [vmem:[%s3 + $0x300] sm:$0xff]
  %v519 = vld [vmem:[%s3 + $0x308] sm:$0xff]
  %v520 = vpack.c.bf16 %v457, %v456
  %v521 = vpack.c.bf16 %v459, %v458
  %v522 = vpack.c.bf16 %v461, %v460
  %v523 = vpack.c.bf16 %v463, %v462
  %v524 = vpack.c.bf16 %v465, %v464
  %v525 = vpack.c.bf16 %v467, %v466
  %v526 = vpack.c.bf16 %v469, %v468
  %v527 = vpack.c.bf16 %v471, %v470
  %v528 = vpack.c.bf16 %v473, %v472
  %v529 = vpack.c.bf16 %v475, %v474
  %v530 = vpack.c.bf16 %v477, %v476
  %v531 = vpack.c.bf16 %v479, %v478
  %v532 = vpack.c.bf16 %v481, %v480
  %v533 = vpack.c.bf16 %v483, %v482
  %v534 = vpack.c.bf16 %v485, %v484
  %v535 = vpack.c.bf16 %v487, %v486
  %v536 = vpack.c.bf16 %v489, %v488
  %v537 = vpack.c.bf16 %v491, %v490
  %v538 = vpack.c.bf16 %v493, %v492
  %v539 = vpack.c.bf16 %v495, %v494
  %v540 = vpack.c.bf16 %v497, %v496
  %v541 = vpack.c.bf16 %v499, %v498
  %v542 = vpack.c.bf16 %v501, %v500
  %v543 = vpack.c.bf16 %v503, %v502
  %v544 = vpack.c.bf16 %v505, %v504
  %v545 = vpack.c.bf16 %v507, %v506
  %v546 = vpack.c.bf16 %v509, %v508
  %v547 = vpack.c.bf16 %v511, %v510
  %v548 = vpack.c.bf16 %v513, %v512
  %v549 = vpack.c.bf16 %v515, %v514
  %v550 = vpack.c.bf16 %v517, %v516
  %v551 = vpack.c.bf16 %v519, %v518
  %v552 = vld [vmem:[%s4] sm:$0x3]
  %s553 = scalar_lea.vmem %s4, 2
  %v554 = vld [vmem:[%s553] sm:$0x3]
  %vm555 = vcmask 23552
  %v557 = vsel %vm555, %v262, 0
  %v560 = vsel %vm555, %v263, 0
  %v563 = vsel %vm555, %v264, 0
  %v566 = vsel %vm555, %v265, 0
  %v569 = vsel %vm555, %v266, 0
  %v572 = vsel %vm555, %v267, 0
  %v575 = vsel %vm555, %v268, 0
  %v578 = vsel %vm555, %v269, 0
  %v581 = vsel %vm555, %v270, 0
  %v584 = vsel %vm555, %v271, 0
  %v587 = vsel %vm555, %v272, 0
  %v590 = vsel %vm555, %v273, 0
  %v593 = vsel %vm555, %v274, 0
  %v596 = vsel %vm555, %v275, 0
  %v599 = vsel %vm555, %v276, 0
  %v602 = vsel %vm555, %v277, 0
  %v605 = vsel %vm555, %v279, 0
  %v608 = vsel %vm555, %v280, 0
  %v611 = vsel %vm555, %v281, 0
  %v614 = vsel %vm555, %v282, 0
  %v617 = vsel %vm555, %v283, 0
  %v620 = vsel %vm555, %v284, 0
  %v623 = vsel %vm555, %v285, 0
  %v626 = vsel %vm555, %v286, 0
  %v629 = vsel %vm555, %v287, 0
  %v632 = vsel %vm555, %v288, 0
  %v635 = vsel %vm555, %v289, 0
  %v638 = vsel %vm555, %v290, 0
  %v641 = vsel %vm555, %v291, 0
  %v644 = vsel %vm555, %v292, 0
  %v647 = vsel %vm555, %v293, 0
  %v650 = vsel %vm555, %v294, 0
  %vm652 = vcmask 1040384
  %vm653 = vcmask 1041408
  %v654 = vsel %vm652, 4294967295, 65535
  %v655 = vsel %vm653, %v654, 0
  %v657 = vand.u32 %v554, %v655
  %659 = vmatprep.subr.bf16.mxu0 0
  %660 = vmatpush1.bf16.msra.mxu0 %v657
  %661 = vmatprep.subr.bf16.mxu0 0
  %662 = vmatpush1.bf16.msra.mxu0 0
  %663 = vmatprep.subr.bf16.mxu0 0
  %664 = vmatpush1.bf16.msra.mxu0 0
  %665 = vmatprep.subr.bf16.mxu0 0
  %666 = vmatpush1.bf16.msra.mxu0 0
  %667 = vmatprep.subr.bf16.mxu0 0
  %668 = vmatpush1.bf16.msra.mxu0 0
  %669 = vmatprep.subr.bf16.mxu0 0
  %670 = vmatpush1.bf16.msra.mxu0 0
  %671 = vmatprep.subr.bf16.mxu0 0
  %672 = vmatpush1.bf16.msra.mxu0 0
  %673 = vmatprep.subr.bf16.mxu0 0
  %674 = vmatpush1.bf16.msra.mxu0 0
  %675 = vmatprep.subr.bf16.mxu0 0
  %676 = vmatpush1.bf16.msra.mxu0 0
  %677 = vmatprep.subr.bf16.mxu0 0
  %678 = vmatpush1.bf16.msra.mxu0 0
  %679 = vmatprep.subr.bf16.mxu0 0
  %680 = vmatpush1.bf16.msra.mxu0 0
  %681 = vmatprep.subr.bf16.mxu0 0
  %682 = vmatpush1.bf16.msra.mxu0 0
  %683 = vmatprep.subr.bf16.mxu0 0
  %684 = vmatpush1.bf16.msra.mxu0 0
  %685 = vmatprep.subr.bf16.mxu0 0
  %686 = vmatpush1.bf16.msra.mxu0 0
  %687 = vmatprep.subr.bf16.mxu0 0
  %688 = vmatpush1.bf16.msra.mxu0 0
  %689 = vmatprep.subr.bf16.mxu0 0
  %690 = vmatpush1.bf16.msra.mxu0 0
  %691 = vmatprep.mubr.bf16.mxu0 0
  %692 = vmatmul.mubr.bf16.gmra.mrb[0].mxu0 %v557
  %v693 = vpop.f32.mrb[0].mxu0
  %v694 = vadd.f32 0.0, %v693
  %v695 = vpop.f32.mrb[0].mxu0
  %v696 = vpop.f32.mrb[0].mxu0
  %v697 = vadd.f32 0.0, %v696
  %v698 = vpop.f32.mrb[0].mxu0
  %699 = vmatprep.mubr.bf16.mxu0 0
  %700 = vmatmul.mubr.bf16.gmra.mrb[0].mxu0 %v560
  %v701 = vpop.f32.mrb[0].mxu0
  %v702 = vadd.f32 0.0, %v701
  %v703 = vpop.f32.mrb[0].mxu0
  %v704 = vpop.f32.mrb[0].mxu0
  %v705 = vadd.f32 0.0, %v704
  %v706 = vpop.f32.mrb[0].mxu0
  %707 = vmatprep.mubr.bf16.mxu0 0
  %708 = vmatmul.mubr.bf16.gmra.mrb[0].mxu0 %v563
  %v709 = vpop.f32.mrb[0].mxu0
  %v710 = vadd.f32 0.0, %v709
  %v711 = vpop.f32.mrb[0].mxu0
  %v712 = vpop.f32.mrb[0].mxu0
  %v713 = vadd.f32 0.0, %v712
  %v714 = vpop.f32.mrb[0].mxu0
  %715 = vmatprep.mubr.bf16.mxu0 0
  %716 = vmatmul.mubr.bf16.gmra.mrb[0].mxu0 %v566
  %v717 = vpop.f32.mrb[0].mxu0
  %v718 = vadd.f32 0.0, %v717
  %v719 = vpop.f32.mrb[0].mxu0
  %v720 = vpop.f32.mrb[0].mxu0
  %v721 = vadd.f32 0.0, %v720
  %v722 = vpop.f32.mrb[0].mxu0
  %723 = vmatprep.mubr.bf16.mxu0 0
  %724 = vmatmul.mubr.bf16.gmra.mrb[0].mxu0 %v569
  %v725 = vpop.f32.mrb[0].mxu0
  %v726 = vadd.f32 0.0, %v725
  %v727 = vpop.f32.mrb[0].mxu0
  %v728 = vpop.f32.mrb[0].mxu0
  %v729 = vadd.f32 0.0, %v728
  %v730 = vpop.f32.mrb[0].mxu0
  %731 = vmatprep.mubr.bf16.mxu0 0
  %732 = vmatmul.mubr.bf16.gmra.mrb[0].mxu0 %v572
  %v733 = vpop.f32.mrb[0].mxu0
  %v734 = vadd.f32 0.0, %v733
  %v735 = vpop.f32.mrb[0].mxu0
  %v736 = vpop.f32.mrb[0].mxu0
  %v737 = vadd.f32 0.0, %v736
  %v738 = vpop.f32.mrb[0].mxu0
  %739 = vmatprep.mubr.bf16.mxu0 0
  %740 = vmatmul.mubr.bf16.gmra.mrb[0].mxu0 %v575
  %v741 = vpop.f32.mrb[0].mxu0
  %v742 = vadd.f32 0.0, %v741
  %v743 = vpop.f32.mrb[0].mxu0
  %v744 = vpop.f32.mrb[0].mxu0
  %v745 = vadd.f32 0.0, %v744
  %v746 = vpop.f32.mrb[0].mxu0
  %747 = vmatprep.mubr.bf16.mxu0 0
  %748 = vmatmul.mubr.bf16.gmra.mrb[0].mxu0 %v578
  %v749 = vpop.f32.mrb[0].mxu0
  %v750 = vadd.f32 0.0, %v749
  %v751 = vpop.f32.mrb[0].mxu0
  %v752 = vpop.f32.mrb[0].mxu0
  %v753 = vadd.f32 0.0, %v752
  %v754 = vpop.f32.mrb[0].mxu0
  %755 = vmatprep.mubr.bf16.mxu0 0
  %756 = vmatmul.mubr.bf16.gmra.mrb[0].mxu0 %v581
  %v757 = vpop.f32.mrb[0].mxu0
  %v758 = vadd.f32 0.0, %v757
  %v759 = vpop.f32.mrb[0].mxu0
  %v760 = vpop.f32.mrb[0].mxu0
  %v761 = vadd.f32 0.0, %v760
  %v762 = vpop.f32.mrb[0].mxu0
  %763 = vmatprep.mubr.bf16.mxu0 0
  %764 = vmatmul.mubr.bf16.gmra.mrb[0].mxu0 %v584
  %v765 = vpop.f32.mrb[0].mxu0
  %v766 = vadd.f32 0.0, %v765
  %v767 = vpop.f32.mrb[0].mxu0
  %v768 = vpop.f32.mrb[0].mxu0
  %v769 = vadd.f32 0.0, %v768
  %v770 = vpop.f32.mrb[0].mxu0
  %771 = vmatprep.mubr.bf16.mxu0 0
  %772 = vmatmul.mubr.bf16.gmra.mrb[0].mxu0 %v587
  %v773 = vpop.f32.mrb[0].mxu0
  %v774 = vadd.f32 0.0, %v773
  %v775 = vpop.f32.mrb[0].mxu0
  %v776 = vpop.f32.mrb[0].mxu0
  %v777 = vadd.f32 0.0, %v776
  %v778 = vpop.f32.mrb[0].mxu0
  %779 = vmatprep.mubr.bf16.mxu0 0
  %780 = vmatmul.mubr.bf16.gmra.mrb[0].mxu0 %v590
  %v781 = vpop.f32.mrb[0].mxu0
  %v782 = vadd.f32 0.0, %v781
  %v783 = vpop.f32.mrb[0].mxu0
  %v784 = vpop.f32.mrb[0].mxu0
  %v785 = vadd.f32 0.0, %v784
  %v786 = vpop.f32.mrb[0].mxu0
  %787 = vmatprep.mubr.bf16.mxu0 0
  %788 = vmatmul.mubr.bf16.gmra.mrb[0].mxu0 %v593
  %v789 = vpop.f32.mrb[0].mxu0
  %v790 = vadd.f32 0.0, %v789
  %v791 = vpop.f32.mrb[0].mxu0
  %v792 = vpop.f32.mrb[0].mxu0
  %v793 = vadd.f32 0.0, %v792
  %v794 = vpop.f32.mrb[0].mxu0
  %795 = vmatprep.mubr.bf16.mxu0 0
  %796 = vmatmul.mubr.bf16.gmra.mrb[0].mxu0 %v596
  %v797 = vpop.f32.mrb[0].mxu0
  %v798 = vadd.f32 0.0, %v797
  %v799 = vpop.f32.mrb[0].mxu0
  %v800 = vpop.f32.mrb[0].mxu0
  %v801 = vadd.f32 0.0, %v800
  %v802 = vpop.f32.mrb[0].mxu0
  %803 = vmatprep.mubr.bf16.mxu0 0
  %804 = vmatmul.mubr.bf16.gmra.mrb[0].mxu0 %v599
  %v805 = vpop.f32.mrb[0].mxu0
  %v806 = vadd.f32 0.0, %v805
  %v807 = vpop.f32.mrb[0].mxu0
  %v808 = vpop.f32.mrb[0].mxu0
  %v809 = vadd.f32 0.0, %v808
  %v810 = vpop.f32.mrb[0].mxu0
  %811 = vmatprep.mubr.bf16.mxu0 0
  %812 = vmatmul.mubr.bf16.gmra.mrb[0].mxu0 %v602
  %v813 = vpop.f32.mrb[0].mxu0
  %v814 = vadd.f32 0.0, %v813
  %v815 = vpop.f32.mrb[0].mxu0
  %v816 = vpop.f32.mrb[0].mxu0
  %v817 = vadd.f32 0.0, %v816
  %v818 = vpop.f32.mrb[0].mxu0
  %819 = vmatprep.mubr.bf16.mxu0 0
  %820 = vmatmul.mubr.bf16.gmra.mrb[0].mxu0 %v605
  %v821 = vpop.f32.mrb[0].mxu0
  %v822 = vadd.f32 0.0, %v821
  %v823 = vpop.f32.mrb[0].mxu0
  %v824 = vpop.f32.mrb[0].mxu0
  %v825 = vadd.f32 0.0, %v824
  %v826 = vpop.f32.mrb[0].mxu0
  %827 = vmatprep.mubr.bf16.mxu0 0
  %828 = vmatmul.mubr.bf16.gmra.mrb[0].mxu0 %v608
  %v829 = vpop.f32.mrb[0].mxu0
  %v830 = vadd.f32 0.0, %v829
  %v831 = vpop.f32.mrb[0].mxu0
  %v832 = vpop.f32.mrb[0].mxu0
  %v833 = vadd.f32 0.0, %v832
  %v834 = vpop.f32.mrb[0].mxu0
  %835 = vmatprep.mubr.bf16.mxu0 0
  %836 = vmatmul.mubr.bf16.gmra.mrb[0].mxu0 %v611
  %v837 = vpop.f32.mrb[0].mxu0
  %v838 = vadd.f32 0.0, %v837
  %v839 = vpop.f32.mrb[0].mxu0
  %v840 = vpop.f32.mrb[0].mxu0
  %v841 = vadd.f32 0.0, %v840
  %v842 = vpop.f32.mrb[0].mxu0
  %843 = vmatprep.mubr.bf16.mxu0 0
  %844 = vmatmul.mubr.bf16.gmra.mrb[0].mxu0 %v614
  %v845 = vpop.f32.mrb[0].mxu0
  %v846 = vadd.f32 0.0, %v845
  %v847 = vpop.f32.mrb[0].mxu0
  %v848 = vpop.f32.mrb[0].mxu0
  %v849 = vadd.f32 0.0, %v848
  %v850 = vpop.f32.mrb[0].mxu0
  %851 = vmatprep.mubr.bf16.mxu0 0
  %852 = vmatmul.mubr.bf16.gmra.mrb[0].mxu0 %v617
  %v853 = vpop.f32.mrb[0].mxu0
  %v854 = vadd.f32 0.0, %v853
  %v855 = vpop.f32.mrb[0].mxu0
  %v856 = vpop.f32.mrb[0].mxu0
  %v857 = vadd.f32 0.0, %v856
  %v858 = vpop.f32.mrb[0].mxu0
  %859 = vmatprep.mubr.bf16.mxu0 0
  %860 = vmatmul.mubr.bf16.gmra.mrb[0].mxu0 %v620
  %v861 = vpop.f32.mrb[0].mxu0
  %v862 = vadd.f32 0.0, %v861
  %v863 = vpop.f32.mrb[0].mxu0
  %v864 = vpop.f32.mrb[0].mxu0
  %v865 = vadd.f32 0.0, %v864
  %v866 = vpop.f32.mrb[0].mxu0
  %867 = vmatprep.mubr.bf16.mxu0 0
  %868 = vmatmul.mubr.bf16.gmra.mrb[0].mxu0 %v623
  %v869 = vpop.f32.mrb[0].mxu0
  %v870 = vadd.f32 0.0, %v869
  %v871 = vpop.f32.mrb[0].mxu0
  %v872 = vpop.f32.mrb[0].mxu0
  %v873 = vadd.f32 0.0, %v872
  %v874 = vpop.f32.mrb[0].mxu0
  %875 = vmatprep.mubr.bf16.mxu0 0
  %876 = vmatmul.mubr.bf16.gmra.mrb[0].mxu0 %v626
  %v877 = vpop.f32.mrb[0].mxu0
  %v878 = vadd.f32 0.0, %v877
  %v879 = vpop.f32.mrb[0].mxu0
  %v880 = vpop.f32.mrb[0].mxu0
  %v881 = vadd.f32 0.0, %v880
  %v882 = vpop.f32.mrb[0].mxu0
  %883 = vmatprep.mubr.bf16.mxu0 0
  %884 = vmatmul.mubr.bf16.gmra.mrb[0].mxu0 %v629
  %v885 = vpop.f32.mrb[0].mxu0
  %v886 = vadd.f32 0.0, %v885
  %v887 = vpop.f32.mrb[0].mxu0
  %v888 = vpop.f32.mrb[0].mxu0
  %v889 = vadd.f32 0.0, %v888
  %v890 = vpop.f32.mrb[0].mxu0
  %891 = vmatprep.mubr.bf16.mxu0 0
  %892 = vmatmul.mubr.bf16.gmra.mrb[0].mxu0 %v632
  %v893 = vpop.f32.mrb[0].mxu0
  %v894 = vadd.f32 0.0, %v893
  %v895 = vpop.f32.mrb[0].mxu0
  %v896 = vpop.f32.mrb[0].mxu0
  %v897 = vadd.f32 0.0, %v896
  %v898 = vpop.f32.mrb[0].mxu0
  %899 = vmatprep.mubr.bf16.mxu0 0
  %900 = vmatmul.mubr.bf16.gmra.mrb[0].mxu0 %v635
  %v901 = vpop.f32.mrb[0].mxu0
  %v902 = vadd.f32 0.0, %v901
  %v903 = vpop.f32.mrb[0].mxu0
  %v904 = vpop.f32.mrb[0].mxu0
  %v905 = vadd.f32 0.0, %v904
  %v906 = vpop.f32.mrb[0].mxu0
  %907 = vmatprep.mubr.bf16.mxu0 0
  %908 = vmatmul.mubr.bf16.gmra.mrb[0].mxu0 %v638
  %v909 = vpop.f32.mrb[0].mxu0
  %v910 = vadd.f32 0.0, %v909
  %v911 = vpop.f32.mrb[0].mxu0
  %v912 = vpop.f32.mrb[0].mxu0
  %v913 = vadd.f32 0.0, %v912
  %v914 = vpop.f32.mrb[0].mxu0
  %915 = vmatprep.mubr.bf16.mxu0 0
  %916 = vmatmul.mubr.bf16.gmra.mrb[0].mxu0 %v641
  %v917 = vpop.f32.mrb[0].mxu0
  %v918 = vadd.f32 0.0, %v917
  %v919 = vpop.f32.mrb[0].mxu0
  %v920 = vpop.f32.mrb[0].mxu0
  %v921 = vadd.f32 0.0, %v920
  %v922 = vpop.f32.mrb[0].mxu0
  %923 = vmatprep.mubr.bf16.mxu0 0
  %924 = vmatmul.mubr.bf16.gmra.mrb[0].mxu0 %v644
  %v925 = vpop.f32.mrb[0].mxu0
  %v926 = vadd.f32 0.0, %v925
  %v927 = vpop.f32.mrb[0].mxu0
  %v928 = vpop.f32.mrb[0].mxu0
  %v929 = vadd.f32 0.0, %v928
  %v930 = vpop.f32.mrb[0].mxu0
  %931 = vmatprep.mubr.bf16.mxu0 0
  %932 = vmatmul.mubr.bf16.gmra.mrb[0].mxu0 %v647
  %v933 = vpop.f32.mrb[0].mxu0
  %v934 = vadd.f32 0.0, %v933
  %v935 = vpop.f32.mrb[0].mxu0
  %v936 = vpop.f32.mrb[0].mxu0
  %v937 = vadd.f32 0.0, %v936
  %v938 = vpop.f32.mrb[0].mxu0
  %939 = vmatprep.mubr.bf16.mxu0 0
  %940 = vmatmul.mubr.bf16.gmra.mrb[0].mxu0 %v650
  %v941 = vpop.f32.mrb[0].mxu0
  %v942 = vadd.f32 0.0, %v941
  %v943 = vpop.f32.mrb[0].mxu0
  %v944 = vpop.f32.mrb[0].mxu0
  %v945 = vadd.f32 0.0, %v944
  %v946 = vpop.f32.mrb[0].mxu0
  %947 = vdwg.mxu0
  %v949 = vsel %vm555, %v126, 0
  %v952 = vsel %vm555, %v128, 0
  %v955 = vsel %vm555, %v130, 0
  %v958 = vsel %vm555, %v132, 0
  %v961 = vsel %vm555, %v134, 0
  %v964 = vsel %vm555, %v136, 0
  %v967 = vsel %vm555, %v138, 0
  %v970 = vsel %vm555, %v140, 0
  %v973 = vsel %vm555, %v142, 0
  %v976 = vsel %vm555, %v144, 0
  %v979 = vsel %vm555, %v146, 0
  %v982 = vsel %vm555, %v148, 0
  %v985 = vsel %vm555, %v150, 0
  %v988 = vsel %vm555, %v152, 0
  %v991 = vsel %vm555, %v154, 0
  %v994 = vsel %vm555, %v156, 0
  %v997 = vsel %vm555, %v160, 0
  %v1000 = vsel %vm555, %v162, 0
  %v1003 = vsel %vm555, %v164, 0
  %v1006 = vsel %vm555, %v166, 0
  %v1009 = vsel %vm555, %v168, 0
  %v1012 = vsel %vm555, %v170, 0
  %v1015 = vsel %vm555, %v172, 0
  %v1018 = vsel %vm555, %v174, 0
  %v1021 = vsel %vm555, %v176, 0
  %v1024 = vsel %vm555, %v178, 0
  %v1027 = vsel %vm555, %v180, 0
  %v1030 = vsel %vm555, %v182, 0
  %v1033 = vsel %vm555, %v184, 0
  %v1036 = vsel %vm555, %v186, 0
  %v1039 = vsel %vm555, %v188, 0
  %v1042 = vsel %vm555, %v190, 0
  %v1045 = vand.u32 %v552, %v655
  %1047 = vmatprep.subr.bf16.mxu0 0
  %1048 = vmatpush1.bf16.msra.mxu0 %v1045
  %1049 = vmatprep.subr.bf16.mxu0 0
  %1050 = vmatpush1.bf16.msra.mxu0 0
  %1051 = vmatprep.subr.bf16.mxu0 0
  %1052 = vmatpush1.bf16.msra.mxu0 0
  %1053 = vmatprep.subr.bf16.mxu0 0
  %1054 = vmatpush1.bf16.msra.mxu0 0
  %1055 = vmatprep.subr.bf16.mxu0 0
  %1056 = vmatpush1.bf16.msra.mxu0 0
  %1057 = vmatprep.subr.bf16.mxu0 0
  %1058 = vmatpush1.bf16.msra.mxu0 0
  %1059 = vmatprep.subr.bf16.mxu0 0
  %1060 = vmatpush1.bf16.msra.mxu0 0
  %1061 = vmatprep.subr.bf16.mxu0 0
  %1062 = vmatpush1.bf16.msra.mxu0 0
  %1063 = vmatprep.subr.bf16.mxu0 0
  %1064 = vmatpush1.bf16.msra.mxu0 0
  %1065 = vmatprep.subr.bf16.mxu0 0
  %1066 = vmatpush1.bf16.msra.mxu0 0
  %1067 = vmatprep.subr.bf16.mxu0 0
  %1068 = vmatpush1.bf16.msra.mxu0 0
  %1069 = vmatprep.subr.bf16.mxu0 0
  %1070 = vmatpush1.bf16.msra.mxu0 0
  %1071 = vmatprep.subr.bf16.mxu0 0
  %1072 = vmatpush1.bf16.msra.mxu0 0
  %1073 = vmatprep.subr.bf16.mxu0 0
  %1074 = vmatpush1.bf16.msra.mxu0 0
  %1075 = vmatprep.subr.bf16.mxu0 0
  %1076 = vmatpush1.bf16.msra.mxu0 0
  %1077 = vmatprep.subr.bf16.mxu0 0
  %1078 = vmatpush1.bf16.msra.mxu0 0
  %1079 = vmatprep.mubr.bf16.mxu0 0
  %1080 = vmatmul.mubr.bf16.gmra.mrb[0].mxu0 %v949
  %v1081 = vpop.f32.mrb[0].mxu0
  %v1082 = vadd.f32 %v694, %v1081
  %v1083 = vpop.f32.mrb[0].mxu0
  %v1084 = vpop.f32.mrb[0].mxu0
  %v1085 = vadd.f32 %v697, %v1084
  %v1086 = vpop.f32.mrb[0].mxu0
  %1087 = vmatprep.mubr.bf16.mxu0 0
  %1088 = vmatmul.mubr.bf16.gmra.mrb[0].mxu0 %v952
  %v1089 = vpop.f32.mrb[0].mxu0
  %v1090 = vadd.f32 %v702, %v1089
  %v1091 = vpop.f32.mrb[0].mxu0
  %v1092 = vpop.f32.mrb[0].mxu0
  %v1093 = vadd.f32 %v705, %v1092
  %v1094 = vpop.f32.mrb[0].mxu0
  %1095 = vmatprep.mubr.bf16.mxu0 0
  %1096 = vmatmul.mubr.bf16.gmra.mrb[0].mxu0 %v955
  %v1097 = vpop.f32.mrb[0].mxu0
  %v1098 = vadd.f32 %v710, %v1097
  %v1099 = vpop.f32.mrb[0].mxu0
  %v1100 = vpop.f32.mrb[0].mxu0
  %v1101 = vadd.f32 %v713, %v1100
  %v1102 = vpop.f32.mrb[0].mxu0
  %1103 = vmatprep.mubr.bf16.mxu0 0
  %1104 = vmatmul.mubr.bf16.gmra.mrb[0].mxu0 %v958
  %v1105 = vpop.f32.mrb[0].mxu0
  %v1106 = vadd.f32 %v718, %v1105
  %v1107 = vpop.f32.mrb[0].mxu0
  %v1108 = vpop.f32.mrb[0].mxu0
  %v1109 = vadd.f32 %v721, %v1108
  %v1110 = vpop.f32.mrb[0].mxu0
  %1111 = vmatprep.mubr.bf16.mxu0 0
  %1112 = vmatmul.mubr.bf16.gmra.mrb[0].mxu0 %v961
  %v1113 = vpop.f32.mrb[0].mxu0
  %v1114 = vadd.f32 %v726, %v1113
  %v1115 = vpop.f32.mrb[0].mxu0
  %v1116 = vpop.f32.mrb[0].mxu0
  %v1117 = vadd.f32 %v729, %v1116
  %v1118 = vpop.f32.mrb[0].mxu0
  %1119 = vmatprep.mubr.bf16.mxu0 0
  %1120 = vmatmul.mubr.bf16.gmra.mrb[0].mxu0 %v964
  %v1121 = vpop.f32.mrb[0].mxu0
  %v1122 = vadd.f32 %v734, %v1121
  %v1123 = vpop.f32.mrb[0].mxu0
  %v1124 = vpop.f32.mrb[0].mxu0
  %v1125 = vadd.f32 %v737, %v1124
  %v1126 = vpop.f32.mrb[0].mxu0
  %1127 = vmatprep.mubr.bf16.mxu0 0
  %1128 = vmatmul.mubr.bf16.gmra.mrb[0].mxu0 %v967
  %v1129 = vpop.f32.mrb[0].mxu0
  %v1130 = vadd.f32 %v742, %v1129
  %v1131 = vpop.f32.mrb[0].mxu0
  %v1132 = vpop.f32.mrb[0].mxu0
  %v1133 = vadd.f32 %v745, %v1132
  %v1134 = vpop.f32.mrb[0].mxu0
  %1135 = vmatprep.mubr.bf16.mxu0 0
  %1136 = vmatmul.mubr.bf16.gmra.mrb[0].mxu0 %v970
  %v1137 = vpop.f32.mrb[0].mxu0
  %v1138 = vadd.f32 %v750, %v1137
  %v1139 = vpop.f32.mrb[0].mxu0
  %v1140 = vpop.f32.mrb[0].mxu0
  %v1141 = vadd.f32 %v753, %v1140
  %v1142 = vpop.f32.mrb[0].mxu0
  %1143 = vmatprep.mubr.bf16.mxu0 0
  %1144 = vmatmul.mubr.bf16.gmra.mrb[0].mxu0 %v973
  %v1145 = vpop.f32.mrb[0].mxu0
  %v1146 = vadd.f32 %v758, %v1145
  %v1147 = vpop.f32.mrb[0].mxu0
  %v1148 = vpop.f32.mrb[0].mxu0
  %v1149 = vadd.f32 %v761, %v1148
  %v1150 = vpop.f32.mrb[0].mxu0
  %1151 = vmatprep.mubr.bf16.mxu0 0
  %1152 = vmatmul.mubr.bf16.gmra.mrb[0].mxu0 %v976
  %v1153 = vpop.f32.mrb[0].mxu0
  %v1154 = vadd.f32 %v766, %v1153
  %v1155 = vpop.f32.mrb[0].mxu0
  %v1156 = vpop.f32.mrb[0].mxu0
  %v1157 = vadd.f32 %v769, %v1156
  %v1158 = vpop.f32.mrb[0].mxu0
  %1159 = vmatprep.mubr.bf16.mxu0 0
  %1160 = vmatmul.mubr.bf16.gmra.mrb[0].mxu0 %v979
  %v1161 = vpop.f32.mrb[0].mxu0
  %v1162 = vadd.f32 %v774, %v1161
  %v1163 = vpop.f32.mrb[0].mxu0
  %v1164 = vpop.f32.mrb[0].mxu0
  %v1165 = vadd.f32 %v777, %v1164
  %v1166 = vpop.f32.mrb[0].mxu0
  %1167 = vmatprep.mubr.bf16.mxu0 0
  %1168 = vmatmul.mubr.bf16.gmra.mrb[0].mxu0 %v982
  %v1169 = vpop.f32.mrb[0].mxu0
  %v1170 = vadd.f32 %v782, %v1169
  %v1171 = vpop.f32.mrb[0].mxu0
  %v1172 = vpop.f32.mrb[0].mxu0
  %v1173 = vadd.f32 %v785, %v1172
  %v1174 = vpop.f32.mrb[0].mxu0
  %1175 = vmatprep.mubr.bf16.mxu0 0
  %1176 = vmatmul.mubr.bf16.gmra.mrb[0].mxu0 %v985
  %v1177 = vpop.f32.mrb[0].mxu0
  %v1178 = vadd.f32 %v790, %v1177
  %v1179 = vpop.f32.mrb[0].mxu0
  %v1180 = vpop.f32.mrb[0].mxu0
  %v1181 = vadd.f32 %v793, %v1180
  %v1182 = vpop.f32.mrb[0].mxu0
  %1183 = vmatprep.mubr.bf16.mxu0 0
  %1184 = vmatmul.mubr.bf16.gmra.mrb[0].mxu0 %v988
  %v1185 = vpop.f32.mrb[0].mxu0
  %v1186 = vadd.f32 %v798, %v1185
  %v1187 = vpop.f32.mrb[0].mxu0
  %v1188 = vpop.f32.mrb[0].mxu0
  %v1189 = vadd.f32 %v801, %v1188
  %v1190 = vpop.f32.mrb[0].mxu0
  %1191 = vmatprep.mubr.bf16.mxu0 0
  %1192 = vmatmul.mubr.bf16.gmra.mrb[0].mxu0 %v991
  %v1193 = vpop.f32.mrb[0].mxu0
  %v1194 = vadd.f32 %v806, %v1193
  %v1195 = vpop.f32.mrb[0].mxu0
  %v1196 = vpop.f32.mrb[0].mxu0
  %v1197 = vadd.f32 %v809, %v1196
  %v1198 = vpop.f32.mrb[0].mxu0
  %1199 = vmatprep.mubr.bf16.mxu0 0
  %1200 = vmatmul.mubr.bf16.gmra.mrb[0].mxu0 %v994
  %v1201 = vpop.f32.mrb[0].mxu0
  %v1202 = vadd.f32 %v814, %v1201
  %v1203 = vpop.f32.mrb[0].mxu0
  %v1204 = vpop.f32.mrb[0].mxu0
  %v1205 = vadd.f32 %v817, %v1204
  %v1206 = vpop.f32.mrb[0].mxu0
  %1207 = vmatprep.mubr.bf16.mxu0 0
  %1208 = vmatmul.mubr.bf16.gmra.mrb[0].mxu0 %v997
  %v1209 = vpop.f32.mrb[0].mxu0
  %v1210 = vadd.f32 %v822, %v1209
  %v1211 = vpop.f32.mrb[0].mxu0
  %v1212 = vpop.f32.mrb[0].mxu0
  %v1213 = vadd.f32 %v825, %v1212
  %v1214 = vpop.f32.mrb[0].mxu0
  %1215 = vmatprep.mubr.bf16.mxu0 0
  %1216 = vmatmul.mubr.bf16.gmra.mrb[0].mxu0 %v1000
  %v1217 = vpop.f32.mrb[0].mxu0
  %v1218 = vadd.f32 %v830, %v1217
  %v1219 = vpop.f32.mrb[0].mxu0
  %v1220 = vpop.f32.mrb[0].mxu0
  %v1221 = vadd.f32 %v833, %v1220
  %v1222 = vpop.f32.mrb[0].mxu0
  %1223 = vmatprep.mubr.bf16.mxu0 0
  %1224 = vmatmul.mubr.bf16.gmra.mrb[0].mxu0 %v1003
  %v1225 = vpop.f32.mrb[0].mxu0
  %v1226 = vadd.f32 %v838, %v1225
  %v1227 = vpop.f32.mrb[0].mxu0
  %v1228 = vpop.f32.mrb[0].mxu0
  %v1229 = vadd.f32 %v841, %v1228
  %v1230 = vpop.f32.mrb[0].mxu0
  %1231 = vmatprep.mubr.bf16.mxu0 0
  %1232 = vmatmul.mubr.bf16.gmra.mrb[0].mxu0 %v1006
  %v1233 = vpop.f32.mrb[0].mxu0
  %v1234 = vadd.f32 %v846, %v1233
  %v1235 = vpop.f32.mrb[0].mxu0
  %v1236 = vpop.f32.mrb[0].mxu0
  %v1237 = vadd.f32 %v849, %v1236
  %v1238 = vpop.f32.mrb[0].mxu0
  %1239 = vmatprep.mubr.bf16.mxu0 0
  %1240 = vmatmul.mubr.bf16.gmra.mrb[0].mxu0 %v1009
  %v1241 = vpop.f32.mrb[0].mxu0
  %v1242 = vadd.f32 %v854, %v1241
  %v1243 = vpop.f32.mrb[0].mxu0
  %v1244 = vpop.f32.mrb[0].mxu0
  %v1245 = vadd.f32 %v857, %v1244
  %v1246 = vpop.f32.mrb[0].mxu0
  %1247 = vmatprep.mubr.bf16.mxu0 0
  %1248 = vmatmul.mubr.bf16.gmra.mrb[0].mxu0 %v1012
  %v1249 = vpop.f32.mrb[0].mxu0
  %v1250 = vadd.f32 %v862, %v1249
  %v1251 = vpop.f32.mrb[0].mxu0
  %v1252 = vpop.f32.mrb[0].mxu0
  %v1253 = vadd.f32 %v865, %v1252
  %v1254 = vpop.f32.mrb[0].mxu0
  %1255 = vmatprep.mubr.bf16.mxu0 0
  %1256 = vmatmul.mubr.bf16.gmra.mrb[0].mxu0 %v1015
  %v1257 = vpop.f32.mrb[0].mxu0
  %v1258 = vadd.f32 %v870, %v1257
  %v1259 = vpop.f32.mrb[0].mxu0
  %v1260 = vpop.f32.mrb[0].mxu0
  %v1261 = vadd.f32 %v873, %v1260
  %v1262 = vpop.f32.mrb[0].mxu0
  %1263 = vmatprep.mubr.bf16.mxu0 0
  %1264 = vmatmul.mubr.bf16.gmra.mrb[0].mxu0 %v1018
  %v1265 = vpop.f32.mrb[0].mxu0
  %v1266 = vadd.f32 %v878, %v1265
  %v1267 = vpop.f32.mrb[0].mxu0
  %v1268 = vpop.f32.mrb[0].mxu0
  %v1269 = vadd.f32 %v881, %v1268
  %v1270 = vpop.f32.mrb[0].mxu0
  %1271 = vmatprep.mubr.bf16.mxu0 0
  %1272 = vmatmul.mubr.bf16.gmra.mrb[0].mxu0 %v1021
  %v1273 = vpop.f32.mrb[0].mxu0
  %v1274 = vadd.f32 %v886, %v1273
  %v1275 = vpop.f32.mrb[0].mxu0
  %v1276 = vpop.f32.mrb[0].mxu0
  %v1277 = vadd.f32 %v889, %v1276
  %v1278 = vpop.f32.mrb[0].mxu0
  %1279 = vmatprep.mubr.bf16.mxu0 0
  %1280 = vmatmul.mubr.bf16.gmra.mrb[0].mxu0 %v1024
  %v1281 = vpop.f32.mrb[0].mxu0
  %v1282 = vadd.f32 %v894, %v1281
  %v1283 = vpop.f32.mrb[0].mxu0
  %v1284 = vpop.f32.mrb[0].mxu0
  %v1285 = vadd.f32 %v897, %v1284
  %v1286 = vpop.f32.mrb[0].mxu0
  %1287 = vmatprep.mubr.bf16.mxu0 0
  %1288 = vmatmul.mubr.bf16.gmra.mrb[0].mxu0 %v1027
  %v1289 = vpop.f32.mrb[0].mxu0
  %v1290 = vadd.f32 %v902, %v1289
  %v1291 = vpop.f32.mrb[0].mxu0
  %v1292 = vpop.f32.mrb[0].mxu0
  %v1293 = vadd.f32 %v905, %v1292
  %v1294 = vpop.f32.mrb[0].mxu0
  %1295 = vmatprep.mubr.bf16.mxu0 0
  %1296 = vmatmul.mubr.bf16.gmra.mrb[0].mxu0 %v1030
  %v1297 = vpop.f32.mrb[0].mxu0
  %v1298 = vadd.f32 %v910, %v1297
  %v1299 = vpop.f32.mrb[0].mxu0
  %v1300 = vpop.f32.mrb[0].mxu0
  %v1301 = vadd.f32 %v913, %v1300
  %v1302 = vpop.f32.mrb[0].mxu0
  %1303 = vmatprep.mubr.bf16.mxu0 0
  %1304 = vmatmul.mubr.bf16.gmra.mrb[0].mxu0 %v1033
  %v1305 = vpop.f32.mrb[0].mxu0
  %v1306 = vadd.f32 %v918, %v1305
  %v1307 = vpop.f32.mrb[0].mxu0
  %v1308 = vpop.f32.mrb[0].mxu0
  %v1309 = vadd.f32 %v921, %v1308
  %v1310 = vpop.f32.mrb[0].mxu0
  %1311 = vmatprep.mubr.bf16.mxu0 0
  %1312 = vmatmul.mubr.bf16.gmra.mrb[0].mxu0 %v1036
  %v1313 = vpop.f32.mrb[0].mxu0
  %v1314 = vadd.f32 %v926, %v1313
  %v1315 = vpop.f32.mrb[0].mxu0
  %v1316 = vpop.f32.mrb[0].mxu0
  %v1317 = vadd.f32 %v929, %v1316
  %v1318 = vpop.f32.mrb[0].mxu0
  %1319 = vmatprep.mubr.bf16.mxu0 0
  %1320 = vmatmul.mubr.bf16.gmra.mrb[0].mxu0 %v1039
  %v1321 = vpop.f32.mrb[0].mxu0
  %v1322 = vadd.f32 %v934, %v1321
  %v1323 = vpop.f32.mrb[0].mxu0
  %v1324 = vpop.f32.mrb[0].mxu0
  %v1325 = vadd.f32 %v937, %v1324
  %v1326 = vpop.f32.mrb[0].mxu0
  %1327 = vmatprep.mubr.bf16.mxu0 0
  %1328 = vmatmul.mubr.bf16.gmra.mrb[0].mxu0 %v1042
  %v1329 = vpop.f32.mrb[0].mxu0
  %v1330 = vadd.f32 %v942, %v1329
  %v1331 = vpop.f32.mrb[0].mxu0
  %v1332 = vpop.f32.mrb[0].mxu0
  %v1333 = vadd.f32 %v945, %v1332
  %v1334 = vpop.f32.mrb[0].mxu0
  %1335 = vdwg.mxu0
  %vm1336 = vsmask.f32 7424
  %v1337 = vshrl.u32 %v126, 16
  %v1339 = vshll.u32 %v126, 16
  %v1341 = vrot.slane %v1339, 1
  %v1342 = vor.u32 %v1337, %v1341
  %v1344 = vshll.u32 %v127, 16
  %v1346 = vrot.slane %v1344, 1
  %v1347 = vsel %vm1336, %v1342, %v1346
  %v1348 = vshrl.u32 %v128, 16
  %v1350 = vshll.u32 %v128, 16
  %v1352 = vrot.slane %v1350, 1
  %v1353 = vor.u32 %v1348, %v1352
  %v1355 = vshll.u32 %v129, 16
  %v1357 = vrot.slane %v1355, 1
  %v1358 = vsel %vm1336, %v1353, %v1357
  %v1359 = vshrl.u32 %v130, 16
  %v1361 = vshll.u32 %v130, 16
  %v1363 = vrot.slane %v1361, 1
  %v1364 = vor.u32 %v1359, %v1363
  %v1366 = vshll.u32 %v131, 16
  %v1368 = vrot.slane %v1366, 1
  %v1369 = vsel %vm1336, %v1364, %v1368
  %v1370 = vshrl.u32 %v132, 16
  %v1372 = vshll.u32 %v132, 16
  %v1374 = vrot.slane %v1372, 1
  %v1375 = vor.u32 %v1370, %v1374
  %v1377 = vshll.u32 %v133, 16
  %v1379 = vrot.slane %v1377, 1
  %v1380 = vsel %vm1336, %v1375, %v1379
  %v1381 = vshrl.u32 %v134, 16
  %v1383 = vshll.u32 %v134, 16
  %v1385 = vrot.slane %v1383, 1
  %v1386 = vor.u32 %v1381, %v1385
  %v1388 = vshll.u32 %v135, 16
  %v1390 = vrot.slane %v1388, 1
  %v1391 = vsel %vm1336, %v1386, %v1390
  %v1392 = vshrl.u32 %v136, 16
  %v1394 = vshll.u32 %v136, 16
  %v1396 = vrot.slane %v1394, 1
  %v1397 = vor.u32 %v1392, %v1396
  %v1399 = vshll.u32 %v137, 16
  %v1401 = vrot.slane %v1399, 1
  %v1402 = vsel %vm1336, %v1397, %v1401
  %v1403 = vshrl.u32 %v138, 16
  %v1405 = vshll.u32 %v138, 16
  %v1407 = vrot.slane %v1405, 1
  %v1408 = vor.u32 %v1403, %v1407
  %v1410 = vshll.u32 %v139, 16
  %v1412 = vrot.slane %v1410, 1
  %v1413 = vsel %vm1336, %v1408, %v1412
  %v1414 = vshrl.u32 %v140, 16
  %v1416 = vshll.u32 %v140, 16
  %v1418 = vrot.slane %v1416, 1
  %v1419 = vor.u32 %v1414, %v1418
  %v1421 = vshll.u32 %v141, 16
  %v1423 = vrot.slane %v1421, 1
  %v1424 = vsel %vm1336, %v1419, %v1423
  %v1425 = vshrl.u32 %v142, 16
  %v1427 = vshll.u32 %v142, 16
  %v1429 = vrot.slane %v1427, 1
  %v1430 = vor.u32 %v1425, %v1429
  %v1432 = vshll.u32 %v143, 16
  %v1434 = vrot.slane %v1432, 1
  %v1435 = vsel %vm1336, %v1430, %v1434
  %v1436 = vshrl.u32 %v144, 16
  %v1438 = vshll.u32 %v144, 16
  %v1440 = vrot.slane %v1438, 1
  %v1441 = vor.u32 %v1436, %v1440
  %v1443 = vshll.u32 %v145, 16
  %v1445 = vrot.slane %v1443, 1
  %v1446 = vsel %vm1336, %v1441, %v1445
  %v1447 = vshrl.u32 %v146, 16
  %v1449 = vshll.u32 %v146, 16
  %v1451 = vrot.slane %v1449, 1
  %v1452 = vor.u32 %v1447, %v1451
  %v1454 = vshll.u32 %v147, 16
  %v1456 = vrot.slane %v1454, 1
  %v1457 = vsel %vm1336, %v1452, %v1456
  %v1458 = vshrl.u32 %v148, 16
  %v1460 = vshll.u32 %v148, 16
  %v1462 = vrot.slane %v1460, 1
  %v1463 = vor.u32 %v1458, %v1462
  %v1465 = vshll.u32 %v149, 16
  %v1467 = vrot.slane %v1465, 1
  %v1468 = vsel %vm1336, %v1463, %v1467
  %v1469 = vshrl.u32 %v150, 16
  %v1471 = vshll.u32 %v150, 16
  %v1473 = vrot.slane %v1471, 1
  %v1474 = vor.u32 %v1469, %v1473
  %v1476 = vshll.u32 %v151, 16
  %v1478 = vrot.slane %v1476, 1
  %v1479 = vsel %vm1336, %v1474, %v1478
  %v1480 = vshrl.u32 %v152, 16
  %v1482 = vshll.u32 %v152, 16
  %v1484 = vrot.slane %v1482, 1
  %v1485 = vor.u32 %v1480, %v1484
  %v1487 = vshll.u32 %v153, 16
  %v1489 = vrot.slane %v1487, 1
  %v1490 = vsel %vm1336, %v1485, %v1489
  %v1491 = vshrl.u32 %v154, 16
  %v1493 = vshll.u32 %v154, 16
  %v1495 = vrot.slane %v1493, 1
  %v1496 = vor.u32 %v1491, %v1495
  %v1498 = vshll.u32 %v155, 16
  %v1500 = vrot.slane %v1498, 1
  %v1501 = vsel %vm1336, %v1496, %v1500
  %v1502 = vshrl.u32 %v156, 16
  %v1504 = vshll.u32 %v156, 16
  %v1506 = vrot.slane %v1504, 1
  %v1507 = vor.u32 %v1502, %v1506
  %v1509 = vshll.u32 %v157, 16
  %v1511 = vrot.slane %v1509, 1
  %v1512 = vsel %vm1336, %v1507, %v1511
  %v1513 = vshrl.u32 %v160, 16
  %v1515 = vshll.u32 %v160, 16
  %v1517 = vrot.slane %v1515, 1
  %v1518 = vor.u32 %v1513, %v1517
  %v1520 = vshll.u32 %v161, 16
  %v1522 = vrot.slane %v1520, 1
  %v1523 = vsel %vm1336, %v1518, %v1522
  %v1524 = vshrl.u32 %v162, 16
  %v1526 = vshll.u32 %v162, 16
  %v1528 = vrot.slane %v1526, 1
  %v1529 = vor.u32 %v1524, %v1528
  %v1531 = vshll.u32 %v163, 16
  %v1533 = vrot.slane %v1531, 1
  %v1534 = vsel %vm1336, %v1529, %v1533
  %v1535 = vshrl.u32 %v164, 16
  %v1537 = vshll.u32 %v164, 16
  %v1539 = vrot.slane %v1537, 1
  %v1540 = vor.u32 %v1535, %v1539
  %v1542 = vshll.u32 %v165, 16
  %v1544 = vrot.slane %v1542, 1
  %v1545 = vsel %vm1336, %v1540, %v1544
  %v1546 = vshrl.u32 %v166, 16
  %v1548 = vshll.u32 %v166, 16
  %v1550 = vrot.slane %v1548, 1
  %v1551 = vor.u32 %v1546, %v1550
  %v1553 = vshll.u32 %v167, 16
  %v1555 = vrot.slane %v1553, 1
  %v1556 = vsel %vm1336, %v1551, %v1555
  %v1557 = vshrl.u32 %v168, 16
  %v1559 = vshll.u32 %v168, 16
  %v1561 = vrot.slane %v1559, 1
  %v1562 = vor.u32 %v1557, %v1561
  %v1564 = vshll.u32 %v169, 16
  %v1566 = vrot.slane %v1564, 1
  %v1567 = vsel %vm1336, %v1562, %v1566
  %v1568 = vshrl.u32 %v170, 16
  %v1570 = vshll.u32 %v170, 16
  %v1572 = vrot.slane %v1570, 1
  %v1573 = vor.u32 %v1568, %v1572
  %v1575 = vshll.u32 %v171, 16
  %v1577 = vrot.slane %v1575, 1
  %v1578 = vsel %vm1336, %v1573, %v1577
  %v1579 = vshrl.u32 %v172, 16
  %v1581 = vshll.u32 %v172, 16
  %v1583 = vrot.slane %v1581, 1
  %v1584 = vor.u32 %v1579, %v1583
  %v1586 = vshll.u32 %v173, 16
  %v1588 = vrot.slane %v1586, 1
  %v1589 = vsel %vm1336, %v1584, %v1588
  %v1590 = vshrl.u32 %v174, 16
  %v1592 = vshll.u32 %v174, 16
  %v1594 = vrot.slane %v1592, 1
  %v1595 = vor.u32 %v1590, %v1594
  %v1597 = vshll.u32 %v175, 16
  %v1599 = vrot.slane %v1597, 1
  %v1600 = vsel %vm1336, %v1595, %v1599
  %v1601 = vshrl.u32 %v176, 16
  %v1603 = vshll.u32 %v176, 16
  %v1605 = vrot.slane %v1603, 1
  %v1606 = vor.u32 %v1601, %v1605
  %v1608 = vshll.u32 %v177, 16
  %v1610 = vrot.slane %v1608, 1
  %v1611 = vsel %vm1336, %v1606, %v1610
  %v1612 = vshrl.u32 %v178, 16
  %v1614 = vshll.u32 %v178, 16
  %v1616 = vrot.slane %v1614, 1
  %v1617 = vor.u32 %v1612, %v1616
  %v1619 = vshll.u32 %v179, 16
  %v1621 = vrot.slane %v1619, 1
  %v1622 = vsel %vm1336, %v1617, %v1621
  %v1623 = vshrl.u32 %v180, 16
  %v1625 = vshll.u32 %v180, 16
  %v1627 = vrot.slane %v1625, 1
  %v1628 = vor.u32 %v1623, %v1627
  %v1630 = vshll.u32 %v181, 16
  %v1632 = vrot.slane %v1630, 1
  %v1633 = vsel %vm1336, %v1628, %v1632
  %v1634 = vshrl.u32 %v182, 16
  %v1636 = vshll.u32 %v182, 16
  %v1638 = vrot.slane %v1636, 1
  %v1639 = vor.u32 %v1634, %v1638
  %v1641 = vshll.u32 %v183, 16
  %v1643 = vrot.slane %v1641, 1
  %v1644 = vsel %vm1336, %v1639, %v1643
  %v1645 = vshrl.u32 %v184, 16
  %v1647 = vshll.u32 %v184, 16
  %v1649 = vrot.slane %v1647, 1
  %v1650 = vor.u32 %v1645, %v1649
  %v1652 = vshll.u32 %v185, 16
  %v1654 = vrot.slane %v1652, 1
  %v1655 = vsel %vm1336, %v1650, %v1654
  %v1656 = vshrl.u32 %v186, 16
  %v1658 = vshll.u32 %v186, 16
  %v1660 = vrot.slane %v1658, 1
  %v1661 = vor.u32 %v1656, %v1660
  %v1663 = vshll.u32 %v187, 16
  %v1665 = vrot.slane %v1663, 1
  %v1666 = vsel %vm1336, %v1661, %v1665
  %v1667 = vshrl.u32 %v188, 16
  %v1669 = vshll.u32 %v188, 16
  %v1671 = vrot.slane %v1669, 1
  %v1672 = vor.u32 %v1667, %v1671
  %v1674 = vshll.u32 %v189, 16
  %v1676 = vrot.slane %v1674, 1
  %v1677 = vsel %vm1336, %v1672, %v1676
  %v1678 = vshrl.u32 %v190, 16
  %v1680 = vshll.u32 %v190, 16
  %v1682 = vrot.slane %v1680, 1
  %v1683 = vor.u32 %v1678, %v1682
  %v1685 = vshll.u32 %v191, 16
  %v1687 = vrot.slane %v1685, 1
  %v1688 = vsel %vm1336, %v1683, %v1687
  %s1689 = scalar_lea.vmem %s4, 4
  %v1690 = vld [vmem:[%s1689] sm:$0x3]
  %v1692 = vsel %vm555, %v1347, 0
  %v1695 = vsel %vm555, %v1358, 0
  %v1698 = vsel %vm555, %v1369, 0
  %v1701 = vsel %vm555, %v1380, 0
  %v1704 = vsel %vm555, %v1391, 0
  %v1707 = vsel %vm555, %v1402, 0
  %v1710 = vsel %vm555, %v1413, 0
  %v1713 = vsel %vm555, %v1424, 0
  %v1716 = vsel %vm555, %v1435, 0
  %v1719 = vsel %vm555, %v1446, 0
  %v1722 = vsel %vm555, %v1457, 0
  %v1725 = vsel %vm555, %v1468, 0
  %v1728 = vsel %vm555, %v1479, 0
  %v1731 = vsel %vm555, %v1490, 0
  %v1734 = vsel %vm555, %v1501, 0
  %v1737 = vsel %vm555, %v1512, 0
  %v1740 = vsel %vm555, %v1523, 0
  %v1743 = vsel %vm555, %v1534, 0
  %v1746 = vsel %vm555, %v1545, 0
  %v1749 = vsel %vm555, %v1556, 0
  %v1752 = vsel %vm555, %v1567, 0
  %v1755 = vsel %vm555, %v1578, 0
  %v1758 = vsel %vm555, %v1589, 0
  %v1761 = vsel %vm555, %v1600, 0
  %v1764 = vsel %vm555, %v1611, 0
  %v1767 = vsel %vm555, %v1622, 0
  %v1770 = vsel %vm555, %v1633, 0
  %v1773 = vsel %vm555, %v1644, 0
  %v1776 = vsel %vm555, %v1655, 0
  %v1779 = vsel %vm555, %v1666, 0
  %v1782 = vsel %vm555, %v1677, 0
  %v1785 = vsel %vm555, %v1688, 0
  %v1788 = vand.u32 %v1690, %v655
  %1790 = vmatprep.subr.bf16.mxu0 0
  %1791 = vmatpush1.bf16.msra.mxu0 %v1788
  %1792 = vmatprep.subr.bf16.mxu0 0
  %1793 = vmatpush1.bf16.msra.mxu0 0
  %1794 = vmatprep.subr.bf16.mxu0 0
  %1795 = vmatpush1.bf16.msra.mxu0 0
  %1796 = vmatprep.subr.bf16.mxu0 0
  %1797 = vmatpush1.bf16.msra.mxu0 0
  %1798 = vmatprep.subr.bf16.mxu0 0
  %1799 = vmatpush1.bf16.msra.mxu0 0
  %1800 = vmatprep.subr.bf16.mxu0 0
  %1801 = vmatpush1.bf16.msra.mxu0 0
  %1802 = vmatprep.subr.bf16.mxu0 0
  %1803 = vmatpush1.bf16.msra.mxu0 0
  %1804 = vmatprep.subr.bf16.mxu0 0
  %1805 = vmatpush1.bf16.msra.mxu0 0
  %1806 = vmatprep.subr.bf16.mxu0 0
  %1807 = vmatpush1.bf16.msra.mxu0 0
  %1808 = vmatprep.subr.bf16.mxu0 0
  %1809 = vmatpush1.bf16.msra.mxu0 0
  %1810 = vmatprep.subr.bf16.mxu0 0
  %1811 = vmatpush1.bf16.msra.mxu0 0
  %1812 = vmatprep.subr.bf16.mxu0 0
  %1813 = vmatpush1.bf16.msra.mxu0 0
  %1814 = vmatprep.subr.bf16.mxu0 0
  %1815 = vmatpush1.bf16.msra.mxu0 0
  %1816 = vmatprep.subr.bf16.mxu0 0
  %1817 = vmatpush1.bf16.msra.mxu0 0
  %1818 = vmatprep.subr.bf16.mxu0 0
  %1819 = vmatpush1.bf16.msra.mxu0 0
  %1820 = vmatprep.subr.bf16.mxu0 0
  %1821 = vmatpush1.bf16.msra.mxu0 0
  %1822 = vmatprep.mubr.bf16.mxu0 0
  %1823 = vmatmul.mubr.bf16.gmra.mrb[0].mxu0 %v1692
  %v1824 = vpop.f32.mrb[0].mxu0
  %v1825 = vadd.f32 0.0, %v1824
  %v1826 = vpop.f32.mrb[0].mxu0
  %v1827 = vpop.f32.mrb[0].mxu0
  %v1828 = vadd.f32 0.0, %v1827
  %v1829 = vpop.f32.mrb[0].mxu0
  %1830 = vmatprep.mubr.bf16.mxu0 0
  %1831 = vmatmul.mubr.bf16.gmra.mrb[0].mxu0 %v1695
  %v1832 = vpop.f32.mrb[0].mxu0
  %v1833 = vadd.f32 0.0, %v1832
  %v1834 = vpop.f32.mrb[0].mxu0
  %v1835 = vpop.f32.mrb[0].mxu0
  %v1836 = vadd.f32 0.0, %v1835
  %v1837 = vpop.f32.mrb[0].mxu0
  %1838 = vmatprep.mubr.bf16.mxu0 0
  %1839 = vmatmul.mubr.bf16.gmra.mrb[0].mxu0 %v1698
  %v1840 = vpop.f32.mrb[0].mxu0
  %v1841 = vadd.f32 0.0, %v1840
  %v1842 = vpop.f32.mrb[0].mxu0
  %v1843 = vpop.f32.mrb[0].mxu0
  %v1844 = vadd.f32 0.0, %v1843
  %v1845 = vpop.f32.mrb[0].mxu0
  %1846 = vmatprep.mubr.bf16.mxu0 0
  %1847 = vmatmul.mubr.bf16.gmra.mrb[0].mxu0 %v1701
  %v1848 = vpop.f32.mrb[0].mxu0
  %v1849 = vadd.f32 0.0, %v1848
  %v1850 = vpop.f32.mrb[0].mxu0
  %v1851 = vpop.f32.mrb[0].mxu0
  %v1852 = vadd.f32 0.0, %v1851
  %v1853 = vpop.f32.mrb[0].mxu0
  %1854 = vmatprep.mubr.bf16.mxu0 0
  %1855 = vmatmul.mubr.bf16.gmra.mrb[0].mxu0 %v1704
  %v1856 = vpop.f32.mrb[0].mxu0
  %v1857 = vadd.f32 0.0, %v1856
  %v1858 = vpop.f32.mrb[0].mxu0
  %v1859 = vpop.f32.mrb[0].mxu0
  %v1860 = vadd.f32 0.0, %v1859
  %v1861 = vpop.f32.mrb[0].mxu0
  %1862 = vmatprep.mubr.bf16.mxu0 0
  %1863 = vmatmul.mubr.bf16.gmra.mrb[0].mxu0 %v1707
  %v1864 = vpop.f32.mrb[0].mxu0
  %v1865 = vadd.f32 0.0, %v1864
  %v1866 = vpop.f32.mrb[0].mxu0
  %v1867 = vpop.f32.mrb[0].mxu0
  %v1868 = vadd.f32 0.0, %v1867
  %v1869 = vpop.f32.mrb[0].mxu0
  %1870 = vmatprep.mubr.bf16.mxu0 0
  %1871 = vmatmul.mubr.bf16.gmra.mrb[0].mxu0 %v1710
  %v1872 = vpop.f32.mrb[0].mxu0
  %v1873 = vadd.f32 0.0, %v1872
  %v1874 = vpop.f32.mrb[0].mxu0
  %v1875 = vpop.f32.mrb[0].mxu0
  %v1876 = vadd.f32 0.0, %v1875
  %v1877 = vpop.f32.mrb[0].mxu0
  %1878 = vmatprep.mubr.bf16.mxu0 0
  %1879 = vmatmul.mubr.bf16.gmra.mrb[0].mxu0 %v1713
  %v1880 = vpop.f32.mrb[0].mxu0
  %v1881 = vadd.f32 0.0, %v1880
  %v1882 = vpop.f32.mrb[0].mxu0
  %v1883 = vpop.f32.mrb[0].mxu0
  %v1884 = vadd.f32 0.0, %v1883
  %v1885 = vpop.f32.mrb[0].mxu0
  %1886 = vmatprep.mubr.bf16.mxu0 0
  %1887 = vmatmul.mubr.bf16.gmra.mrb[0].mxu0 %v1716
  %v1888 = vpop.f32.mrb[0].mxu0
  %v1889 = vadd.f32 0.0, %v1888
  %v1890 = vpop.f32.mrb[0].mxu0
  %v1891 = vpop.f32.mrb[0].mxu0
  %v1892 = vadd.f32 0.0, %v1891
  %v1893 = vpop.f32.mrb[0].mxu0
  %1894 = vmatprep.mubr.bf16.mxu0 0
  %1895 = vmatmul.mubr.bf16.gmra.mrb[0].mxu0 %v1719
  %v1896 = vpop.f32.mrb[0].mxu0
  %v1897 = vadd.f32 0.0, %v1896
  %v1898 = vpop.f32.mrb[0].mxu0
  %v1899 = vpop.f32.mrb[0].mxu0
  %v1900 = vadd.f32 0.0, %v1899
  %v1901 = vpop.f32.mrb[0].mxu0
  %1902 = vmatprep.mubr.bf16.mxu0 0
  %1903 = vmatmul.mubr.bf16.gmra.mrb[0].mxu0 %v1722
  %v1904 = vpop.f32.mrb[0].mxu0
  %v1905 = vadd.f32 0.0, %v1904
  %v1906 = vpop.f32.mrb[0].mxu0
  %v1907 = vpop.f32.mrb[0].mxu0
  %v1908 = vadd.f32 0.0, %v1907
  %v1909 = vpop.f32.mrb[0].mxu0
  %1910 = vmatprep.mubr.bf16.mxu0 0
  %1911 = vmatmul.mubr.bf16.gmra.mrb[0].mxu0 %v1725
  %v1912 = vpop.f32.mrb[0].mxu0
  %v1913 = vadd.f32 0.0, %v1912
  %v1914 = vpop.f32.mrb[0].mxu0
  %v1915 = vpop.f32.mrb[0].mxu0
  %v1916 = vadd.f32 0.0, %v1915
  %v1917 = vpop.f32.mrb[0].mxu0
  %1918 = vmatprep.mubr.bf16.mxu0 0
  %1919 = vmatmul.mubr.bf16.gmra.mrb[0].mxu0 %v1728
  %v1920 = vpop.f32.mrb[0].mxu0
  %v1921 = vadd.f32 0.0, %v1920
  %v1922 = vpop.f32.mrb[0].mxu0
  %v1923 = vpop.f32.mrb[0].mxu0
  %v1924 = vadd.f32 0.0, %v1923
  %v1925 = vpop.f32.mrb[0].mxu0
  %1926 = vmatprep.mubr.bf16.mxu0 0
  %1927 = vmatmul.mubr.bf16.gmra.mrb[0].mxu0 %v1731
  %v1928 = vpop.f32.mrb[0].mxu0
  %v1929 = vadd.f32 0.0, %v1928
  %v1930 = vpop.f32.mrb[0].mxu0
  %v1931 = vpop.f32.mrb[0].mxu0
  %v1932 = vadd.f32 0.0, %v1931
  %v1933 = vpop.f32.mrb[0].mxu0
  %1934 = vmatprep.mubr.bf16.mxu0 0
  %1935 = vmatmul.mubr.bf16.gmra.mrb[0].mxu0 %v1734
  %v1936 = vpop.f32.mrb[0].mxu0
  %v1937 = vadd.f32 0.0, %v1936
  %v1938 = vpop.f32.mrb[0].mxu0
  %v1939 = vpop.f32.mrb[0].mxu0
  %v1940 = vadd.f32 0.0, %v1939
  %v1941 = vpop.f32.mrb[0].mxu0
  %1942 = vmatprep.mubr.bf16.mxu0 0
  %1943 = vmatmul.mubr.bf16.gmra.mrb[0].mxu0 %v1737
  %v1944 = vpop.f32.mrb[0].mxu0
  %v1945 = vadd.f32 0.0, %v1944
  %v1946 = vpop.f32.mrb[0].mxu0
  %v1947 = vpop.f32.mrb[0].mxu0
  %v1948 = vadd.f32 0.0, %v1947
  %v1949 = vpop.f32.mrb[0].mxu0
  %1950 = vmatprep.mubr.bf16.mxu0 0
  %1951 = vmatmul.mubr.bf16.gmra.mrb[0].mxu0 %v1740
  %v1952 = vpop.f32.mrb[0].mxu0
  %v1953 = vadd.f32 0.0, %v1952
  %v1954 = vpop.f32.mrb[0].mxu0
  %v1955 = vpop.f32.mrb[0].mxu0
  %v1956 = vadd.f32 0.0, %v1955
  %v1957 = vpop.f32.mrb[0].mxu0
  %1958 = vmatprep.mubr.bf16.mxu0 0
  %1959 = vmatmul.mubr.bf16.gmra.mrb[0].mxu0 %v1743
  %v1960 = vpop.f32.mrb[0].mxu0
  %v1961 = vadd.f32 0.0, %v1960
  %v1962 = vpop.f32.mrb[0].mxu0
  %v1963 = vpop.f32.mrb[0].mxu0
  %v1964 = vadd.f32 0.0, %v1963
  %v1965 = vpop.f32.mrb[0].mxu0
  %1966 = vmatprep.mubr.bf16.mxu0 0
  %1967 = vmatmul.mubr.bf16.gmra.mrb[0].mxu0 %v1746
  %v1968 = vpop.f32.mrb[0].mxu0
  %v1969 = vadd.f32 0.0, %v1968
  %v1970 = vpop.f32.mrb[0].mxu0
  %v1971 = vpop.f32.mrb[0].mxu0
  %v1972 = vadd.f32 0.0, %v1971
  %v1973 = vpop.f32.mrb[0].mxu0
  %1974 = vmatprep.mubr.bf16.mxu0 0
  %1975 = vmatmul.mubr.bf16.gmra.mrb[0].mxu0 %v1749
  %v1976 = vpop.f32.mrb[0].mxu0
  %v1977 = vadd.f32 0.0, %v1976
  %v1978 = vpop.f32.mrb[0].mxu0
  %v1979 = vpop.f32.mrb[0].mxu0
  %v1980 = vadd.f32 0.0, %v1979
  %v1981 = vpop.f32.mrb[0].mxu0
  %1982 = vmatprep.mubr.bf16.mxu0 0
  %1983 = vmatmul.mubr.bf16.gmra.mrb[0].mxu0 %v1752
  %v1984 = vpop.f32.mrb[0].mxu0
  %v1985 = vadd.f32 0.0, %v1984
  %v1986 = vpop.f32.mrb[0].mxu0
  %v1987 = vpop.f32.mrb[0].mxu0
  %v1988 = vadd.f32 0.0, %v1987
  %v1989 = vpop.f32.mrb[0].mxu0
  %1990 = vmatprep.mubr.bf16.mxu0 0
  %1991 = vmatmul.mubr.bf16.gmra.mrb[0].mxu0 %v1755
  %v1992 = vpop.f32.mrb[0].mxu0
  %v1993 = vadd.f32 0.0, %v1992
  %v1994 = vpop.f32.mrb[0].mxu0
  %v1995 = vpop.f32.mrb[0].mxu0
  %v1996 = vadd.f32 0.0, %v1995
  %v1997 = vpop.f32.mrb[0].mxu0
  %1998 = vmatprep.mubr.bf16.mxu0 0
  %1999 = vmatmul.mubr.bf16.gmra.mrb[0].mxu0 %v1758
  %v2000 = vpop.f32.mrb[0].mxu0
  %v2001 = vadd.f32 0.0, %v2000
  %v2002 = vpop.f32.mrb[0].mxu0
  %v2003 = vpop.f32.mrb[0].mxu0
  %v2004 = vadd.f32 0.0, %v2003
  %v2005 = vpop.f32.mrb[0].mxu0
  %2006 = vmatprep.mubr.bf16.mxu0 0
  %2007 = vmatmul.mubr.bf16.gmra.mrb[0].mxu0 %v1761
  %v2008 = vpop.f32.mrb[0].mxu0
  %v2009 = vadd.f32 0.0, %v2008
  %v2010 = vpop.f32.mrb[0].mxu0
  %v2011 = vpop.f32.mrb[0].mxu0
  %v2012 = vadd.f32 0.0, %v2011
  %v2013 = vpop.f32.mrb[0].mxu0
  %2014 = vmatprep.mubr.bf16.mxu0 0
  %2015 = vmatmul.mubr.bf16.gmra.mrb[0].mxu0 %v1764
  %v2016 = vpop.f32.mrb[0].mxu0
  %v2017 = vadd.f32 0.0, %v2016
  %v2018 = vpop.f32.mrb[0].mxu0
  %v2019 = vpop.f32.mrb[0].mxu0
  %v2020 = vadd.f32 0.0, %v2019
  %v2021 = vpop.f32.mrb[0].mxu0
  %2022 = vmatprep.mubr.bf16.mxu0 0
  %2023 = vmatmul.mubr.bf16.gmra.mrb[0].mxu0 %v1767
  %v2024 = vpop.f32.mrb[0].mxu0
  %v2025 = vadd.f32 0.0, %v2024
  %v2026 = vpop.f32.mrb[0].mxu0
  %v2027 = vpop.f32.mrb[0].mxu0
  %v2028 = vadd.f32 0.0, %v2027
  %v2029 = vpop.f32.mrb[0].mxu0
  %2030 = vmatprep.mubr.bf16.mxu0 0
  %2031 = vmatmul.mubr.bf16.gmra.mrb[0].mxu0 %v1770
  %v2032 = vpop.f32.mrb[0].mxu0
  %v2033 = vadd.f32 0.0, %v2032
  %v2034 = vpop.f32.mrb[0].mxu0
  %v2035 = vpop.f32.mrb[0].mxu0
  %v2036 = vadd.f32 0.0, %v2035
  %v2037 = vpop.f32.mrb[0].mxu0
  %2038 = vmatprep.mubr.bf16.mxu0 0
  %2039 = vmatmul.mubr.bf16.gmra.mrb[0].mxu0 %v1773
  %v2040 = vpop.f32.mrb[0].mxu0
  %v2041 = vadd.f32 0.0, %v2040
  %v2042 = vpop.f32.mrb[0].mxu0
  %v2043 = vpop.f32.mrb[0].mxu0
  %v2044 = vadd.f32 0.0, %v2043
  %v2045 = vpop.f32.mrb[0].mxu0
  %2046 = vmatprep.mubr.bf16.mxu0 0
  %2047 = vmatmul.mubr.bf16.gmra.mrb[0].mxu0 %v1776
  %v2048 = vpop.f32.mrb[0].mxu0
  %v2049 = vadd.f32 0.0, %v2048
  %v2050 = vpop.f32.mrb[0].mxu0
  %v2051 = vpop.f32.mrb[0].mxu0
  %v2052 = vadd.f32 0.0, %v2051
  %v2053 = vpop.f32.mrb[0].mxu0
  %2054 = vmatprep.mubr.bf16.mxu0 0
  %2055 = vmatmul.mubr.bf16.gmra.mrb[0].mxu0 %v1779
  %v2056 = vpop.f32.mrb[0].mxu0
  %v2057 = vadd.f32 0.0, %v2056
  %v2058 = vpop.f32.mrb[0].mxu0
  %v2059 = vpop.f32.mrb[0].mxu0
  %v2060 = vadd.f32 0.0, %v2059
  %v2061 = vpop.f32.mrb[0].mxu0
  %2062 = vmatprep.mubr.bf16.mxu0 0
  %2063 = vmatmul.mubr.bf16.gmra.mrb[0].mxu0 %v1782
  %v2064 = vpop.f32.mrb[0].mxu0
  %v2065 = vadd.f32 0.0, %v2064
  %v2066 = vpop.f32.mrb[0].mxu0
  %v2067 = vpop.f32.mrb[0].mxu0
  %v2068 = vadd.f32 0.0, %v2067
  %v2069 = vpop.f32.mrb[0].mxu0
  %2070 = vmatprep.mubr.bf16.mxu0 0
  %2071 = vmatmul.mubr.bf16.gmra.mrb[0].mxu0 %v1785
  %v2072 = vpop.f32.mrb[0].mxu0
  %v2073 = vadd.f32 0.0, %v2072
  %v2074 = vpop.f32.mrb[0].mxu0
  %v2075 = vpop.f32.mrb[0].mxu0
  %v2076 = vadd.f32 0.0, %v2075
  %v2077 = vpop.f32.mrb[0].mxu0
  %2078 = vdwg.mxu0
  %v2079 = vadd.f32 %v1082, %v1825
  %v2080 = vadd.f32 %v1085, %v1828
  %v2081 = vadd.f32 %v1090, %v1833
  %v2082 = vadd.f32 %v1093, %v1836
  %v2083 = vadd.f32 %v1098, %v1841
  %v2084 = vadd.f32 %v1101, %v1844
  %v2085 = vadd.f32 %v1106, %v1849
  %v2086 = vadd.f32 %v1109, %v1852
  %v2087 = vadd.f32 %v1114, %v1857
  %v2088 = vadd.f32 %v1117, %v1860
  %v2089 = vadd.f32 %v1122, %v1865
  %v2090 = vadd.f32 %v1125, %v1868
  %v2091 = vadd.f32 %v1130, %v1873
  %v2092 = vadd.f32 %v1133, %v1876
  %v2093 = vadd.f32 %v1138, %v1881
  %v2094 = vadd.f32 %v1141, %v1884
  %v2095 = vadd.f32 %v1146, %v1889
  %v2096 = vadd.f32 %v1149, %v1892
  %v2097 = vadd.f32 %v1154, %v1897
  %v2098 = vadd.f32 %v1157, %v1900
  %v2099 = vadd.f32 %v1162, %v1905
  %v2100 = vadd.f32 %v1165, %v1908
  %v2101 = vadd.f32 %v1170, %v1913
  %v2102 = vadd.f32 %v1173, %v1916
  %v2103 = vadd.f32 %v1178, %v1921
  %v2104 = vadd.f32 %v1181, %v1924
  %v2105 = vadd.f32 %v1186, %v1929
  %v2106 = vadd.f32 %v1189, %v1932
  %v2107 = vadd.f32 %v1194, %v1937
  %v2108 = vadd.f32 %v1197, %v1940
  %v2109 = vadd.f32 %v1202, %v1945
  %v2110 = vadd.f32 %v1205, %v1948
  %v2111 = vadd.f32 %v1210, %v1953
  %v2112 = vadd.f32 %v1213, %v1956
  %v2113 = vadd.f32 %v1218, %v1961
  %v2114 = vadd.f32 %v1221, %v1964
  %v2115 = vadd.f32 %v1226, %v1969
  %v2116 = vadd.f32 %v1229, %v1972
  %v2117 = vadd.f32 %v1234, %v1977
  %v2118 = vadd.f32 %v1237, %v1980
  %v2119 = vadd.f32 %v1242, %v1985
  %v2120 = vadd.f32 %v1245, %v1988
  %v2121 = vadd.f32 %v1250, %v1993
  %v2122 = vadd.f32 %v1253, %v1996
  %v2123 = vadd.f32 %v1258, %v2001
  %v2124 = vadd.f32 %v1261, %v2004
  %v2125 = vadd.f32 %v1266, %v2009
  %v2126 = vadd.f32 %v1269, %v2012
  %v2127 = vadd.f32 %v1274, %v2017
  %v2128 = vadd.f32 %v1277, %v2020
  %v2129 = vadd.f32 %v1282, %v2025
  %v2130 = vadd.f32 %v1285, %v2028
  %v2131 = vadd.f32 %v1290, %v2033
  %v2132 = vadd.f32 %v1293, %v2036
  %v2133 = vadd.f32 %v1298, %v2041
  %v2134 = vadd.f32 %v1301, %v2044
  %v2135 = vadd.f32 %v1306, %v2049
  %v2136 = vadd.f32 %v1309, %v2052
  %v2137 = vadd.f32 %v1314, %v2057
  %v2138 = vadd.f32 %v1317, %v2060
  %v2139 = vadd.f32 %v1322, %v2065
  %v2140 = vadd.f32 %v1325, %v2068
  %v2141 = vadd.f32 %v1330, %v2073
  %v2142 = vadd.f32 %v1333, %v2076
  %s2143 = scalar_lea.vmem %s4, 6
  %v2144 = vld [vmem:[%s2143] sm:$0x3]
  %v2146 = vsel %vm555, %v392, 0
  %v2149 = vsel %vm555, %v394, 0
  %v2152 = vsel %vm555, %v396, 0
  %v2155 = vsel %vm555, %v398, 0
  %v2158 = vsel %vm555, %v400, 0
  %v2161 = vsel %vm555, %v402, 0
  %v2164 = vsel %vm555, %v404, 0
  %v2167 = vsel %vm555, %v406, 0
  %v2170 = vsel %vm555, %v408, 0
  %v2173 = vsel %vm555, %v410, 0
  %v2176 = vsel %vm555, %v412, 0
  %v2179 = vsel %vm555, %v414, 0
  %v2182 = vsel %vm555, %v416, 0
  %v2185 = vsel %vm555, %v418, 0
  %v2188 = vsel %vm555, %v420, 0
  %v2191 = vsel %vm555, %v422, 0
  %v2194 = vsel %vm555, %v424, 0
  %v2197 = vsel %vm555, %v426, 0
  %v2200 = vsel %vm555, %v428, 0
  %v2203 = vsel %vm555, %v430, 0
  %v2206 = vsel %vm555, %v432, 0
  %v2209 = vsel %vm555, %v434, 0
  %v2212 = vsel %vm555, %v436, 0
  %v2215 = vsel %vm555, %v438, 0
  %v2218 = vsel %vm555, %v440, 0
  %v2221 = vsel %vm555, %v442, 0
  %v2224 = vsel %vm555, %v444, 0
  %v2227 = vsel %vm555, %v446, 0
  %v2230 = vsel %vm555, %v448, 0
  %v2233 = vsel %vm555, %v450, 0
  %v2236 = vsel %vm555, %v452, 0
  %v2239 = vsel %vm555, %v454, 0
  %v2242 = vand.u32 %v2144, %v655
  %2244 = vmatprep.subr.bf16.mxu0 0
  %2245 = vmatpush1.bf16.msra.mxu0 %v2242
  %2246 = vmatprep.subr.bf16.mxu0 0
  %2247 = vmatpush1.bf16.msra.mxu0 0
  %2248 = vmatprep.subr.bf16.mxu0 0
  %2249 = vmatpush1.bf16.msra.mxu0 0
  %2250 = vmatprep.subr.bf16.mxu0 0
  %2251 = vmatpush1.bf16.msra.mxu0 0
  %2252 = vmatprep.subr.bf16.mxu0 0
  %2253 = vmatpush1.bf16.msra.mxu0 0
  %2254 = vmatprep.subr.bf16.mxu0 0
  %2255 = vmatpush1.bf16.msra.mxu0 0
  %2256 = vmatprep.subr.bf16.mxu0 0
  %2257 = vmatpush1.bf16.msra.mxu0 0
  %2258 = vmatprep.subr.bf16.mxu0 0
  %2259 = vmatpush1.bf16.msra.mxu0 0
  %2260 = vmatprep.subr.bf16.mxu0 0
  %2261 = vmatpush1.bf16.msra.mxu0 0
  %2262 = vmatprep.subr.bf16.mxu0 0
  %2263 = vmatpush1.bf16.msra.mxu0 0
  %2264 = vmatprep.subr.bf16.mxu0 0
  %2265 = vmatpush1.bf16.msra.mxu0 0
  %2266 = vmatprep.subr.bf16.mxu0 0
  %2267 = vmatpush1.bf16.msra.mxu0 0
  %2268 = vmatprep.subr.bf16.mxu0 0
  %2269 = vmatpush1.bf16.msra.mxu0 0
  %2270 = vmatprep.subr.bf16.mxu0 0
  %2271 = vmatpush1.bf16.msra.mxu0 0
  %2272 = vmatprep.subr.bf16.mxu0 0
  %2273 = vmatpush1.bf16.msra.mxu0 0
  %2274 = vmatprep.subr.bf16.mxu0 0
  %2275 = vmatpush1.bf16.msra.mxu0 0
  %2276 = vmatprep.mubr.bf16.mxu0 0
  %2277 = vmatmul.mubr.bf16.gmra.mrb[0].mxu0 %v2146
  %v2278 = vpop.f32.mrb[0].mxu0
  %v2279 = vadd.f32 0.0, %v2278
  %v2280 = vpop.f32.mrb[0].mxu0
  %v2281 = vpop.f32.mrb[0].mxu0
  %v2282 = vadd.f32 0.0, %v2281
  %v2283 = vpop.f32.mrb[0].mxu0
  %2284 = vmatprep.mubr.bf16.mxu0 0
  %2285 = vmatmul.mubr.bf16.gmra.mrb[0].mxu0 %v2149
  %v2286 = vpop.f32.mrb[0].mxu0
  %v2287 = vadd.f32 0.0, %v2286
  %v2288 = vpop.f32.mrb[0].mxu0
  %v2289 = vpop.f32.mrb[0].mxu0
  %v2290 = vadd.f32 0.0, %v2289
  %v2291 = vpop.f32.mrb[0].mxu0
  %2292 = vmatprep.mubr.bf16.mxu0 0
  %2293 = vmatmul.mubr.bf16.gmra.mrb[0].mxu0 %v2152
  %v2294 = vpop.f32.mrb[0].mxu0
  %v2295 = vadd.f32 0.0, %v2294
  %v2296 = vpop.f32.mrb[0].mxu0
  %v2297 = vpop.f32.mrb[0].mxu0
  %v2298 = vadd.f32 0.0, %v2297
  %v2299 = vpop.f32.mrb[0].mxu0
  %2300 = vmatprep.mubr.bf16.mxu0 0
  %2301 = vmatmul.mubr.bf16.gmra.mrb[0].mxu0 %v2155
  %v2302 = vpop.f32.mrb[0].mxu0
  %v2303 = vadd.f32 0.0, %v2302
  %v2304 = vpop.f32.mrb[0].mxu0
  %v2305 = vpop.f32.mrb[0].mxu0
  %v2306 = vadd.f32 0.0, %v2305
  %v2307 = vpop.f32.mrb[0].mxu0
  %2308 = vmatprep.mubr.bf16.mxu0 0
  %2309 = vmatmul.mubr.bf16.gmra.mrb[0].mxu0 %v2158
  %v2310 = vpop.f32.mrb[0].mxu0
  %v2311 = vadd.f32 0.0, %v2310
  %v2312 = vpop.f32.mrb[0].mxu0
  %v2313 = vpop.f32.mrb[0].mxu0
  %v2314 = vadd.f32 0.0, %v2313
  %v2315 = vpop.f32.mrb[0].mxu0
  %2316 = vmatprep.mubr.bf16.mxu0 0
  %2317 = vmatmul.mubr.bf16.gmra.mrb[0].mxu0 %v2161
  %v2318 = vpop.f32.mrb[0].mxu0
  %v2319 = vadd.f32 0.0, %v2318
  %v2320 = vpop.f32.mrb[0].mxu0
  %v2321 = vpop.f32.mrb[0].mxu0
  %v2322 = vadd.f32 0.0, %v2321
  %v2323 = vpop.f32.mrb[0].mxu0
  %2324 = vmatprep.mubr.bf16.mxu0 0
  %2325 = vmatmul.mubr.bf16.gmra.mrb[0].mxu0 %v2164
  %v2326 = vpop.f32.mrb[0].mxu0
  %v2327 = vadd.f32 0.0, %v2326
  %v2328 = vpop.f32.mrb[0].mxu0
  %v2329 = vpop.f32.mrb[0].mxu0
  %v2330 = vadd.f32 0.0, %v2329
  %v2331 = vpop.f32.mrb[0].mxu0
  %2332 = vmatprep.mubr.bf16.mxu0 0
  %2333 = vmatmul.mubr.bf16.gmra.mrb[0].mxu0 %v2167
  %v2334 = vpop.f32.mrb[0].mxu0
  %v2335 = vadd.f32 0.0, %v2334
  %v2336 = vpop.f32.mrb[0].mxu0
  %v2337 = vpop.f32.mrb[0].mxu0
  %v2338 = vadd.f32 0.0, %v2337
  %v2339 = vpop.f32.mrb[0].mxu0
  %2340 = vmatprep.mubr.bf16.mxu0 0
  %2341 = vmatmul.mubr.bf16.gmra.mrb[0].mxu0 %v2170
  %v2342 = vpop.f32.mrb[0].mxu0
  %v2343 = vadd.f32 0.0, %v2342
  %v2344 = vpop.f32.mrb[0].mxu0
  %v2345 = vpop.f32.mrb[0].mxu0
  %v2346 = vadd.f32 0.0, %v2345
  %v2347 = vpop.f32.mrb[0].mxu0
  %2348 = vmatprep.mubr.bf16.mxu0 0
  %2349 = vmatmul.mubr.bf16.gmra.mrb[0].mxu0 %v2173
  %v2350 = vpop.f32.mrb[0].mxu0
  %v2351 = vadd.f32 0.0, %v2350
  %v2352 = vpop.f32.mrb[0].mxu0
  %v2353 = vpop.f32.mrb[0].mxu0
  %v2354 = vadd.f32 0.0, %v2353
  %v2355 = vpop.f32.mrb[0].mxu0
  %2356 = vmatprep.mubr.bf16.mxu0 0
  %2357 = vmatmul.mubr.bf16.gmra.mrb[0].mxu0 %v2176
  %v2358 = vpop.f32.mrb[0].mxu0
  %v2359 = vadd.f32 0.0, %v2358
  %v2360 = vpop.f32.mrb[0].mxu0
  %v2361 = vpop.f32.mrb[0].mxu0
  %v2362 = vadd.f32 0.0, %v2361
  %v2363 = vpop.f32.mrb[0].mxu0
  %2364 = vmatprep.mubr.bf16.mxu0 0
  %2365 = vmatmul.mubr.bf16.gmra.mrb[0].mxu0 %v2179
  %v2366 = vpop.f32.mrb[0].mxu0
  %v2367 = vadd.f32 0.0, %v2366
  %v2368 = vpop.f32.mrb[0].mxu0
  %v2369 = vpop.f32.mrb[0].mxu0
  %v2370 = vadd.f32 0.0, %v2369
  %v2371 = vpop.f32.mrb[0].mxu0
  %2372 = vmatprep.mubr.bf16.mxu0 0
  %2373 = vmatmul.mubr.bf16.gmra.mrb[0].mxu0 %v2182
  %v2374 = vpop.f32.mrb[0].mxu0
  %v2375 = vadd.f32 0.0, %v2374
  %v2376 = vpop.f32.mrb[0].mxu0
  %v2377 = vpop.f32.mrb[0].mxu0
  %v2378 = vadd.f32 0.0, %v2377
  %v2379 = vpop.f32.mrb[0].mxu0
  %2380 = vmatprep.mubr.bf16.mxu0 0
  %2381 = vmatmul.mubr.bf16.gmra.mrb[0].mxu0 %v2185
  %v2382 = vpop.f32.mrb[0].mxu0
  %v2383 = vadd.f32 0.0, %v2382
  %v2384 = vpop.f32.mrb[0].mxu0
  %v2385 = vpop.f32.mrb[0].mxu0
  %v2386 = vadd.f32 0.0, %v2385
  %v2387 = vpop.f32.mrb[0].mxu0
  %2388 = vmatprep.mubr.bf16.mxu0 0
  %2389 = vmatmul.mubr.bf16.gmra.mrb[0].mxu0 %v2188
  %v2390 = vpop.f32.mrb[0].mxu0
  %v2391 = vadd.f32 0.0, %v2390
  %v2392 = vpop.f32.mrb[0].mxu0
  %v2393 = vpop.f32.mrb[0].mxu0
  %v2394 = vadd.f32 0.0, %v2393
  %v2395 = vpop.f32.mrb[0].mxu0
  %2396 = vmatprep.mubr.bf16.mxu0 0
  %2397 = vmatmul.mubr.bf16.gmra.mrb[0].mxu0 %v2191
  %v2398 = vpop.f32.mrb[0].mxu0
  %v2399 = vadd.f32 0.0, %v2398
  %v2400 = vpop.f32.mrb[0].mxu0
  %v2401 = vpop.f32.mrb[0].mxu0
  %v2402 = vadd.f32 0.0, %v2401
  %v2403 = vpop.f32.mrb[0].mxu0
  %2404 = vmatprep.mubr.bf16.mxu0 0
  %2405 = vmatmul.mubr.bf16.gmra.mrb[0].mxu0 %v2194
  %v2406 = vpop.f32.mrb[0].mxu0
  %v2407 = vadd.f32 0.0, %v2406
  %v2408 = vpop.f32.mrb[0].mxu0
  %v2409 = vpop.f32.mrb[0].mxu0
  %v2410 = vadd.f32 0.0, %v2409
  %v2411 = vpop.f32.mrb[0].mxu0
  %2412 = vmatprep.mubr.bf16.mxu0 0
  %2413 = vmatmul.mubr.bf16.gmra.mrb[0].mxu0 %v2197
  %v2414 = vpop.f32.mrb[0].mxu0
  %v2415 = vadd.f32 0.0, %v2414
  %v2416 = vpop.f32.mrb[0].mxu0
  %v2417 = vpop.f32.mrb[0].mxu0
  %v2418 = vadd.f32 0.0, %v2417
  %v2419 = vpop.f32.mrb[0].mxu0
  %2420 = vmatprep.mubr.bf16.mxu0 0
  %2421 = vmatmul.mubr.bf16.gmra.mrb[0].mxu0 %v2200
  %v2422 = vpop.f32.mrb[0].mxu0
  %v2423 = vadd.f32 0.0, %v2422
  %v2424 = vpop.f32.mrb[0].mxu0
  %v2425 = vpop.f32.mrb[0].mxu0
  %v2426 = vadd.f32 0.0, %v2425
  %v2427 = vpop.f32.mrb[0].mxu0
  %2428 = vmatprep.mubr.bf16.mxu0 0
  %2429 = vmatmul.mubr.bf16.gmra.mrb[0].mxu0 %v2203
  %v2430 = vpop.f32.mrb[0].mxu0
  %v2431 = vadd.f32 0.0, %v2430
  %v2432 = vpop.f32.mrb[0].mxu0
  %v2433 = vpop.f32.mrb[0].mxu0
  %v2434 = vadd.f32 0.0, %v2433
  %v2435 = vpop.f32.mrb[0].mxu0
  %2436 = vmatprep.mubr.bf16.mxu0 0
  %2437 = vmatmul.mubr.bf16.gmra.mrb[0].mxu0 %v2206
  %v2438 = vpop.f32.mrb[0].mxu0
  %v2439 = vadd.f32 0.0, %v2438
  %v2440 = vpop.f32.mrb[0].mxu0
  %v2441 = vpop.f32.mrb[0].mxu0
  %v2442 = vadd.f32 0.0, %v2441
  %v2443 = vpop.f32.mrb[0].mxu0
  %2444 = vmatprep.mubr.bf16.mxu0 0
  %2445 = vmatmul.mubr.bf16.gmra.mrb[0].mxu0 %v2209
  %v2446 = vpop.f32.mrb[0].mxu0
  %v2447 = vadd.f32 0.0, %v2446
  %v2448 = vpop.f32.mrb[0].mxu0
  %v2449 = vpop.f32.mrb[0].mxu0
  %v2450 = vadd.f32 0.0, %v2449
  %v2451 = vpop.f32.mrb[0].mxu0
  %2452 = vmatprep.mubr.bf16.mxu0 0
  %2453 = vmatmul.mubr.bf16.gmra.mrb[0].mxu0 %v2212
  %v2454 = vpop.f32.mrb[0].mxu0
  %v2455 = vadd.f32 0.0, %v2454
  %v2456 = vpop.f32.mrb[0].mxu0
  %v2457 = vpop.f32.mrb[0].mxu0
  %v2458 = vadd.f32 0.0, %v2457
  %v2459 = vpop.f32.mrb[0].mxu0
  %2460 = vmatprep.mubr.bf16.mxu0 0
  %2461 = vmatmul.mubr.bf16.gmra.mrb[0].mxu0 %v2215
  %v2462 = vpop.f32.mrb[0].mxu0
  %v2463 = vadd.f32 0.0, %v2462
  %v2464 = vpop.f32.mrb[0].mxu0
  %v2465 = vpop.f32.mrb[0].mxu0
  %v2466 = vadd.f32 0.0, %v2465
  %v2467 = vpop.f32.mrb[0].mxu0
  %2468 = vmatprep.mubr.bf16.mxu0 0
  %2469 = vmatmul.mubr.bf16.gmra.mrb[0].mxu0 %v2218
  %v2470 = vpop.f32.mrb[0].mxu0
  %v2471 = vadd.f32 0.0, %v2470
  %v2472 = vpop.f32.mrb[0].mxu0
  %v2473 = vpop.f32.mrb[0].mxu0
  %v2474 = vadd.f32 0.0, %v2473
  %v2475 = vpop.f32.mrb[0].mxu0
  %2476 = vmatprep.mubr.bf16.mxu0 0
  %2477 = vmatmul.mubr.bf16.gmra.mrb[0].mxu0 %v2221
  %v2478 = vpop.f32.mrb[0].mxu0
  %v2479 = vadd.f32 0.0, %v2478
  %v2480 = vpop.f32.mrb[0].mxu0
  %v2481 = vpop.f32.mrb[0].mxu0
  %v2482 = vadd.f32 0.0, %v2481
  %v2483 = vpop.f32.mrb[0].mxu0
  %2484 = vmatprep.mubr.bf16.mxu0 0
  %2485 = vmatmul.mubr.bf16.gmra.mrb[0].mxu0 %v2224
  %v2486 = vpop.f32.mrb[0].mxu0
  %v2487 = vadd.f32 0.0, %v2486
  %v2488 = vpop.f32.mrb[0].mxu0
  %v2489 = vpop.f32.mrb[0].mxu0
  %v2490 = vadd.f32 0.0, %v2489
  %v2491 = vpop.f32.mrb[0].mxu0
  %2492 = vmatprep.mubr.bf16.mxu0 0
  %2493 = vmatmul.mubr.bf16.gmra.mrb[0].mxu0 %v2227
  %v2494 = vpop.f32.mrb[0].mxu0
  %v2495 = vadd.f32 0.0, %v2494
  %v2496 = vpop.f32.mrb[0].mxu0
  %v2497 = vpop.f32.mrb[0].mxu0
  %v2498 = vadd.f32 0.0, %v2497
  %v2499 = vpop.f32.mrb[0].mxu0
  %2500 = vmatprep.mubr.bf16.mxu0 0
  %2501 = vmatmul.mubr.bf16.gmra.mrb[0].mxu0 %v2230
  %v2502 = vpop.f32.mrb[0].mxu0
  %v2503 = vadd.f32 0.0, %v2502
  %v2504 = vpop.f32.mrb[0].mxu0
  %v2505 = vpop.f32.mrb[0].mxu0
  %v2506 = vadd.f32 0.0, %v2505
  %v2507 = vpop.f32.mrb[0].mxu0
  %2508 = vmatprep.mubr.bf16.mxu0 0
  %2509 = vmatmul.mubr.bf16.gmra.mrb[0].mxu0 %v2233
  %v2510 = vpop.f32.mrb[0].mxu0
  %v2511 = vadd.f32 0.0, %v2510
  %v2512 = vpop.f32.mrb[0].mxu0
  %v2513 = vpop.f32.mrb[0].mxu0
  %v2514 = vadd.f32 0.0, %v2513
  %v2515 = vpop.f32.mrb[0].mxu0
  %2516 = vmatprep.mubr.bf16.mxu0 0
  %2517 = vmatmul.mubr.bf16.gmra.mrb[0].mxu0 %v2236
  %v2518 = vpop.f32.mrb[0].mxu0
  %v2519 = vadd.f32 0.0, %v2518
  %v2520 = vpop.f32.mrb[0].mxu0
  %v2521 = vpop.f32.mrb[0].mxu0
  %v2522 = vadd.f32 0.0, %v2521
  %v2523 = vpop.f32.mrb[0].mxu0
  %2524 = vmatprep.mubr.bf16.mxu0 0
  %2525 = vmatmul.mubr.bf16.gmra.mrb[0].mxu0 %v2239
  %v2526 = vpop.f32.mrb[0].mxu0
  %v2527 = vadd.f32 0.0, %v2526
  %v2528 = vpop.f32.mrb[0].mxu0
  %v2529 = vpop.f32.mrb[0].mxu0
  %v2530 = vadd.f32 0.0, %v2529
  %v2531 = vpop.f32.mrb[0].mxu0
  %2532 = vdwg.mxu0
  %v2533 = vadd.f32 %v2079, %v2279
  %v2534 = vadd.f32 %v2080, %v2282
  %v2535 = vadd.f32 %v2081, %v2287
  %v2536 = vadd.f32 %v2082, %v2290
  %v2537 = vadd.f32 %v2083, %v2295
  %v2538 = vadd.f32 %v2084, %v2298
  %v2539 = vadd.f32 %v2085, %v2303
  %v2540 = vadd.f32 %v2086, %v2306
  %v2541 = vadd.f32 %v2087, %v2311
  %v2542 = vadd.f32 %v2088, %v2314
  %v2543 = vadd.f32 %v2089, %v2319
  %v2544 = vadd.f32 %v2090, %v2322
  %v2545 = vadd.f32 %v2091, %v2327
  %v2546 = vadd.f32 %v2092, %v2330
  %v2547 = vadd.f32 %v2093, %v2335
  %v2548 = vadd.f32 %v2094, %v2338
  %v2549 = vadd.f32 %v2095, %v2343
  %v2550 = vadd.f32 %v2096, %v2346
  %v2551 = vadd.f32 %v2097, %v2351
  %v2552 = vadd.f32 %v2098, %v2354
  %v2553 = vadd.f32 %v2099, %v2359
  %v2554 = vadd.f32 %v2100, %v2362
  %v2555 = vadd.f32 %v2101, %v2367
  %v2556 = vadd.f32 %v2102, %v2370
  %v2557 = vadd.f32 %v2103, %v2375
  %v2558 = vadd.f32 %v2104, %v2378
  %v2559 = vadd.f32 %v2105, %v2383
  %v2560 = vadd.f32 %v2106, %v2386
  %v2561 = vadd.f32 %v2107, %v2391
  %v2562 = vadd.f32 %v2108, %v2394
  %v2563 = vadd.f32 %v2109, %v2399
  %v2564 = vadd.f32 %v2110, %v2402
  %v2565 = vadd.f32 %v2111, %v2407
  %v2566 = vadd.f32 %v2112, %v2410
  %v2567 = vadd.f32 %v2113, %v2415
  %v2568 = vadd.f32 %v2114, %v2418
  %v2569 = vadd.f32 %v2115, %v2423
  %v2570 = vadd.f32 %v2116, %v2426
  %v2571 = vadd.f32 %v2117, %v2431
  %v2572 = vadd.f32 %v2118, %v2434
  %v2573 = vadd.f32 %v2119, %v2439
  %v2574 = vadd.f32 %v2120, %v2442
  %v2575 = vadd.f32 %v2121, %v2447
  %v2576 = vadd.f32 %v2122, %v2450
  %v2577 = vadd.f32 %v2123, %v2455
  %v2578 = vadd.f32 %v2124, %v2458
  %v2579 = vadd.f32 %v2125, %v2463
  %v2580 = vadd.f32 %v2126, %v2466
  %v2581 = vadd.f32 %v2127, %v2471
  %v2582 = vadd.f32 %v2128, %v2474
  %v2583 = vadd.f32 %v2129, %v2479
  %v2584 = vadd.f32 %v2130, %v2482
  %v2585 = vadd.f32 %v2131, %v2487
  %v2586 = vadd.f32 %v2132, %v2490
  %v2587 = vadd.f32 %v2133, %v2495
  %v2588 = vadd.f32 %v2134, %v2498
  %v2589 = vadd.f32 %v2135, %v2503
  %v2590 = vadd.f32 %v2136, %v2506
  %v2591 = vadd.f32 %v2137, %v2511
  %v2592 = vadd.f32 %v2138, %v2514
  %v2593 = vadd.f32 %v2139, %v2519
  %v2594 = vadd.f32 %v2140, %v2522
  %v2595 = vadd.f32 %v2141, %v2527
  %v2596 = vadd.f32 %v2142, %v2530
  %s2597 = scalar_lea.vmem %s4, 8
  %v2598 = vld [vmem:[%s2597] sm:$0x3]
  %v2600 = vsel %vm555, %v520, 0
  %v2603 = vsel %vm555, %v521, 0
  %v2606 = vsel %vm555, %v522, 0
  %v2609 = vsel %vm555, %v523, 0
  %v2612 = vsel %vm555, %v524, 0
  %v2615 = vsel %vm555, %v525, 0
  %v2618 = vsel %vm555, %v526, 0
  %v2621 = vsel %vm555, %v527, 0
  %v2624 = vsel %vm555, %v528, 0
  %v2627 = vsel %vm555, %v529, 0
  %v2630 = vsel %vm555, %v530, 0
  %v2633 = vsel %vm555, %v531, 0
  %v2636 = vsel %vm555, %v532, 0
  %v2639 = vsel %vm555, %v533, 0
  %v2642 = vsel %vm555, %v534, 0
  %v2645 = vsel %vm555, %v535, 0
  %v2648 = vsel %vm555, %v536, 0
  %v2651 = vsel %vm555, %v537, 0
  %v2654 = vsel %vm555, %v538, 0
  %v2657 = vsel %vm555, %v539, 0
  %v2660 = vsel %vm555, %v540, 0
  %v2663 = vsel %vm555, %v541, 0
  %v2666 = vsel %vm555, %v542, 0
  %v2669 = vsel %vm555, %v543, 0
  %v2672 = vsel %vm555, %v544, 0
  %v2675 = vsel %vm555, %v545, 0
  %v2678 = vsel %vm555, %v546, 0
  %v2681 = vsel %vm555, %v547, 0
  %v2684 = vsel %vm555, %v548, 0
  %v2687 = vsel %vm555, %v549, 0
  %v2690 = vsel %vm555, %v550, 0
  %v2693 = vsel %vm555, %v551, 0
  %v2696 = vand.u32 %v2598, %v655
  %2698 = vmatprep.subr.bf16.mxu0 0
  %2699 = vmatpush1.bf16.msra.mxu0 %v2696
  %2700 = vmatprep.subr.bf16.mxu0 0
  %2701 = vmatpush1.bf16.msra.mxu0 0
  %2702 = vmatprep.subr.bf16.mxu0 0
  %2703 = vmatpush1.bf16.msra.mxu0 0
  %2704 = vmatprep.subr.bf16.mxu0 0
  %2705 = vmatpush1.bf16.msra.mxu0 0
  %2706 = vmatprep.subr.bf16.mxu0 0
  %2707 = vmatpush1.bf16.msra.mxu0 0
  %2708 = vmatprep.subr.bf16.mxu0 0
  %2709 = vmatpush1.bf16.msra.mxu0 0
  %2710 = vmatprep.subr.bf16.mxu0 0
  %2711 = vmatpush1.bf16.msra.mxu0 0
  %2712 = vmatprep.subr.bf16.mxu0 0
  %2713 = vmatpush1.bf16.msra.mxu0 0
  %2714 = vmatprep.subr.bf16.mxu0 0
  %2715 = vmatpush1.bf16.msra.mxu0 0
  %2716 = vmatprep.subr.bf16.mxu0 0
  %2717 = vmatpush1.bf16.msra.mxu0 0
  %2718 = vmatprep.subr.bf16.mxu0 0
  %2719 = vmatpush1.bf16.msra.mxu0 0
  %2720 = vmatprep.subr.bf16.mxu0 0
  %2721 = vmatpush1.bf16.msra.mxu0 0
  %2722 = vmatprep.subr.bf16.mxu0 0
  %2723 = vmatpush1.bf16.msra.mxu0 0
  %2724 = vmatprep.subr.bf16.mxu0 0
  %2725 = vmatpush1.bf16.msra.mxu0 0
  %2726 = vmatprep.subr.bf16.mxu0 0
  %2727 = vmatpush1.bf16.msra.mxu0 0
  %2728 = vmatprep.subr.bf16.mxu0 0
  %2729 = vmatpush1.bf16.msra.mxu0 0
  %2730 = vmatprep.mubr.bf16.mxu0 0
  %2731 = vmatmul.mubr.bf16.gmra.mrb[0].mxu0 %v2600
  %v2732 = vpop.f32.mrb[0].mxu0
  %v2733 = vadd.f32 0.0, %v2732
  %v2734 = vpop.f32.mrb[0].mxu0
  %v2735 = vpop.f32.mrb[0].mxu0
  %v2736 = vadd.f32 0.0, %v2735
  %v2737 = vpop.f32.mrb[0].mxu0
  %2738 = vmatprep.mubr.bf16.mxu0 0
  %2739 = vmatmul.mubr.bf16.gmra.mrb[0].mxu0 %v2603
  %v2740 = vpop.f32.mrb[0].mxu0
  %v2741 = vadd.f32 0.0, %v2740
  %v2742 = vpop.f32.mrb[0].mxu0
  %v2743 = vpop.f32.mrb[0].mxu0
  %v2744 = vadd.f32 0.0, %v2743
  %v2745 = vpop.f32.mrb[0].mxu0
  %2746 = vmatprep.mubr.bf16.mxu0 0
  %2747 = vmatmul.mubr.bf16.gmra.mrb[0].mxu0 %v2606
  %v2748 = vpop.f32.mrb[0].mxu0
  %v2749 = vadd.f32 0.0, %v2748
  %v2750 = vpop.f32.mrb[0].mxu0
  %v2751 = vpop.f32.mrb[0].mxu0
  %v2752 = vadd.f32 0.0, %v2751
  %v2753 = vpop.f32.mrb[0].mxu0
  %2754 = vmatprep.mubr.bf16.mxu0 0
  %2755 = vmatmul.mubr.bf16.gmra.mrb[0].mxu0 %v2609
  %v2756 = vpop.f32.mrb[0].mxu0
  %v2757 = vadd.f32 0.0, %v2756
  %v2758 = vpop.f32.mrb[0].mxu0
  %v2759 = vpop.f32.mrb[0].mxu0
  %v2760 = vadd.f32 0.0, %v2759
  %v2761 = vpop.f32.mrb[0].mxu0
  %2762 = vmatprep.mubr.bf16.mxu0 0
  %2763 = vmatmul.mubr.bf16.gmra.mrb[0].mxu0 %v2612
  %v2764 = vpop.f32.mrb[0].mxu0
  %v2765 = vadd.f32 0.0, %v2764
  %v2766 = vpop.f32.mrb[0].mxu0
  %v2767 = vpop.f32.mrb[0].mxu0
  %v2768 = vadd.f32 0.0, %v2767
  %v2769 = vpop.f32.mrb[0].mxu0
  %2770 = vmatprep.mubr.bf16.mxu0 0
  %2771 = vmatmul.mubr.bf16.gmra.mrb[0].mxu0 %v2615
  %v2772 = vpop.f32.mrb[0].mxu0
  %v2773 = vadd.f32 0.0, %v2772
  %v2774 = vpop.f32.mrb[0].mxu0
  %v2775 = vpop.f32.mrb[0].mxu0
  %v2776 = vadd.f32 0.0, %v2775
  %v2777 = vpop.f32.mrb[0].mxu0
  %2778 = vmatprep.mubr.bf16.mxu0 0
  %2779 = vmatmul.mubr.bf16.gmra.mrb[0].mxu0 %v2618
  %v2780 = vpop.f32.mrb[0].mxu0
  %v2781 = vadd.f32 0.0, %v2780
  %v2782 = vpop.f32.mrb[0].mxu0
  %v2783 = vpop.f32.mrb[0].mxu0
  %v2784 = vadd.f32 0.0, %v2783
  %v2785 = vpop.f32.mrb[0].mxu0
  %2786 = vmatprep.mubr.bf16.mxu0 0
  %2787 = vmatmul.mubr.bf16.gmra.mrb[0].mxu0 %v2621
  %v2788 = vpop.f32.mrb[0].mxu0
  %v2789 = vadd.f32 0.0, %v2788
  %v2790 = vpop.f32.mrb[0].mxu0
  %v2791 = vpop.f32.mrb[0].mxu0
  %v2792 = vadd.f32 0.0, %v2791
  %v2793 = vpop.f32.mrb[0].mxu0
  %2794 = vmatprep.mubr.bf16.mxu0 0
  %2795 = vmatmul.mubr.bf16.gmra.mrb[0].mxu0 %v2624
  %v2796 = vpop.f32.mrb[0].mxu0
  %v2797 = vadd.f32 0.0, %v2796
  %v2798 = vpop.f32.mrb[0].mxu0
  %v2799 = vpop.f32.mrb[0].mxu0
  %v2800 = vadd.f32 0.0, %v2799
  %v2801 = vpop.f32.mrb[0].mxu0
  %2802 = vmatprep.mubr.bf16.mxu0 0
  %2803 = vmatmul.mubr.bf16.gmra.mrb[0].mxu0 %v2627
  %v2804 = vpop.f32.mrb[0].mxu0
  %v2805 = vadd.f32 0.0, %v2804
  %v2806 = vpop.f32.mrb[0].mxu0
  %v2807 = vpop.f32.mrb[0].mxu0
  %v2808 = vadd.f32 0.0, %v2807
  %v2809 = vpop.f32.mrb[0].mxu0
  %2810 = vmatprep.mubr.bf16.mxu0 0
  %2811 = vmatmul.mubr.bf16.gmra.mrb[0].mxu0 %v2630
  %v2812 = vpop.f32.mrb[0].mxu0
  %v2813 = vadd.f32 0.0, %v2812
  %v2814 = vpop.f32.mrb[0].mxu0
  %v2815 = vpop.f32.mrb[0].mxu0
  %v2816 = vadd.f32 0.0, %v2815
  %v2817 = vpop.f32.mrb[0].mxu0
  %2818 = vmatprep.mubr.bf16.mxu0 0
  %2819 = vmatmul.mubr.bf16.gmra.mrb[0].mxu0 %v2633
  %v2820 = vpop.f32.mrb[0].mxu0
  %v2821 = vadd.f32 0.0, %v2820
  %v2822 = vpop.f32.mrb[0].mxu0
  %v2823 = vpop.f32.mrb[0].mxu0
  %v2824 = vadd.f32 0.0, %v2823
  %v2825 = vpop.f32.mrb[0].mxu0
  %2826 = vmatprep.mubr.bf16.mxu0 0
  %2827 = vmatmul.mubr.bf16.gmra.mrb[0].mxu0 %v2636
  %v2828 = vpop.f32.mrb[0].mxu0
  %v2829 = vadd.f32 0.0, %v2828
  %v2830 = vpop.f32.mrb[0].mxu0
  %v2831 = vpop.f32.mrb[0].mxu0
  %v2832 = vadd.f32 0.0, %v2831
  %v2833 = vpop.f32.mrb[0].mxu0
  %2834 = vmatprep.mubr.bf16.mxu0 0
  %2835 = vmatmul.mubr.bf16.gmra.mrb[0].mxu0 %v2639
  %v2836 = vpop.f32.mrb[0].mxu0
  %v2837 = vadd.f32 0.0, %v2836
  %v2838 = vpop.f32.mrb[0].mxu0
  %v2839 = vpop.f32.mrb[0].mxu0
  %v2840 = vadd.f32 0.0, %v2839
  %v2841 = vpop.f32.mrb[0].mxu0
  %2842 = vmatprep.mubr.bf16.mxu0 0
  %2843 = vmatmul.mubr.bf16.gmra.mrb[0].mxu0 %v2642
  %v2844 = vpop.f32.mrb[0].mxu0
  %v2845 = vadd.f32 0.0, %v2844
  %v2846 = vpop.f32.mrb[0].mxu0
  %v2847 = vpop.f32.mrb[0].mxu0
  %v2848 = vadd.f32 0.0, %v2847
  %v2849 = vpop.f32.mrb[0].mxu0
  %2850 = vmatprep.mubr.bf16.mxu0 0
  %2851 = vmatmul.mubr.bf16.gmra.mrb[0].mxu0 %v2645
  %v2852 = vpop.f32.mrb[0].mxu0
  %v2853 = vadd.f32 0.0, %v2852
  %v2854 = vpop.f32.mrb[0].mxu0
  %v2855 = vpop.f32.mrb[0].mxu0
  %v2856 = vadd.f32 0.0, %v2855
  %v2857 = vpop.f32.mrb[0].mxu0
  %2858 = vmatprep.mubr.bf16.mxu0 0
  %2859 = vmatmul.mubr.bf16.gmra.mrb[0].mxu0 %v2648
  %v2860 = vpop.f32.mrb[0].mxu0
  %v2861 = vadd.f32 0.0, %v2860
  %v2862 = vpop.f32.mrb[0].mxu0
  %v2863 = vpop.f32.mrb[0].mxu0
  %v2864 = vadd.f32 0.0, %v2863
  %v2865 = vpop.f32.mrb[0].mxu0
  %2866 = vmatprep.mubr.bf16.mxu0 0
  %2867 = vmatmul.mubr.bf16.gmra.mrb[0].mxu0 %v2651
  %v2868 = vpop.f32.mrb[0].mxu0
  %v2869 = vadd.f32 0.0, %v2868
  %v2870 = vpop.f32.mrb[0].mxu0
  %v2871 = vpop.f32.mrb[0].mxu0
  %v2872 = vadd.f32 0.0, %v2871
  %v2873 = vpop.f32.mrb[0].mxu0
  %2874 = vmatprep.mubr.bf16.mxu0 0
  %2875 = vmatmul.mubr.bf16.gmra.mrb[0].mxu0 %v2654
  %v2876 = vpop.f32.mrb[0].mxu0
  %v2877 = vadd.f32 0.0, %v2876
  %v2878 = vpop.f32.mrb[0].mxu0
  %v2879 = vpop.f32.mrb[0].mxu0
  %v2880 = vadd.f32 0.0, %v2879
  %v2881 = vpop.f32.mrb[0].mxu0
  %2882 = vmatprep.mubr.bf16.mxu0 0
  %2883 = vmatmul.mubr.bf16.gmra.mrb[0].mxu0 %v2657
  %v2884 = vpop.f32.mrb[0].mxu0
  %v2885 = vadd.f32 0.0, %v2884
  %v2886 = vpop.f32.mrb[0].mxu0
  %v2887 = vpop.f32.mrb[0].mxu0
  %v2888 = vadd.f32 0.0, %v2887
  %v2889 = vpop.f32.mrb[0].mxu0
  %2890 = vmatprep.mubr.bf16.mxu0 0
  %2891 = vmatmul.mubr.bf16.gmra.mrb[0].mxu0 %v2660
  %v2892 = vpop.f32.mrb[0].mxu0
  %v2893 = vadd.f32 0.0, %v2892
  %v2894 = vpop.f32.mrb[0].mxu0
  %v2895 = vpop.f32.mrb[0].mxu0
  %v2896 = vadd.f32 0.0, %v2895
  %v2897 = vpop.f32.mrb[0].mxu0
  %2898 = vmatprep.mubr.bf16.mxu0 0
  %2899 = vmatmul.mubr.bf16.gmra.mrb[0].mxu0 %v2663
  %v2900 = vpop.f32.mrb[0].mxu0
  %v2901 = vadd.f32 0.0, %v2900
  %v2902 = vpop.f32.mrb[0].mxu0
  %v2903 = vpop.f32.mrb[0].mxu0
  %v2904 = vadd.f32 0.0, %v2903
  %v2905 = vpop.f32.mrb[0].mxu0
  %2906 = vmatprep.mubr.bf16.mxu0 0
  %2907 = vmatmul.mubr.bf16.gmra.mrb[0].mxu0 %v2666
  %v2908 = vpop.f32.mrb[0].mxu0
  %v2909 = vadd.f32 0.0, %v2908
  %v2910 = vpop.f32.mrb[0].mxu0
  %v2911 = vpop.f32.mrb[0].mxu0
  %v2912 = vadd.f32 0.0, %v2911
  %v2913 = vpop.f32.mrb[0].mxu0
  %2914 = vmatprep.mubr.bf16.mxu0 0
  %2915 = vmatmul.mubr.bf16.gmra.mrb[0].mxu0 %v2669
  %v2916 = vpop.f32.mrb[0].mxu0
  %v2917 = vadd.f32 0.0, %v2916
  %v2918 = vpop.f32.mrb[0].mxu0
  %v2919 = vpop.f32.mrb[0].mxu0
  %v2920 = vadd.f32 0.0, %v2919
  %v2921 = vpop.f32.mrb[0].mxu0
  %2922 = vmatprep.mubr.bf16.mxu0 0
  %2923 = vmatmul.mubr.bf16.gmra.mrb[0].mxu0 %v2672
  %v2924 = vpop.f32.mrb[0].mxu0
  %v2925 = vadd.f32 0.0, %v2924
  %v2926 = vpop.f32.mrb[0].mxu0
  %v2927 = vpop.f32.mrb[0].mxu0
  %v2928 = vadd.f32 0.0, %v2927
  %v2929 = vpop.f32.mrb[0].mxu0
  %2930 = vmatprep.mubr.bf16.mxu0 0
  %2931 = vmatmul.mubr.bf16.gmra.mrb[0].mxu0 %v2675
  %v2932 = vpop.f32.mrb[0].mxu0
  %v2933 = vadd.f32 0.0, %v2932
  %v2934 = vpop.f32.mrb[0].mxu0
  %v2935 = vpop.f32.mrb[0].mxu0
  %v2936 = vadd.f32 0.0, %v2935
  %v2937 = vpop.f32.mrb[0].mxu0
  %2938 = vmatprep.mubr.bf16.mxu0 0
  %2939 = vmatmul.mubr.bf16.gmra.mrb[0].mxu0 %v2678
  %v2940 = vpop.f32.mrb[0].mxu0
  %v2941 = vadd.f32 0.0, %v2940
  %v2942 = vpop.f32.mrb[0].mxu0
  %v2943 = vpop.f32.mrb[0].mxu0
  %v2944 = vadd.f32 0.0, %v2943
  %v2945 = vpop.f32.mrb[0].mxu0
  %2946 = vmatprep.mubr.bf16.mxu0 0
  %2947 = vmatmul.mubr.bf16.gmra.mrb[0].mxu0 %v2681
  %v2948 = vpop.f32.mrb[0].mxu0
  %v2949 = vadd.f32 0.0, %v2948
  %v2950 = vpop.f32.mrb[0].mxu0
  %v2951 = vpop.f32.mrb[0].mxu0
  %v2952 = vadd.f32 0.0, %v2951
  %v2953 = vpop.f32.mrb[0].mxu0
  %2954 = vmatprep.mubr.bf16.mxu0 0
  %2955 = vmatmul.mubr.bf16.gmra.mrb[0].mxu0 %v2684
  %v2956 = vpop.f32.mrb[0].mxu0
  %v2957 = vadd.f32 0.0, %v2956
  %v2958 = vpop.f32.mrb[0].mxu0
  %v2959 = vpop.f32.mrb[0].mxu0
  %v2960 = vadd.f32 0.0, %v2959
  %v2961 = vpop.f32.mrb[0].mxu0
  %2962 = vmatprep.mubr.bf16.mxu0 0
  %2963 = vmatmul.mubr.bf16.gmra.mrb[0].mxu0 %v2687
  %v2964 = vpop.f32.mrb[0].mxu0
  %v2965 = vadd.f32 0.0, %v2964
  %v2966 = vpop.f32.mrb[0].mxu0
  %v2967 = vpop.f32.mrb[0].mxu0
  %v2968 = vadd.f32 0.0, %v2967
  %v2969 = vpop.f32.mrb[0].mxu0
  %2970 = vmatprep.mubr.bf16.mxu0 0
  %2971 = vmatmul.mubr.bf16.gmra.mrb[0].mxu0 %v2690
  %v2972 = vpop.f32.mrb[0].mxu0
  %v2973 = vadd.f32 0.0, %v2972
  %v2974 = vpop.f32.mrb[0].mxu0
  %v2975 = vpop.f32.mrb[0].mxu0
  %v2976 = vadd.f32 0.0, %v2975
  %v2977 = vpop.f32.mrb[0].mxu0
  %2978 = vmatprep.mubr.bf16.mxu0 0
  %2979 = vmatmul.mubr.bf16.gmra.mrb[0].mxu0 %v2693
  %v2980 = vpop.f32.mrb[0].mxu0
  %v2981 = vadd.f32 0.0, %v2980
  %v2982 = vpop.f32.mrb[0].mxu0
  %v2983 = vpop.f32.mrb[0].mxu0
  %v2984 = vadd.f32 0.0, %v2983
  %v2985 = vpop.f32.mrb[0].mxu0
  %2986 = vdwg.mxu0
  %v2987 = vadd.f32 %v2533, %v2733
  %v2988 = vadd.f32 %v2534, %v2736
  %v2989 = vadd.f32 %v2535, %v2741
  %v2990 = vadd.f32 %v2536, %v2744
  %v2991 = vadd.f32 %v2537, %v2749
  %v2992 = vadd.f32 %v2538, %v2752
  %v2993 = vadd.f32 %v2539, %v2757
  %v2994 = vadd.f32 %v2540, %v2760
  %v2995 = vadd.f32 %v2541, %v2765
  %v2996 = vadd.f32 %v2542, %v2768
  %v2997 = vadd.f32 %v2543, %v2773
  %v2998 = vadd.f32 %v2544, %v2776
  %v2999 = vadd.f32 %v2545, %v2781
  %v3000 = vadd.f32 %v2546, %v2784
  %v3001 = vadd.f32 %v2547, %v2789
  %v3002 = vadd.f32 %v2548, %v2792
  %v3003 = vadd.f32 %v2549, %v2797
  %v3004 = vadd.f32 %v2550, %v2800
  %v3005 = vadd.f32 %v2551, %v2805
  %v3006 = vadd.f32 %v2552, %v2808
  %v3007 = vadd.f32 %v2553, %v2813
  %v3008 = vadd.f32 %v2554, %v2816
  %v3009 = vadd.f32 %v2555, %v2821
  %v3010 = vadd.f32 %v2556, %v2824
  %v3011 = vadd.f32 %v2557, %v2829
  %v3012 = vadd.f32 %v2558, %v2832
  %v3013 = vadd.f32 %v2559, %v2837
  %v3014 = vadd.f32 %v2560, %v2840
  %v3015 = vadd.f32 %v2561, %v2845
  %v3016 = vadd.f32 %v2562, %v2848
  %v3017 = vadd.f32 %v2563, %v2853
  %v3018 = vadd.f32 %v2564, %v2856
  %v3019 = vadd.f32 %v2565, %v2861
  %v3020 = vadd.f32 %v2566, %v2864
  %v3021 = vadd.f32 %v2567, %v2869
  %v3022 = vadd.f32 %v2568, %v2872
  %v3023 = vadd.f32 %v2569, %v2877
  %v3024 = vadd.f32 %v2570, %v2880
  %v3025 = vadd.f32 %v2571, %v2885
  %v3026 = vadd.f32 %v2572, %v2888
  %v3027 = vadd.f32 %v2573, %v2893
  %v3028 = vadd.f32 %v2574, %v2896
  %v3029 = vadd.f32 %v2575, %v2901
  %v3030 = vadd.f32 %v2576, %v2904
  %v3031 = vadd.f32 %v2577, %v2909
  %v3032 = vadd.f32 %v2578, %v2912
  %v3033 = vadd.f32 %v2579, %v2917
  %v3034 = vadd.f32 %v2580, %v2920
  %v3035 = vadd.f32 %v2581, %v2925
  %v3036 = vadd.f32 %v2582, %v2928
  %v3037 = vadd.f32 %v2583, %v2933
  %v3038 = vadd.f32 %v2584, %v2936
  %v3039 = vadd.f32 %v2585, %v2941
  %v3040 = vadd.f32 %v2586, %v2944
  %v3041 = vadd.f32 %v2587, %v2949
  %v3042 = vadd.f32 %v2588, %v2952
  %v3043 = vadd.f32 %v2589, %v2957
  %v3044 = vadd.f32 %v2590, %v2960
  %v3045 = vadd.f32 %v2591, %v2965
  %v3046 = vadd.f32 %v2592, %v2968
  %v3047 = vadd.f32 %v2593, %v2973
  %v3048 = vadd.f32 %v2594, %v2976
  %v3049 = vadd.f32 %v2595, %v2981
  %v3050 = vadd.f32 %v2596, %v2984
  %v3051 = vshrl.u32 %v392, 16
  %v3053 = vshll.u32 %v392, 16
  %v3055 = vrot.slane %v3053, 1
  %v3056 = vor.u32 %v3051, %v3055
  %v3058 = vshll.u32 %v393, 16
  %v3060 = vrot.slane %v3058, 1
  %v3061 = vsel %vm1336, %v3056, %v3060
  %v3062 = vshrl.u32 %v394, 16
  %v3064 = vshll.u32 %v394, 16
  %v3066 = vrot.slane %v3064, 1
  %v3067 = vor.u32 %v3062, %v3066
  %v3069 = vshll.u32 %v395, 16
  %v3071 = vrot.slane %v3069, 1
  %v3072 = vsel %vm1336, %v3067, %v3071
  %v3073 = vshrl.u32 %v396, 16
  %v3075 = vshll.u32 %v396, 16
  %v3077 = vrot.slane %v3075, 1
  %v3078 = vor.u32 %v3073, %v3077
  %v3080 = vshll.u32 %v397, 16
  %v3082 = vrot.slane %v3080, 1
  %v3083 = vsel %vm1336, %v3078, %v3082
  %v3084 = vshrl.u32 %v398, 16
  %v3086 = vshll.u32 %v398, 16
  %v3088 = vrot.slane %v3086, 1
  %v3089 = vor.u32 %v3084, %v3088
  %v3091 = vshll.u32 %v399, 16
  %v3093 = vrot.slane %v3091, 1
  %v3094 = vsel %vm1336, %v3089, %v3093
  %v3095 = vshrl.u32 %v400, 16
  %v3097 = vshll.u32 %v400, 16
  %v3099 = vrot.slane %v3097, 1
  %v3100 = vor.u32 %v3095, %v3099
  %v3102 = vshll.u32 %v401, 16
  %v3104 = vrot.slane %v3102, 1
  %v3105 = vsel %vm1336, %v3100, %v3104
  %v3106 = vshrl.u32 %v402, 16
  %v3108 = vshll.u32 %v402, 16
  %v3110 = vrot.slane %v3108, 1
  %v3111 = vor.u32 %v3106, %v3110
  %v3113 = vshll.u32 %v403, 16
  %v3115 = vrot.slane %v3113, 1
  %v3116 = vsel %vm1336, %v3111, %v3115
  %v3117 = vshrl.u32 %v404, 16
  %v3119 = vshll.u32 %v404, 16
  %v3121 = vrot.slane %v3119, 1
  %v3122 = vor.u32 %v3117, %v3121
  %v3124 = vshll.u32 %v405, 16
  %v3126 = vrot.slane %v3124, 1
  %v3127 = vsel %vm1336, %v3122, %v3126
  %v3128 = vshrl.u32 %v406, 16
  %v3130 = vshll.u32 %v406, 16
  %v3132 = vrot.slane %v3130, 1
  %v3133 = vor.u32 %v3128, %v3132
  %v3135 = vshll.u32 %v407, 16
  %v3137 = vrot.slane %v3135, 1
  %v3138 = vsel %vm1336, %v3133, %v3137
  %v3139 = vshrl.u32 %v408, 16
  %v3141 = vshll.u32 %v408, 16
  %v3143 = vrot.slane %v3141, 1
  %v3144 = vor.u32 %v3139, %v3143
  %v3146 = vshll.u32 %v409, 16
  %v3148 = vrot.slane %v3146, 1
  %v3149 = vsel %vm1336, %v3144, %v3148
  %v3150 = vshrl.u32 %v410, 16
  %v3152 = vshll.u32 %v410, 16
  %v3154 = vrot.slane %v3152, 1
  %v3155 = vor.u32 %v3150, %v3154
  %v3157 = vshll.u32 %v411, 16
  %v3159 = vrot.slane %v3157, 1
  %v3160 = vsel %vm1336, %v3155, %v3159
  %v3161 = vshrl.u32 %v412, 16
  %v3163 = vshll.u32 %v412, 16
  %v3165 = vrot.slane %v3163, 1
  %v3166 = vor.u32 %v3161, %v3165
  %v3168 = vshll.u32 %v413, 16
  %v3170 = vrot.slane %v3168, 1
  %v3171 = vsel %vm1336, %v3166, %v3170
  %v3172 = vshrl.u32 %v414, 16
  %v3174 = vshll.u32 %v414, 16
  %v3176 = vrot.slane %v3174, 1
  %v3177 = vor.u32 %v3172, %v3176
  %v3179 = vshll.u32 %v415, 16
  %v3181 = vrot.slane %v3179, 1
  %v3182 = vsel %vm1336, %v3177, %v3181
  %v3183 = vshrl.u32 %v416, 16
  %v3185 = vshll.u32 %v416, 16
  %v3187 = vrot.slane %v3185, 1
  %v3188 = vor.u32 %v3183, %v3187
  %v3190 = vshll.u32 %v417, 16
  %v3192 = vrot.slane %v3190, 1
  %v3193 = vsel %vm1336, %v3188, %v3192
  %v3194 = vshrl.u32 %v418, 16
  %v3196 = vshll.u32 %v418, 16
  %v3198 = vrot.slane %v3196, 1
  %v3199 = vor.u32 %v3194, %v3198
  %v3201 = vshll.u32 %v419, 16
  %v3203 = vrot.slane %v3201, 1
  %v3204 = vsel %vm1336, %v3199, %v3203
  %v3205 = vshrl.u32 %v420, 16
  %v3207 = vshll.u32 %v420, 16
  %v3209 = vrot.slane %v3207, 1
  %v3210 = vor.u32 %v3205, %v3209
  %v3212 = vshll.u32 %v421, 16
  %v3214 = vrot.slane %v3212, 1
  %v3215 = vsel %vm1336, %v3210, %v3214
  %v3216 = vshrl.u32 %v422, 16
  %v3218 = vshll.u32 %v422, 16
  %v3220 = vrot.slane %v3218, 1
  %v3221 = vor.u32 %v3216, %v3220
  %v3223 = vshll.u32 %v423, 16
  %v3225 = vrot.slane %v3223, 1
  %v3226 = vsel %vm1336, %v3221, %v3225
  %v3227 = vshrl.u32 %v424, 16
  %v3229 = vshll.u32 %v424, 16
  %v3231 = vrot.slane %v3229, 1
  %v3232 = vor.u32 %v3227, %v3231
  %v3234 = vshll.u32 %v425, 16
  %v3236 = vrot.slane %v3234, 1
  %v3237 = vsel %vm1336, %v3232, %v3236
  %v3238 = vshrl.u32 %v426, 16
  %v3240 = vshll.u32 %v426, 16
  %v3242 = vrot.slane %v3240, 1
  %v3243 = vor.u32 %v3238, %v3242
  %v3245 = vshll.u32 %v427, 16
  %v3247 = vrot.slane %v3245, 1
  %v3248 = vsel %vm1336, %v3243, %v3247
  %v3249 = vshrl.u32 %v428, 16
  %v3251 = vshll.u32 %v428, 16
  %v3253 = vrot.slane %v3251, 1
  %v3254 = vor.u32 %v3249, %v3253
  %v3256 = vshll.u32 %v429, 16
  %v3258 = vrot.slane %v3256, 1
  %v3259 = vsel %vm1336, %v3254, %v3258
  %v3260 = vshrl.u32 %v430, 16
  %v3262 = vshll.u32 %v430, 16
  %v3264 = vrot.slane %v3262, 1
  %v3265 = vor.u32 %v3260, %v3264
  %v3267 = vshll.u32 %v431, 16
  %v3269 = vrot.slane %v3267, 1
  %v3270 = vsel %vm1336, %v3265, %v3269
  %v3271 = vshrl.u32 %v432, 16
  %v3273 = vshll.u32 %v432, 16
  %v3275 = vrot.slane %v3273, 1
  %v3276 = vor.u32 %v3271, %v3275
  %v3278 = vshll.u32 %v433, 16
  %v3280 = vrot.slane %v3278, 1
  %v3281 = vsel %vm1336, %v3276, %v3280
  %v3282 = vshrl.u32 %v434, 16
  %v3284 = vshll.u32 %v434, 16
  %v3286 = vrot.slane %v3284, 1
  %v3287 = vor.u32 %v3282, %v3286
  %v3289 = vshll.u32 %v435, 16
  %v3291 = vrot.slane %v3289, 1
  %v3292 = vsel %vm1336, %v3287, %v3291
  %v3293 = vshrl.u32 %v436, 16
  %v3295 = vshll.u32 %v436, 16
  %v3297 = vrot.slane %v3295, 1
  %v3298 = vor.u32 %v3293, %v3297
  %v3300 = vshll.u32 %v437, 16
  %v3302 = vrot.slane %v3300, 1
  %v3303 = vsel %vm1336, %v3298, %v3302
  %v3304 = vshrl.u32 %v438, 16
  %v3306 = vshll.u32 %v438, 16
  %v3308 = vrot.slane %v3306, 1
  %v3309 = vor.u32 %v3304, %v3308
  %v3311 = vshll.u32 %v439, 16
  %v3313 = vrot.slane %v3311, 1
  %v3314 = vsel %vm1336, %v3309, %v3313
  %v3315 = vshrl.u32 %v440, 16
  %v3317 = vshll.u32 %v440, 16
  %v3319 = vrot.slane %v3317, 1
  %v3320 = vor.u32 %v3315, %v3319
  %v3322 = vshll.u32 %v441, 16
  %v3324 = vrot.slane %v3322, 1
  %v3325 = vsel %vm1336, %v3320, %v3324
  %v3326 = vshrl.u32 %v442, 16
  %v3328 = vshll.u32 %v442, 16
  %v3330 = vrot.slane %v3328, 1
  %v3331 = vor.u32 %v3326, %v3330
  %v3333 = vshll.u32 %v443, 16
  %v3335 = vrot.slane %v3333, 1
  %v3336 = vsel %vm1336, %v3331, %v3335
  %v3337 = vshrl.u32 %v444, 16
  %v3339 = vshll.u32 %v444, 16
  %v3341 = vrot.slane %v3339, 1
  %v3342 = vor.u32 %v3337, %v3341
  %v3344 = vshll.u32 %v445, 16
  %v3346 = vrot.slane %v3344, 1
  %v3347 = vsel %vm1336, %v3342, %v3346
  %v3348 = vshrl.u32 %v446, 16
  %v3350 = vshll.u32 %v446, 16
  %v3352 = vrot.slane %v3350, 1
  %v3353 = vor.u32 %v3348, %v3352
  %v3355 = vshll.u32 %v447, 16
  %v3357 = vrot.slane %v3355, 1
  %v3358 = vsel %vm1336, %v3353, %v3357
  %v3359 = vshrl.u32 %v448, 16
  %v3361 = vshll.u32 %v448, 16
  %v3363 = vrot.slane %v3361, 1
  %v3364 = vor.u32 %v3359, %v3363
  %v3366 = vshll.u32 %v449, 16
  %v3368 = vrot.slane %v3366, 1
  %v3369 = vsel %vm1336, %v3364, %v3368
  %v3370 = vshrl.u32 %v450, 16
  %v3372 = vshll.u32 %v450, 16
  %v3374 = vrot.slane %v3372, 1
  %v3375 = vor.u32 %v3370, %v3374
  %v3377 = vshll.u32 %v451, 16
  %v3379 = vrot.slane %v3377, 1
  %v3380 = vsel %vm1336, %v3375, %v3379
  %v3381 = vshrl.u32 %v452, 16
  %v3383 = vshll.u32 %v452, 16
  %v3385 = vrot.slane %v3383, 1
  %v3386 = vor.u32 %v3381, %v3385
  %v3388 = vshll.u32 %v453, 16
  %v3390 = vrot.slane %v3388, 1
  %v3391 = vsel %vm1336, %v3386, %v3390
  %v3392 = vshrl.u32 %v454, 16
  %v3394 = vshll.u32 %v454, 16
  %v3396 = vrot.slane %v3394, 1
  %v3397 = vor.u32 %v3392, %v3396
  %v3399 = vshll.u32 %v455, 16
  %v3401 = vrot.slane %v3399, 1
  %v3402 = vsel %vm1336, %v3397, %v3401
  %s3403 = scalar_lea.vmem %s4, 10
  %v3404 = vld [vmem:[%s3403] sm:$0x3]
  %v3406 = vsel %vm555, %v3061, 0
  %v3409 = vsel %vm555, %v3072, 0
  %v3412 = vsel %vm555, %v3083, 0
  %v3415 = vsel %vm555, %v3094, 0
  %v3418 = vsel %vm555, %v3105, 0
  %v3421 = vsel %vm555, %v3116, 0
  %v3424 = vsel %vm555, %v3127, 0
  %v3427 = vsel %vm555, %v3138, 0
  %v3430 = vsel %vm555, %v3149, 0
  %v3433 = vsel %vm555, %v3160, 0
  %v3436 = vsel %vm555, %v3171, 0
  %v3439 = vsel %vm555, %v3182, 0
  %v3442 = vsel %vm555, %v3193, 0
  %v3445 = vsel %vm555, %v3204, 0
  %v3448 = vsel %vm555, %v3215, 0
  %v3451 = vsel %vm555, %v3226, 0
  %v3454 = vsel %vm555, %v3237, 0
  %v3457 = vsel %vm555, %v3248, 0
  %v3460 = vsel %vm555, %v3259, 0
  %v3463 = vsel %vm555, %v3270, 0
  %v3466 = vsel %vm555, %v3281, 0
  %v3469 = vsel %vm555, %v3292, 0
  %v3472 = vsel %vm555, %v3303, 0
  %v3475 = vsel %vm555, %v3314, 0
  %v3478 = vsel %vm555, %v3325, 0
  %v3481 = vsel %vm555, %v3336, 0
  %v3484 = vsel %vm555, %v3347, 0
  %v3487 = vsel %vm555, %v3358, 0
  %v3490 = vsel %vm555, %v3369, 0
  %v3493 = vsel %vm555, %v3380, 0
  %v3496 = vsel %vm555, %v3391, 0
  %v3499 = vsel %vm555, %v3402, 0
  %v3502 = vand.u32 %v3404, %v655
  %3504 = vmatprep.subr.bf16.mxu0 0
  %3505 = vmatpush1.bf16.msra.mxu0 %v3502
  %3506 = vmatprep.subr.bf16.mxu0 0
  %3507 = vmatpush1.bf16.msra.mxu0 0
  %3508 = vmatprep.subr.bf16.mxu0 0
  %3509 = vmatpush1.bf16.msra.mxu0 0
  %3510 = vmatprep.subr.bf16.mxu0 0
  %3511 = vmatpush1.bf16.msra.mxu0 0
  %3512 = vmatprep.subr.bf16.mxu0 0
  %3513 = vmatpush1.bf16.msra.mxu0 0
  %3514 = vmatprep.subr.bf16.mxu0 0
  %3515 = vmatpush1.bf16.msra.mxu0 0
  %3516 = vmatprep.subr.bf16.mxu0 0
  %3517 = vmatpush1.bf16.msra.mxu0 0
  %3518 = vmatprep.subr.bf16.mxu0 0
  %3519 = vmatpush1.bf16.msra.mxu0 0
  %3520 = vmatprep.subr.bf16.mxu0 0
  %3521 = vmatpush1.bf16.msra.mxu0 0
  %3522 = vmatprep.subr.bf16.mxu0 0
  %3523 = vmatpush1.bf16.msra.mxu0 0
  %3524 = vmatprep.subr.bf16.mxu0 0
  %3525 = vmatpush1.bf16.msra.mxu0 0
  %3526 = vmatprep.subr.bf16.mxu0 0
  %3527 = vmatpush1.bf16.msra.mxu0 0
  %3528 = vmatprep.subr.bf16.mxu0 0
  %3529 = vmatpush1.bf16.msra.mxu0 0
  %3530 = vmatprep.subr.bf16.mxu0 0
  %3531 = vmatpush1.bf16.msra.mxu0 0
  %3532 = vmatprep.subr.bf16.mxu0 0
  %3533 = vmatpush1.bf16.msra.mxu0 0
  %3534 = vmatprep.subr.bf16.mxu0 0
  %3535 = vmatpush1.bf16.msra.mxu0 0
  %3536 = vmatprep.mubr.bf16.mxu0 0
  %3537 = vmatmul.mubr.bf16.gmra.mrb[0].mxu0 %v3406
  %v3538 = vpop.f32.mrb[0].mxu0
  %v3539 = vadd.f32 0.0, %v3538
  %v3540 = vpop.f32.mrb[0].mxu0
  %v3541 = vpop.f32.mrb[0].mxu0
  %v3542 = vadd.f32 0.0, %v3541
  %v3543 = vpop.f32.mrb[0].mxu0
  %3544 = vmatprep.mubr.bf16.mxu0 0
  %3545 = vmatmul.mubr.bf16.gmra.mrb[0].mxu0 %v3409
  %v3546 = vpop.f32.mrb[0].mxu0
  %v3547 = vadd.f32 0.0, %v3546
  %v3548 = vpop.f32.mrb[0].mxu0
  %v3549 = vpop.f32.mrb[0].mxu0
  %v3550 = vadd.f32 0.0, %v3549
  %v3551 = vpop.f32.mrb[0].mxu0
  %3552 = vmatprep.mubr.bf16.mxu0 0
  %3553 = vmatmul.mubr.bf16.gmra.mrb[0].mxu0 %v3412
  %v3554 = vpop.f32.mrb[0].mxu0
  %v3555 = vadd.f32 0.0, %v3554
  %v3556 = vpop.f32.mrb[0].mxu0
  %v3557 = vpop.f32.mrb[0].mxu0
  %v3558 = vadd.f32 0.0, %v3557
  %v3559 = vpop.f32.mrb[0].mxu0
  %3560 = vmatprep.mubr.bf16.mxu0 0
  %3561 = vmatmul.mubr.bf16.gmra.mrb[0].mxu0 %v3415
  %v3562 = vpop.f32.mrb[0].mxu0
  %v3563 = vadd.f32 0.0, %v3562
  %v3564 = vpop.f32.mrb[0].mxu0
  %v3565 = vpop.f32.mrb[0].mxu0
  %v3566 = vadd.f32 0.0, %v3565
  %v3567 = vpop.f32.mrb[0].mxu0
  %3568 = vmatprep.mubr.bf16.mxu0 0
  %3569 = vmatmul.mubr.bf16.gmra.mrb[0].mxu0 %v3418
  %v3570 = vpop.f32.mrb[0].mxu0
  %v3571 = vadd.f32 0.0, %v3570
  %v3572 = vpop.f32.mrb[0].mxu0
  %v3573 = vpop.f32.mrb[0].mxu0
  %v3574 = vadd.f32 0.0, %v3573
  %v3575 = vpop.f32.mrb[0].mxu0
  %3576 = vmatprep.mubr.bf16.mxu0 0
  %3577 = vmatmul.mubr.bf16.gmra.mrb[0].mxu0 %v3421
  %v3578 = vpop.f32.mrb[0].mxu0
  %v3579 = vadd.f32 0.0, %v3578
  %v3580 = vpop.f32.mrb[0].mxu0
  %v3581 = vpop.f32.mrb[0].mxu0
  %v3582 = vadd.f32 0.0, %v3581
  %v3583 = vpop.f32.mrb[0].mxu0
  %3584 = vmatprep.mubr.bf16.mxu0 0
  %3585 = vmatmul.mubr.bf16.gmra.mrb[0].mxu0 %v3424
  %v3586 = vpop.f32.mrb[0].mxu0
  %v3587 = vadd.f32 0.0, %v3586
  %v3588 = vpop.f32.mrb[0].mxu0
  %v3589 = vpop.f32.mrb[0].mxu0
  %v3590 = vadd.f32 0.0, %v3589
  %v3591 = vpop.f32.mrb[0].mxu0
  %3592 = vmatprep.mubr.bf16.mxu0 0
  %3593 = vmatmul.mubr.bf16.gmra.mrb[0].mxu0 %v3427
  %v3594 = vpop.f32.mrb[0].mxu0
  %v3595 = vadd.f32 0.0, %v3594
  %v3596 = vpop.f32.mrb[0].mxu0
  %v3597 = vpop.f32.mrb[0].mxu0
  %v3598 = vadd.f32 0.0, %v3597
  %v3599 = vpop.f32.mrb[0].mxu0
  %3600 = vmatprep.mubr.bf16.mxu0 0
  %3601 = vmatmul.mubr.bf16.gmra.mrb[0].mxu0 %v3430
  %v3602 = vpop.f32.mrb[0].mxu0
  %v3603 = vadd.f32 0.0, %v3602
  %v3604 = vpop.f32.mrb[0].mxu0
  %v3605 = vpop.f32.mrb[0].mxu0
  %v3606 = vadd.f32 0.0, %v3605
  %v3607 = vpop.f32.mrb[0].mxu0
  %3608 = vmatprep.mubr.bf16.mxu0 0
  %3609 = vmatmul.mubr.bf16.gmra.mrb[0].mxu0 %v3433
  %v3610 = vpop.f32.mrb[0].mxu0
  %v3611 = vadd.f32 0.0, %v3610
  %v3612 = vpop.f32.mrb[0].mxu0
  %v3613 = vpop.f32.mrb[0].mxu0
  %v3614 = vadd.f32 0.0, %v3613
  %v3615 = vpop.f32.mrb[0].mxu0
  %3616 = vmatprep.mubr.bf16.mxu0 0
  %3617 = vmatmul.mubr.bf16.gmra.mrb[0].mxu0 %v3436
  %v3618 = vpop.f32.mrb[0].mxu0
  %v3619 = vadd.f32 0.0, %v3618
  %v3620 = vpop.f32.mrb[0].mxu0
  %v3621 = vpop.f32.mrb[0].mxu0
  %v3622 = vadd.f32 0.0, %v3621
  %v3623 = vpop.f32.mrb[0].mxu0
  %3624 = vmatprep.mubr.bf16.mxu0 0
  %3625 = vmatmul.mubr.bf16.gmra.mrb[0].mxu0 %v3439
  %v3626 = vpop.f32.mrb[0].mxu0
  %v3627 = vadd.f32 0.0, %v3626
  %v3628 = vpop.f32.mrb[0].mxu0
  %v3629 = vpop.f32.mrb[0].mxu0
  %v3630 = vadd.f32 0.0, %v3629
  %v3631 = vpop.f32.mrb[0].mxu0
  %3632 = vmatprep.mubr.bf16.mxu0 0
  %3633 = vmatmul.mubr.bf16.gmra.mrb[0].mxu0 %v3442
  %v3634 = vpop.f32.mrb[0].mxu0
  %v3635 = vadd.f32 0.0, %v3634
  %v3636 = vpop.f32.mrb[0].mxu0
  %v3637 = vpop.f32.mrb[0].mxu0
  %v3638 = vadd.f32 0.0, %v3637
  %v3639 = vpop.f32.mrb[0].mxu0
  %3640 = vmatprep.mubr.bf16.mxu0 0
  %3641 = vmatmul.mubr.bf16.gmra.mrb[0].mxu0 %v3445
  %v3642 = vpop.f32.mrb[0].mxu0
  %v3643 = vadd.f32 0.0, %v3642
  %v3644 = vpop.f32.mrb[0].mxu0
  %v3645 = vpop.f32.mrb[0].mxu0
  %v3646 = vadd.f32 0.0, %v3645
  %v3647 = vpop.f32.mrb[0].mxu0
  %3648 = vmatprep.mubr.bf16.mxu0 0
  %3649 = vmatmul.mubr.bf16.gmra.mrb[0].mxu0 %v3448
  %v3650 = vpop.f32.mrb[0].mxu0
  %v3651 = vadd.f32 0.0, %v3650
  %v3652 = vpop.f32.mrb[0].mxu0
  %v3653 = vpop.f32.mrb[0].mxu0
  %v3654 = vadd.f32 0.0, %v3653
  %v3655 = vpop.f32.mrb[0].mxu0
  %3656 = vmatprep.mubr.bf16.mxu0 0
  %3657 = vmatmul.mubr.bf16.gmra.mrb[0].mxu0 %v3451
  %v3658 = vpop.f32.mrb[0].mxu0
  %v3659 = vadd.f32 0.0, %v3658
  %v3660 = vpop.f32.mrb[0].mxu0
  %v3661 = vpop.f32.mrb[0].mxu0
  %v3662 = vadd.f32 0.0, %v3661
  %v3663 = vpop.f32.mrb[0].mxu0
  %3664 = vmatprep.mubr.bf16.mxu0 0
  %3665 = vmatmul.mubr.bf16.gmra.mrb[0].mxu0 %v3454
  %v3666 = vpop.f32.mrb[0].mxu0
  %v3667 = vadd.f32 0.0, %v3666
  %v3668 = vpop.f32.mrb[0].mxu0
  %v3669 = vpop.f32.mrb[0].mxu0
  %v3670 = vadd.f32 0.0, %v3669
  %v3671 = vpop.f32.mrb[0].mxu0
  %3672 = vmatprep.mubr.bf16.mxu0 0
  %3673 = vmatmul.mubr.bf16.gmra.mrb[0].mxu0 %v3457
  %v3674 = vpop.f32.mrb[0].mxu0
  %v3675 = vadd.f32 0.0, %v3674
  %v3676 = vpop.f32.mrb[0].mxu0
  %v3677 = vpop.f32.mrb[0].mxu0
  %v3678 = vadd.f32 0.0, %v3677
  %v3679 = vpop.f32.mrb[0].mxu0
  %3680 = vmatprep.mubr.bf16.mxu0 0
  %3681 = vmatmul.mubr.bf16.gmra.mrb[0].mxu0 %v3460
  %v3682 = vpop.f32.mrb[0].mxu0
  %v3683 = vadd.f32 0.0, %v3682
  %v3684 = vpop.f32.mrb[0].mxu0
  %v3685 = vpop.f32.mrb[0].mxu0
  %v3686 = vadd.f32 0.0, %v3685
  %v3687 = vpop.f32.mrb[0].mxu0
  %3688 = vmatprep.mubr.bf16.mxu0 0
  %3689 = vmatmul.mubr.bf16.gmra.mrb[0].mxu0 %v3463
  %v3690 = vpop.f32.mrb[0].mxu0
  %v3691 = vadd.f32 0.0, %v3690
  %v3692 = vpop.f32.mrb[0].mxu0
  %v3693 = vpop.f32.mrb[0].mxu0
  %v3694 = vadd.f32 0.0, %v3693
  %v3695 = vpop.f32.mrb[0].mxu0
  %3696 = vmatprep.mubr.bf16.mxu0 0
  %3697 = vmatmul.mubr.bf16.gmra.mrb[0].mxu0 %v3466
  %v3698 = vpop.f32.mrb[0].mxu0
  %v3699 = vadd.f32 0.0, %v3698
  %v3700 = vpop.f32.mrb[0].mxu0
  %v3701 = vpop.f32.mrb[0].mxu0
  %v3702 = vadd.f32 0.0, %v3701
  %v3703 = vpop.f32.mrb[0].mxu0
  %3704 = vmatprep.mubr.bf16.mxu0 0
  %3705 = vmatmul.mubr.bf16.gmra.mrb[0].mxu0 %v3469
  %v3706 = vpop.f32.mrb[0].mxu0
  %v3707 = vadd.f32 0.0, %v3706
  %v3708 = vpop.f32.mrb[0].mxu0
  %v3709 = vpop.f32.mrb[0].mxu0
  %v3710 = vadd.f32 0.0, %v3709
  %v3711 = vpop.f32.mrb[0].mxu0
  %3712 = vmatprep.mubr.bf16.mxu0 0
  %3713 = vmatmul.mubr.bf16.gmra.mrb[0].mxu0 %v3472
  %v3714 = vpop.f32.mrb[0].mxu0
  %v3715 = vadd.f32 0.0, %v3714
  %v3716 = vpop.f32.mrb[0].mxu0
  %v3717 = vpop.f32.mrb[0].mxu0
  %v3718 = vadd.f32 0.0, %v3717
  %v3719 = vpop.f32.mrb[0].mxu0
  %3720 = vmatprep.mubr.bf16.mxu0 0
  %3721 = vmatmul.mubr.bf16.gmra.mrb[0].mxu0 %v3475
  %v3722 = vpop.f32.mrb[0].mxu0
  %v3723 = vadd.f32 0.0, %v3722
  %v3724 = vpop.f32.mrb[0].mxu0
  %v3725 = vpop.f32.mrb[0].mxu0
  %v3726 = vadd.f32 0.0, %v3725
  %v3727 = vpop.f32.mrb[0].mxu0
  %3728 = vmatprep.mubr.bf16.mxu0 0
  %3729 = vmatmul.mubr.bf16.gmra.mrb[0].mxu0 %v3478
  %v3730 = vpop.f32.mrb[0].mxu0
  %v3731 = vadd.f32 0.0, %v3730
  %v3732 = vpop.f32.mrb[0].mxu0
  %v3733 = vpop.f32.mrb[0].mxu0
  %v3734 = vadd.f32 0.0, %v3733
  %v3735 = vpop.f32.mrb[0].mxu0
  %3736 = vmatprep.mubr.bf16.mxu0 0
  %3737 = vmatmul.mubr.bf16.gmra.mrb[0].mxu0 %v3481
  %v3738 = vpop.f32.mrb[0].mxu0
  %v3739 = vadd.f32 0.0, %v3738
  %v3740 = vpop.f32.mrb[0].mxu0
  %v3741 = vpop.f32.mrb[0].mxu0
  %v3742 = vadd.f32 0.0, %v3741
  %v3743 = vpop.f32.mrb[0].mxu0
  %3744 = vmatprep.mubr.bf16.mxu0 0
  %3745 = vmatmul.mubr.bf16.gmra.mrb[0].mxu0 %v3484
  %v3746 = vpop.f32.mrb[0].mxu0
  %v3747 = vadd.f32 0.0, %v3746
  %v3748 = vpop.f32.mrb[0].mxu0
  %v3749 = vpop.f32.mrb[0].mxu0
  %v3750 = vadd.f32 0.0, %v3749
  %v3751 = vpop.f32.mrb[0].mxu0
  %3752 = vmatprep.mubr.bf16.mxu0 0
  %3753 = vmatmul.mubr.bf16.gmra.mrb[0].mxu0 %v3487
  %v3754 = vpop.f32.mrb[0].mxu0
  %v3755 = vadd.f32 0.0, %v3754
  %v3756 = vpop.f32.mrb[0].mxu0
  %v3757 = vpop.f32.mrb[0].mxu0
  %v3758 = vadd.f32 0.0, %v3757
  %v3759 = vpop.f32.mrb[0].mxu0
  %3760 = vmatprep.mubr.bf16.mxu0 0
  %3761 = vmatmul.mubr.bf16.gmra.mrb[0].mxu0 %v3490
  %v3762 = vpop.f32.mrb[0].mxu0
  %v3763 = vadd.f32 0.0, %v3762
  %v3764 = vpop.f32.mrb[0].mxu0
  %v3765 = vpop.f32.mrb[0].mxu0
  %v3766 = vadd.f32 0.0, %v3765
  %v3767 = vpop.f32.mrb[0].mxu0
  %3768 = vmatprep.mubr.bf16.mxu0 0
  %3769 = vmatmul.mubr.bf16.gmra.mrb[0].mxu0 %v3493
  %v3770 = vpop.f32.mrb[0].mxu0
  %v3771 = vadd.f32 0.0, %v3770
  %v3772 = vpop.f32.mrb[0].mxu0
  %v3773 = vpop.f32.mrb[0].mxu0
  %v3774 = vadd.f32 0.0, %v3773
  %v3775 = vpop.f32.mrb[0].mxu0
  %3776 = vmatprep.mubr.bf16.mxu0 0
  %3777 = vmatmul.mubr.bf16.gmra.mrb[0].mxu0 %v3496
  %v3778 = vpop.f32.mrb[0].mxu0
  %v3779 = vadd.f32 0.0, %v3778
  %v3780 = vpop.f32.mrb[0].mxu0
  %v3781 = vpop.f32.mrb[0].mxu0
  %v3782 = vadd.f32 0.0, %v3781
  %v3783 = vpop.f32.mrb[0].mxu0
  %3784 = vmatprep.mubr.bf16.mxu0 0
  %3785 = vmatmul.mubr.bf16.gmra.mrb[0].mxu0 %v3499
  %v3786 = vpop.f32.mrb[0].mxu0
  %v3787 = vadd.f32 0.0, %v3786
  %v3788 = vpop.f32.mrb[0].mxu0
  %v3789 = vpop.f32.mrb[0].mxu0
  %v3790 = vadd.f32 0.0, %v3789
  %v3791 = vpop.f32.mrb[0].mxu0
  %3792 = vdwg.mxu0
  %v3793 = vadd.f32 %v2987, %v3539
  %v3794 = vadd.f32 %v2988, %v3542
  %v3795 = vadd.f32 %v2989, %v3547
  %v3796 = vadd.f32 %v2990, %v3550
  %v3797 = vadd.f32 %v2991, %v3555
  %v3798 = vadd.f32 %v2992, %v3558
  %v3799 = vadd.f32 %v2993, %v3563
  %v3800 = vadd.f32 %v2994, %v3566
  %v3801 = vadd.f32 %v2995, %v3571
  %v3802 = vadd.f32 %v2996, %v3574
  %v3803 = vadd.f32 %v2997, %v3579
  %v3804 = vadd.f32 %v2998, %v3582
  %v3805 = vadd.f32 %v2999, %v3587
  %v3806 = vadd.f32 %v3000, %v3590
  %v3807 = vadd.f32 %v3001, %v3595
  %v3808 = vadd.f32 %v3002, %v3598
  %v3809 = vadd.f32 %v3003, %v3603
  %v3810 = vadd.f32 %v3004, %v3606
  %v3811 = vadd.f32 %v3005, %v3611
  %v3812 = vadd.f32 %v3006, %v3614
  %v3813 = vadd.f32 %v3007, %v3619
  %v3814 = vadd.f32 %v3008, %v3622
  %v3815 = vadd.f32 %v3009, %v3627
  %v3816 = vadd.f32 %v3010, %v3630
  %v3817 = vadd.f32 %v3011, %v3635
  %v3818 = vadd.f32 %v3012, %v3638
  %v3819 = vadd.f32 %v3013, %v3643
  %v3820 = vadd.f32 %v3014, %v3646
  %v3821 = vadd.f32 %v3015, %v3651
  %v3822 = vadd.f32 %v3016, %v3654
  %v3823 = vadd.f32 %v3017, %v3659
  %v3824 = vadd.f32 %v3018, %v3662
  %v3825 = vadd.f32 %v3019, %v3667
  %v3826 = vadd.f32 %v3020, %v3670
  %v3827 = vadd.f32 %v3021, %v3675
  %v3828 = vadd.f32 %v3022, %v3678
  %v3829 = vadd.f32 %v3023, %v3683
  %v3830 = vadd.f32 %v3024, %v3686
  %v3831 = vadd.f32 %v3025, %v3691
  %v3832 = vadd.f32 %v3026, %v3694
  %v3833 = vadd.f32 %v3027, %v3699
  %v3834 = vadd.f32 %v3028, %v3702
  %v3835 = vadd.f32 %v3029, %v3707
  %v3836 = vadd.f32 %v3030, %v3710
  %v3837 = vadd.f32 %v3031, %v3715
  %v3838 = vadd.f32 %v3032, %v3718
  %v3839 = vadd.f32 %v3033, %v3723
  %v3840 = vadd.f32 %v3034, %v3726
  %v3841 = vadd.f32 %v3035, %v3731
  %v3842 = vadd.f32 %v3036, %v3734
  %v3843 = vadd.f32 %v3037, %v3739
  %v3844 = vadd.f32 %v3038, %v3742
  %v3845 = vadd.f32 %v3039, %v3747
  %v3846 = vadd.f32 %v3040, %v3750
  %v3847 = vadd.f32 %v3041, %v3755
  %v3848 = vadd.f32 %v3042, %v3758
  %v3849 = vadd.f32 %v3043, %v3763
  %v3850 = vadd.f32 %v3044, %v3766
  %v3851 = vadd.f32 %v3045, %v3771
  %v3852 = vadd.f32 %v3046, %v3774
  %v3853 = vadd.f32 %v3047, %v3779
  %v3854 = vadd.f32 %v3048, %v3782
  %v3855 = vadd.f32 %v3049, %v3787
  %v3856 = vadd.f32 %v3050, %v3790
  %s3857 = scalar_lea.vmem %s4, 12
  %v3858 = vld [vmem:[%s3857] sm:$0x3]
  %v3860 = vsel %vm555, %v158, 0
  %v3863 = vsel %vm555, %v192, 0
  %v3866 = vand.u32 %v3858, %v655
  %3868 = vmatprep.subr.bf16.mxu0 0
  %3869 = vmatpush1.bf16.msra.mxu0 %v3866
  %3870 = vmatprep.subr.bf16.mxu0 0
  %3871 = vmatpush1.bf16.msra.mxu0 0
  %3872 = vmatprep.subr.bf16.mxu0 0
  %3873 = vmatpush1.bf16.msra.mxu0 0
  %3874 = vmatprep.subr.bf16.mxu0 0
  %3875 = vmatpush1.bf16.msra.mxu0 0
  %3876 = vmatprep.subr.bf16.mxu0 0
  %3877 = vmatpush1.bf16.msra.mxu0 0
  %3878 = vmatprep.subr.bf16.mxu0 0
  %3879 = vmatpush1.bf16.msra.mxu0 0
  %3880 = vmatprep.subr.bf16.mxu0 0
  %3881 = vmatpush1.bf16.msra.mxu0 0
  %3882 = vmatprep.subr.bf16.mxu0 0
  %3883 = vmatpush1.bf16.msra.mxu0 0
  %3884 = vmatprep.subr.bf16.mxu0 0
  %3885 = vmatpush1.bf16.msra.mxu0 0
  %3886 = vmatprep.subr.bf16.mxu0 0
  %3887 = vmatpush1.bf16.msra.mxu0 0
  %3888 = vmatprep.subr.bf16.mxu0 0
  %3889 = vmatpush1.bf16.msra.mxu0 0
  %3890 = vmatprep.subr.bf16.mxu0 0
  %3891 = vmatpush1.bf16.msra.mxu0 0
  %3892 = vmatprep.subr.bf16.mxu0 0
  %3893 = vmatpush1.bf16.msra.mxu0 0
  %3894 = vmatprep.subr.bf16.mxu0 0
  %3895 = vmatpush1.bf16.msra.mxu0 0
  %3896 = vmatprep.subr.bf16.mxu0 0
  %3897 = vmatpush1.bf16.msra.mxu0 0
  %3898 = vmatprep.subr.bf16.mxu0 0
  %3899 = vmatpush1.bf16.msra.mxu0 0
  %3900 = vmatprep.mubr.bf16.mxu0 0
  %3901 = vmatmul.mubr.bf16.gmra.mrb[0].mxu0 %v952
  %v3902 = vpop.f32.mrb[0].mxu0
  %v3903 = vadd.f32 0.0, %v3902
  %v3904 = vpop.f32.mrb[0].mxu0
  %v3905 = vpop.f32.mrb[0].mxu0
  %v3906 = vadd.f32 0.0, %v3905
  %v3907 = vpop.f32.mrb[0].mxu0
  %3908 = vmatprep.mubr.bf16.mxu0 0
  %3909 = vmatmul.mubr.bf16.gmra.mrb[0].mxu0 %v955
  %v3910 = vpop.f32.mrb[0].mxu0
  %v3911 = vadd.f32 0.0, %v3910
  %v3912 = vpop.f32.mrb[0].mxu0
  %v3913 = vpop.f32.mrb[0].mxu0
  %v3914 = vadd.f32 0.0, %v3913
  %v3915 = vpop.f32.mrb[0].mxu0
  %3916 = vmatprep.mubr.bf16.mxu0 0
  %3917 = vmatmul.mubr.bf16.gmra.mrb[0].mxu0 %v958
  %v3918 = vpop.f32.mrb[0].mxu0
  %v3919 = vadd.f32 0.0, %v3918
  %v3920 = vpop.f32.mrb[0].mxu0
  %v3921 = vpop.f32.mrb[0].mxu0
  %v3922 = vadd.f32 0.0, %v3921
  %v3923 = vpop.f32.mrb[0].mxu0
  %3924 = vmatprep.mubr.bf16.mxu0 0
  %3925 = vmatmul.mubr.bf16.gmra.mrb[0].mxu0 %v961
  %v3926 = vpop.f32.mrb[0].mxu0
  %v3927 = vadd.f32 0.0, %v3926
  %v3928 = vpop.f32.mrb[0].mxu0
  %v3929 = vpop.f32.mrb[0].mxu0
  %v3930 = vadd.f32 0.0, %v3929
  %v3931 = vpop.f32.mrb[0].mxu0
  %3932 = vmatprep.mubr.bf16.mxu0 0
  %3933 = vmatmul.mubr.bf16.gmra.mrb[0].mxu0 %v964
  %v3934 = vpop.f32.mrb[0].mxu0
  %v3935 = vadd.f32 0.0, %v3934
  %v3936 = vpop.f32.mrb[0].mxu0
  %v3937 = vpop.f32.mrb[0].mxu0
  %v3938 = vadd.f32 0.0, %v3937
  %v3939 = vpop.f32.mrb[0].mxu0
  %3940 = vmatprep.mubr.bf16.mxu0 0
  %3941 = vmatmul.mubr.bf16.gmra.mrb[0].mxu0 %v967
  %v3942 = vpop.f32.mrb[0].mxu0
  %v3943 = vadd.f32 0.0, %v3942
  %v3944 = vpop.f32.mrb[0].mxu0
  %v3945 = vpop.f32.mrb[0].mxu0
  %v3946 = vadd.f32 0.0, %v3945
  %v3947 = vpop.f32.mrb[0].mxu0
  %3948 = vmatprep.mubr.bf16.mxu0 0
  %3949 = vmatmul.mubr.bf16.gmra.mrb[0].mxu0 %v970
  %v3950 = vpop.f32.mrb[0].mxu0
  %v3951 = vadd.f32 0.0, %v3950
  %v3952 = vpop.f32.mrb[0].mxu0
  %v3953 = vpop.f32.mrb[0].mxu0
  %v3954 = vadd.f32 0.0, %v3953
  %v3955 = vpop.f32.mrb[0].mxu0
  %3956 = vmatprep.mubr.bf16.mxu0 0
  %3957 = vmatmul.mubr.bf16.gmra.mrb[0].mxu0 %v973
  %v3958 = vpop.f32.mrb[0].mxu0
  %v3959 = vadd.f32 0.0, %v3958
  %v3960 = vpop.f32.mrb[0].mxu0
  %v3961 = vpop.f32.mrb[0].mxu0
  %v3962 = vadd.f32 0.0, %v3961
  %v3963 = vpop.f32.mrb[0].mxu0
  %3964 = vmatprep.mubr.bf16.mxu0 0
  %3965 = vmatmul.mubr.bf16.gmra.mrb[0].mxu0 %v976
  %v3966 = vpop.f32.mrb[0].mxu0
  %v3967 = vadd.f32 0.0, %v3966
  %v3968 = vpop.f32.mrb[0].mxu0
  %v3969 = vpop.f32.mrb[0].mxu0
  %v3970 = vadd.f32 0.0, %v3969
  %v3971 = vpop.f32.mrb[0].mxu0
  %3972 = vmatprep.mubr.bf16.mxu0 0
  %3973 = vmatmul.mubr.bf16.gmra.mrb[0].mxu0 %v979
  %v3974 = vpop.f32.mrb[0].mxu0
  %v3975 = vadd.f32 0.0, %v3974
  %v3976 = vpop.f32.mrb[0].mxu0
  %v3977 = vpop.f32.mrb[0].mxu0
  %v3978 = vadd.f32 0.0, %v3977
  %v3979 = vpop.f32.mrb[0].mxu0
  %3980 = vmatprep.mubr.bf16.mxu0 0
  %3981 = vmatmul.mubr.bf16.gmra.mrb[0].mxu0 %v982
  %v3982 = vpop.f32.mrb[0].mxu0
  %v3983 = vadd.f32 0.0, %v3982
  %v3984 = vpop.f32.mrb[0].mxu0
  %v3985 = vpop.f32.mrb[0].mxu0
  %v3986 = vadd.f32 0.0, %v3985
  %v3987 = vpop.f32.mrb[0].mxu0
  %3988 = vmatprep.mubr.bf16.mxu0 0
  %3989 = vmatmul.mubr.bf16.gmra.mrb[0].mxu0 %v985
  %v3990 = vpop.f32.mrb[0].mxu0
  %v3991 = vadd.f32 0.0, %v3990
  %v3992 = vpop.f32.mrb[0].mxu0
  %v3993 = vpop.f32.mrb[0].mxu0
  %v3994 = vadd.f32 0.0, %v3993
  %v3995 = vpop.f32.mrb[0].mxu0
  %3996 = vmatprep.mubr.bf16.mxu0 0
  %3997 = vmatmul.mubr.bf16.gmra.mrb[0].mxu0 %v988
  %v3998 = vpop.f32.mrb[0].mxu0
  %v3999 = vadd.f32 0.0, %v3998
  %v4000 = vpop.f32.mrb[0].mxu0
  %v4001 = vpop.f32.mrb[0].mxu0
  %v4002 = vadd.f32 0.0, %v4001
  %v4003 = vpop.f32.mrb[0].mxu0
  %4004 = vmatprep.mubr.bf16.mxu0 0
  %4005 = vmatmul.mubr.bf16.gmra.mrb[0].mxu0 %v991
  %v4006 = vpop.f32.mrb[0].mxu0
  %v4007 = vadd.f32 0.0, %v4006
  %v4008 = vpop.f32.mrb[0].mxu0
  %v4009 = vpop.f32.mrb[0].mxu0
  %v4010 = vadd.f32 0.0, %v4009
  %v4011 = vpop.f32.mrb[0].mxu0
  %4012 = vmatprep.mubr.bf16.mxu0 0
  %4013 = vmatmul.mubr.bf16.gmra.mrb[0].mxu0 %v994
  %v4014 = vpop.f32.mrb[0].mxu0
  %v4015 = vadd.f32 0.0, %v4014
  %v4016 = vpop.f32.mrb[0].mxu0
  %v4017 = vpop.f32.mrb[0].mxu0
  %v4018 = vadd.f32 0.0, %v4017
  %v4019 = vpop.f32.mrb[0].mxu0
  %4020 = vmatprep.mubr.bf16.mxu0 0
  %4021 = vmatmul.mubr.bf16.gmra.mrb[0].mxu0 %v3860
  %v4022 = vpop.f32.mrb[0].mxu0
  %v4023 = vadd.f32 0.0, %v4022
  %v4024 = vpop.f32.mrb[0].mxu0
  %v4025 = vpop.f32.mrb[0].mxu0
  %v4026 = vadd.f32 0.0, %v4025
  %v4027 = vpop.f32.mrb[0].mxu0
  %4028 = vmatprep.mubr.bf16.mxu0 0
  %4029 = vmatmul.mubr.bf16.gmra.mrb[0].mxu0 %v1000
  %v4030 = vpop.f32.mrb[0].mxu0
  %v4031 = vadd.f32 0.0, %v4030
  %v4032 = vpop.f32.mrb[0].mxu0
  %v4033 = vpop.f32.mrb[0].mxu0
  %v4034 = vadd.f32 0.0, %v4033
  %v4035 = vpop.f32.mrb[0].mxu0
  %4036 = vmatprep.mubr.bf16.mxu0 0
  %4037 = vmatmul.mubr.bf16.gmra.mrb[0].mxu0 %v1003
  %v4038 = vpop.f32.mrb[0].mxu0
  %v4039 = vadd.f32 0.0, %v4038
  %v4040 = vpop.f32.mrb[0].mxu0
  %v4041 = vpop.f32.mrb[0].mxu0
  %v4042 = vadd.f32 0.0, %v4041
  %v4043 = vpop.f32.mrb[0].mxu0
  %4044 = vmatprep.mubr.bf16.mxu0 0
  %4045 = vmatmul.mubr.bf16.gmra.mrb[0].mxu0 %v1006
  %v4046 = vpop.f32.mrb[0].mxu0
  %v4047 = vadd.f32 0.0, %v4046
  %v4048 = vpop.f32.mrb[0].mxu0
  %v4049 = vpop.f32.mrb[0].mxu0
  %v4050 = vadd.f32 0.0, %v4049
  %v4051 = vpop.f32.mrb[0].mxu0
  %4052 = vmatprep.mubr.bf16.mxu0 0
  %4053 = vmatmul.mubr.bf16.gmra.mrb[0].mxu0 %v1009
  %v4054 = vpop.f32.mrb[0].mxu0
  %v4055 = vadd.f32 0.0, %v4054
  %v4056 = vpop.f32.mrb[0].mxu0
  %v4057 = vpop.f32.mrb[0].mxu0
  %v4058 = vadd.f32 0.0, %v4057
  %v4059 = vpop.f32.mrb[0].mxu0
  %4060 = vmatprep.mubr.bf16.mxu0 0
  %4061 = vmatmul.mubr.bf16.gmra.mrb[0].mxu0 %v1012
  %v4062 = vpop.f32.mrb[0].mxu0
  %v4063 = vadd.f32 0.0, %v4062
  %v4064 = vpop.f32.mrb[0].mxu0
  %v4065 = vpop.f32.mrb[0].mxu0
  %v4066 = vadd.f32 0.0, %v4065
  %v4067 = vpop.f32.mrb[0].mxu0
  %4068 = vmatprep.mubr.bf16.mxu0 0
  %4069 = vmatmul.mubr.bf16.gmra.mrb[0].mxu0 %v1015
  %v4070 = vpop.f32.mrb[0].mxu0
  %v4071 = vadd.f32 0.0, %v4070
  %v4072 = vpop.f32.mrb[0].mxu0
  %v4073 = vpop.f32.mrb[0].mxu0
  %v4074 = vadd.f32 0.0, %v4073
  %v4075 = vpop.f32.mrb[0].mxu0
  %4076 = vmatprep.mubr.bf16.mxu0 0
  %4077 = vmatmul.mubr.bf16.gmra.mrb[0].mxu0 %v1018
  %v4078 = vpop.f32.mrb[0].mxu0
  %v4079 = vadd.f32 0.0, %v4078
  %v4080 = vpop.f32.mrb[0].mxu0
  %v4081 = vpop.f32.mrb[0].mxu0
  %v4082 = vadd.f32 0.0, %v4081
  %v4083 = vpop.f32.mrb[0].mxu0
  %4084 = vmatprep.mubr.bf16.mxu0 0
  %4085 = vmatmul.mubr.bf16.gmra.mrb[0].mxu0 %v1021
  %v4086 = vpop.f32.mrb[0].mxu0
  %v4087 = vadd.f32 0.0, %v4086
  %v4088 = vpop.f32.mrb[0].mxu0
  %v4089 = vpop.f32.mrb[0].mxu0
  %v4090 = vadd.f32 0.0, %v4089
  %v4091 = vpop.f32.mrb[0].mxu0
  %4092 = vmatprep.mubr.bf16.mxu0 0
  %4093 = vmatmul.mubr.bf16.gmra.mrb[0].mxu0 %v1024
  %v4094 = vpop.f32.mrb[0].mxu0
  %v4095 = vadd.f32 0.0, %v4094
  %v4096 = vpop.f32.mrb[0].mxu0
  %v4097 = vpop.f32.mrb[0].mxu0
  %v4098 = vadd.f32 0.0, %v4097
  %v4099 = vpop.f32.mrb[0].mxu0
  %4100 = vmatprep.mubr.bf16.mxu0 0
  %4101 = vmatmul.mubr.bf16.gmra.mrb[0].mxu0 %v1027
  %v4102 = vpop.f32.mrb[0].mxu0
  %v4103 = vadd.f32 0.0, %v4102
  %v4104 = vpop.f32.mrb[0].mxu0
  %v4105 = vpop.f32.mrb[0].mxu0
  %v4106 = vadd.f32 0.0, %v4105
  %v4107 = vpop.f32.mrb[0].mxu0
  %4108 = vmatprep.mubr.bf16.mxu0 0
  %4109 = vmatmul.mubr.bf16.gmra.mrb[0].mxu0 %v1030
  %v4110 = vpop.f32.mrb[0].mxu0
  %v4111 = vadd.f32 0.0, %v4110
  %v4112 = vpop.f32.mrb[0].mxu0
  %v4113 = vpop.f32.mrb[0].mxu0
  %v4114 = vadd.f32 0.0, %v4113
  %v4115 = vpop.f32.mrb[0].mxu0
  %4116 = vmatprep.mubr.bf16.mxu0 0
  %4117 = vmatmul.mubr.bf16.gmra.mrb[0].mxu0 %v1033
  %v4118 = vpop.f32.mrb[0].mxu0
  %v4119 = vadd.f32 0.0, %v4118
  %v4120 = vpop.f32.mrb[0].mxu0
  %v4121 = vpop.f32.mrb[0].mxu0
  %v4122 = vadd.f32 0.0, %v4121
  %v4123 = vpop.f32.mrb[0].mxu0
  %4124 = vmatprep.mubr.bf16.mxu0 0
  %4125 = vmatmul.mubr.bf16.gmra.mrb[0].mxu0 %v1036
  %v4126 = vpop.f32.mrb[0].mxu0
  %v4127 = vadd.f32 0.0, %v4126
  %v4128 = vpop.f32.mrb[0].mxu0
  %v4129 = vpop.f32.mrb[0].mxu0
  %v4130 = vadd.f32 0.0, %v4129
  %v4131 = vpop.f32.mrb[0].mxu0
  %4132 = vmatprep.mubr.bf16.mxu0 0
  %4133 = vmatmul.mubr.bf16.gmra.mrb[0].mxu0 %v1039
  %v4134 = vpop.f32.mrb[0].mxu0
  %v4135 = vadd.f32 0.0, %v4134
  %v4136 = vpop.f32.mrb[0].mxu0
  %v4137 = vpop.f32.mrb[0].mxu0
  %v4138 = vadd.f32 0.0, %v4137
  %v4139 = vpop.f32.mrb[0].mxu0
  %4140 = vmatprep.mubr.bf16.mxu0 0
  %4141 = vmatmul.mubr.bf16.gmra.mrb[0].mxu0 %v1042
  %v4142 = vpop.f32.mrb[0].mxu0
  %v4143 = vadd.f32 0.0, %v4142
  %v4144 = vpop.f32.mrb[0].mxu0
  %v4145 = vpop.f32.mrb[0].mxu0
  %v4146 = vadd.f32 0.0, %v4145
  %v4147 = vpop.f32.mrb[0].mxu0
  %4148 = vmatprep.mubr.bf16.mxu0 0
  %4149 = vmatmul.mubr.bf16.gmra.mrb[0].mxu0 %v3863
  %v4150 = vpop.f32.mrb[0].mxu0
  %v4151 = vadd.f32 0.0, %v4150
  %v4152 = vpop.f32.mrb[0].mxu0
  %v4153 = vpop.f32.mrb[0].mxu0
  %v4154 = vadd.f32 0.0, %v4153
  %v4155 = vpop.f32.mrb[0].mxu0
  %4156 = vdwg.mxu0
  %v4157 = vadd.f32 %v3793, %v3903
  %v4158 = vadd.f32 %v3794, %v3906
  %v4159 = vadd.f32 %v3795, %v3911
  %v4160 = vadd.f32 %v3796, %v3914
  %v4161 = vadd.f32 %v3797, %v3919
  %v4162 = vadd.f32 %v3798, %v3922
  %v4163 = vadd.f32 %v3799, %v3927
  %v4164 = vadd.f32 %v3800, %v3930
  %v4165 = vadd.f32 %v3801, %v3935
  %v4166 = vadd.f32 %v3802, %v3938
  %v4167 = vadd.f32 %v3803, %v3943
  %v4168 = vadd.f32 %v3804, %v3946
  %v4169 = vadd.f32 %v3805, %v3951
  %v4170 = vadd.f32 %v3806, %v3954
  %v4171 = vadd.f32 %v3807, %v3959
  %v4172 = vadd.f32 %v3808, %v3962
  %v4173 = vadd.f32 %v3809, %v3967
  %v4174 = vadd.f32 %v3810, %v3970
  %v4175 = vadd.f32 %v3811, %v3975
  %v4176 = vadd.f32 %v3812, %v3978
  %v4177 = vadd.f32 %v3813, %v3983
  %v4178 = vadd.f32 %v3814, %v3986
  %v4179 = vadd.f32 %v3815, %v3991
  %v4180 = vadd.f32 %v3816, %v3994
  %v4181 = vadd.f32 %v3817, %v3999
  %v4182 = vadd.f32 %v3818, %v4002
  %v4183 = vadd.f32 %v3819, %v4007
  %v4184 = vadd.f32 %v3820, %v4010
  %v4185 = vadd.f32 %v3821, %v4015
  %v4186 = vadd.f32 %v3822, %v4018
  %v4187 = vadd.f32 %v3823, %v4023
  %v4188 = vadd.f32 %v3824, %v4026
  %v4189 = vadd.f32 %v3825, %v4031
  %v4190 = vadd.f32 %v3826, %v4034
  %v4191 = vadd.f32 %v3827, %v4039
  %v4192 = vadd.f32 %v3828, %v4042
  %v4193 = vadd.f32 %v3829, %v4047
  %v4194 = vadd.f32 %v3830, %v4050
  %v4195 = vadd.f32 %v3831, %v4055
  %v4196 = vadd.f32 %v3832, %v4058
  %v4197 = vadd.f32 %v3833, %v4063
  %v4198 = vadd.f32 %v3834, %v4066
  %v4199 = vadd.f32 %v3835, %v4071
  %v4200 = vadd.f32 %v3836, %v4074
  %v4201 = vadd.f32 %v3837, %v4079
  %v4202 = vadd.f32 %v3838, %v4082
  %v4203 = vadd.f32 %v3839, %v4087
  %v4204 = vadd.f32 %v3840, %v4090
  %v4205 = vadd.f32 %v3841, %v4095
  %v4206 = vadd.f32 %v3842, %v4098
  %v4207 = vadd.f32 %v3843, %v4103
  %v4208 = vadd.f32 %v3844, %v4106
  %v4209 = vadd.f32 %v3845, %v4111
  %v4210 = vadd.f32 %v3846, %v4114
  %v4211 = vadd.f32 %v3847, %v4119
  %v4212 = vadd.f32 %v3848, %v4122
  %v4213 = vadd.f32 %v3849, %v4127
  %v4214 = vadd.f32 %v3850, %v4130
  %v4215 = vadd.f32 %v3851, %v4135
  %v4216 = vadd.f32 %v3852, %v4138
  %v4217 = vadd.f32 %v3853, %v4143
  %v4218 = vadd.f32 %v3854, %v4146
  %v4219 = vadd.f32 %v3855, %v4151
  %v4220 = vadd.f32 %v3856, %v4154
  %s4221 = scalar_lea.vmem %s4, 14
  %v4222 = vld [vmem:[%s4221] sm:$0x3]
  %v4224 = vsel %vm555, %v278, 0
  %v4227 = vsel %vm555, %v295, 0
  %v4230 = vand.u32 %v4222, %v655
  %4232 = vmatprep.subr.bf16.mxu0 0
  %4233 = vmatpush1.bf16.msra.mxu0 %v4230
  %4234 = vmatprep.subr.bf16.mxu0 0
  %4235 = vmatpush1.bf16.msra.mxu0 0
  %4236 = vmatprep.subr.bf16.mxu0 0
  %4237 = vmatpush1.bf16.msra.mxu0 0
  %4238 = vmatprep.subr.bf16.mxu0 0
  %4239 = vmatpush1.bf16.msra.mxu0 0
  %4240 = vmatprep.subr.bf16.mxu0 0
  %4241 = vmatpush1.bf16.msra.mxu0 0
  %4242 = vmatprep.subr.bf16.mxu0 0
  %4243 = vmatpush1.bf16.msra.mxu0 0
  %4244 = vmatprep.subr.bf16.mxu0 0
  %4245 = vmatpush1.bf16.msra.mxu0 0
  %4246 = vmatprep.subr.bf16.mxu0 0
  %4247 = vmatpush1.bf16.msra.mxu0 0
  %4248 = vmatprep.subr.bf16.mxu0 0
  %4249 = vmatpush1.bf16.msra.mxu0 0
  %4250 = vmatprep.subr.bf16.mxu0 0
  %4251 = vmatpush1.bf16.msra.mxu0 0
  %4252 = vmatprep.subr.bf16.mxu0 0
  %4253 = vmatpush1.bf16.msra.mxu0 0
  %4254 = vmatprep.subr.bf16.mxu0 0
  %4255 = vmatpush1.bf16.msra.mxu0 0
  %4256 = vmatprep.subr.bf16.mxu0 0
  %4257 = vmatpush1.bf16.msra.mxu0 0
  %4258 = vmatprep.subr.bf16.mxu0 0
  %4259 = vmatpush1.bf16.msra.mxu0 0
  %4260 = vmatprep.subr.bf16.mxu0 0
  %4261 = vmatpush1.bf16.msra.mxu0 0
  %4262 = vmatprep.subr.bf16.mxu0 0
  %4263 = vmatpush1.bf16.msra.mxu0 0
  %4264 = vmatprep.mubr.bf16.mxu0 0
  %4265 = vmatmul.mubr.bf16.gmra.mrb[0].mxu0 %v560
  %v4266 = vpop.f32.mrb[0].mxu0
  %v4267 = vadd.f32 0.0, %v4266
  %v4268 = vpop.f32.mrb[0].mxu0
  %v4269 = vpop.f32.mrb[0].mxu0
  %v4270 = vadd.f32 0.0, %v4269
  %v4271 = vpop.f32.mrb[0].mxu0
  %4272 = vmatprep.mubr.bf16.mxu0 0
  %4273 = vmatmul.mubr.bf16.gmra.mrb[0].mxu0 %v563
  %v4274 = vpop.f32.mrb[0].mxu0
  %v4275 = vadd.f32 0.0, %v4274
  %v4276 = vpop.f32.mrb[0].mxu0
  %v4277 = vpop.f32.mrb[0].mxu0
  %v4278 = vadd.f32 0.0, %v4277
  %v4279 = vpop.f32.mrb[0].mxu0
  %4280 = vmatprep.mubr.bf16.mxu0 0
  %4281 = vmatmul.mubr.bf16.gmra.mrb[0].mxu0 %v566
  %v4282 = vpop.f32.mrb[0].mxu0
  %v4283 = vadd.f32 0.0, %v4282
  %v4284 = vpop.f32.mrb[0].mxu0
  %v4285 = vpop.f32.mrb[0].mxu0
  %v4286 = vadd.f32 0.0, %v4285
  %v4287 = vpop.f32.mrb[0].mxu0
  %4288 = vmatprep.mubr.bf16.mxu0 0
  %4289 = vmatmul.mubr.bf16.gmra.mrb[0].mxu0 %v569
  %v4290 = vpop.f32.mrb[0].mxu0
  %v4291 = vadd.f32 0.0, %v4290
  %v4292 = vpop.f32.mrb[0].mxu0
  %v4293 = vpop.f32.mrb[0].mxu0
  %v4294 = vadd.f32 0.0, %v4293
  %v4295 = vpop.f32.mrb[0].mxu0
  %4296 = vmatprep.mubr.bf16.mxu0 0
  %4297 = vmatmul.mubr.bf16.gmra.mrb[0].mxu0 %v572
  %v4298 = vpop.f32.mrb[0].mxu0
  %v4299 = vadd.f32 0.0, %v4298
  %v4300 = vpop.f32.mrb[0].mxu0
  %v4301 = vpop.f32.mrb[0].mxu0
  %v4302 = vadd.f32 0.0, %v4301
  %v4303 = vpop.f32.mrb[0].mxu0
  %4304 = vmatprep.mubr.bf16.mxu0 0
  %4305 = vmatmul.mubr.bf16.gmra.mrb[0].mxu0 %v575
  %v4306 = vpop.f32.mrb[0].mxu0
  %v4307 = vadd.f32 0.0, %v4306
  %v4308 = vpop.f32.mrb[0].mxu0
  %v4309 = vpop.f32.mrb[0].mxu0
  %v4310 = vadd.f32 0.0, %v4309
  %v4311 = vpop.f32.mrb[0].mxu0
  %4312 = vmatprep.mubr.bf16.mxu0 0
  %4313 = vmatmul.mubr.bf16.gmra.mrb[0].mxu0 %v578
  %v4314 = vpop.f32.mrb[0].mxu0
  %v4315 = vadd.f32 0.0, %v4314
  %v4316 = vpop.f32.mrb[0].mxu0
  %v4317 = vpop.f32.mrb[0].mxu0
  %v4318 = vadd.f32 0.0, %v4317
  %v4319 = vpop.f32.mrb[0].mxu0
  %4320 = vmatprep.mubr.bf16.mxu0 0
  %4321 = vmatmul.mubr.bf16.gmra.mrb[0].mxu0 %v581
  %v4322 = vpop.f32.mrb[0].mxu0
  %v4323 = vadd.f32 0.0, %v4322
  %v4324 = vpop.f32.mrb[0].mxu0
  %v4325 = vpop.f32.mrb[0].mxu0
  %v4326 = vadd.f32 0.0, %v4325
  %v4327 = vpop.f32.mrb[0].mxu0
  %4328 = vmatprep.mubr.bf16.mxu0 0
  %4329 = vmatmul.mubr.bf16.gmra.mrb[0].mxu0 %v584
  %v4330 = vpop.f32.mrb[0].mxu0
  %v4331 = vadd.f32 0.0, %v4330
  %v4332 = vpop.f32.mrb[0].mxu0
  %v4333 = vpop.f32.mrb[0].mxu0
  %v4334 = vadd.f32 0.0, %v4333
  %v4335 = vpop.f32.mrb[0].mxu0
  %4336 = vmatprep.mubr.bf16.mxu0 0
  %4337 = vmatmul.mubr.bf16.gmra.mrb[0].mxu0 %v587
  %v4338 = vpop.f32.mrb[0].mxu0
  %v4339 = vadd.f32 0.0, %v4338
  %v4340 = vpop.f32.mrb[0].mxu0
  %v4341 = vpop.f32.mrb[0].mxu0
  %v4342 = vadd.f32 0.0, %v4341
  %v4343 = vpop.f32.mrb[0].mxu0
  %4344 = vmatprep.mubr.bf16.mxu0 0
  %4345 = vmatmul.mubr.bf16.gmra.mrb[0].mxu0 %v590
  %v4346 = vpop.f32.mrb[0].mxu0
  %v4347 = vadd.f32 0.0, %v4346
  %v4348 = vpop.f32.mrb[0].mxu0
  %v4349 = vpop.f32.mrb[0].mxu0
  %v4350 = vadd.f32 0.0, %v4349
  %v4351 = vpop.f32.mrb[0].mxu0
  %4352 = vmatprep.mubr.bf16.mxu0 0
  %4353 = vmatmul.mubr.bf16.gmra.mrb[0].mxu0 %v593
  %v4354 = vpop.f32.mrb[0].mxu0
  %v4355 = vadd.f32 0.0, %v4354
  %v4356 = vpop.f32.mrb[0].mxu0
  %v4357 = vpop.f32.mrb[0].mxu0
  %v4358 = vadd.f32 0.0, %v4357
  %v4359 = vpop.f32.mrb[0].mxu0
  %4360 = vmatprep.mubr.bf16.mxu0 0
  %4361 = vmatmul.mubr.bf16.gmra.mrb[0].mxu0 %v596
  %v4362 = vpop.f32.mrb[0].mxu0
  %v4363 = vadd.f32 0.0, %v4362
  %v4364 = vpop.f32.mrb[0].mxu0
  %v4365 = vpop.f32.mrb[0].mxu0
  %v4366 = vadd.f32 0.0, %v4365
  %v4367 = vpop.f32.mrb[0].mxu0
  %4368 = vmatprep.mubr.bf16.mxu0 0
  %4369 = vmatmul.mubr.bf16.gmra.mrb[0].mxu0 %v599
  %v4370 = vpop.f32.mrb[0].mxu0
  %v4371 = vadd.f32 0.0, %v4370
  %v4372 = vpop.f32.mrb[0].mxu0
  %v4373 = vpop.f32.mrb[0].mxu0
  %v4374 = vadd.f32 0.0, %v4373
  %v4375 = vpop.f32.mrb[0].mxu0
  %4376 = vmatprep.mubr.bf16.mxu0 0
  %4377 = vmatmul.mubr.bf16.gmra.mrb[0].mxu0 %v602
  %v4378 = vpop.f32.mrb[0].mxu0
  %v4379 = vadd.f32 0.0, %v4378
  %v4380 = vpop.f32.mrb[0].mxu0
  %v4381 = vpop.f32.mrb[0].mxu0
  %v4382 = vadd.f32 0.0, %v4381
  %v4383 = vpop.f32.mrb[0].mxu0
  %4384 = vmatprep.mubr.bf16.mxu0 0
  %4385 = vmatmul.mubr.bf16.gmra.mrb[0].mxu0 %v4224
  %v4386 = vpop.f32.mrb[0].mxu0
  %v4387 = vadd.f32 0.0, %v4386
  %v4388 = vpop.f32.mrb[0].mxu0
  %v4389 = vpop.f32.mrb[0].mxu0
  %v4390 = vadd.f32 0.0, %v4389
  %v4391 = vpop.f32.mrb[0].mxu0
  %4392 = vmatprep.mubr.bf16.mxu0 0
  %4393 = vmatmul.mubr.bf16.gmra.mrb[0].mxu0 %v608
  %v4394 = vpop.f32.mrb[0].mxu0
  %v4395 = vadd.f32 0.0, %v4394
  %v4396 = vpop.f32.mrb[0].mxu0
  %v4397 = vpop.f32.mrb[0].mxu0
  %v4398 = vadd.f32 0.0, %v4397
  %v4399 = vpop.f32.mrb[0].mxu0
  %4400 = vmatprep.mubr.bf16.mxu0 0
  %4401 = vmatmul.mubr.bf16.gmra.mrb[0].mxu0 %v611
  %v4402 = vpop.f32.mrb[0].mxu0
  %v4403 = vadd.f32 0.0, %v4402
  %v4404 = vpop.f32.mrb[0].mxu0
  %v4405 = vpop.f32.mrb[0].mxu0
  %v4406 = vadd.f32 0.0, %v4405
  %v4407 = vpop.f32.mrb[0].mxu0
  %4408 = vmatprep.mubr.bf16.mxu0 0
  %4409 = vmatmul.mubr.bf16.gmra.mrb[0].mxu0 %v614
  %v4410 = vpop.f32.mrb[0].mxu0
  %v4411 = vadd.f32 0.0, %v4410
  %v4412 = vpop.f32.mrb[0].mxu0
  %v4413 = vpop.f32.mrb[0].mxu0
  %v4414 = vadd.f32 0.0, %v4413
  %v4415 = vpop.f32.mrb[0].mxu0
  %4416 = vmatprep.mubr.bf16.mxu0 0
  %4417 = vmatmul.mubr.bf16.gmra.mrb[0].mxu0 %v617
  %v4418 = vpop.f32.mrb[0].mxu0
  %v4419 = vadd.f32 0.0, %v4418
  %v4420 = vpop.f32.mrb[0].mxu0
  %v4421 = vpop.f32.mrb[0].mxu0
  %v4422 = vadd.f32 0.0, %v4421
  %v4423 = vpop.f32.mrb[0].mxu0
  %4424 = vmatprep.mubr.bf16.mxu0 0
  %4425 = vmatmul.mubr.bf16.gmra.mrb[0].mxu0 %v620
  %v4426 = vpop.f32.mrb[0].mxu0
  %v4427 = vadd.f32 0.0, %v4426
  %v4428 = vpop.f32.mrb[0].mxu0
  %v4429 = vpop.f32.mrb[0].mxu0
  %v4430 = vadd.f32 0.0, %v4429
  %v4431 = vpop.f32.mrb[0].mxu0
  %4432 = vmatprep.mubr.bf16.mxu0 0
  %4433 = vmatmul.mubr.bf16.gmra.mrb[0].mxu0 %v623
  %v4434 = vpop.f32.mrb[0].mxu0
  %v4435 = vadd.f32 0.0, %v4434
  %v4436 = vpop.f32.mrb[0].mxu0
  %v4437 = vpop.f32.mrb[0].mxu0
  %v4438 = vadd.f32 0.0, %v4437
  %v4439 = vpop.f32.mrb[0].mxu0
  %4440 = vmatprep.mubr.bf16.mxu0 0
  %4441 = vmatmul.mubr.bf16.gmra.mrb[0].mxu0 %v626
  %v4442 = vpop.f32.mrb[0].mxu0
  %v4443 = vadd.f32 0.0, %v4442
  %v4444 = vpop.f32.mrb[0].mxu0
  %v4445 = vpop.f32.mrb[0].mxu0
  %v4446 = vadd.f32 0.0, %v4445
  %v4447 = vpop.f32.mrb[0].mxu0
  %4448 = vmatprep.mubr.bf16.mxu0 0
  %4449 = vmatmul.mubr.bf16.gmra.mrb[0].mxu0 %v629
  %v4450 = vpop.f32.mrb[0].mxu0
  %v4451 = vadd.f32 0.0, %v4450
  %v4452 = vpop.f32.mrb[0].mxu0
  %v4453 = vpop.f32.mrb[0].mxu0
  %v4454 = vadd.f32 0.0, %v4453
  %v4455 = vpop.f32.mrb[0].mxu0
  %4456 = vmatprep.mubr.bf16.mxu0 0
  %4457 = vmatmul.mubr.bf16.gmra.mrb[0].mxu0 %v632
  %v4458 = vpop.f32.mrb[0].mxu0
  %v4459 = vadd.f32 0.0, %v4458
  %v4460 = vpop.f32.mrb[0].mxu0
  %v4461 = vpop.f32.mrb[0].mxu0
  %v4462 = vadd.f32 0.0, %v4461
  %v4463 = vpop.f32.mrb[0].mxu0
  %4464 = vmatprep.mubr.bf16.mxu0 0
  %4465 = vmatmul.mubr.bf16.gmra.mrb[0].mxu0 %v635
  %v4466 = vpop.f32.mrb[0].mxu0
  %v4467 = vadd.f32 0.0, %v4466
  %v4468 = vpop.f32.mrb[0].mxu0
  %v4469 = vpop.f32.mrb[0].mxu0
  %v4470 = vadd.f32 0.0, %v4469
  %v4471 = vpop.f32.mrb[0].mxu0
  %4472 = vmatprep.mubr.bf16.mxu0 0
  %4473 = vmatmul.mubr.bf16.gmra.mrb[0].mxu0 %v638
  %v4474 = vpop.f32.mrb[0].mxu0
  %v4475 = vadd.f32 0.0, %v4474
  %v4476 = vpop.f32.mrb[0].mxu0
  %v4477 = vpop.f32.mrb[0].mxu0
  %v4478 = vadd.f32 0.0, %v4477
  %v4479 = vpop.f32.mrb[0].mxu0
  %4480 = vmatprep.mubr.bf16.mxu0 0
  %4481 = vmatmul.mubr.bf16.gmra.mrb[0].mxu0 %v641
  %v4482 = vpop.f32.mrb[0].mxu0
  %v4483 = vadd.f32 0.0, %v4482
  %v4484 = vpop.f32.mrb[0].mxu0
  %v4485 = vpop.f32.mrb[0].mxu0
  %v4486 = vadd.f32 0.0, %v4485
  %v4487 = vpop.f32.mrb[0].mxu0
  %4488 = vmatprep.mubr.bf16.mxu0 0
  %4489 = vmatmul.mubr.bf16.gmra.mrb[0].mxu0 %v644
  %v4490 = vpop.f32.mrb[0].mxu0
  %v4491 = vadd.f32 0.0, %v4490
  %v4492 = vpop.f32.mrb[0].mxu0
  %v4493 = vpop.f32.mrb[0].mxu0
  %v4494 = vadd.f32 0.0, %v4493
  %v4495 = vpop.f32.mrb[0].mxu0
  %4496 = vmatprep.mubr.bf16.mxu0 0
  %4497 = vmatmul.mubr.bf16.gmra.mrb[0].mxu0 %v647
  %v4498 = vpop.f32.mrb[0].mxu0
  %v4499 = vadd.f32 0.0, %v4498
  %v4500 = vpop.f32.mrb[0].mxu0
  %v4501 = vpop.f32.mrb[0].mxu0
  %v4502 = vadd.f32 0.0, %v4501
  %v4503 = vpop.f32.mrb[0].mxu0
  %4504 = vmatprep.mubr.bf16.mxu0 0
  %4505 = vmatmul.mubr.bf16.gmra.mrb[0].mxu0 %v650
  %v4506 = vpop.f32.mrb[0].mxu0
  %v4507 = vadd.f32 0.0, %v4506
  %v4508 = vpop.f32.mrb[0].mxu0
  %v4509 = vpop.f32.mrb[0].mxu0
  %v4510 = vadd.f32 0.0, %v4509
  %v4511 = vpop.f32.mrb[0].mxu0
  %4512 = vmatprep.mubr.bf16.mxu0 0
  %4513 = vmatmul.mubr.bf16.gmra.mrb[0].mxu0 %v4227
  %v4514 = vpop.f32.mrb[0].mxu0
  %v4515 = vadd.f32 0.0, %v4514
  %v4516 = vpop.f32.mrb[0].mxu0
  %v4517 = vpop.f32.mrb[0].mxu0
  %v4518 = vadd.f32 0.0, %v4517
  %v4519 = vpop.f32.mrb[0].mxu0
  %4520 = vdwg.mxu0
  %v4521 = vadd.f32 %v4157, %v4267
  %v4522 = vadd.f32 %v4158, %v4270
  %v4523 = vadd.f32 %v4159, %v4275
  %v4524 = vadd.f32 %v4160, %v4278
  %v4525 = vadd.f32 %v4161, %v4283
  %v4526 = vadd.f32 %v4162, %v4286
  %v4527 = vadd.f32 %v4163, %v4291
  %v4528 = vadd.f32 %v4164, %v4294
  %v4529 = vadd.f32 %v4165, %v4299
  %v4530 = vadd.f32 %v4166, %v4302
  %v4531 = vadd.f32 %v4167, %v4307
  %v4532 = vadd.f32 %v4168, %v4310
  %v4533 = vadd.f32 %v4169, %v4315
  %v4534 = vadd.f32 %v4170, %v4318
  %v4535 = vadd.f32 %v4171, %v4323
  %v4536 = vadd.f32 %v4172, %v4326
  %v4537 = vadd.f32 %v4173, %v4331
  %v4538 = vadd.f32 %v4174, %v4334
  %v4539 = vadd.f32 %v4175, %v4339
  %v4540 = vadd.f32 %v4176, %v4342
  %v4541 = vadd.f32 %v4177, %v4347
  %v4542 = vadd.f32 %v4178, %v4350
  %v4543 = vadd.f32 %v4179, %v4355
  %v4544 = vadd.f32 %v4180, %v4358
  %v4545 = vadd.f32 %v4181, %v4363
  %v4546 = vadd.f32 %v4182, %v4366
  %v4547 = vadd.f32 %v4183, %v4371
  %v4548 = vadd.f32 %v4184, %v4374
  %v4549 = vadd.f32 %v4185, %v4379
  %v4550 = vadd.f32 %v4186, %v4382
  %v4551 = vadd.f32 %v4187, %v4387
  %v4552 = vadd.f32 %v4188, %v4390
  %v4553 = vadd.f32 %v4189, %v4395
  %v4554 = vadd.f32 %v4190, %v4398
  %v4555 = vadd.f32 %v4191, %v4403
  %v4556 = vadd.f32 %v4192, %v4406
  %v4557 = vadd.f32 %v4193, %v4411
  %v4558 = vadd.f32 %v4194, %v4414
  %v4559 = vadd.f32 %v4195, %v4419
  %v4560 = vadd.f32 %v4196, %v4422
  %v4561 = vadd.f32 %v4197, %v4427
  %v4562 = vadd.f32 %v4198, %v4430
  %v4563 = vadd.f32 %v4199, %v4435
  %v4564 = vadd.f32 %v4200, %v4438
  %v4565 = vadd.f32 %v4201, %v4443
  %v4566 = vadd.f32 %v4202, %v4446
  %v4567 = vadd.f32 %v4203, %v4451
  %v4568 = vadd.f32 %v4204, %v4454
  %v4569 = vadd.f32 %v4205, %v4459
  %v4570 = vadd.f32 %v4206, %v4462
  %v4571 = vadd.f32 %v4207, %v4467
  %v4572 = vadd.f32 %v4208, %v4470
  %v4573 = vadd.f32 %v4209, %v4475
  %v4574 = vadd.f32 %v4210, %v4478
  %v4575 = vadd.f32 %v4211, %v4483
  %v4576 = vadd.f32 %v4212, %v4486
  %v4577 = vadd.f32 %v4213, %v4491
  %v4578 = vadd.f32 %v4214, %v4494
  %v4579 = vadd.f32 %v4215, %v4499
  %v4580 = vadd.f32 %v4216, %v4502
  %v4581 = vadd.f32 %v4217, %v4507
  %v4582 = vadd.f32 %v4218, %v4510
  %v4583 = vadd.f32 %v4219, %v4515
  %v4584 = vadd.f32 %v4220, %v4518
  %v4585 = vshrl.u32 %v158, 16
  %v4587 = vshll.u32 %v158, 16
  %v4589 = vrot.slane %v4587, 1
  %v4590 = vor.u32 %v4585, %v4589
  %v4592 = vshll.u32 %v159, 16
  %v4594 = vrot.slane %v4592, 1
  %v4595 = vsel %vm1336, %v4590, %v4594
  %v4596 = vshrl.u32 %v192, 16
  %v4598 = vshll.u32 %v192, 16
  %v4600 = vrot.slane %v4598, 1
  %v4601 = vor.u32 %v4596, %v4600
  %v4603 = vshll.u32 %v193, 16
  %v4605 = vrot.slane %v4603, 1
  %v4606 = vsel %vm1336, %v4601, %v4605
  %s4607 = scalar_lea.vmem %s4, 16
  %v4608 = vld [vmem:[%s4607] sm:$0x3]
  %v4610 = vsel %vm555, %v4595, 0
  %v4613 = vsel %vm555, %v4606, 0
  %v4616 = vand.u32 %v4608, %v655
  %4618 = vmatprep.subr.bf16.mxu0 0
  %4619 = vmatpush1.bf16.msra.mxu0 %v4616
  %4620 = vmatprep.subr.bf16.mxu0 0
  %4621 = vmatpush1.bf16.msra.mxu0 0
  %4622 = vmatprep.subr.bf16.mxu0 0
  %4623 = vmatpush1.bf16.msra.mxu0 0
  %4624 = vmatprep.subr.bf16.mxu0 0
  %4625 = vmatpush1.bf16.msra.mxu0 0
  %4626 = vmatprep.subr.bf16.mxu0 0
  %4627 = vmatpush1.bf16.msra.mxu0 0
  %4628 = vmatprep.subr.bf16.mxu0 0
  %4629 = vmatpush1.bf16.msra.mxu0 0
  %4630 = vmatprep.subr.bf16.mxu0 0
  %4631 = vmatpush1.bf16.msra.mxu0 0
  %4632 = vmatprep.subr.bf16.mxu0 0
  %4633 = vmatpush1.bf16.msra.mxu0 0
  %4634 = vmatprep.subr.bf16.mxu0 0
  %4635 = vmatpush1.bf16.msra.mxu0 0
  %4636 = vmatprep.subr.bf16.mxu0 0
  %4637 = vmatpush1.bf16.msra.mxu0 0
  %4638 = vmatprep.subr.bf16.mxu0 0
  %4639 = vmatpush1.bf16.msra.mxu0 0
  %4640 = vmatprep.subr.bf16.mxu0 0
  %4641 = vmatpush1.bf16.msra.mxu0 0
  %4642 = vmatprep.subr.bf16.mxu0 0
  %4643 = vmatpush1.bf16.msra.mxu0 0
  %4644 = vmatprep.subr.bf16.mxu0 0
  %4645 = vmatpush1.bf16.msra.mxu0 0
  %4646 = vmatprep.subr.bf16.mxu0 0
  %4647 = vmatpush1.bf16.msra.mxu0 0
  %4648 = vmatprep.subr.bf16.mxu0 0
  %4649 = vmatpush1.bf16.msra.mxu0 0
  %4650 = vmatprep.mubr.bf16.mxu0 0
  %4651 = vmatmul.mubr.bf16.gmra.mrb[0].mxu0 %v1695
  %v4652 = vpop.f32.mrb[0].mxu0
  %v4653 = vadd.f32 0.0, %v4652
  %v4654 = vpop.f32.mrb[0].mxu0
  %v4655 = vpop.f32.mrb[0].mxu0
  %v4656 = vadd.f32 0.0, %v4655
  %v4657 = vpop.f32.mrb[0].mxu0
  %4658 = vmatprep.mubr.bf16.mxu0 0
  %4659 = vmatmul.mubr.bf16.gmra.mrb[0].mxu0 %v1698
  %v4660 = vpop.f32.mrb[0].mxu0
  %v4661 = vadd.f32 0.0, %v4660
  %v4662 = vpop.f32.mrb[0].mxu0
  %v4663 = vpop.f32.mrb[0].mxu0
  %v4664 = vadd.f32 0.0, %v4663
  %v4665 = vpop.f32.mrb[0].mxu0
  %4666 = vmatprep.mubr.bf16.mxu0 0
  %4667 = vmatmul.mubr.bf16.gmra.mrb[0].mxu0 %v1701
  %v4668 = vpop.f32.mrb[0].mxu0
  %v4669 = vadd.f32 0.0, %v4668
  %v4670 = vpop.f32.mrb[0].mxu0
  %v4671 = vpop.f32.mrb[0].mxu0
  %v4672 = vadd.f32 0.0, %v4671
  %v4673 = vpop.f32.mrb[0].mxu0
  %4674 = vmatprep.mubr.bf16.mxu0 0
  %4675 = vmatmul.mubr.bf16.gmra.mrb[0].mxu0 %v1704
  %v4676 = vpop.f32.mrb[0].mxu0
  %v4677 = vadd.f32 0.0, %v4676
  %v4678 = vpop.f32.mrb[0].mxu0
  %v4679 = vpop.f32.mrb[0].mxu0
  %v4680 = vadd.f32 0.0, %v4679
  %v4681 = vpop.f32.mrb[0].mxu0
  %4682 = vmatprep.mubr.bf16.mxu0 0
  %4683 = vmatmul.mubr.bf16.gmra.mrb[0].mxu0 %v1707
  %v4684 = vpop.f32.mrb[0].mxu0
  %v4685 = vadd.f32 0.0, %v4684
  %v4686 = vpop.f32.mrb[0].mxu0
  %v4687 = vpop.f32.mrb[0].mxu0
  %v4688 = vadd.f32 0.0, %v4687
  %v4689 = vpop.f32.mrb[0].mxu0
  %4690 = vmatprep.mubr.bf16.mxu0 0
  %4691 = vmatmul.mubr.bf16.gmra.mrb[0].mxu0 %v1710
  %v4692 = vpop.f32.mrb[0].mxu0
  %v4693 = vadd.f32 0.0, %v4692
  %v4694 = vpop.f32.mrb[0].mxu0
  %v4695 = vpop.f32.mrb[0].mxu0
  %v4696 = vadd.f32 0.0, %v4695
  %v4697 = vpop.f32.mrb[0].mxu0
  %4698 = vmatprep.mubr.bf16.mxu0 0
  %4699 = vmatmul.mubr.bf16.gmra.mrb[0].mxu0 %v1713
  %v4700 = vpop.f32.mrb[0].mxu0
  %v4701 = vadd.f32 0.0, %v4700
  %v4702 = vpop.f32.mrb[0].mxu0
  %v4703 = vpop.f32.mrb[0].mxu0
  %v4704 = vadd.f32 0.0, %v4703
  %v4705 = vpop.f32.mrb[0].mxu0
  %4706 = vmatprep.mubr.bf16.mxu0 0
  %4707 = vmatmul.mubr.bf16.gmra.mrb[0].mxu0 %v1716
  %v4708 = vpop.f32.mrb[0].mxu0
  %v4709 = vadd.f32 0.0, %v4708
  %v4710 = vpop.f32.mrb[0].mxu0
  %v4711 = vpop.f32.mrb[0].mxu0
  %v4712 = vadd.f32 0.0, %v4711
  %v4713 = vpop.f32.mrb[0].mxu0
  %4714 = vmatprep.mubr.bf16.mxu0 0
  %4715 = vmatmul.mubr.bf16.gmra.mrb[0].mxu0 %v1719
  %v4716 = vpop.f32.mrb[0].mxu0
  %v4717 = vadd.f32 0.0, %v4716
  %v4718 = vpop.f32.mrb[0].mxu0
  %v4719 = vpop.f32.mrb[0].mxu0
  %v4720 = vadd.f32 0.0, %v4719
  %v4721 = vpop.f32.mrb[0].mxu0
  %4722 = vmatprep.mubr.bf16.mxu0 0
  %4723 = vmatmul.mubr.bf16.gmra.mrb[0].mxu0 %v1722
  %v4724 = vpop.f32.mrb[0].mxu0
  %v4725 = vadd.f32 0.0, %v4724
  %v4726 = vpop.f32.mrb[0].mxu0
  %v4727 = vpop.f32.mrb[0].mxu0
  %v4728 = vadd.f32 0.0, %v4727
  %v4729 = vpop.f32.mrb[0].mxu0
  %4730 = vmatprep.mubr.bf16.mxu0 0
  %4731 = vmatmul.mubr.bf16.gmra.mrb[0].mxu0 %v1725
  %v4732 = vpop.f32.mrb[0].mxu0
  %v4733 = vadd.f32 0.0, %v4732
  %v4734 = vpop.f32.mrb[0].mxu0
  %v4735 = vpop.f32.mrb[0].mxu0
  %v4736 = vadd.f32 0.0, %v4735
  %v4737 = vpop.f32.mrb[0].mxu0
  %4738 = vmatprep.mubr.bf16.mxu0 0
  %4739 = vmatmul.mubr.bf16.gmra.mrb[0].mxu0 %v1728
  %v4740 = vpop.f32.mrb[0].mxu0
  %v4741 = vadd.f32 0.0, %v4740
  %v4742 = vpop.f32.mrb[0].mxu0
  %v4743 = vpop.f32.mrb[0].mxu0
  %v4744 = vadd.f32 0.0, %v4743
  %v4745 = vpop.f32.mrb[0].mxu0
  %4746 = vmatprep.mubr.bf16.mxu0 0
  %4747 = vmatmul.mubr.bf16.gmra.mrb[0].mxu0 %v1731
  %v4748 = vpop.f32.mrb[0].mxu0
  %v4749 = vadd.f32 0.0, %v4748
  %v4750 = vpop.f32.mrb[0].mxu0
  %v4751 = vpop.f32.mrb[0].mxu0
  %v4752 = vadd.f32 0.0, %v4751
  %v4753 = vpop.f32.mrb[0].mxu0
  %4754 = vmatprep.mubr.bf16.mxu0 0
  %4755 = vmatmul.mubr.bf16.gmra.mrb[0].mxu0 %v1734
  %v4756 = vpop.f32.mrb[0].mxu0
  %v4757 = vadd.f32 0.0, %v4756
  %v4758 = vpop.f32.mrb[0].mxu0
  %v4759 = vpop.f32.mrb[0].mxu0
  %v4760 = vadd.f32 0.0, %v4759
  %v4761 = vpop.f32.mrb[0].mxu0
  %4762 = vmatprep.mubr.bf16.mxu0 0
  %4763 = vmatmul.mubr.bf16.gmra.mrb[0].mxu0 %v1737
  %v4764 = vpop.f32.mrb[0].mxu0
  %v4765 = vadd.f32 0.0, %v4764
  %v4766 = vpop.f32.mrb[0].mxu0
  %v4767 = vpop.f32.mrb[0].mxu0
  %v4768 = vadd.f32 0.0, %v4767
  %v4769 = vpop.f32.mrb[0].mxu0
  %4770 = vmatprep.mubr.bf16.mxu0 0
  %4771 = vmatmul.mubr.bf16.gmra.mrb[0].mxu0 %v4610
  %v4772 = vpop.f32.mrb[0].mxu0
  %v4773 = vadd.f32 0.0, %v4772
  %v4774 = vpop.f32.mrb[0].mxu0
  %v4775 = vpop.f32.mrb[0].mxu0
  %v4776 = vadd.f32 0.0, %v4775
  %v4777 = vpop.f32.mrb[0].mxu0
  %4778 = vmatprep.mubr.bf16.mxu0 0
  %4779 = vmatmul.mubr.bf16.gmra.mrb[0].mxu0 %v1743
  %v4780 = vpop.f32.mrb[0].mxu0
  %v4781 = vadd.f32 0.0, %v4780
  %v4782 = vpop.f32.mrb[0].mxu0
  %v4783 = vpop.f32.mrb[0].mxu0
  %v4784 = vadd.f32 0.0, %v4783
  %v4785 = vpop.f32.mrb[0].mxu0
  %4786 = vmatprep.mubr.bf16.mxu0 0
  %4787 = vmatmul.mubr.bf16.gmra.mrb[0].mxu0 %v1746
  %v4788 = vpop.f32.mrb[0].mxu0
  %v4789 = vadd.f32 0.0, %v4788
  %v4790 = vpop.f32.mrb[0].mxu0
  %v4791 = vpop.f32.mrb[0].mxu0
  %v4792 = vadd.f32 0.0, %v4791
  %v4793 = vpop.f32.mrb[0].mxu0
  %4794 = vmatprep.mubr.bf16.mxu0 0
  %4795 = vmatmul.mubr.bf16.gmra.mrb[0].mxu0 %v1749
  %v4796 = vpop.f32.mrb[0].mxu0
  %v4797 = vadd.f32 0.0, %v4796
  %v4798 = vpop.f32.mrb[0].mxu0
  %v4799 = vpop.f32.mrb[0].mxu0
  %v4800 = vadd.f32 0.0, %v4799
  %v4801 = vpop.f32.mrb[0].mxu0
  %4802 = vmatprep.mubr.bf16.mxu0 0
  %4803 = vmatmul.mubr.bf16.gmra.mrb[0].mxu0 %v1752
  %v4804 = vpop.f32.mrb[0].mxu0
  %v4805 = vadd.f32 0.0, %v4804
  %v4806 = vpop.f32.mrb[0].mxu0
  %v4807 = vpop.f32.mrb[0].mxu0
  %v4808 = vadd.f32 0.0, %v4807
  %v4809 = vpop.f32.mrb[0].mxu0
  %4810 = vmatprep.mubr.bf16.mxu0 0
  %4811 = vmatmul.mubr.bf16.gmra.mrb[0].mxu0 %v1755
  %v4812 = vpop.f32.mrb[0].mxu0
  %v4813 = vadd.f32 0.0, %v4812
  %v4814 = vpop.f32.mrb[0].mxu0
  %v4815 = vpop.f32.mrb[0].mxu0
  %v4816 = vadd.f32 0.0, %v4815
  %v4817 = vpop.f32.mrb[0].mxu0
  %4818 = vmatprep.mubr.bf16.mxu0 0
  %4819 = vmatmul.mubr.bf16.gmra.mrb[0].mxu0 %v1758
  %v4820 = vpop.f32.mrb[0].mxu0
  %v4821 = vadd.f32 0.0, %v4820
  %v4822 = vpop.f32.mrb[0].mxu0
  %v4823 = vpop.f32.mrb[0].mxu0
  %v4824 = vadd.f32 0.0, %v4823
  %v4825 = vpop.f32.mrb[0].mxu0
  %4826 = vmatprep.mubr.bf16.mxu0 0
  %4827 = vmatmul.mubr.bf16.gmra.mrb[0].mxu0 %v1761
  %v4828 = vpop.f32.mrb[0].mxu0
  %v4829 = vadd.f32 0.0, %v4828
  %v4830 = vpop.f32.mrb[0].mxu0
  %v4831 = vpop.f32.mrb[0].mxu0
  %v4832 = vadd.f32 0.0, %v4831
  %v4833 = vpop.f32.mrb[0].mxu0
  %4834 = vmatprep.mubr.bf16.mxu0 0
  %4835 = vmatmul.mubr.bf16.gmra.mrb[0].mxu0 %v1764
  %v4836 = vpop.f32.mrb[0].mxu0
  %v4837 = vadd.f32 0.0, %v4836
  %v4838 = vpop.f32.mrb[0].mxu0
  %v4839 = vpop.f32.mrb[0].mxu0
  %v4840 = vadd.f32 0.0, %v4839
  %v4841 = vpop.f32.mrb[0].mxu0
  %4842 = vmatprep.mubr.bf16.mxu0 0
  %4843 = vmatmul.mubr.bf16.gmra.mrb[0].mxu0 %v1767
  %v4844 = vpop.f32.mrb[0].mxu0
  %v4845 = vadd.f32 0.0, %v4844
  %v4846 = vpop.f32.mrb[0].mxu0
  %v4847 = vpop.f32.mrb[0].mxu0
  %v4848 = vadd.f32 0.0, %v4847
  %v4849 = vpop.f32.mrb[0].mxu0
  %4850 = vmatprep.mubr.bf16.mxu0 0
  %4851 = vmatmul.mubr.bf16.gmra.mrb[0].mxu0 %v1770
  %v4852 = vpop.f32.mrb[0].mxu0
  %v4853 = vadd.f32 0.0, %v4852
  %v4854 = vpop.f32.mrb[0].mxu0
  %v4855 = vpop.f32.mrb[0].mxu0
  %v4856 = vadd.f32 0.0, %v4855
  %v4857 = vpop.f32.mrb[0].mxu0
  %4858 = vmatprep.mubr.bf16.mxu0 0
  %4859 = vmatmul.mubr.bf16.gmra.mrb[0].mxu0 %v1773
  %v4860 = vpop.f32.mrb[0].mxu0
  %v4861 = vadd.f32 0.0, %v4860
  %v4862 = vpop.f32.mrb[0].mxu0
  %v4863 = vpop.f32.mrb[0].mxu0
  %v4864 = vadd.f32 0.0, %v4863
  %v4865 = vpop.f32.mrb[0].mxu0
  %4866 = vmatprep.mubr.bf16.mxu0 0
  %4867 = vmatmul.mubr.bf16.gmra.mrb[0].mxu0 %v1776
  %v4868 = vpop.f32.mrb[0].mxu0
  %v4869 = vadd.f32 0.0, %v4868
  %v4870 = vpop.f32.mrb[0].mxu0
  %v4871 = vpop.f32.mrb[0].mxu0
  %v4872 = vadd.f32 0.0, %v4871
  %v4873 = vpop.f32.mrb[0].mxu0
  %4874 = vmatprep.mubr.bf16.mxu0 0
  %4875 = vmatmul.mubr.bf16.gmra.mrb[0].mxu0 %v1779
  %v4876 = vpop.f32.mrb[0].mxu0
  %v4877 = vadd.f32 0.0, %v4876
  %v4878 = vpop.f32.mrb[0].mxu0
  %v4879 = vpop.f32.mrb[0].mxu0
  %v4880 = vadd.f32 0.0, %v4879
  %v4881 = vpop.f32.mrb[0].mxu0
  %4882 = vmatprep.mubr.bf16.mxu0 0
  %4883 = vmatmul.mubr.bf16.gmra.mrb[0].mxu0 %v1782
  %v4884 = vpop.f32.mrb[0].mxu0
  %v4885 = vadd.f32 0.0, %v4884
  %v4886 = vpop.f32.mrb[0].mxu0
  %v4887 = vpop.f32.mrb[0].mxu0
  %v4888 = vadd.f32 0.0, %v4887
  %v4889 = vpop.f32.mrb[0].mxu0
  %4890 = vmatprep.mubr.bf16.mxu0 0
  %4891 = vmatmul.mubr.bf16.gmra.mrb[0].mxu0 %v1785
  %v4892 = vpop.f32.mrb[0].mxu0
  %v4893 = vadd.f32 0.0, %v4892
  %v4894 = vpop.f32.mrb[0].mxu0
  %v4895 = vpop.f32.mrb[0].mxu0
  %v4896 = vadd.f32 0.0, %v4895
  %v4897 = vpop.f32.mrb[0].mxu0
  %4898 = vmatprep.mubr.bf16.mxu0 0
  %4899 = vmatmul.mubr.bf16.gmra.mrb[0].mxu0 %v4613
  %v4900 = vpop.f32.mrb[0].mxu0
  %v4901 = vadd.f32 0.0, %v4900
  %v4902 = vpop.f32.mrb[0].mxu0
  %v4903 = vpop.f32.mrb[0].mxu0
  %v4904 = vadd.f32 0.0, %v4903
  %v4905 = vpop.f32.mrb[0].mxu0
  %4906 = vdwg.mxu0
  %v4907 = vadd.f32 %v4521, %v4653
  %v4908 = vadd.f32 %v4522, %v4656
  %v4909 = vadd.f32 %v4523, %v4661
  %v4910 = vadd.f32 %v4524, %v4664
  %v4911 = vadd.f32 %v4525, %v4669
  %v4912 = vadd.f32 %v4526, %v4672
  %v4913 = vadd.f32 %v4527, %v4677
  %v4914 = vadd.f32 %v4528, %v4680
  %v4915 = vadd.f32 %v4529, %v4685
  %v4916 = vadd.f32 %v4530, %v4688
  %v4917 = vadd.f32 %v4531, %v4693
  %v4918 = vadd.f32 %v4532, %v4696
  %v4919 = vadd.f32 %v4533, %v4701
  %v4920 = vadd.f32 %v4534, %v4704
  %v4921 = vadd.f32 %v4535, %v4709
  %v4922 = vadd.f32 %v4536, %v4712
  %v4923 = vadd.f32 %v4537, %v4717
  %v4924 = vadd.f32 %v4538, %v4720
  %v4925 = vadd.f32 %v4539, %v4725
  %v4926 = vadd.f32 %v4540, %v4728
  %v4927 = vadd.f32 %v4541, %v4733
  %v4928 = vadd.f32 %v4542, %v4736
  %v4929 = vadd.f32 %v4543, %v4741
  %v4930 = vadd.f32 %v4544, %v4744
  %v4931 = vadd.f32 %v4545, %v4749
  %v4932 = vadd.f32 %v4546, %v4752
  %v4933 = vadd.f32 %v4547, %v4757
  %v4934 = vadd.f32 %v4548, %v4760
  %v4935 = vadd.f32 %v4549, %v4765
  %v4936 = vadd.f32 %v4550, %v4768
  %v4937 = vadd.f32 %v4551, %v4773
  %v4938 = vadd.f32 %v4552, %v4776
  %v4939 = vadd.f32 %v4553, %v4781
  %v4940 = vadd.f32 %v4554, %v4784
  %v4941 = vadd.f32 %v4555, %v4789
  %v4942 = vadd.f32 %v4556, %v4792
  %v4943 = vadd.f32 %v4557, %v4797
  %v4944 = vadd.f32 %v4558, %v4800
  %v4945 = vadd.f32 %v4559, %v4805
  %v4946 = vadd.f32 %v4560, %v4808
  %v4947 = vadd.f32 %v4561, %v4813
  %v4948 = vadd.f32 %v4562, %v4816
  %v4949 = vadd.f32 %v4563, %v4821
  %v4950 = vadd.f32 %v4564, %v4824
  %v4951 = vadd.f32 %v4565, %v4829
  %v4952 = vadd.f32 %v4566, %v4832
  %v4953 = vadd.f32 %v4567, %v4837
  %v4954 = vadd.f32 %v4568, %v4840
  %v4955 = vadd.f32 %v4569, %v4845
  %v4956 = vadd.f32 %v4570, %v4848
  %v4957 = vadd.f32 %v4571, %v4853
  %v4958 = vadd.f32 %v4572, %v4856
  %v4959 = vadd.f32 %v4573, %v4861
  %v4960 = vadd.f32 %v4574, %v4864
  %v4961 = vadd.f32 %v4575, %v4869
  %v4962 = vadd.f32 %v4576, %v4872
  %v4963 = vadd.f32 %v4577, %v4877
  %v4964 = vadd.f32 %v4578, %v4880
  %v4965 = vadd.f32 %v4579, %v4885
  %v4966 = vadd.f32 %v4580, %v4888
  %v4967 = vadd.f32 %v4581, %v4893
  %v4968 = vadd.f32 %v4582, %v4896
  %v4969 = vadd.f32 %v4583, %v4901
  %v4970 = vadd.f32 %v4584, %v4904
  %v4971 = vld [vmem:[%s5] sm:$0x1]
  %v4973 = vlaneseq
  %v4974 = vshrl.u32 %v4973, 7
  %v4975 = vsub.s32 0, %v4974
  %v4976 = vrot.slane %v4971, %v4975
  %v4978 = vadd.f32 %v4907, %v4976
  %v4979 = vadd.f32 %v4908, %v4976
  %v4980 = vadd.f32 %v4909, %v4976
  %v4981 = vadd.f32 %v4910, %v4976
  %v4982 = vadd.f32 %v4911, %v4976
  %v4983 = vadd.f32 %v4912, %v4976
  %v4984 = vadd.f32 %v4913, %v4976
  %v4985 = vadd.f32 %v4914, %v4976
  %v4986 = vadd.f32 %v4915, %v4976
  %v4987 = vadd.f32 %v4916, %v4976
  %v4988 = vadd.f32 %v4917, %v4976
  %v4989 = vadd.f32 %v4918, %v4976
  %v4990 = vadd.f32 %v4919, %v4976
  %v4991 = vadd.f32 %v4920, %v4976
  %v4992 = vadd.f32 %v4921, %v4976
  %v4993 = vadd.f32 %v4922, %v4976
  %v4994 = vadd.f32 %v4923, %v4976
  %v4995 = vadd.f32 %v4924, %v4976
  %v4996 = vadd.f32 %v4925, %v4976
  %v4997 = vadd.f32 %v4926, %v4976
  %v4998 = vadd.f32 %v4927, %v4976
  %v4999 = vadd.f32 %v4928, %v4976
  %v5000 = vadd.f32 %v4929, %v4976
  %v5001 = vadd.f32 %v4930, %v4976
  %v5002 = vadd.f32 %v4931, %v4976
  %v5003 = vadd.f32 %v4932, %v4976
  %v5004 = vadd.f32 %v4933, %v4976
  %v5005 = vadd.f32 %v4934, %v4976
  %v5006 = vadd.f32 %v4935, %v4976
  %v5007 = vadd.f32 %v4936, %v4976
  %v5008 = vadd.f32 %v4937, %v4976
  %v5009 = vadd.f32 %v4938, %v4976
  %v5010 = vadd.f32 %v4939, %v4976
  %v5011 = vadd.f32 %v4940, %v4976
  %v5012 = vadd.f32 %v4941, %v4976
  %v5013 = vadd.f32 %v4942, %v4976
  %v5014 = vadd.f32 %v4943, %v4976
  %v5015 = vadd.f32 %v4944, %v4976
  %v5016 = vadd.f32 %v4945, %v4976
  %v5017 = vadd.f32 %v4946, %v4976
  %v5018 = vadd.f32 %v4947, %v4976
  %v5019 = vadd.f32 %v4948, %v4976
  %v5020 = vadd.f32 %v4949, %v4976
  %v5021 = vadd.f32 %v4950, %v4976
  %v5022 = vadd.f32 %v4951, %v4976
  %v5023 = vadd.f32 %v4952, %v4976
  %v5024 = vadd.f32 %v4953, %v4976
  %v5025 = vadd.f32 %v4954, %v4976
  %v5026 = vadd.f32 %v4955, %v4976
  %v5027 = vadd.f32 %v4956, %v4976
  %v5028 = vadd.f32 %v4957, %v4976
  %v5029 = vadd.f32 %v4958, %v4976
  %v5030 = vadd.f32 %v4959, %v4976
  %v5031 = vadd.f32 %v4960, %v4976
  %v5032 = vadd.f32 %v4961, %v4976
  %v5033 = vadd.f32 %v4962, %v4976
  %v5034 = vadd.f32 %v4963, %v4976
  %v5035 = vadd.f32 %v4964, %v4976
  %v5036 = vadd.f32 %v4965, %v4976
  %v5037 = vadd.f32 %v4966, %v4976
  %v5038 = vadd.f32 %v4967, %v4976
  %v5039 = vadd.f32 %v4968, %v4976
  %v5040 = vadd.f32 %v4969, %v4976
  %v5041 = vadd.f32 %v4970, %v4976
  %v5042 = vmax.f32 %v4978, 0.0
  %v5043 = vmax.f32 %v4979, 0.0
  %v5044 = vmax.f32 %v4980, 0.0
  %v5045 = vmax.f32 %v4981, 0.0
  %v5046 = vmax.f32 %v4982, 0.0
  %v5047 = vmax.f32 %v4983, 0.0
  %v5048 = vmax.f32 %v4984, 0.0
  %v5049 = vmax.f32 %v4985, 0.0
  %v5050 = vmax.f32 %v4986, 0.0
  %v5051 = vmax.f32 %v4987, 0.0
  %v5052 = vmax.f32 %v4988, 0.0
  %v5053 = vmax.f32 %v4989, 0.0
  %v5054 = vmax.f32 %v4990, 0.0
  %v5055 = vmax.f32 %v4991, 0.0
  %v5056 = vmax.f32 %v4992, 0.0
  %v5057 = vmax.f32 %v4993, 0.0
  %v5058 = vmax.f32 %v4994, 0.0
  %v5059 = vmax.f32 %v4995, 0.0
  %v5060 = vmax.f32 %v4996, 0.0
  %v5061 = vmax.f32 %v4997, 0.0
  %v5062 = vmax.f32 %v4998, 0.0
  %v5063 = vmax.f32 %v4999, 0.0
  %v5064 = vmax.f32 %v5000, 0.0
  %v5065 = vmax.f32 %v5001, 0.0
  %v5066 = vmax.f32 %v5002, 0.0
  %v5067 = vmax.f32 %v5003, 0.0
  %v5068 = vmax.f32 %v5004, 0.0
  %v5069 = vmax.f32 %v5005, 0.0
  %v5070 = vmax.f32 %v5006, 0.0
  %v5071 = vmax.f32 %v5007, 0.0
  %v5072 = vmax.f32 %v5008, 0.0
  %v5073 = vmax.f32 %v5009, 0.0
  %v5074 = vmax.f32 %v5010, 0.0
  %v5075 = vmax.f32 %v5011, 0.0
  %v5076 = vmax.f32 %v5012, 0.0
  %v5077 = vmax.f32 %v5013, 0.0
  %v5078 = vmax.f32 %v5014, 0.0
  %v5079 = vmax.f32 %v5015, 0.0
  %v5080 = vmax.f32 %v5016, 0.0
  %v5081 = vmax.f32 %v5017, 0.0
  %v5082 = vmax.f32 %v5018, 0.0
  %v5083 = vmax.f32 %v5019, 0.0
  %v5084 = vmax.f32 %v5020, 0.0
  %v5085 = vmax.f32 %v5021, 0.0
  %v5086 = vmax.f32 %v5022, 0.0
  %v5087 = vmax.f32 %v5023, 0.0
  %v5088 = vmax.f32 %v5024, 0.0
  %v5089 = vmax.f32 %v5025, 0.0
  %v5090 = vmax.f32 %v5026, 0.0
  %v5091 = vmax.f32 %v5027, 0.0
  %v5092 = vmax.f32 %v5028, 0.0
  %v5093 = vmax.f32 %v5029, 0.0
  %v5094 = vmax.f32 %v5030, 0.0
  %v5095 = vmax.f32 %v5031, 0.0
  %v5096 = vmax.f32 %v5032, 0.0
  %v5097 = vmax.f32 %v5033, 0.0
  %v5098 = vmax.f32 %v5034, 0.0
  %v5099 = vmax.f32 %v5035, 0.0
  %v5100 = vmax.f32 %v5036, 0.0
  %v5101 = vmax.f32 %v5037, 0.0
  %v5102 = vmax.f32 %v5038, 0.0
  %v5103 = vmax.f32 %v5039, 0.0
  %v5104 = vmax.f32 %v5040, 0.0
  %v5105 = vmax.f32 %v5041, 0.0
  %v5106 = vpack.c.bf16 %v5043, %v5042
  %v5107 = vpack.c.bf16 %v5045, %v5044
  %v5108 = vpack.c.bf16 %v5047, %v5046
  %v5109 = vpack.c.bf16 %v5049, %v5048
  %v5110 = vpack.c.bf16 %v5051, %v5050
  %v5111 = vpack.c.bf16 %v5053, %v5052
  %v5112 = vpack.c.bf16 %v5055, %v5054
  %v5113 = vpack.c.bf16 %v5057, %v5056
  %v5114 = vpack.c.bf16 %v5059, %v5058
  %v5115 = vpack.c.bf16 %v5061, %v5060
  %v5116 = vpack.c.bf16 %v5063, %v5062
  %v5117 = vpack.c.bf16 %v5065, %v5064
  %v5118 = vpack.c.bf16 %v5067, %v5066
  %v5119 = vpack.c.bf16 %v5069, %v5068
  %v5120 = vpack.c.bf16 %v5071, %v5070
  %v5121 = vpack.c.bf16 %v5073, %v5072
  %v5122 = vpack.c.bf16 %v5075, %v5074
  %v5123 = vpack.c.bf16 %v5077, %v5076
  %v5124 = vpack.c.bf16 %v5079, %v5078
  %v5125 = vpack.c.bf16 %v5081, %v5080
  %v5126 = vpack.c.bf16 %v5083, %v5082
  %v5127 = vpack.c.bf16 %v5085, %v5084
  %v5128 = vpack.c.bf16 %v5087, %v5086
  %v5129 = vpack.c.bf16 %v5089, %v5088
  %v5130 = vpack.c.bf16 %v5091, %v5090
  %v5131 = vpack.c.bf16 %v5093, %v5092
  %v5132 = vpack.c.bf16 %v5095, %v5094
  %v5133 = vpack.c.bf16 %v5097, %v5096
  %v5134 = vpack.c.bf16 %v5099, %v5098
  %v5135 = vpack.c.bf16 %v5101, %v5100
  %v5136 = vpack.c.bf16 %v5103, %v5102
  %v5137 = vpack.c.bf16 %v5105, %v5104
  %v5170 = vunpack.c.l.b16 %v5106
  %v5171 = vunpack.c.h.b16 %v5106
  %v5172 = vunpack.c.l.b16 %v5107
  %v5173 = vunpack.c.h.b16 %v5107
  %v5174 = vunpack.c.l.b16 %v5108
  %v5175 = vunpack.c.h.b16 %v5108
  %v5176 = vunpack.c.l.b16 %v5109
  %v5177 = vunpack.c.h.b16 %v5109
  %v5178 = vunpack.c.l.b16 %v5110
  %v5179 = vunpack.c.h.b16 %v5110
  %v5180 = vunpack.c.l.b16 %v5111
  %v5181 = vunpack.c.h.b16 %v5111
  %v5182 = vunpack.c.l.b16 %v5112
  %v5183 = vunpack.c.h.b16 %v5112
  %v5184 = vunpack.c.l.b16 %v5113
  %v5185 = vunpack.c.h.b16 %v5113
  %v5186 = vunpack.c.l.b16 %v5114
  %v5187 = vunpack.c.h.b16 %v5114
  %v5188 = vunpack.c.l.b16 %v5115
  %v5189 = vunpack.c.h.b16 %v5115
  %v5190 = vunpack.c.l.b16 %v5116
  %v5191 = vunpack.c.h.b16 %v5116
  %v5192 = vunpack.c.l.b16 %v5117
  %v5193 = vunpack.c.h.b16 %v5117
  %v5194 = vunpack.c.l.b16 %v5118
  %v5195 = vunpack.c.h.b16 %v5118
  %v5196 = vunpack.c.l.b16 %v5119
  %v5197 = vunpack.c.h.b16 %v5119
  %v5198 = vunpack.c.l.b16 %v5120
  %v5199 = vunpack.c.h.b16 %v5120
  %v5200 = vunpack.c.l.b16 %v5121
  %v5201 = vunpack.c.h.b16 %v5121
  %v5202 = vunpack.c.l.b16 %v5122
  %v5203 = vunpack.c.h.b16 %v5122
  %v5204 = vunpack.c.l.b16 %v5123
  %v5205 = vunpack.c.h.b16 %v5123
  %v5206 = vunpack.c.l.b16 %v5124
  %v5207 = vunpack.c.h.b16 %v5124
  %v5208 = vunpack.c.l.b16 %v5125
  %v5209 = vunpack.c.h.b16 %v5125
  %v5210 = vunpack.c.l.b16 %v5126
  %v5211 = vunpack.c.h.b16 %v5126
  %v5212 = vunpack.c.l.b16 %v5127
  %v5213 = vunpack.c.h.b16 %v5127
  %v5214 = vunpack.c.l.b16 %v5128
  %v5215 = vunpack.c.h.b16 %v5128
  %v5216 = vunpack.c.l.b16 %v5129
  %v5217 = vunpack.c.h.b16 %v5129
  %v5218 = vunpack.c.l.b16 %v5130
  %v5219 = vunpack.c.h.b16 %v5130
  %v5220 = vunpack.c.l.b16 %v5131
  %v5221 = vunpack.c.h.b16 %v5131
  %v5222 = vunpack.c.l.b16 %v5132
  %v5223 = vunpack.c.h.b16 %v5132
  %v5224 = vunpack.c.l.b16 %v5133
  %v5225 = vunpack.c.h.b16 %v5133
  %v5226 = vunpack.c.l.b16 %v5134
  %v5227 = vunpack.c.h.b16 %v5134
  %v5228 = vunpack.c.l.b16 %v5135
  %v5229 = vunpack.c.h.b16 %v5135
  %v5230 = vunpack.c.l.b16 %v5136
  %v5231 = vunpack.c.h.b16 %v5136
  %v5232 = vunpack.c.l.b16 %v5137
  %v5233 = vunpack.c.h.b16 %v5137
  %v5234 = vpack.c.b16 %v5170, %v5170
  %v5235 = vpack.c.b16 %v5171, %v5171
  %v5236 = vpack.c.b16 %v5172, %v5172
  %v5237 = vpack.c.b16 %v5173, %v5173
  %v5238 = vpack.c.b16 %v5174, %v5174
  %v5239 = vpack.c.b16 %v5175, %v5175
  %v5240 = vpack.c.b16 %v5176, %v5176
  %v5241 = vpack.c.b16 %v5177, %v5177
  %v5242 = vpack.c.b16 %v5178, %v5178
  %v5243 = vpack.c.b16 %v5179, %v5179
  %v5244 = vpack.c.b16 %v5180, %v5180
  %v5245 = vpack.c.b16 %v5181, %v5181
  %v5246 = vpack.c.b16 %v5182, %v5182
  %v5247 = vpack.c.b16 %v5183, %v5183
  %v5248 = vpack.c.b16 %v5184, %v5184
  %v5249 = vpack.c.b16 %v5185, %v5185
  %v5250 = vpack.c.b16 %v5186, %v5186
  %v5251 = vpack.c.b16 %v5187, %v5187
  %v5252 = vpack.c.b16 %v5188, %v5188
  %v5253 = vpack.c.b16 %v5189, %v5189
  %v5254 = vpack.c.b16 %v5190, %v5190
  %v5255 = vpack.c.b16 %v5191, %v5191
  %v5256 = vpack.c.b16 %v5192, %v5192
  %v5257 = vpack.c.b16 %v5193, %v5193
  %v5258 = vpack.c.b16 %v5194, %v5194
  %v5259 = vpack.c.b16 %v5195, %v5195
  %v5260 = vpack.c.b16 %v5196, %v5196
  %v5261 = vpack.c.b16 %v5197, %v5197
  %v5262 = vpack.c.b16 %v5198, %v5198
  %v5263 = vpack.c.b16 %v5199, %v5199
  %v5264 = vpack.c.b16 %v5200, %v5200
  %v5265 = vpack.c.b16 %v5201, %v5201
  %v5266 = vpack.c.b16 %v5202, %v5202
  %v5267 = vpack.c.b16 %v5203, %v5203
  %v5268 = vpack.c.b16 %v5204, %v5204
  %v5269 = vpack.c.b16 %v5205, %v5205
  %v5270 = vpack.c.b16 %v5206, %v5206
  %v5271 = vpack.c.b16 %v5207, %v5207
  %v5272 = vpack.c.b16 %v5208, %v5208
  %v5273 = vpack.c.b16 %v5209, %v5209
  %v5274 = vpack.c.b16 %v5210, %v5210
  %v5275 = vpack.c.b16 %v5211, %v5211
  %v5276 = vpack.c.b16 %v5212, %v5212
  %v5277 = vpack.c.b16 %v5213, %v5213
  %v5278 = vpack.c.b16 %v5214, %v5214
  %v5279 = vpack.c.b16 %v5215, %v5215
  %v5280 = vpack.c.b16 %v5216, %v5216
  %v5281 = vpack.c.b16 %v5217, %v5217
  %v5282 = vpack.c.b16 %v5218, %v5218
  %v5283 = vpack.c.b16 %v5219, %v5219
  %v5284 = vpack.c.b16 %v5220, %v5220
  %v5285 = vpack.c.b16 %v5221, %v5221
  %v5286 = vpack.c.b16 %v5222, %v5222
  %v5287 = vpack.c.b16 %v5223, %v5223
  %v5288 = vpack.c.b16 %v5224, %v5224
  %v5289 = vpack.c.b16 %v5225, %v5225
  %v5290 = vpack.c.b16 %v5226, %v5226
  %v5291 = vpack.c.b16 %v5227, %v5227
  %v5292 = vpack.c.b16 %v5228, %v5228
  %v5293 = vpack.c.b16 %v5229, %v5229
  %v5294 = vpack.c.b16 %v5230, %v5230
  %v5295 = vpack.c.b16 %v5231, %v5231
  %v5296 = vpack.c.b16 %v5232, %v5232
  %v5297 = vpack.c.b16 %v5233, %v5233
  %vm5362 = vcmask 125952
  %5363 = vst.msk [vmem:[%s6] sm:$0xf] %vm5362, %v5234
  %5364 = vst.msk [vmem:[%s6 + $0x4] sm:$0xf] %vm5362, %v5235
  %5365 = vst.msk [vmem:[%s6 + $0x8] sm:$0xf] %vm5362, %v5236
  %5366 = vst.msk [vmem:[%s6 + $0xc] sm:$0xf] %vm5362, %v5237
  %5367 = vst.msk [vmem:[%s6 + $0x10] sm:$0xf] %vm5362, %v5238
  %5368 = vst.msk [vmem:[%s6 + $0x14] sm:$0xf] %vm5362, %v5239
  %5369 = vst.msk [vmem:[%s6 + $0x18] sm:$0xf] %vm5362, %v5240
  %5370 = vst.msk [vmem:[%s6 + $0x1c] sm:$0xf] %vm5362, %v5241
  %5371 = vst.msk [vmem:[%s6 + $0x20] sm:$0xf] %vm5362, %v5242
  %5372 = vst.msk [vmem:[%s6 + $0x24] sm:$0xf] %vm5362, %v5243
  %5373 = vst.msk [vmem:[%s6 + $0x28] sm:$0xf] %vm5362, %v5244
  %5374 = vst.msk [vmem:[%s6 + $0x2c] sm:$0xf] %vm5362, %v5245
  %5375 = vst.msk [vmem:[%s6 + $0x30] sm:$0xf] %vm5362, %v5246
  %5376 = vst.msk [vmem:[%s6 + $0x34] sm:$0xf] %vm5362, %v5247
  %5377 = vst.msk [vmem:[%s6 + $0x38] sm:$0xf] %vm5362, %v5248
  %5378 = vst.msk [vmem:[%s6 + $0x3c] sm:$0xf] %vm5362, %v5249
  %5379 = vst.msk [vmem:[%s6 + $0x40] sm:$0xf] %vm5362, %v5250
  %5380 = vst.msk [vmem:[%s6 + $0x44] sm:$0xf] %vm5362, %v5251
  %5381 = vst.msk [vmem:[%s6 + $0x48] sm:$0xf] %vm5362, %v5252
  %5382 = vst.msk [vmem:[%s6 + $0x4c] sm:$0xf] %vm5362, %v5253
  %5383 = vst.msk [vmem:[%s6 + $0x50] sm:$0xf] %vm5362, %v5254
  %5384 = vst.msk [vmem:[%s6 + $0x54] sm:$0xf] %vm5362, %v5255
  %5385 = vst.msk [vmem:[%s6 + $0x58] sm:$0xf] %vm5362, %v5256
  %5386 = vst.msk [vmem:[%s6 + $0x5c] sm:$0xf] %vm5362, %v5257
  %5387 = vst.msk [vmem:[%s6 + $0x60] sm:$0xf] %vm5362, %v5258
  %5388 = vst.msk [vmem:[%s6 + $0x64] sm:$0xf] %vm5362, %v5259
  %5389 = vst.msk [vmem:[%s6 + $0x68] sm:$0xf] %vm5362, %v5260
  %5390 = vst.msk [vmem:[%s6 + $0x6c] sm:$0xf] %vm5362, %v5261
  %5391 = vst.msk [vmem:[%s6 + $0x70] sm:$0xf] %vm5362, %v5262
  %5392 = vst.msk [vmem:[%s6 + $0x74] sm:$0xf] %vm5362, %v5263
  %5393 = vst.msk [vmem:[%s6 + $0x78] sm:$0xf] %vm5362, %v5264
  %5394 = vst.msk [vmem:[%s6 + $0x7c] sm:$0xf] %vm5362, %v5265
  %5395 = vst.msk [vmem:[%s6 + $0x80] sm:$0xf] %vm5362, %v5266
  %5396 = vst.msk [vmem:[%s6 + $0x84] sm:$0xf] %vm5362, %v5267
  %5397 = vst.msk [vmem:[%s6 + $0x88] sm:$0xf] %vm5362, %v5268
  %5398 = vst.msk [vmem:[%s6 + $0x8c] sm:$0xf] %vm5362, %v5269
  %5399 = vst.msk [vmem:[%s6 + $0x90] sm:$0xf] %vm5362, %v5270
  %5400 = vst.msk [vmem:[%s6 + $0x94] sm:$0xf] %vm5362, %v5271
  %5401 = vst.msk [vmem:[%s6 + $0x98] sm:$0xf] %vm5362, %v5272
  %5402 = vst.msk [vmem:[%s6 + $0x9c] sm:$0xf] %vm5362, %v5273
  %5403 = vst.msk [vmem:[%s6 + $0xa0] sm:$0xf] %vm5362, %v5274
  %5404 = vst.msk [vmem:[%s6 + $0xa4] sm:$0xf] %vm5362, %v5275
  %5405 = vst.msk [vmem:[%s6 + $0xa8] sm:$0xf] %vm5362, %v5276
  %5406 = vst.msk [vmem:[%s6 + $0xac] sm:$0xf] %vm5362, %v5277
  %5407 = vst.msk [vmem:[%s6 + $0xb0] sm:$0xf] %vm5362, %v5278
  %5408 = vst.msk [vmem:[%s6 + $0xb4] sm:$0xf] %vm5362, %v5279
  %5409 = vst.msk [vmem:[%s6 + $0xb8] sm:$0xf] %vm5362, %v5280
  %5410 = vst.msk [vmem:[%s6 + $0xbc] sm:$0xf] %vm5362, %v5281
  %5411 = vst.msk [vmem:[%s6 + $0xc0] sm:$0xf] %vm5362, %v5282
  %5412 = vst.msk [vmem:[%s6 + $0xc4] sm:$0xf] %vm5362, %v5283
  %5413 = vst.msk [vmem:[%s6 + $0xc8] sm:$0xf] %vm5362, %v5284
  %5414 = vst.msk [vmem:[%s6 + $0xcc] sm:$0xf] %vm5362, %v5285
  %5415 = vst.msk [vmem:[%s6 + $0xd0] sm:$0xf] %vm5362, %v5286
  %5416 = vst.msk [vmem:[%s6 + $0xd4] sm:$0xf] %vm5362, %v5287
  %5417 = vst.msk [vmem:[%s6 + $0xd8] sm:$0xf] %vm5362, %v5288
  %5418 = vst.msk [vmem:[%s6 + $0xdc] sm:$0xf] %vm5362, %v5289
  %5419 = vst.msk [vmem:[%s6 + $0xe0] sm:$0xf] %vm5362, %v5290
  %5420 = vst.msk [vmem:[%s6 + $0xe4] sm:$0xf] %vm5362, %v5291
  %5421 = vst.msk [vmem:[%s6 + $0xe8] sm:$0xf] %vm5362, %v5292
  %5422 = vst.msk [vmem:[%s6 + $0xec] sm:$0xf] %vm5362, %v5293
  %5423 = vst.msk [vmem:[%s6 + $0xf0] sm:$0xf] %vm5362, %v5294
  %5424 = vst.msk [vmem:[%s6 + $0xf4] sm:$0xf] %vm5362, %v5295
  %5425 = vst.msk [vmem:[%s6 + $0xf8] sm:$0xf] %vm5362, %v5296
  %5426 = vst.msk [vmem:[%s6 + $0xfc] sm:$0xf] %vm5362, %v5297
  // Predicated region
  $region26: #{_lambda_.4} parent=0 // pred_check
    _
  $region27: #{_lambda_.4} parent=0 // pred_check_branch
    %5428 = sbr.rel (0) target = $region29
  $region28: #{_lambda_.4} parent=0 // pred_region
    _
  $region29: #{_lambda_.4} parent=0 // pred_fallthru
    _
  // Predicated region
  $region30: #{_lambda_.4} parent=0 // pred_check
    _
  $region31: #{_lambda_.4} parent=0 // pred_check_branch
    %5430 = sbr.rel (0) target = $region33
  $region32: #{_lambda_.4} parent=0 // pred_region
    _
  $region33: #{_lambda_.4} parent=0 // pred_fallthru
    _

// kernel: _lambda_.7
$region0: #{_lambda_.7}
  #allocation0 [shape = 'u32[]', space=smem, size = 0x4, offset = 0x4, fixed_abs, tag = 'smem constant byte address 0x4 - core index']
  #allocation1 [shape = 'u32[144,128]{1,0:T(1,128)}', space=vmem, size = 0x12000, scoped, tag = 'internal scratch']
  %s0 = inlined_call_operand.vmem [shape: f32[32,1568], index: 0, kind: input, shape index: {}]
  %s1 = inlined_call_operand.vmem [shape: bf16[1568,256], index: 1, kind: input, shape index: {}]
  %s2 = inlined_call_operand.vmem [shape: f32[1,256], index: 2, kind: input, shape index: {}]
  %s3 = inlined_call_operand.vmem [shape: bf16[256,256], index: 3, kind: input, shape index: {}]
  %s4 = inlined_call_operand.vmem [shape: f32[1,256], index: 4, kind: input, shape index: {}]
  %s5 = inlined_call_operand.vmem [shape: bf16[256,128], index: 5, kind: input, shape index: {}]
  %s6 = inlined_call_operand.vmem [shape: f32[1,128], index: 6, kind: input, shape index: {}]
  %s7 = inlined_call_operand.vmem [shape: f32[32,128], index: 7, kind: output, shape index: {}]
  %s8 = sld [smem:[#allocation0]]
  $region38: #{_lambda_.7} parent=0
    _
  %s10 = ssub.s32 1, %s8
  %s11 = scalar_select 0, %s10, %s8
  // Predicated region
  $region2: #{_lambda_.7} parent=0 // pred_check
    _
  $region3: #{_lambda_.7} parent=0 // pred_check_branch
    %13 = sbr.rel (0) target = $region5
  $region4: #{_lambda_.7} parent=0 // pred_region
    _
  $region5: #{_lambda_.7} parent=0 // pred_fallthru
    _
  // Predicated region
  $region6: #{_lambda_.7} parent=0 // pred_check
    _
  $region7: #{_lambda_.7} parent=0 // pred_check_branch
    %15 = sbr.rel (0) target = $region9
  $region8: #{_lambda_.7} parent=0 // pred_region
    _
  $region9: #{_lambda_.7} parent=0 // pred_fallthru
    _
  // Predicated region
  $region10: #{_lambda_.7} parent=0 // pred_check
    _
  $region11: #{_lambda_.7} parent=0 // pred_check_branch
    %17 = sbr.rel (0) target = $region13
  $region12: #{_lambda_.7} parent=0 // pred_region
    _
  $region13: #{_lambda_.7} parent=0 // pred_fallthru
    _
  // Predicated region
  $region14: #{_lambda_.7} parent=0 // pred_check
    _
  $region15: #{_lambda_.7} parent=0 // pred_check_branch
    %19 = sbr.rel (0) target = $region17
  $region16: #{_lambda_.7} parent=0 // pred_region
    _
  $region17: #{_lambda_.7} parent=0 // pred_fallthru
    _
  // Predicated region
  $region18: #{_lambda_.7} parent=0 // pred_check
    _
  $region19: #{_lambda_.7} parent=0 // pred_check_branch
    %21 = sbr.rel (0) target = $region21
  $region20: #{_lambda_.7} parent=0 // pred_region
    _
  $region21: #{_lambda_.7} parent=0 // pred_fallthru
    _
  // Predicated region
  $region22: #{_lambda_.7} parent=0 // pred_check
    _
  $region23: #{_lambda_.7} parent=0 // pred_check_branch
    %23 = sbr.rel (0) target = $region25
  $region24: #{_lambda_.7} parent=0 // pred_region
    _
  $region25: #{_lambda_.7} parent=0 // pred_fallthru
    _
  // Predicated region
  $region26: #{_lambda_.7} parent=0 // pred_check
    _
  $region27: #{_lambda_.7} parent=0 // pred_check_branch
    %25 = sbr.rel (0) target = $region29
  $region28: #{_lambda_.7} parent=0 // pred_region
    _
  $region29: #{_lambda_.7} parent=0 // pred_fallthru
    _
  %v27 = vld [vmem:[%s0] sm:$0xff]
  %v28 = vld [vmem:[%s0 + $0x8] sm:$0xff]
  %v29 = vld [vmem:[%s0 + $0x10] sm:$0xff]
  %v30 = vld [vmem:[%s0 + $0x18] sm:$0xff]
  %v31 = vld [vmem:[%s0 + $0x20] sm:$0xff]
  %v32 = vld [vmem:[%s0 + $0x28] sm:$0xff]
  %v33 = vld [vmem:[%s0 + $0x30] sm:$0xff]
  %v34 = vld [vmem:[%s0 + $0x38] sm:$0xff]
  %v35 = vld [vmem:[%s0 + $0x40] sm:$0xff]
  %v36 = vld [vmem:[%s0 + $0x48] sm:$0xff]
  %v37 = vld [vmem:[%s0 + $0x50] sm:$0xff]
  %v38 = vld [vmem:[%s0 + $0x58] sm:$0xff]
  %v39 = vld [vmem:[%s0 + $0x60] sm:$0xff]
  %v40 = vld [vmem:[%s0 + $0x68] sm:$0xff]
  %v41 = vld [vmem:[%s0 + $0x70] sm:$0xff]
  %v42 = vld [vmem:[%s0 + $0x78] sm:$0xff]
  %v43 = vld [vmem:[%s0 + $0x80] sm:$0xff]
  %v44 = vld [vmem:[%s0 + $0x88] sm:$0xff]
  %v45 = vld [vmem:[%s0 + $0x90] sm:$0xff]
  %v46 = vld [vmem:[%s0 + $0x98] sm:$0xff]
  %v47 = vld [vmem:[%s0 + $0xa0] sm:$0xff]
  %v48 = vld [vmem:[%s0 + $0xa8] sm:$0xff]
  %v49 = vld [vmem:[%s0 + $0xb0] sm:$0xff]
  %v50 = vld [vmem:[%s0 + $0xb8] sm:$0xff]
  %v51 = vld [vmem:[%s0 + $0xc0] sm:$0xff]
  %v52 = vld [vmem:[%s0 + $0xc8] sm:$0xff]
  %v53 = vld [vmem:[%s0 + $0xd0] sm:$0xff]
  %v54 = vld [vmem:[%s0 + $0xd8] sm:$0xff]
  %v55 = vld [vmem:[%s0 + $0xe0] sm:$0xff]
  %v56 = vld [vmem:[%s0 + $0xe8] sm:$0xff]
  %v57 = vld [vmem:[%s0 + $0xf0] sm:$0xff]
  %v58 = vld [vmem:[%s0 + $0xf8] sm:$0xff]
  %v59 = vld [vmem:[%s0 + $0x100] sm:$0xff]
  %v60 = vld [vmem:[%s0 + $0x108] sm:$0xff]
  %v61 = vld [vmem:[%s0 + $0x110] sm:$0xff]
  %v62 = vld [vmem:[%s0 + $0x118] sm:$0xff]
  %v63 = vld [vmem:[%s0 + $0x120] sm:$0xff]
  %v64 = vld [vmem:[%s0 + $0x128] sm:$0xff]
  %v65 = vld [vmem:[%s0 + $0x130] sm:$0xff]
  %v66 = vld [vmem:[%s0 + $0x138] sm:$0xff]
  %v67 = vld [vmem:[%s0 + $0x140] sm:$0xff]
  %v68 = vld [vmem:[%s0 + $0x148] sm:$0xff]
  %v69 = vld [vmem:[%s0 + $0x150] sm:$0xff]
  %v70 = vld [vmem:[%s0 + $0x158] sm:$0xff]
  %v71 = vld [vmem:[%s0 + $0x160] sm:$0xff]
  %v72 = vld [vmem:[%s0 + $0x168] sm:$0xff]
  %v73 = vld [vmem:[%s0 + $0x170] sm:$0xff]
  %v74 = vld [vmem:[%s0 + $0x178] sm:$0xff]
  %v75 = vld [vmem:[%s0 + $0x180] sm:$0xff]
  %v76 = vld [vmem:[%s0 + $0x188] sm:$0xff]
  %v77 = vld [vmem:[%s0 + $0x190] sm:$0xff]
  %v78 = vld [vmem:[%s0 + $0x198] sm:$0xff]
  %v79 = vpack.c.bf16 %v40, %v27
  %v80 = vpack.c.bf16 %v41, %v28
  %v81 = vpack.c.bf16 %v42, %v29
  %v82 = vpack.c.bf16 %v43, %v30
  %v83 = vpack.c.bf16 %v44, %v31
  %v84 = vpack.c.bf16 %v45, %v32
  %v85 = vpack.c.bf16 %v46, %v33
  %v86 = vpack.c.bf16 %v47, %v34
  %v87 = vpack.c.bf16 %v48, %v35
  %v88 = vpack.c.bf16 %v49, %v36
  %v89 = vpack.c.bf16 %v50, %v37
  %v90 = vpack.c.bf16 %v51, %v38
  %v91 = vpack.c.bf16 %v52, %v39
  %v92 = vpack.c.bf16 %v66, %v53
  %v93 = vpack.c.bf16 %v67, %v54
  %v94 = vpack.c.bf16 %v68, %v55
  %v95 = vpack.c.bf16 %v69, %v56
  %v96 = vpack.c.bf16 %v70, %v57
  %v97 = vpack.c.bf16 %v71, %v58
  %v98 = vpack.c.bf16 %v72, %v59
  %v99 = vpack.c.bf16 %v73, %v60
  %v100 = vpack.c.bf16 %v74, %v61
  %v101 = vpack.c.bf16 %v75, %v62
  %v102 = vpack.c.bf16 %v76, %v63
  %v103 = vpack.c.bf16 %v77, %v64
  %v104 = vpack.c.bf16 %v78, %v65
  %v105 = vld [vmem:[%s1] sm:$0xff]
  %v106 = vld [vmem:[%s1 + $0x8] sm:$0xff]
  %v107 = vld [vmem:[%s1 + $0x10] sm:$0xff]
  %v108 = vld [vmem:[%s1 + $0x18] sm:$0xff]
  %v109 = vld [vmem:[%s1 + $0x20] sm:$0xff]
  %v110 = vld [vmem:[%s1 + $0x28] sm:$0xff]
  %v111 = vld [vmem:[%s1 + $0x30] sm:$0xff]
  %v112 = vld [vmem:[%s1 + $0x38] sm:$0xff]
  %v113 = vld [vmem:[%s1 + $0x40] sm:$0xff]
  %v114 = vld [vmem:[%s1 + $0x48] sm:$0xff]
  %v115 = vld [vmem:[%s1 + $0x50] sm:$0xff]
  %v116 = vld [vmem:[%s1 + $0x58] sm:$0xff]
  %v117 = vld [vmem:[%s1 + $0x60] sm:$0xff]
  %v118 = vld [vmem:[%s1 + $0x68] sm:$0xff]
  %v119 = vld [vmem:[%s1 + $0x70] sm:$0xff]
  %v120 = vld [vmem:[%s1 + $0x78] sm:$0xff]
  %v121 = vld [vmem:[%s1 + $0x80] sm:$0xff]
  %v122 = vld [vmem:[%s1 + $0x88] sm:$0xff]
  %v123 = vld [vmem:[%s1 + $0x90] sm:$0xff]
  %v124 = vld [vmem:[%s1 + $0x98] sm:$0xff]
  %v125 = vld [vmem:[%s1 + $0xa0] sm:$0xff]
  %v126 = vld [vmem:[%s1 + $0xa8] sm:$0xff]
  %v127 = vld [vmem:[%s1 + $0xb0] sm:$0xff]
  %v128 = vld [vmem:[%s1 + $0xb8] sm:$0xff]
  %v129 = vld [vmem:[%s1 + $0xc0] sm:$0xff]
  %v130 = vld [vmem:[%s1 + $0xc8] sm:$0xff]
  %v131 = vld [vmem:[%s1 + $0xd0] sm:$0xff]
  %v132 = vld [vmem:[%s1 + $0xd8] sm:$0xff]
  %v133 = vld [vmem:[%s1 + $0xe0] sm:$0xff]
  %v134 = vld [vmem:[%s1 + $0xe8] sm:$0xff]
  %v135 = vld [vmem:[%s1 + $0xf0] sm:$0xff]
  %v136 = vld [vmem:[%s1 + $0xf8] sm:$0xff]
  %v137 = vld [vmem:[%s1 + $0x100] sm:$0xff]
  %v138 = vld [vmem:[%s1 + $0x108] sm:$0xff]
  %v139 = vld [vmem:[%s1 + $0x110] sm:$0xff]
  %v140 = vld [vmem:[%s1 + $0x118] sm:$0xff]
  %v141 = vld [vmem:[%s1 + $0x120] sm:$0xff]
  %v142 = vld [vmem:[%s1 + $0x128] sm:$0xff]
  %v143 = vld [vmem:[%s1 + $0x130] sm:$0xff]
  %v144 = vld [vmem:[%s1 + $0x138] sm:$0xff]
  %v145 = vld [vmem:[%s1 + $0x140] sm:$0xff]
  %v146 = vld [vmem:[%s1 + $0x148] sm:$0xff]
  %v147 = vld [vmem:[%s1 + $0x150] sm:$0xff]
  %v148 = vld [vmem:[%s1 + $0x158] sm:$0xff]
  %v149 = vld [vmem:[%s1 + $0x160] sm:$0xff]
  %v150 = vld [vmem:[%s1 + $0x168] sm:$0xff]
  %v151 = vld [vmem:[%s1 + $0x170] sm:$0xff]
  %v152 = vld [vmem:[%s1 + $0x178] sm:$0xff]
  %v153 = vld [vmem:[%s1 + $0x180] sm:$0xff]
  %v154 = vld [vmem:[%s1 + $0x188] sm:$0xff]
  %v155 = vld [vmem:[%s1 + $0x190] sm:$0xff]
  %v156 = vld [vmem:[%s1 + $0x198] sm:$0xff]
  %v157 = vld [vmem:[%s1 + $0x1a0] sm:$0xff]
  %v158 = vld [vmem:[%s1 + $0x1a8] sm:$0xff]
  %v159 = vld [vmem:[%s1 + $0x1b0] sm:$0xff]
  %v160 = vld [vmem:[%s1 + $0x1b8] sm:$0xff]
  %v161 = vld [vmem:[%s1 + $0x1c0] sm:$0xff]
  %v162 = vld [vmem:[%s1 + $0x1c8] sm:$0xff]
  %v163 = vld [vmem:[%s1 + $0x1d0] sm:$0xff]
  %v164 = vld [vmem:[%s1 + $0x1d8] sm:$0xff]
  %v165 = vld [vmem:[%s1 + $0x1e0] sm:$0xff]
  %v166 = vld [vmem:[%s1 + $0x1e8] sm:$0xff]
  %v167 = vld [vmem:[%s1 + $0x1f0] sm:$0xff]
  %v168 = vld [vmem:[%s1 + $0x1f8] sm:$0xff]
  %v169 = vld [vmem:[%s1 + $0x200] sm:$0xff]
  %v170 = vld [vmem:[%s1 + $0x208] sm:$0xff]
  %v171 = vld [vmem:[%s1 + $0x210] sm:$0xff]
  %v172 = vld [vmem:[%s1 + $0x218] sm:$0xff]
  %v173 = vld [vmem:[%s1 + $0x220] sm:$0xff]
  %v174 = vld [vmem:[%s1 + $0x228] sm:$0xff]
  %v175 = vld [vmem:[%s1 + $0x230] sm:$0xff]
  %v176 = vld [vmem:[%s1 + $0x238] sm:$0xff]
  %v177 = vld [vmem:[%s1 + $0x240] sm:$0xff]
  %v178 = vld [vmem:[%s1 + $0x248] sm:$0xff]
  %v179 = vld [vmem:[%s1 + $0x250] sm:$0xff]
  %v180 = vld [vmem:[%s1 + $0x258] sm:$0xff]
  %v181 = vld [vmem:[%s1 + $0x260] sm:$0xff]
  %v182 = vld [vmem:[%s1 + $0x268] sm:$0xff]
  %v183 = vld [vmem:[%s1 + $0x270] sm:$0xff]
  %v184 = vld [vmem:[%s1 + $0x278] sm:$0xff]
  %v185 = vld [vmem:[%s1 + $0x280] sm:$0xff]
  %v186 = vld [vmem:[%s1 + $0x288] sm:$0xff]
  %v187 = vld [vmem:[%s1 + $0x290] sm:$0xff]
  %v188 = vld [vmem:[%s1 + $0x298] sm:$0xff]
  %v189 = vld [vmem:[%s1 + $0x2a0] sm:$0xff]
  %v190 = vld [vmem:[%s1 + $0x2a8] sm:$0xff]
  %v191 = vld [vmem:[%s1 + $0x2b0] sm:$0xff]
  %v192 = vld [vmem:[%s1 + $0x2b8] sm:$0xff]
  %v193 = vld [vmem:[%s1 + $0x2c0] sm:$0xff]
  %v194 = vld [vmem:[%s1 + $0x2c8] sm:$0xff]
  %v195 = vld [vmem:[%s1 + $0x2d0] sm:$0xff]
  %v196 = vld [vmem:[%s1 + $0x2d8] sm:$0xff]
  %v197 = vld [vmem:[%s1 + $0x2e0] sm:$0xff]
  %v198 = vld [vmem:[%s1 + $0x2e8] sm:$0xff]
  %v199 = vld [vmem:[%s1 + $0x2f0] sm:$0xff]
  %v200 = vld [vmem:[%s1 + $0x2f8] sm:$0xff]
  %v201 = vld [vmem:[%s1 + $0x300] sm:$0xff]
  %v202 = vld [vmem:[%s1 + $0x308] sm:$0xff]
  %v203 = vld [vmem:[%s1 + $0x310] sm:$0xff]
  %v204 = vld [vmem:[%s1 + $0x318] sm:$0xff]
  %v205 = vld [vmem:[%s1 + $0x320] sm:$0xff]
  %v206 = vld [vmem:[%s1 + $0x328] sm:$0xff]
  %v207 = vld [vmem:[%s1 + $0x330] sm:$0xff]
  %v208 = vld [vmem:[%s1 + $0x338] sm:$0xff]
  %v209 = vld [vmem:[%s1 + $0x340] sm:$0xff]
  %v210 = vld [vmem:[%s1 + $0x348] sm:$0xff]
  %v211 = vld [vmem:[%s1 + $0x350] sm:$0xff]
  %v212 = vld [vmem:[%s1 + $0x358] sm:$0xff]
  %v213 = vld [vmem:[%s1 + $0x360] sm:$0xff]
  %v214 = vld [vmem:[%s1 + $0x368] sm:$0xff]
  %v215 = vld [vmem:[%s1 + $0x370] sm:$0xff]
  %v216 = vld [vmem:[%s1 + $0x378] sm:$0xff]
  %v217 = vld [vmem:[%s1 + $0x380] sm:$0xff]
  %v218 = vld [vmem:[%s1 + $0x388] sm:$0xff]
  %v219 = vld [vmem:[%s1 + $0x390] sm:$0xff]
  %v220 = vld [vmem:[%s1 + $0x398] sm:$0xff]
  %v221 = vld [vmem:[%s1 + $0x3a0] sm:$0xff]
  %v222 = vld [vmem:[%s1 + $0x3a8] sm:$0xff]
  %v223 = vld [vmem:[%s1 + $0x3b0] sm:$0xff]
  %v224 = vld [vmem:[%s1 + $0x3b8] sm:$0xff]
  %v225 = vld [vmem:[%s1 + $0x3c0] sm:$0xff]
  %v226 = vld [vmem:[%s1 + $0x3c8] sm:$0xff]
  %v227 = vld [vmem:[%s1 + $0x3d0] sm:$0xff]
  %v228 = vld [vmem:[%s1 + $0x3d8] sm:$0xff]
  %v229 = vld [vmem:[%s1 + $0x3e0] sm:$0xff]
  %v230 = vld [vmem:[%s1 + $0x3e8] sm:$0xff]
  %v231 = vld [vmem:[%s1 + $0x3f0] sm:$0xff]
  %v232 = vld [vmem:[%s1 + $0x3f8] sm:$0xff]
  %v233 = vld [vmem:[%s1 + $0x400] sm:$0xff]
  %v234 = vld [vmem:[%s1 + $0x408] sm:$0xff]
  %v235 = vld [vmem:[%s1 + $0x410] sm:$0xff]
  %v236 = vld [vmem:[%s1 + $0x418] sm:$0xff]
  %v237 = vld [vmem:[%s1 + $0x420] sm:$0xff]
  %v238 = vld [vmem:[%s1 + $0x428] sm:$0xff]
  %v239 = vld [vmem:[%s1 + $0x430] sm:$0xff]
  %v240 = vld [vmem:[%s1 + $0x438] sm:$0xff]
  %v241 = vld [vmem:[%s1 + $0x440] sm:$0xff]
  %v242 = vld [vmem:[%s1 + $0x448] sm:$0xff]
  %v243 = vld [vmem:[%s1 + $0x450] sm:$0xff]
  %v244 = vld [vmem:[%s1 + $0x458] sm:$0xff]
  %v245 = vld [vmem:[%s1 + $0x460] sm:$0xff]
  %v246 = vld [vmem:[%s1 + $0x468] sm:$0xff]
  %v247 = vld [vmem:[%s1 + $0x470] sm:$0xff]
  %v248 = vld [vmem:[%s1 + $0x478] sm:$0xff]
  %v249 = vld [vmem:[%s1 + $0x480] sm:$0xff]
  %v250 = vld [vmem:[%s1 + $0x488] sm:$0xff]
  %v251 = vld [vmem:[%s1 + $0x490] sm:$0xff]
  %v252 = vld [vmem:[%s1 + $0x498] sm:$0xff]
  %v253 = vld [vmem:[%s1 + $0x4a0] sm:$0xff]
  %v254 = vld [vmem:[%s1 + $0x4a8] sm:$0xff]
  %v255 = vld [vmem:[%s1 + $0x4b0] sm:$0xff]
  %v256 = vld [vmem:[%s1 + $0x4b8] sm:$0xff]
  %v257 = vld [vmem:[%s1 + $0x4c0] sm:$0xff]
  %v258 = vld [vmem:[%s1 + $0x4c8] sm:$0xff]
  %v259 = vld [vmem:[%s1 + $0x4d0] sm:$0xff]
  %v260 = vld [vmem:[%s1 + $0x4d8] sm:$0xff]
  %v261 = vld [vmem:[%s1 + $0x4e0] sm:$0xff]
  %v262 = vld [vmem:[%s1 + $0x4e8] sm:$0xff]
  %v263 = vld [vmem:[%s1 + $0x4f0] sm:$0xff]
  %v264 = vld [vmem:[%s1 + $0x4f8] sm:$0xff]
  %v265 = vld [vmem:[%s1 + $0x500] sm:$0xff]
  %v266 = vld [vmem:[%s1 + $0x508] sm:$0xff]
  %v267 = vld [vmem:[%s1 + $0x510] sm:$0xff]
  %v268 = vld [vmem:[%s1 + $0x518] sm:$0xff]
  %v269 = vld [vmem:[%s1 + $0x520] sm:$0xff]
  %v270 = vld [vmem:[%s1 + $0x528] sm:$0xff]
  %v271 = vld [vmem:[%s1 + $0x530] sm:$0xff]
  %v272 = vld [vmem:[%s1 + $0x538] sm:$0xff]
  %v273 = vld [vmem:[%s1 + $0x540] sm:$0xff]
  %v274 = vld [vmem:[%s1 + $0x548] sm:$0xff]
  %v275 = vld [vmem:[%s1 + $0x550] sm:$0xff]
  %v276 = vld [vmem:[%s1 + $0x558] sm:$0xff]
  %v277 = vld [vmem:[%s1 + $0x560] sm:$0xff]
  %v278 = vld [vmem:[%s1 + $0x568] sm:$0xff]
  %v279 = vld [vmem:[%s1 + $0x570] sm:$0xff]
  %v280 = vld [vmem:[%s1 + $0x578] sm:$0xff]
  %v281 = vld [vmem:[%s1 + $0x580] sm:$0xff]
  %v282 = vld [vmem:[%s1 + $0x588] sm:$0xff]
  %v283 = vld [vmem:[%s1 + $0x590] sm:$0xff]
  %v284 = vld [vmem:[%s1 + $0x598] sm:$0xff]
  %v285 = vld [vmem:[%s1 + $0x5a0] sm:$0xff]
  %v286 = vld [vmem:[%s1 + $0x5a8] sm:$0xff]
  %v287 = vld [vmem:[%s1 + $0x5b0] sm:$0xff]
  %v288 = vld [vmem:[%s1 + $0x5b8] sm:$0xff]
  %v289 = vld [vmem:[%s1 + $0x5c0] sm:$0xff]
  %v290 = vld [vmem:[%s1 + $0x5c8] sm:$0xff]
  %v291 = vld [vmem:[%s1 + $0x5d0] sm:$0xff]
  %v292 = vld [vmem:[%s1 + $0x5d8] sm:$0xff]
  %v293 = vld [vmem:[%s1 + $0x5e0] sm:$0xff]
  %v294 = vld [vmem:[%s1 + $0x5e8] sm:$0xff]
  %v295 = vld [vmem:[%s1 + $0x5f0] sm:$0xff]
  %v296 = vld [vmem:[%s1 + $0x5f8] sm:$0xff]
  %v297 = vld [vmem:[%s1 + $0x600] sm:$0xff]
  %v298 = vld [vmem:[%s1 + $0x608] sm:$0xff]
  %v299 = vld [vmem:[%s1 + $0x610] sm:$0xff]
  %v300 = vld [vmem:[%s1 + $0x618] sm:$0xff]
  %v301 = vld [vmem:[%s2] sm:$0x3]
  %v303 = vlaneseq
  %v304 = vshrl.u32 %v303, 7
  %v305 = vsub.s32 0, %v304
  %v306 = vrot.slane %v301, %v305
  %v307 = vlaneseq
  %v308 = vshrl.u32 %v307, 7
  %v309 = vsub.s32 1, %v308
  %v310 = vrot.slane %v301, %v309
  %v509 = vunpack.c.l.b16 %v105
  %v510 = vunpack.c.h.b16 %v105
  %v511 = vunpack.c.l.b16 %v106
  %v512 = vunpack.c.h.b16 %v106
  %v513 = vunpack.c.l.b16 %v107
  %v514 = vunpack.c.h.b16 %v107
  %v515 = vunpack.c.l.b16 %v108
  %v516 = vunpack.c.h.b16 %v108
  %v517 = vunpack.c.l.b16 %v109
  %v518 = vunpack.c.h.b16 %v109
  %v519 = vunpack.c.l.b16 %v110
  %v520 = vunpack.c.h.b16 %v110
  %v521 = vunpack.c.l.b16 %v111
  %v522 = vunpack.c.h.b16 %v111
  %v523 = vunpack.c.l.b16 %v112
  %v524 = vunpack.c.h.b16 %v112
  %v525 = vunpack.c.l.b16 %v113
  %v526 = vunpack.c.h.b16 %v113
  %v527 = vunpack.c.l.b16 %v114
  %v528 = vunpack.c.h.b16 %v114
  %v529 = vunpack.c.l.b16 %v115
  %v530 = vunpack.c.h.b16 %v115
  %v531 = vunpack.c.l.b16 %v116
  %v532 = vunpack.c.h.b16 %v116
  %v533 = vunpack.c.l.b16 %v117
  %v534 = vunpack.c.h.b16 %v117
  %v535 = vunpack.c.l.b16 %v118
  %v536 = vunpack.c.h.b16 %v118
  %v537 = vunpack.c.l.b16 %v119
  %v538 = vunpack.c.h.b16 %v119
  %v539 = vunpack.c.l.b16 %v120
  %v540 = vunpack.c.h.b16 %v120
  %v541 = vunpack.c.l.b16 %v121
  %v542 = vunpack.c.h.b16 %v121
  %v543 = vunpack.c.l.b16 %v122
  %v544 = vunpack.c.h.b16 %v122
  %v545 = vunpack.c.l.b16 %v123
  %v546 = vunpack.c.h.b16 %v123
  %v547 = vunpack.c.l.b16 %v124
  %v548 = vunpack.c.h.b16 %v124
  %v549 = vunpack.c.l.b16 %v125
  %v550 = vunpack.c.h.b16 %v125
  %v551 = vunpack.c.l.b16 %v126
  %v552 = vunpack.c.h.b16 %v126
  %v553 = vunpack.c.l.b16 %v127
  %v554 = vunpack.c.h.b16 %v127
  %v555 = vunpack.c.l.b16 %v128
  %v556 = vunpack.c.h.b16 %v128
  %v557 = vunpack.c.l.b16 %v129
  %v558 = vunpack.c.h.b16 %v129
  %v559 = vunpack.c.l.b16 %v130
  %v560 = vunpack.c.h.b16 %v130
  %v561 = vunpack.c.l.b16 %v131
  %v562 = vunpack.c.h.b16 %v131
  %v563 = vunpack.c.l.b16 %v132
  %v564 = vunpack.c.h.b16 %v132
  %v565 = vunpack.c.l.b16 %v133
  %v566 = vunpack.c.h.b16 %v133
  %v567 = vunpack.c.l.b16 %v134
  %v568 = vunpack.c.h.b16 %v134
  %v569 = vunpack.c.l.b16 %v135
  %v570 = vunpack.c.h.b16 %v135
  %v571 = vunpack.c.l.b16 %v136
  %v572 = vunpack.c.h.b16 %v136
  %v573 = vunpack.c.l.b16 %v137
  %v574 = vunpack.c.h.b16 %v137
  %v575 = vunpack.c.l.b16 %v138
  %v576 = vunpack.c.h.b16 %v138
  %v577 = vunpack.c.l.b16 %v139
  %v578 = vunpack.c.h.b16 %v139
  %v579 = vunpack.c.l.b16 %v140
  %v580 = vunpack.c.h.b16 %v140
  %v581 = vunpack.c.l.b16 %v141
  %v582 = vunpack.c.h.b16 %v141
  %v583 = vunpack.c.l.b16 %v142
  %v584 = vunpack.c.h.b16 %v142
  %v585 = vunpack.c.l.b16 %v143
  %v586 = vunpack.c.h.b16 %v143
  %v587 = vunpack.c.l.b16 %v144
  %v588 = vunpack.c.h.b16 %v144
  %v589 = vunpack.c.l.b16 %v145
  %v590 = vunpack.c.h.b16 %v145
  %v591 = vunpack.c.l.b16 %v146
  %v592 = vunpack.c.h.b16 %v146
  %v593 = vunpack.c.l.b16 %v147
  %v594 = vunpack.c.h.b16 %v147
  %v595 = vunpack.c.l.b16 %v148
  %v596 = vunpack.c.h.b16 %v148
  %v597 = vunpack.c.l.b16 %v149
  %v598 = vunpack.c.h.b16 %v149
  %v599 = vunpack.c.l.b16 %v150
  %v600 = vunpack.c.h.b16 %v150
  %v601 = vunpack.c.l.b16 %v151
  %v602 = vunpack.c.h.b16 %v151
  %v603 = vunpack.c.l.b16 %v152
  %v604 = vunpack.c.h.b16 %v152
  %v605 = vunpack.c.l.b16 %v153
  %v606 = vunpack.c.h.b16 %v153
  %v607 = vunpack.c.l.b16 %v154
  %v608 = vunpack.c.h.b16 %v154
  %v609 = vunpack.c.l.b16 %v155
  %v610 = vunpack.c.h.b16 %v155
  %v611 = vunpack.c.l.b16 %v156
  %v612 = vunpack.c.h.b16 %v156
  %v613 = vunpack.c.l.b16 %v157
  %v614 = vunpack.c.h.b16 %v157
  %v615 = vunpack.c.l.b16 %v158
  %v616 = vunpack.c.h.b16 %v158
  %v617 = vunpack.c.l.b16 %v159
  %v618 = vunpack.c.h.b16 %v159
  %v619 = vunpack.c.l.b16 %v160
  %v620 = vunpack.c.h.b16 %v160
  %v621 = vunpack.c.l.b16 %v161
  %v622 = vunpack.c.h.b16 %v161
  %v623 = vunpack.c.l.b16 %v162
  %v624 = vunpack.c.h.b16 %v162
  %v625 = vunpack.c.l.b16 %v163
  %v626 = vunpack.c.h.b16 %v163
  %v627 = vunpack.c.l.b16 %v164
  %v628 = vunpack.c.h.b16 %v164
  %v629 = vunpack.c.l.b16 %v165
  %v630 = vunpack.c.h.b16 %v165
  %v631 = vunpack.c.l.b16 %v166
  %v632 = vunpack.c.h.b16 %v166
  %v633 = vunpack.c.l.b16 %v167
  %v634 = vunpack.c.h.b16 %v167
  %v635 = vunpack.c.l.b16 %v168
  %v636 = vunpack.c.h.b16 %v168
  %v637 = vunpack.c.l.b16 %v169
  %v638 = vunpack.c.h.b16 %v169
  %v639 = vunpack.c.l.b16 %v170
  %v640 = vunpack.c.h.b16 %v170
  %v641 = vunpack.c.l.b16 %v171
  %v642 = vunpack.c.h.b16 %v171
  %v643 = vunpack.c.l.b16 %v172
  %v644 = vunpack.c.h.b16 %v172
  %v645 = vunpack.c.l.b16 %v173
  %v646 = vunpack.c.h.b16 %v173
  %v647 = vunpack.c.l.b16 %v174
  %v648 = vunpack.c.h.b16 %v174
  %v649 = vunpack.c.l.b16 %v175
  %v650 = vunpack.c.h.b16 %v175
  %v651 = vunpack.c.l.b16 %v176
  %v652 = vunpack.c.h.b16 %v176
  %v653 = vunpack.c.l.b16 %v177
  %v654 = vunpack.c.h.b16 %v177
  %v655 = vunpack.c.l.b16 %v178
  %v656 = vunpack.c.h.b16 %v178
  %v657 = vunpack.c.l.b16 %v179
  %v658 = vunpack.c.h.b16 %v179
  %v659 = vunpack.c.l.b16 %v180
  %v660 = vunpack.c.h.b16 %v180
  %v661 = vunpack.c.l.b16 %v181
  %v662 = vunpack.c.h.b16 %v181
  %v663 = vunpack.c.l.b16 %v182
  %v664 = vunpack.c.h.b16 %v182
  %v665 = vunpack.c.l.b16 %v183
  %v666 = vunpack.c.h.b16 %v183
  %v667 = vunpack.c.l.b16 %v184
  %v668 = vunpack.c.h.b16 %v184
  %v669 = vunpack.c.l.b16 %v185
  %v670 = vunpack.c.h.b16 %v185
  %v671 = vunpack.c.l.b16 %v186
  %v672 = vunpack.c.h.b16 %v186
  %v673 = vunpack.c.l.b16 %v187
  %v674 = vunpack.c.h.b16 %v187
  %v675 = vunpack.c.l.b16 %v188
  %v676 = vunpack.c.h.b16 %v188
  %v677 = vunpack.c.l.b16 %v189
  %v678 = vunpack.c.h.b16 %v189
  %v679 = vunpack.c.l.b16 %v190
  %v680 = vunpack.c.h.b16 %v190
  %v681 = vunpack.c.l.b16 %v191
  %v682 = vunpack.c.h.b16 %v191
  %v683 = vunpack.c.l.b16 %v192
  %v684 = vunpack.c.h.b16 %v192
  %v685 = vunpack.c.l.b16 %v193
  %v686 = vunpack.c.h.b16 %v193
  %v687 = vunpack.c.l.b16 %v194
  %v688 = vunpack.c.h.b16 %v194
  %v689 = vunpack.c.l.b16 %v195
  %v690 = vunpack.c.h.b16 %v195
  %v691 = vunpack.c.l.b16 %v196
  %v692 = vunpack.c.h.b16 %v196
  %v693 = vunpack.c.l.b16 %v197
  %v694 = vunpack.c.h.b16 %v197
  %v695 = vunpack.c.l.b16 %v198
  %v696 = vunpack.c.h.b16 %v198
  %v697 = vunpack.c.l.b16 %v199
  %v698 = vunpack.c.h.b16 %v199
  %v699 = vunpack.c.l.b16 %v200
  %v700 = vunpack.c.h.b16 %v200
  %v701 = vunpack.c.l.b16 %v201
  %v702 = vunpack.c.h.b16 %v201
  %v703 = vunpack.c.l.b16 %v202
  %v704 = vunpack.c.h.b16 %v202
  %v705 = vunpack.c.l.b16 %v203
  %v706 = vunpack.c.h.b16 %v203
  %v707 = vunpack.c.l.b16 %v204
  %v708 = vunpack.c.h.b16 %v204
  %v709 = vunpack.c.l.b16 %v205
  %v710 = vunpack.c.h.b16 %v205
  %v711 = vunpack.c.l.b16 %v206
  %v712 = vunpack.c.h.b16 %v206
  %v713 = vunpack.c.l.b16 %v207
  %v714 = vunpack.c.h.b16 %v207
  %v715 = vunpack.c.l.b16 %v208
  %v716 = vunpack.c.h.b16 %v208
  %v717 = vunpack.c.l.b16 %v209
  %v718 = vunpack.c.h.b16 %v209
  %v719 = vunpack.c.l.b16 %v210
  %v720 = vunpack.c.h.b16 %v210
  %v721 = vunpack.c.l.b16 %v211
  %v722 = vunpack.c.h.b16 %v211
  %v723 = vunpack.c.l.b16 %v212
  %v724 = vunpack.c.h.b16 %v212
  %v725 = vunpack.c.l.b16 %v213
  %v726 = vunpack.c.h.b16 %v213
  %v727 = vunpack.c.l.b16 %v214
  %v728 = vunpack.c.h.b16 %v214
  %v729 = vunpack.c.l.b16 %v215
  %v730 = vunpack.c.h.b16 %v215
  %v731 = vunpack.c.l.b16 %v216
  %v732 = vunpack.c.h.b16 %v216
  %v733 = vunpack.c.l.b16 %v217
  %v734 = vunpack.c.h.b16 %v217
  %v735 = vunpack.c.l.b16 %v218
  %v736 = vunpack.c.h.b16 %v218
  %v737 = vunpack.c.l.b16 %v219
  %v738 = vunpack.c.h.b16 %v219
  %v739 = vunpack.c.l.b16 %v220
  %v740 = vunpack.c.h.b16 %v220
  %v741 = vunpack.c.l.b16 %v221
  %v742 = vunpack.c.h.b16 %v221
  %v743 = vunpack.c.l.b16 %v222
  %v744 = vunpack.c.h.b16 %v222
  %v745 = vunpack.c.l.b16 %v223
  %v746 = vunpack.c.h.b16 %v223
  %v747 = vunpack.c.l.b16 %v224
  %v748 = vunpack.c.h.b16 %v224
  %v749 = vunpack.c.l.b16 %v225
  %v750 = vunpack.c.h.b16 %v225
  %v751 = vunpack.c.l.b16 %v226
  %v752 = vunpack.c.h.b16 %v226
  %v753 = vunpack.c.l.b16 %v227
  %v754 = vunpack.c.h.b16 %v227
  %v755 = vunpack.c.l.b16 %v228
  %v756 = vunpack.c.h.b16 %v228
  %v757 = vunpack.c.l.b16 %v229
  %v758 = vunpack.c.h.b16 %v229
  %v759 = vunpack.c.l.b16 %v230
  %v760 = vunpack.c.h.b16 %v230
  %v761 = vunpack.c.l.b16 %v231
  %v762 = vunpack.c.h.b16 %v231
  %v763 = vunpack.c.l.b16 %v232
  %v764 = vunpack.c.h.b16 %v232
  %v765 = vunpack.c.l.b16 %v233
  %v766 = vunpack.c.h.b16 %v233
  %v767 = vunpack.c.l.b16 %v234
  %v768 = vunpack.c.h.b16 %v234
  %v769 = vunpack.c.l.b16 %v235
  %v770 = vunpack.c.h.b16 %v235
  %v771 = vunpack.c.l.b16 %v236
  %v772 = vunpack.c.h.b16 %v236
  %v773 = vunpack.c.l.b16 %v237
  %v774 = vunpack.c.h.b16 %v237
  %v775 = vunpack.c.l.b16 %v238
  %v776 = vunpack.c.h.b16 %v238
  %v777 = vunpack.c.l.b16 %v239
  %v778 = vunpack.c.h.b16 %v239
  %v779 = vunpack.c.l.b16 %v240
  %v780 = vunpack.c.h.b16 %v240
  %v781 = vunpack.c.l.b16 %v241
  %v782 = vunpack.c.h.b16 %v241
  %v783 = vunpack.c.l.b16 %v242
  %v784 = vunpack.c.h.b16 %v242
  %v785 = vunpack.c.l.b16 %v243
  %v786 = vunpack.c.h.b16 %v243
  %v787 = vunpack.c.l.b16 %v244
  %v788 = vunpack.c.h.b16 %v244
  %v789 = vunpack.c.l.b16 %v245
  %v790 = vunpack.c.h.b16 %v245
  %v791 = vunpack.c.l.b16 %v246
  %v792 = vunpack.c.h.b16 %v246
  %v793 = vunpack.c.l.b16 %v247
  %v794 = vunpack.c.h.b16 %v247
  %v795 = vunpack.c.l.b16 %v248
  %v796 = vunpack.c.h.b16 %v248
  %v797 = vunpack.c.l.b16 %v249
  %v798 = vunpack.c.h.b16 %v249
  %v799 = vunpack.c.l.b16 %v250
  %v800 = vunpack.c.h.b16 %v250
  %v801 = vunpack.c.l.b16 %v251
  %v802 = vunpack.c.h.b16 %v251
  %v803 = vunpack.c.l.b16 %v252
  %v804 = vunpack.c.h.b16 %v252
  %v805 = vunpack.c.l.b16 %v253
  %v806 = vunpack.c.h.b16 %v253
  %v807 = vunpack.c.l.b16 %v254
  %v808 = vunpack.c.h.b16 %v254
  %v809 = vunpack.c.l.b16 %v255
  %v810 = vunpack.c.h.b16 %v255
  %v811 = vunpack.c.l.b16 %v256
  %v812 = vunpack.c.h.b16 %v256
  %v813 = vunpack.c.l.b16 %v257
  %v814 = vunpack.c.h.b16 %v257
  %v815 = vunpack.c.l.b16 %v258
  %v816 = vunpack.c.h.b16 %v258
  %v817 = vunpack.c.l.b16 %v259
  %v818 = vunpack.c.h.b16 %v259
  %v819 = vunpack.c.l.b16 %v260
  %v820 = vunpack.c.h.b16 %v260
  %v821 = vunpack.c.l.b16 %v261
  %v822 = vunpack.c.h.b16 %v261
  %v823 = vunpack.c.l.b16 %v262
  %v824 = vunpack.c.h.b16 %v262
  %v825 = vunpack.c.l.b16 %v263
  %v826 = vunpack.c.h.b16 %v263
  %v827 = vunpack.c.l.b16 %v264
  %v828 = vunpack.c.h.b16 %v264
  %v829 = vunpack.c.l.b16 %v265
  %v830 = vunpack.c.h.b16 %v265
  %v831 = vunpack.c.l.b16 %v266
  %v832 = vunpack.c.h.b16 %v266
  %v833 = vunpack.c.l.b16 %v267
  %v834 = vunpack.c.h.b16 %v267
  %v835 = vunpack.c.l.b16 %v268
  %v836 = vunpack.c.h.b16 %v268
  %v837 = vunpack.c.l.b16 %v269
  %v838 = vunpack.c.h.b16 %v269
  %v839 = vunpack.c.l.b16 %v270
  %v840 = vunpack.c.h.b16 %v270
  %v841 = vunpack.c.l.b16 %v271
  %v842 = vunpack.c.h.b16 %v271
  %v843 = vunpack.c.l.b16 %v272
  %v844 = vunpack.c.h.b16 %v272
  %v845 = vunpack.c.l.b16 %v273
  %v846 = vunpack.c.h.b16 %v273
  %v847 = vunpack.c.l.b16 %v274
  %v848 = vunpack.c.h.b16 %v274
  %v849 = vunpack.c.l.b16 %v275
  %v850 = vunpack.c.h.b16 %v275
  %v851 = vunpack.c.l.b16 %v276
  %v852 = vunpack.c.h.b16 %v276
  %v853 = vunpack.c.l.b16 %v277
  %v854 = vunpack.c.h.b16 %v277
  %v855 = vunpack.c.l.b16 %v278
  %v856 = vunpack.c.h.b16 %v278
  %v857 = vunpack.c.l.b16 %v279
  %v858 = vunpack.c.h.b16 %v279
  %v859 = vunpack.c.l.b16 %v280
  %v860 = vunpack.c.h.b16 %v280
  %v861 = vunpack.c.l.b16 %v281
  %v862 = vunpack.c.h.b16 %v281
  %v863 = vunpack.c.l.b16 %v282
  %v864 = vunpack.c.h.b16 %v282
  %v865 = vunpack.c.l.b16 %v283
  %v866 = vunpack.c.h.b16 %v283
  %v867 = vunpack.c.l.b16 %v284
  %v868 = vunpack.c.h.b16 %v284
  %v869 = vunpack.c.l.b16 %v285
  %v870 = vunpack.c.h.b16 %v285
  %v871 = vunpack.c.l.b16 %v286
  %v872 = vunpack.c.h.b16 %v286
  %v873 = vunpack.c.l.b16 %v287
  %v874 = vunpack.c.h.b16 %v287
  %v875 = vunpack.c.l.b16 %v288
  %v876 = vunpack.c.h.b16 %v288
  %v877 = vunpack.c.l.b16 %v289
  %v878 = vunpack.c.h.b16 %v289
  %v879 = vunpack.c.l.b16 %v290
  %v880 = vunpack.c.h.b16 %v290
  %v881 = vunpack.c.l.b16 %v291
  %v882 = vunpack.c.h.b16 %v291
  %v883 = vunpack.c.l.b16 %v292
  %v884 = vunpack.c.h.b16 %v292
  %v885 = vunpack.c.l.b16 %v293
  %v886 = vunpack.c.h.b16 %v293
  %v887 = vunpack.c.l.b16 %v294
  %v888 = vunpack.c.h.b16 %v294
  %v889 = vunpack.c.l.b16 %v295
  %v890 = vunpack.c.h.b16 %v295
  %v891 = vunpack.c.l.b16 %v296
  %v892 = vunpack.c.h.b16 %v296
  %v893 = vunpack.c.l.b16 %v297
  %v894 = vunpack.c.h.b16 %v297
  %v895 = vunpack.c.l.b16 %v298
  %v896 = vunpack.c.h.b16 %v298
  %v897 = vunpack.c.l.b16 %v299
  %v898 = vunpack.c.h.b16 %v299
  %v899 = vunpack.c.l.b16 %v300
  %v900 = vunpack.c.h.b16 %v300
  %v901 = vpack.c.b16 %v511, %v509
  %v902 = vpack.c.b16 %v512, %v510
  %v903 = vpack.c.b16 %v515, %v513
  %v904 = vpack.c.b16 %v516, %v514
  %v905 = vpack.c.b16 %v519, %v517
  %v906 = vpack.c.b16 %v520, %v518
  %v907 = vpack.c.b16 %v523, %v521
  %v908 = vpack.c.b16 %v524, %v522
  %v909 = vpack.c.b16 %v527, %v525
  %v910 = vpack.c.b16 %v528, %v526
  %v911 = vpack.c.b16 %v531, %v529
  %v912 = vpack.c.b16 %v532, %v530
  %v913 = vpack.c.b16 %v535, %v533
  %v914 = vpack.c.b16 %v536, %v534
  %v915 = vpack.c.b16 %v539, %v537
  %v916 = vpack.c.b16 %v540, %v538
  %v917 = vpack.c.b16 %v543, %v541
  %v918 = vpack.c.b16 %v544, %v542
  %v919 = vpack.c.b16 %v547, %v545
  %v920 = vpack.c.b16 %v548, %v546
  %v921 = vpack.c.b16 %v551, %v549
  %v922 = vpack.c.b16 %v552, %v550
  %v923 = vpack.c.b16 %v555, %v553
  %v924 = vpack.c.b16 %v556, %v554
  %v925 = vpack.c.b16 %v559, %v557
  %v926 = vpack.c.b16 %v560, %v558
  %v927 = vpack.c.b16 %v563, %v561
  %v928 = vpack.c.b16 %v564, %v562
  %v929 = vpack.c.b16 %v567, %v565
  %v930 = vpack.c.b16 %v568, %v566
  %v931 = vpack.c.b16 %v571, %v569
  %v932 = vpack.c.b16 %v572, %v570
  %v933 = vpack.c.b16 %v575, %v573
  %v934 = vpack.c.b16 %v576, %v574
  %v935 = vpack.c.b16 %v579, %v577
  %v936 = vpack.c.b16 %v580, %v578
  %v937 = vpack.c.b16 %v583, %v581
  %v938 = vpack.c.b16 %v584, %v582
  %v939 = vpack.c.b16 %v587, %v585
  %v940 = vpack.c.b16 %v588, %v586
  %v941 = vpack.c.b16 %v591, %v589
  %v942 = vpack.c.b16 %v592, %v590
  %v943 = vpack.c.b16 %v595, %v593
  %v944 = vpack.c.b16 %v596, %v594
  %v945 = vpack.c.b16 %v599, %v597
  %v946 = vpack.c.b16 %v600, %v598
  %v947 = vpack.c.b16 %v603, %v601
  %v948 = vpack.c.b16 %v604, %v602
  %v949 = vpack.c.b16 %v607, %v605
  %v950 = vpack.c.b16 %v608, %v606
  %v951 = vpack.c.b16 %v611, %v609
  %v952 = vpack.c.b16 %v612, %v610
  %v953 = vpack.c.b16 %v615, %v613
  %v954 = vpack.c.b16 %v616, %v614
  %v955 = vpack.c.b16 %v619, %v617
  %v956 = vpack.c.b16 %v620, %v618
  %v957 = vpack.c.b16 %v623, %v621
  %v958 = vpack.c.b16 %v624, %v622
  %v959 = vpack.c.b16 %v627, %v625
  %v960 = vpack.c.b16 %v628, %v626
  %v961 = vpack.c.b16 %v631, %v629
  %v962 = vpack.c.b16 %v632, %v630
  %v963 = vpack.c.b16 %v635, %v633
  %v964 = vpack.c.b16 %v636, %v634
  %v965 = vpack.c.b16 %v639, %v637
  %v966 = vpack.c.b16 %v640, %v638
  %v967 = vpack.c.b16 %v643, %v641
  %v968 = vpack.c.b16 %v644, %v642
  %v969 = vpack.c.b16 %v647, %v645
  %v970 = vpack.c.b16 %v648, %v646
  %v971 = vpack.c.b16 %v651, %v649
  %v972 = vpack.c.b16 %v652, %v650
  %v973 = vpack.c.b16 %v655, %v653
  %v974 = vpack.c.b16 %v656, %v654
  %v975 = vpack.c.b16 %v659, %v657
  %v976 = vpack.c.b16 %v660, %v658
  %v977 = vpack.c.b16 %v663, %v661
  %v978 = vpack.c.b16 %v664, %v662
  %v979 = vpack.c.b16 %v667, %v665
  %v980 = vpack.c.b16 %v668, %v666
  %v981 = vpack.c.b16 %v671, %v669
  %v982 = vpack.c.b16 %v672, %v670
  %v983 = vpack.c.b16 %v675, %v673
  %v984 = vpack.c.b16 %v676, %v674
  %v985 = vpack.c.b16 %v679, %v677
  %v986 = vpack.c.b16 %v680, %v678
  %v987 = vpack.c.b16 %v683, %v681
  %v988 = vpack.c.b16 %v684, %v682
  %v989 = vpack.c.b16 %v687, %v685
  %v990 = vpack.c.b16 %v688, %v686
  %v991 = vpack.c.b16 %v691, %v689
  %v992 = vpack.c.b16 %v692, %v690
  %v993 = vpack.c.b16 %v695, %v693
  %v994 = vpack.c.b16 %v696, %v694
  %v995 = vpack.c.b16 %v699, %v697
  %v996 = vpack.c.b16 %v700, %v698
  %v997 = vpack.c.b16 %v703, %v701
  %v998 = vpack.c.b16 %v704, %v702
  %v999 = vpack.c.b16 %v707, %v705
  %v1000 = vpack.c.b16 %v708, %v706
  %v1001 = vpack.c.b16 %v711, %v709
  %v1002 = vpack.c.b16 %v712, %v710
  %v1003 = vpack.c.b16 %v715, %v713
  %v1004 = vpack.c.b16 %v716, %v714
  %v1005 = vpack.c.b16 %v719, %v717
  %v1006 = vpack.c.b16 %v720, %v718
  %v1007 = vpack.c.b16 %v723, %v721
  %v1008 = vpack.c.b16 %v724, %v722
  %v1009 = vpack.c.b16 %v727, %v725
  %v1010 = vpack.c.b16 %v728, %v726
  %v1011 = vpack.c.b16 %v731, %v729
  %v1012 = vpack.c.b16 %v732, %v730
  %v1013 = vpack.c.b16 %v735, %v733
  %v1014 = vpack.c.b16 %v736, %v734
  %v1015 = vpack.c.b16 %v739, %v737
  %v1016 = vpack.c.b16 %v740, %v738
  %v1017 = vpack.c.b16 %v743, %v741
  %v1018 = vpack.c.b16 %v744, %v742
  %v1019 = vpack.c.b16 %v747, %v745
  %v1020 = vpack.c.b16 %v748, %v746
  %v1021 = vpack.c.b16 %v751, %v749
  %v1022 = vpack.c.b16 %v752, %v750
  %v1023 = vpack.c.b16 %v755, %v753
  %v1024 = vpack.c.b16 %v756, %v754
  %v1025 = vpack.c.b16 %v759, %v757
  %v1026 = vpack.c.b16 %v760, %v758
  %v1027 = vpack.c.b16 %v763, %v761
  %v1028 = vpack.c.b16 %v764, %v762
  %v1029 = vpack.c.b16 %v767, %v765
  %v1030 = vpack.c.b16 %v768, %v766
  %v1031 = vpack.c.b16 %v771, %v769
  %v1032 = vpack.c.b16 %v772, %v770
  %v1033 = vpack.c.b16 %v775, %v773
  %v1034 = vpack.c.b16 %v776, %v774
  %v1035 = vpack.c.b16 %v779, %v777
  %v1036 = vpack.c.b16 %v780, %v778
  %v1037 = vpack.c.b16 %v783, %v781
  %v1038 = vpack.c.b16 %v784, %v782
  %v1039 = vpack.c.b16 %v787, %v785
  %v1040 = vpack.c.b16 %v788, %v786
  %v1041 = vpack.c.b16 %v791, %v789
  %v1042 = vpack.c.b16 %v792, %v790
  %v1043 = vpack.c.b16 %v795, %v793
  %v1044 = vpack.c.b16 %v796, %v794
  %v1045 = vpack.c.b16 %v799, %v797
  %v1046 = vpack.c.b16 %v800, %v798
  %v1047 = vpack.c.b16 %v803, %v801
  %v1048 = vpack.c.b16 %v804, %v802
  %v1049 = vpack.c.b16 %v807, %v805
  %v1050 = vpack.c.b16 %v808, %v806
  %v1051 = vpack.c.b16 %v811, %v809
  %v1052 = vpack.c.b16 %v812, %v810
  %v1053 = vpack.c.b16 %v815, %v813
  %v1054 = vpack.c.b16 %v816, %v814
  %v1055 = vpack.c.b16 %v819, %v817
  %v1056 = vpack.c.b16 %v820, %v818
  %v1057 = vpack.c.b16 %v823, %v821
  %v1058 = vpack.c.b16 %v824, %v822
  %v1059 = vpack.c.b16 %v827, %v825
  %v1060 = vpack.c.b16 %v828, %v826
  %v1061 = vpack.c.b16 %v831, %v829
  %v1062 = vpack.c.b16 %v832, %v830
  %v1063 = vpack.c.b16 %v835, %v833
  %v1064 = vpack.c.b16 %v836, %v834
  %v1065 = vpack.c.b16 %v839, %v837
  %v1066 = vpack.c.b16 %v840, %v838
  %v1067 = vpack.c.b16 %v843, %v841
  %v1068 = vpack.c.b16 %v844, %v842
  %v1069 = vpack.c.b16 %v847, %v845
  %v1070 = vpack.c.b16 %v848, %v846
  %v1071 = vpack.c.b16 %v851, %v849
  %v1072 = vpack.c.b16 %v852, %v850
  %v1073 = vpack.c.b16 %v855, %v853
  %v1074 = vpack.c.b16 %v856, %v854
  %v1075 = vpack.c.b16 %v859, %v857
  %v1076 = vpack.c.b16 %v860, %v858
  %v1077 = vpack.c.b16 %v863, %v861
  %v1078 = vpack.c.b16 %v864, %v862
  %v1079 = vpack.c.b16 %v867, %v865
  %v1080 = vpack.c.b16 %v868, %v866
  %v1081 = vpack.c.b16 %v871, %v869
  %v1082 = vpack.c.b16 %v872, %v870
  %v1083 = vpack.c.b16 %v875, %v873
  %v1084 = vpack.c.b16 %v876, %v874
  %v1085 = vpack.c.b16 %v879, %v877
  %v1086 = vpack.c.b16 %v880, %v878
  %v1087 = vpack.c.b16 %v883, %v881
  %v1088 = vpack.c.b16 %v884, %v882
  %v1089 = vpack.c.b16 %v887, %v885
  %v1090 = vpack.c.b16 %v888, %v886
  %v1091 = vpack.c.b16 %v891, %v889
  %v1092 = vpack.c.b16 %v892, %v890
  %v1093 = vpack.c.b16 %v895, %v893
  %v1094 = vpack.c.b16 %v896, %v894
  %v1095 = vpack.c.b16 %v899, %v897
  %v1096 = vpack.c.b16 %v900, %v898
  %vm1293 = vcmask 261120
  %v1295 = vsel %vm1293, %v91, 0
  %v1298 = vsel %vm1293, %v104, 0
  %1300 = vmatprep.subr.bf16.mxu0 %v902
  %1301 = vmatpush1.bf16.msra.mxu0 %v901
  %1302 = vmatprep.subr.bf16.mxu0 %v904
  %1303 = vmatpush1.bf16.msra.mxu0 %v903
  %1304 = vmatprep.subr.bf16.mxu0 %v906
  %1305 = vmatpush1.bf16.msra.mxu0 %v905
  %1306 = vmatprep.subr.bf16.mxu0 %v908
  %1307 = vmatpush1.bf16.msra.mxu0 %v907
  %1308 = vmatprep.subr.bf16.mxu0 %v910
  %1309 = vmatpush1.bf16.msra.mxu0 %v909
  %1310 = vmatprep.subr.bf16.mxu0 %v912
  %1311 = vmatpush1.bf16.msra.mxu0 %v911
  %1312 = vmatprep.subr.bf16.mxu0 %v914
  %1313 = vmatpush1.bf16.msra.mxu0 %v913
  %1314 = vmatprep.subr.bf16.mxu0 %v916
  %1315 = vmatpush1.bf16.msra.mxu0 %v915
  %1316 = vmatprep.subr.bf16.mxu0 %v918
  %1317 = vmatpush1.bf16.msra.mxu0 %v917
  %1318 = vmatprep.subr.bf16.mxu0 %v920
  %1319 = vmatpush1.bf16.msra.mxu0 %v919
  %1320 = vmatprep.subr.bf16.mxu0 %v922
  %1321 = vmatpush1.bf16.msra.mxu0 %v921
  %1322 = vmatprep.subr.bf16.mxu0 %v924
  %1323 = vmatpush1.bf16.msra.mxu0 %v923
  %1324 = vmatprep.subr.bf16.mxu0 %v926
  %1325 = vmatpush1.bf16.msra.mxu0 %v925
  %1326 = vmatprep.subr.bf16.mxu0 %v928
  %1327 = vmatpush1.bf16.msra.mxu0 %v927
  %1328 = vmatprep.subr.bf16.mxu0 %v930
  %1329 = vmatpush1.bf16.msra.mxu0 %v929
  %1330 = vmatprep.subr.bf16.mxu0 %v932
  %1331 = vmatpush1.bf16.msra.mxu0 %v931
  %1332 = vmatprep.mubr.bf16.mxu0 %v80
  %1333 = vmatmul.mubr.bf16.gmra.mrb[0].mxu0 %v79
  %v1334 = vpop.f32.mrb[0].mxu0
  %v1335 = vadd.f32 %v306, %v1334
  %v1336 = vpop.f32.mrb[0].mxu0
  %v1337 = vadd.f32 %v310, %v1336
  %v1338 = vpop.f32.mrb[0].mxu0
  %v1339 = vadd.f32 %v306, %v1338
  %v1340 = vpop.f32.mrb[0].mxu0
  %v1341 = vadd.f32 %v310, %v1340
  %1342 = vmatprep.mubr.bf16.mxu0 %v93
  %1343 = vmatmul.mubr.bf16.gmra.mrb[0].mxu0 %v92
  %v1344 = vpop.f32.mrb[0].mxu0
  %v1345 = vadd.f32 %v306, %v1344
  %v1346 = vpop.f32.mrb[0].mxu0
  %v1347 = vadd.f32 %v310, %v1346
  %v1348 = vpop.f32.mrb[0].mxu0
  %v1349 = vadd.f32 %v306, %v1348
  %v1350 = vpop.f32.mrb[0].mxu0
  %v1351 = vadd.f32 %v310, %v1350
  %1352 = vdwg.mxu0
  %1353 = vmatprep.subr.bf16.mxu0 %v934
  %1354 = vmatpush1.bf16.msra.mxu0 %v933
  %1355 = vmatprep.subr.bf16.mxu0 %v936
  %1356 = vmatpush1.bf16.msra.mxu0 %v935
  %1357 = vmatprep.subr.bf16.mxu0 %v938
  %1358 = vmatpush1.bf16.msra.mxu0 %v937
  %1359 = vmatprep.subr.bf16.mxu0 %v940
  %1360 = vmatpush1.bf16.msra.mxu0 %v939
  %1361 = vmatprep.subr.bf16.mxu0 %v942
  %1362 = vmatpush1.bf16.msra.mxu0 %v941
  %1363 = vmatprep.subr.bf16.mxu0 %v944
  %1364 = vmatpush1.bf16.msra.mxu0 %v943
  %1365 = vmatprep.subr.bf16.mxu0 %v946
  %1366 = vmatpush1.bf16.msra.mxu0 %v945
  %1367 = vmatprep.subr.bf16.mxu0 %v948
  %1368 = vmatpush1.bf16.msra.mxu0 %v947
  %1369 = vmatprep.subr.bf16.mxu0 %v950
  %1370 = vmatpush1.bf16.msra.mxu0 %v949
  %1371 = vmatprep.subr.bf16.mxu0 %v952
  %1372 = vmatpush1.bf16.msra.mxu0 %v951
  %1373 = vmatprep.subr.bf16.mxu0 %v954
  %1374 = vmatpush1.bf16.msra.mxu0 %v953
  %1375 = vmatprep.subr.bf16.mxu0 %v956
  %1376 = vmatpush1.bf16.msra.mxu0 %v955
  %1377 = vmatprep.subr.bf16.mxu0 %v958
  %1378 = vmatpush1.bf16.msra.mxu0 %v957
  %1379 = vmatprep.subr.bf16.mxu0 %v960
  %1380 = vmatpush1.bf16.msra.mxu0 %v959
  %1381 = vmatprep.subr.bf16.mxu0 %v962
  %1382 = vmatpush1.bf16.msra.mxu0 %v961
  %1383 = vmatprep.subr.bf16.mxu0 %v964
  %1384 = vmatpush1.bf16.msra.mxu0 %v963
  %1385 = vmatprep.mubr.bf16.mxu0 %v82
  %1386 = vmatmul.mubr.bf16.gmra.mrb[0].mxu0 %v81
  %v1387 = vpop.f32.mrb[0].mxu0
  %v1388 = vadd.f32 %v1335, %v1387
  %v1389 = vpop.f32.mrb[0].mxu0
  %v1390 = vadd.f32 %v1337, %v1389
  %v1391 = vpop.f32.mrb[0].mxu0
  %v1392 = vadd.f32 %v1339, %v1391
  %v1393 = vpop.f32.mrb[0].mxu0
  %v1394 = vadd.f32 %v1341, %v1393
  %1395 = vmatprep.mubr.bf16.mxu0 %v95
  %1396 = vmatmul.mubr.bf16.gmra.mrb[0].mxu0 %v94
  %v1397 = vpop.f32.mrb[0].mxu0
  %v1398 = vadd.f32 %v1345, %v1397
  %v1399 = vpop.f32.mrb[0].mxu0
  %v1400 = vadd.f32 %v1347, %v1399
  %v1401 = vpop.f32.mrb[0].mxu0
  %v1402 = vadd.f32 %v1349, %v1401
  %v1403 = vpop.f32.mrb[0].mxu0
  %v1404 = vadd.f32 %v1351, %v1403
  %1405 = vdwg.mxu0
  %1406 = vmatprep.subr.bf16.mxu0 %v966
  %1407 = vmatpush1.bf16.msra.mxu0 %v965
  %1408 = vmatprep.subr.bf16.mxu0 %v968
  %1409 = vmatpush1.bf16.msra.mxu0 %v967
  %1410 = vmatprep.subr.bf16.mxu0 %v970
  %1411 = vmatpush1.bf16.msra.mxu0 %v969
  %1412 = vmatprep.subr.bf16.mxu0 %v972
  %1413 = vmatpush1.bf16.msra.mxu0 %v971
  %1414 = vmatprep.subr.bf16.mxu0 %v974
  %1415 = vmatpush1.bf16.msra.mxu0 %v973
  %1416 = vmatprep.subr.bf16.mxu0 %v976
  %1417 = vmatpush1.bf16.msra.mxu0 %v975
  %1418 = vmatprep.subr.bf16.mxu0 %v978
  %1419 = vmatpush1.bf16.msra.mxu0 %v977
  %1420 = vmatprep.subr.bf16.mxu0 %v980
  %1421 = vmatpush1.bf16.msra.mxu0 %v979
  %1422 = vmatprep.subr.bf16.mxu0 %v982
  %1423 = vmatpush1.bf16.msra.mxu0 %v981
  %1424 = vmatprep.subr.bf16.mxu0 %v984
  %1425 = vmatpush1.bf16.msra.mxu0 %v983
  %1426 = vmatprep.subr.bf16.mxu0 %v986
  %1427 = vmatpush1.bf16.msra.mxu0 %v985
  %1428 = vmatprep.subr.bf16.mxu0 %v988
  %1429 = vmatpush1.bf16.msra.mxu0 %v987
  %1430 = vmatprep.subr.bf16.mxu0 %v990
  %1431 = vmatpush1.bf16.msra.mxu0 %v989
  %1432 = vmatprep.subr.bf16.mxu0 %v992
  %1433 = vmatpush1.bf16.msra.mxu0 %v991
  %1434 = vmatprep.subr.bf16.mxu0 %v994
  %1435 = vmatpush1.bf16.msra.mxu0 %v993
  %1436 = vmatprep.subr.bf16.mxu0 %v996
  %1437 = vmatpush1.bf16.msra.mxu0 %v995
  %1438 = vmatprep.mubr.bf16.mxu0 %v84
  %1439 = vmatmul.mubr.bf16.gmra.mrb[0].mxu0 %v83
  %v1440 = vpop.f32.mrb[0].mxu0
  %v1441 = vadd.f32 %v1388, %v1440
  %v1442 = vpop.f32.mrb[0].mxu0
  %v1443 = vadd.f32 %v1390, %v1442
  %v1444 = vpop.f32.mrb[0].mxu0
  %v1445 = vadd.f32 %v1392, %v1444
  %v1446 = vpop.f32.mrb[0].mxu0
  %v1447 = vadd.f32 %v1394, %v1446
  %1448 = vmatprep.mubr.bf16.mxu0 %v97
  %1449 = vmatmul.mubr.bf16.gmra.mrb[0].mxu0 %v96
  %v1450 = vpop.f32.mrb[0].mxu0
  %v1451 = vadd.f32 %v1398, %v1450
  %v1452 = vpop.f32.mrb[0].mxu0
  %v1453 = vadd.f32 %v1400, %v1452
  %v1454 = vpop.f32.mrb[0].mxu0
  %v1455 = vadd.f32 %v1402, %v1454
  %v1456 = vpop.f32.mrb[0].mxu0
  %v1457 = vadd.f32 %v1404, %v1456
  %1458 = vdwg.mxu0
  %1459 = vmatprep.subr.bf16.mxu0 %v998
  %1460 = vmatpush1.bf16.msra.mxu0 %v997
  %1461 = vmatprep.subr.bf16.mxu0 %v1000
  %1462 = vmatpush1.bf16.msra.mxu0 %v999
  %1463 = vmatprep.subr.bf16.mxu0 %v1002
  %1464 = vmatpush1.bf16.msra.mxu0 %v1001
  %1465 = vmatprep.subr.bf16.mxu0 %v1004
  %1466 = vmatpush1.bf16.msra.mxu0 %v1003
  %1467 = vmatprep.subr.bf16.mxu0 %v1006
  %1468 = vmatpush1.bf16.msra.mxu0 %v1005
  %1469 = vmatprep.subr.bf16.mxu0 %v1008
  %1470 = vmatpush1.bf16.msra.mxu0 %v1007
  %1471 = vmatprep.subr.bf16.mxu0 %v1010
  %1472 = vmatpush1.bf16.msra.mxu0 %v1009
  %1473 = vmatprep.subr.bf16.mxu0 %v1012
  %1474 = vmatpush1.bf16.msra.mxu0 %v1011
  %1475 = vmatprep.subr.bf16.mxu0 %v1014
  %1476 = vmatpush1.bf16.msra.mxu0 %v1013
  %1477 = vmatprep.subr.bf16.mxu0 %v1016
  %1478 = vmatpush1.bf16.msra.mxu0 %v1015
  %1479 = vmatprep.subr.bf16.mxu0 %v1018
  %1480 = vmatpush1.bf16.msra.mxu0 %v1017
  %1481 = vmatprep.subr.bf16.mxu0 %v1020
  %1482 = vmatpush1.bf16.msra.mxu0 %v1019
  %1483 = vmatprep.subr.bf16.mxu0 %v1022
  %1484 = vmatpush1.bf16.msra.mxu0 %v1021
  %1485 = vmatprep.subr.bf16.mxu0 %v1024
  %1486 = vmatpush1.bf16.msra.mxu0 %v1023
  %1487 = vmatprep.subr.bf16.mxu0 %v1026
  %1488 = vmatpush1.bf16.msra.mxu0 %v1025
  %1489 = vmatprep.subr.bf16.mxu0 %v1028
  %1490 = vmatpush1.bf16.msra.mxu0 %v1027
  %1491 = vmatprep.mubr.bf16.mxu0 %v86
  %1492 = vmatmul.mubr.bf16.gmra.mrb[0].mxu0 %v85
  %v1493 = vpop.f32.mrb[0].mxu0
  %v1494 = vadd.f32 %v1441, %v1493
  %v1495 = vpop.f32.mrb[0].mxu0
  %v1496 = vadd.f32 %v1443, %v1495
  %v1497 = vpop.f32.mrb[0].mxu0
  %v1498 = vadd.f32 %v1445, %v1497
  %v1499 = vpop.f32.mrb[0].mxu0
  %v1500 = vadd.f32 %v1447, %v1499
  %1501 = vmatprep.mubr.bf16.mxu0 %v99
  %1502 = vmatmul.mubr.bf16.gmra.mrb[0].mxu0 %v98
  %v1503 = vpop.f32.mrb[0].mxu0
  %v1504 = vadd.f32 %v1451, %v1503
  %v1505 = vpop.f32.mrb[0].mxu0
  %v1506 = vadd.f32 %v1453, %v1505
  %v1507 = vpop.f32.mrb[0].mxu0
  %v1508 = vadd.f32 %v1455, %v1507
  %v1509 = vpop.f32.mrb[0].mxu0
  %v1510 = vadd.f32 %v1457, %v1509
  %1511 = vdwg.mxu0
  %1512 = vmatprep.subr.bf16.mxu0 %v1030
  %1513 = vmatpush1.bf16.msra.mxu0 %v1029
  %1514 = vmatprep.subr.bf16.mxu0 %v1032
  %1515 = vmatpush1.bf16.msra.mxu0 %v1031
  %1516 = vmatprep.subr.bf16.mxu0 %v1034
  %1517 = vmatpush1.bf16.msra.mxu0 %v1033
  %1518 = vmatprep.subr.bf16.mxu0 %v1036
  %1519 = vmatpush1.bf16.msra.mxu0 %v1035
  %1520 = vmatprep.subr.bf16.mxu0 %v1038
  %1521 = vmatpush1.bf16.msra.mxu0 %v1037
  %1522 = vmatprep.subr.bf16.mxu0 %v1040
  %1523 = vmatpush1.bf16.msra.mxu0 %v1039
  %1524 = vmatprep.subr.bf16.mxu0 %v1042
  %1525 = vmatpush1.bf16.msra.mxu0 %v1041
  %1526 = vmatprep.subr.bf16.mxu0 %v1044
  %1527 = vmatpush1.bf16.msra.mxu0 %v1043
  %1528 = vmatprep.subr.bf16.mxu0 %v1046
  %1529 = vmatpush1.bf16.msra.mxu0 %v1045
  %1530 = vmatprep.subr.bf16.mxu0 %v1048
  %1531 = vmatpush1.bf16.msra.mxu0 %v1047
  %1532 = vmatprep.subr.bf16.mxu0 %v1050
  %1533 = vmatpush1.bf16.msra.mxu0 %v1049
  %1534 = vmatprep.subr.bf16.mxu0 %v1052
  %1535 = vmatpush1.bf16.msra.mxu0 %v1051
  %1536 = vmatprep.subr.bf16.mxu0 %v1054
  %1537 = vmatpush1.bf16.msra.mxu0 %v1053
  %1538 = vmatprep.subr.bf16.mxu0 %v1056
  %1539 = vmatpush1.bf16.msra.mxu0 %v1055
  %1540 = vmatprep.subr.bf16.mxu0 %v1058
  %1541 = vmatpush1.bf16.msra.mxu0 %v1057
  %1542 = vmatprep.subr.bf16.mxu0 %v1060
  %1543 = vmatpush1.bf16.msra.mxu0 %v1059
  %1544 = vmatprep.mubr.bf16.mxu0 %v88
  %1545 = vmatmul.mubr.bf16.gmra.mrb[0].mxu0 %v87
  %v1546 = vpop.f32.mrb[0].mxu0
  %v1547 = vadd.f32 %v1494, %v1546
  %v1548 = vpop.f32.mrb[0].mxu0
  %v1549 = vadd.f32 %v1496, %v1548
  %v1550 = vpop.f32.mrb[0].mxu0
  %v1551 = vadd.f32 %v1498, %v1550
  %v1552 = vpop.f32.mrb[0].mxu0
  %v1553 = vadd.f32 %v1500, %v1552
  %1554 = vmatprep.mubr.bf16.mxu0 %v101
  %1555 = vmatmul.mubr.bf16.gmra.mrb[0].mxu0 %v100
  %v1556 = vpop.f32.mrb[0].mxu0
  %v1557 = vadd.f32 %v1504, %v1556
  %v1558 = vpop.f32.mrb[0].mxu0
  %v1559 = vadd.f32 %v1506, %v1558
  %v1560 = vpop.f32.mrb[0].mxu0
  %v1561 = vadd.f32 %v1508, %v1560
  %v1562 = vpop.f32.mrb[0].mxu0
  %v1563 = vadd.f32 %v1510, %v1562
  %1564 = vdwg.mxu0
  %1565 = vmatprep.subr.bf16.mxu0 %v1062
  %1566 = vmatpush1.bf16.msra.mxu0 %v1061
  %1567 = vmatprep.subr.bf16.mxu0 %v1064
  %1568 = vmatpush1.bf16.msra.mxu0 %v1063
  %1569 = vmatprep.subr.bf16.mxu0 %v1066
  %1570 = vmatpush1.bf16.msra.mxu0 %v1065
  %1571 = vmatprep.subr.bf16.mxu0 %v1068
  %1572 = vmatpush1.bf16.msra.mxu0 %v1067
  %1573 = vmatprep.subr.bf16.mxu0 %v1070
  %1574 = vmatpush1.bf16.msra.mxu0 %v1069
  %1575 = vmatprep.subr.bf16.mxu0 %v1072
  %1576 = vmatpush1.bf16.msra.mxu0 %v1071
  %1577 = vmatprep.subr.bf16.mxu0 %v1074
  %1578 = vmatpush1.bf16.msra.mxu0 %v1073
  %1579 = vmatprep.subr.bf16.mxu0 %v1076
  %1580 = vmatpush1.bf16.msra.mxu0 %v1075
  %1581 = vmatprep.subr.bf16.mxu0 %v1078
  %1582 = vmatpush1.bf16.msra.mxu0 %v1077
  %1583 = vmatprep.subr.bf16.mxu0 %v1080
  %1584 = vmatpush1.bf16.msra.mxu0 %v1079
  %1585 = vmatprep.subr.bf16.mxu0 %v1082
  %1586 = vmatpush1.bf16.msra.mxu0 %v1081
  %1587 = vmatprep.subr.bf16.mxu0 %v1084
  %1588 = vmatpush1.bf16.msra.mxu0 %v1083
  %1589 = vmatprep.subr.bf16.mxu0 %v1086
  %1590 = vmatpush1.bf16.msra.mxu0 %v1085
  %1591 = vmatprep.subr.bf16.mxu0 %v1088
  %1592 = vmatpush1.bf16.msra.mxu0 %v1087
  %1593 = vmatprep.subr.bf16.mxu0 %v1090
  %1594 = vmatpush1.bf16.msra.mxu0 %v1089
  %1595 = vmatprep.subr.bf16.mxu0 %v1092
  %1596 = vmatpush1.bf16.msra.mxu0 %v1091
  %1597 = vmatprep.mubr.bf16.mxu0 %v90
  %1598 = vmatmul.mubr.bf16.gmra.mrb[0].mxu0 %v89
  %v1599 = vpop.f32.mrb[0].mxu0
  %v1600 = vadd.f32 %v1547, %v1599
  %v1601 = vpop.f32.mrb[0].mxu0
  %v1602 = vadd.f32 %v1549, %v1601
  %v1603 = vpop.f32.mrb[0].mxu0
  %v1604 = vadd.f32 %v1551, %v1603
  %v1605 = vpop.f32.mrb[0].mxu0
  %v1606 = vadd.f32 %v1553, %v1605
  %1607 = vmatprep.mubr.bf16.mxu0 %v103
  %1608 = vmatmul.mubr.bf16.gmra.mrb[0].mxu0 %v102
  %v1609 = vpop.f32.mrb[0].mxu0
  %v1610 = vadd.f32 %v1557, %v1609
  %v1611 = vpop.f32.mrb[0].mxu0
  %v1612 = vadd.f32 %v1559, %v1611
  %v1613 = vpop.f32.mrb[0].mxu0
  %v1614 = vadd.f32 %v1561, %v1613
  %v1615 = vpop.f32.mrb[0].mxu0
  %v1616 = vadd.f32 %v1563, %v1615
  %1617 = vdwg.mxu0
  %1618 = vmatprep.subr.bf16.mxu0 %v1094
  %1619 = vmatpush1.bf16.msra.mxu0 %v1093
  %1620 = vmatprep.subr.bf16.mxu0 %v1096
  %1621 = vmatpush1.bf16.msra.mxu0 %v1095
  %1622 = vmatprep.subr.bf16.mxu0 0
  %1623 = vmatpush1.bf16.msra.mxu0 0
  %1624 = vmatprep.subr.bf16.mxu0 0
  %1625 = vmatpush1.bf16.msra.mxu0 0
  %1626 = vmatprep.subr.bf16.mxu0 0
  %1627 = vmatpush1.bf16.msra.mxu0 0
  %1628 = vmatprep.subr.bf16.mxu0 0
  %1629 = vmatpush1.bf16.msra.mxu0 0
  %1630 = vmatprep.subr.bf16.mxu0 0
  %1631 = vmatpush1.bf16.msra.mxu0 0
  %1632 = vmatprep.subr.bf16.mxu0 0
  %1633 = vmatpush1.bf16.msra.mxu0 0
  %1634 = vmatprep.subr.bf16.mxu0 0
  %1635 = vmatpush1.bf16.msra.mxu0 0
  %1636 = vmatprep.subr.bf16.mxu0 0
  %1637 = vmatpush1.bf16.msra.mxu0 0
  %1638 = vmatprep.subr.bf16.mxu0 0
  %1639 = vmatpush1.bf16.msra.mxu0 0
  %1640 = vmatprep.subr.bf16.mxu0 0
  %1641 = vmatpush1.bf16.msra.mxu0 0
  %1642 = vmatprep.subr.bf16.mxu0 0
  %1643 = vmatpush1.bf16.msra.mxu0 0
  %1644 = vmatprep.subr.bf16.mxu0 0
  %1645 = vmatpush1.bf16.msra.mxu0 0
  %1646 = vmatprep.subr.bf16.mxu0 0
  %1647 = vmatpush1.bf16.msra.mxu0 0
  %1648 = vmatprep.subr.bf16.mxu0 0
  %1649 = vmatpush1.bf16.msra.mxu0 0
  %1650 = vmatprep.mubr.bf16.mxu0 0
  %1651 = vmatmul.mubr.bf16.gmra.mrb[0].mxu0 %v1295
  %v1652 = vpop.f32.mrb[0].mxu0
  %v1653 = vadd.f32 %v1600, %v1652
  %v1654 = vpop.f32.mrb[0].mxu0
  %v1655 = vadd.f32 %v1602, %v1654
  %v1656 = vpop.f32.mrb[0].mxu0
  %v1657 = vadd.f32 %v1604, %v1656
  %v1658 = vpop.f32.mrb[0].mxu0
  %v1659 = vadd.f32 %v1606, %v1658
  %1660 = vmatprep.mubr.bf16.mxu0 0
  %1661 = vmatmul.mubr.bf16.gmra.mrb[0].mxu0 %v1298
  %v1662 = vpop.f32.mrb[0].mxu0
  %v1663 = vadd.f32 %v1610, %v1662
  %v1664 = vpop.f32.mrb[0].mxu0
  %v1665 = vadd.f32 %v1612, %v1664
  %v1666 = vpop.f32.mrb[0].mxu0
  %v1667 = vadd.f32 %v1614, %v1666
  %v1668 = vpop.f32.mrb[0].mxu0
  %v1669 = vadd.f32 %v1616, %v1668
  %1670 = vdwg.mxu0
  %v1671 = vmax.f32 %v1653, 0.0
  %v1672 = vmax.f32 %v1655, 0.0
  %v1673 = vmax.f32 %v1657, 0.0
  %v1674 = vmax.f32 %v1659, 0.0
  %v1675 = vmax.f32 %v1663, 0.0
  %v1676 = vmax.f32 %v1665, 0.0
  %v1677 = vmax.f32 %v1667, 0.0
  %v1678 = vmax.f32 %v1669, 0.0
  %v1679 = vpack.c.bf16 %v1673, %v1671
  %v1680 = vpack.c.bf16 %v1674, %v1672
  %v1681 = vpack.c.bf16 %v1677, %v1675
  %v1682 = vpack.c.bf16 %v1678, %v1676
  %v1683 = vld [vmem:[%s3] sm:$0xff]
  %v1684 = vld [vmem:[%s3 + $0x8] sm:$0xff]
  %v1685 = vld [vmem:[%s3 + $0x10] sm:$0xff]
  %v1686 = vld [vmem:[%s3 + $0x18] sm:$0xff]
  %v1687 = vld [vmem:[%s3 + $0x20] sm:$0xff]
  %v1688 = vld [vmem:[%s3 + $0x28] sm:$0xff]
  %v1689 = vld [vmem:[%s3 + $0x30] sm:$0xff]
  %v1690 = vld [vmem:[%s3 + $0x38] sm:$0xff]
  %v1691 = vld [vmem:[%s3 + $0x40] sm:$0xff]
  %v1692 = vld [vmem:[%s3 + $0x48] sm:$0xff]
  %v1693 = vld [vmem:[%s3 + $0x50] sm:$0xff]
  %v1694 = vld [vmem:[%s3 + $0x58] sm:$0xff]
  %v1695 = vld [vmem:[%s3 + $0x60] sm:$0xff]
  %v1696 = vld [vmem:[%s3 + $0x68] sm:$0xff]
  %v1697 = vld [vmem:[%s3 + $0x70] sm:$0xff]
  %v1698 = vld [vmem:[%s3 + $0x78] sm:$0xff]
  %v1699 = vld [vmem:[%s3 + $0x80] sm:$0xff]
  %v1700 = vld [vmem:[%s3 + $0x88] sm:$0xff]
  %v1701 = vld [vmem:[%s3 + $0x90] sm:$0xff]
  %v1702 = vld [vmem:[%s3 + $0x98] sm:$0xff]
  %v1703 = vld [vmem:[%s3 + $0xa0] sm:$0xff]
  %v1704 = vld [vmem:[%s3 + $0xa8] sm:$0xff]
  %v1705 = vld [vmem:[%s3 + $0xb0] sm:$0xff]
  %v1706 = vld [vmem:[%s3 + $0xb8] sm:$0xff]
  %v1707 = vld [vmem:[%s3 + $0xc0] sm:$0xff]
  %v1708 = vld [vmem:[%s3 + $0xc8] sm:$0xff]
  %v1709 = vld [vmem:[%s3 + $0xd0] sm:$0xff]
  %v1710 = vld [vmem:[%s3 + $0xd8] sm:$0xff]
  %v1711 = vld [vmem:[%s3 + $0xe0] sm:$0xff]
  %v1712 = vld [vmem:[%s3 + $0xe8] sm:$0xff]
  %v1713 = vld [vmem:[%s3 + $0xf0] sm:$0xff]
  %v1714 = vld [vmem:[%s3 + $0xf8] sm:$0xff]
  %v1715 = vld [vmem:[%s4] sm:$0x3]
  %v1717 = vlaneseq
  %v1718 = vshrl.u32 %v1717, 7
  %v1719 = vsub.s32 0, %v1718
  %v1720 = vrot.slane %v1715, %v1719
  %v1721 = vlaneseq
  %v1722 = vshrl.u32 %v1721, 7
  %v1723 = vsub.s32 1, %v1722
  %v1724 = vrot.slane %v1715, %v1723
  %v1759 = vunpack.c.l.b16 %v1683
  %v1760 = vunpack.c.h.b16 %v1683
  %v1761 = vunpack.c.l.b16 %v1684
  %v1762 = vunpack.c.h.b16 %v1684
  %v1763 = vunpack.c.l.b16 %v1685
  %v1764 = vunpack.c.h.b16 %v1685
  %v1765 = vunpack.c.l.b16 %v1686
  %v1766 = vunpack.c.h.b16 %v1686
  %v1767 = vunpack.c.l.b16 %v1687
  %v1768 = vunpack.c.h.b16 %v1687
  %v1769 = vunpack.c.l.b16 %v1688
  %v1770 = vunpack.c.h.b16 %v1688
  %v1771 = vunpack.c.l.b16 %v1689
  %v1772 = vunpack.c.h.b16 %v1689
  %v1773 = vunpack.c.l.b16 %v1690
  %v1774 = vunpack.c.h.b16 %v1690
  %v1775 = vunpack.c.l.b16 %v1691
  %v1776 = vunpack.c.h.b16 %v1691
  %v1777 = vunpack.c.l.b16 %v1692
  %v1778 = vunpack.c.h.b16 %v1692
  %v1779 = vunpack.c.l.b16 %v1693
  %v1780 = vunpack.c.h.b16 %v1693
  %v1781 = vunpack.c.l.b16 %v1694
  %v1782 = vunpack.c.h.b16 %v1694
  %v1783 = vunpack.c.l.b16 %v1695
  %v1784 = vunpack.c.h.b16 %v1695
  %v1785 = vunpack.c.l.b16 %v1696
  %v1786 = vunpack.c.h.b16 %v1696
  %v1787 = vunpack.c.l.b16 %v1697
  %v1788 = vunpack.c.h.b16 %v1697
  %v1789 = vunpack.c.l.b16 %v1698
  %v1790 = vunpack.c.h.b16 %v1698
  %v1791 = vunpack.c.l.b16 %v1699
  %v1792 = vunpack.c.h.b16 %v1699
  %v1793 = vunpack.c.l.b16 %v1700
  %v1794 = vunpack.c.h.b16 %v1700
  %v1795 = vunpack.c.l.b16 %v1701
  %v1796 = vunpack.c.h.b16 %v1701
  %v1797 = vunpack.c.l.b16 %v1702
  %v1798 = vunpack.c.h.b16 %v1702
  %v1799 = vunpack.c.l.b16 %v1703
  %v1800 = vunpack.c.h.b16 %v1703
  %v1801 = vunpack.c.l.b16 %v1704
  %v1802 = vunpack.c.h.b16 %v1704
  %v1803 = vunpack.c.l.b16 %v1705
  %v1804 = vunpack.c.h.b16 %v1705
  %v1805 = vunpack.c.l.b16 %v1706
  %v1806 = vunpack.c.h.b16 %v1706
  %v1807 = vunpack.c.l.b16 %v1707
  %v1808 = vunpack.c.h.b16 %v1707
  %v1809 = vunpack.c.l.b16 %v1708
  %v1810 = vunpack.c.h.b16 %v1708
  %v1811 = vunpack.c.l.b16 %v1709
  %v1812 = vunpack.c.h.b16 %v1709
  %v1813 = vunpack.c.l.b16 %v1710
  %v1814 = vunpack.c.h.b16 %v1710
  %v1815 = vunpack.c.l.b16 %v1711
  %v1816 = vunpack.c.h.b16 %v1711
  %v1817 = vunpack.c.l.b16 %v1712
  %v1818 = vunpack.c.h.b16 %v1712
  %v1819 = vunpack.c.l.b16 %v1713
  %v1820 = vunpack.c.h.b16 %v1713
  %v1821 = vunpack.c.l.b16 %v1714
  %v1822 = vunpack.c.h.b16 %v1714
  %v1823 = vpack.c.b16 %v1761, %v1759
  %v1824 = vpack.c.b16 %v1762, %v1760
  %v1825 = vpack.c.b16 %v1765, %v1763
  %v1826 = vpack.c.b16 %v1766, %v1764
  %v1827 = vpack.c.b16 %v1769, %v1767
  %v1828 = vpack.c.b16 %v1770, %v1768
  %v1829 = vpack.c.b16 %v1773, %v1771
  %v1830 = vpack.c.b16 %v1774, %v1772
  %v1831 = vpack.c.b16 %v1777, %v1775
  %v1832 = vpack.c.b16 %v1778, %v1776
  %v1833 = vpack.c.b16 %v1781, %v1779
  %v1834 = vpack.c.b16 %v1782, %v1780
  %v1835 = vpack.c.b16 %v1785, %v1783
  %v1836 = vpack.c.b16 %v1786, %v1784
  %v1837 = vpack.c.b16 %v1789, %v1787
  %v1838 = vpack.c.b16 %v1790, %v1788
  %v1839 = vpack.c.b16 %v1793, %v1791
  %v1840 = vpack.c.b16 %v1794, %v1792
  %v1841 = vpack.c.b16 %v1797, %v1795
  %v1842 = vpack.c.b16 %v1798, %v1796
  %v1843 = vpack.c.b16 %v1801, %v1799
  %v1844 = vpack.c.b16 %v1802, %v1800
  %v1845 = vpack.c.b16 %v1805, %v1803
  %v1846 = vpack.c.b16 %v1806, %v1804
  %v1847 = vpack.c.b16 %v1809, %v1807
  %v1848 = vpack.c.b16 %v1810, %v1808
  %v1849 = vpack.c.b16 %v1813, %v1811
  %v1850 = vpack.c.b16 %v1814, %v1812
  %v1851 = vpack.c.b16 %v1817, %v1815
  %v1852 = vpack.c.b16 %v1818, %v1816
  %v1853 = vpack.c.b16 %v1821, %v1819
  %v1854 = vpack.c.b16 %v1822, %v1820
  %1887 = vmatprep.subr.bf16.mxu0 %v1824
  %1888 = vmatpush1.bf16.msra.mxu0 %v1823
  %1889 = vmatprep.subr.bf16.mxu0 %v1826
  %1890 = vmatpush1.bf16.msra.mxu0 %v1825
  %1891 = vmatprep.subr.bf16.mxu0 %v1828
  %1892 = vmatpush1.bf16.msra.mxu0 %v1827
  %1893 = vmatprep.subr.bf16.mxu0 %v1830
  %1894 = vmatpush1.bf16.msra.mxu0 %v1829
  %1895 = vmatprep.subr.bf16.mxu0 %v1832
  %1896 = vmatpush1.bf16.msra.mxu0 %v1831
  %1897 = vmatprep.subr.bf16.mxu0 %v1834
  %1898 = vmatpush1.bf16.msra.mxu0 %v1833
  %1899 = vmatprep.subr.bf16.mxu0 %v1836
  %1900 = vmatpush1.bf16.msra.mxu0 %v1835
  %1901 = vmatprep.subr.bf16.mxu0 %v1838
  %1902 = vmatpush1.bf16.msra.mxu0 %v1837
  %1903 = vmatprep.subr.bf16.mxu0 %v1840
  %1904 = vmatpush1.bf16.msra.mxu0 %v1839
  %1905 = vmatprep.subr.bf16.mxu0 %v1842
  %1906 = vmatpush1.bf16.msra.mxu0 %v1841
  %1907 = vmatprep.subr.bf16.mxu0 %v1844
  %1908 = vmatpush1.bf16.msra.mxu0 %v1843
  %1909 = vmatprep.subr.bf16.mxu0 %v1846
  %1910 = vmatpush1.bf16.msra.mxu0 %v1845
  %1911 = vmatprep.subr.bf16.mxu0 %v1848
  %1912 = vmatpush1.bf16.msra.mxu0 %v1847
  %1913 = vmatprep.subr.bf16.mxu0 %v1850
  %1914 = vmatpush1.bf16.msra.mxu0 %v1849
  %1915 = vmatprep.subr.bf16.mxu0 %v1852
  %1916 = vmatpush1.bf16.msra.mxu0 %v1851
  %1917 = vmatprep.subr.bf16.mxu0 %v1854
  %1918 = vmatpush1.bf16.msra.mxu0 %v1853
  %1919 = vmatprep.mubr.bf16.mxu0 %v1680
  %1920 = vmatmul.mubr.bf16.gmra.mrb[0].mxu0 %v1679
  %v1921 = vpop.f32.mrb[0].mxu0
  %v1922 = vadd.f32 %v1720, %v1921
  %v1923 = vpop.f32.mrb[0].mxu0
  %v1924 = vadd.f32 %v1724, %v1923
  %v1925 = vpop.f32.mrb[0].mxu0
  %v1926 = vadd.f32 %v1720, %v1925
  %v1927 = vpop.f32.mrb[0].mxu0
  %v1928 = vadd.f32 %v1724, %v1927
  %1929 = vmatprep.mubr.bf16.mxu0 %v1682
  %1930 = vmatmul.mubr.bf16.gmra.mrb[0].mxu0 %v1681
  %v1931 = vpop.f32.mrb[0].mxu0
  %v1932 = vadd.f32 %v1720, %v1931
  %v1933 = vpop.f32.mrb[0].mxu0
  %v1934 = vadd.f32 %v1724, %v1933
  %v1935 = vpop.f32.mrb[0].mxu0
  %v1936 = vadd.f32 %v1720, %v1935
  %v1937 = vpop.f32.mrb[0].mxu0
  %v1938 = vadd.f32 %v1724, %v1937
  %1939 = vdwg.mxu0
  %v1940 = vmax.f32 %v1922, 0.0
  %v1941 = vmax.f32 %v1924, 0.0
  %v1942 = vmax.f32 %v1926, 0.0
  %v1943 = vmax.f32 %v1928, 0.0
  %v1944 = vmax.f32 %v1932, 0.0
  %v1945 = vmax.f32 %v1934, 0.0
  %v1946 = vmax.f32 %v1936, 0.0
  %v1947 = vmax.f32 %v1938, 0.0
  %v1948 = vpack.c.bf16 %v1942, %v1940
  %v1949 = vpack.c.bf16 %v1943, %v1941
  %v1950 = vpack.c.bf16 %v1946, %v1944
  %v1951 = vpack.c.bf16 %v1947, %v1945
  %v1952 = vld [vmem:[%s5] sm:$0xf]
  %v1953 = vld [vmem:[%s5 + $0x4] sm:$0xf]
  %v1954 = vld [vmem:[%s5 + $0x8] sm:$0xf]
  %v1955 = vld [vmem:[%s5 + $0xc] sm:$0xf]
  %v1956 = vld [vmem:[%s5 + $0x10] sm:$0xf]
  %v1957 = vld [vmem:[%s5 + $0x14] sm:$0xf]
  %v1958 = vld [vmem:[%s5 + $0x18] sm:$0xf]
  %v1959 = vld [vmem:[%s5 + $0x1c] sm:$0xf]
  %v1960 = vld [vmem:[%s5 + $0x20] sm:$0xf]
  %v1961 = vld [vmem:[%s5 + $0x24] sm:$0xf]
  %v1962 = vld [vmem:[%s5 + $0x28] sm:$0xf]
  %v1963 = vld [vmem:[%s5 + $0x2c] sm:$0xf]
  %v1964 = vld [vmem:[%s5 + $0x30] sm:$0xf]
  %v1965 = vld [vmem:[%s5 + $0x34] sm:$0xf]
  %v1966 = vld [vmem:[%s5 + $0x38] sm:$0xf]
  %v1967 = vld [vmem:[%s5 + $0x3c] sm:$0xf]
  %v1968 = vld [vmem:[%s5 + $0x40] sm:$0xf]
  %v1969 = vld [vmem:[%s5 + $0x44] sm:$0xf]
  %v1970 = vld [vmem:[%s5 + $0x48] sm:$0xf]
  %v1971 = vld [vmem:[%s5 + $0x4c] sm:$0xf]
  %v1972 = vld [vmem:[%s5 + $0x50] sm:$0xf]
  %v1973 = vld [vmem:[%s5 + $0x54] sm:$0xf]
  %v1974 = vld [vmem:[%s5 + $0x58] sm:$0xf]
  %v1975 = vld [vmem:[%s5 + $0x5c] sm:$0xf]
  %v1976 = vld [vmem:[%s5 + $0x60] sm:$0xf]
  %v1977 = vld [vmem:[%s5 + $0x64] sm:$0xf]
  %v1978 = vld [vmem:[%s5 + $0x68] sm:$0xf]
  %v1979 = vld [vmem:[%s5 + $0x6c] sm:$0xf]
  %v1980 = vld [vmem:[%s5 + $0x70] sm:$0xf]
  %v1981 = vld [vmem:[%s5 + $0x74] sm:$0xf]
  %v1982 = vld [vmem:[%s5 + $0x78] sm:$0xf]
  %v1983 = vld [vmem:[%s5 + $0x7c] sm:$0xf]
  %v1984 = vld [vmem:[%s6] sm:$0x1]
  %v1986 = vlaneseq
  %v1987 = vshrl.u32 %v1986, 7
  %v1988 = vsub.s32 0, %v1987
  %v1989 = vrot.slane %v1984, %v1988
  %v2023 = vunpack.c.l.b16 %v1952
  %v2024 = vunpack.c.l.b16 %v1953
  %v2025 = vunpack.c.l.b16 %v1954
  %v2026 = vunpack.c.l.b16 %v1955
  %v2027 = vunpack.c.l.b16 %v1956
  %v2028 = vunpack.c.l.b16 %v1957
  %v2029 = vunpack.c.l.b16 %v1958
  %v2030 = vunpack.c.l.b16 %v1959
  %v2031 = vunpack.c.l.b16 %v1960
  %v2032 = vunpack.c.l.b16 %v1961
  %v2033 = vunpack.c.l.b16 %v1962
  %v2034 = vunpack.c.l.b16 %v1963
  %v2035 = vunpack.c.l.b16 %v1964
  %v2036 = vunpack.c.l.b16 %v1965
  %v2037 = vunpack.c.l.b16 %v1966
  %v2038 = vunpack.c.l.b16 %v1967
  %v2039 = vunpack.c.l.b16 %v1968
  %v2040 = vunpack.c.l.b16 %v1969
  %v2041 = vunpack.c.l.b16 %v1970
  %v2042 = vunpack.c.l.b16 %v1971
  %v2043 = vunpack.c.l.b16 %v1972
  %v2044 = vunpack.c.l.b16 %v1973
  %v2045 = vunpack.c.l.b16 %v1974
  %v2046 = vunpack.c.l.b16 %v1975
  %v2047 = vunpack.c.l.b16 %v1976
  %v2048 = vunpack.c.l.b16 %v1977
  %v2049 = vunpack.c.l.b16 %v1978
  %v2050 = vunpack.c.l.b16 %v1979
  %v2051 = vunpack.c.l.b16 %v1980
  %v2052 = vunpack.c.l.b16 %v1981
  %v2053 = vunpack.c.l.b16 %v1982
  %v2054 = vunpack.c.l.b16 %v1983
  %v2055 = vpack.c.b16 %v2024, %v2023
  %v2056 = vpack.c.b16 %v2026, %v2025
  %v2057 = vpack.c.b16 %v2028, %v2027
  %v2058 = vpack.c.b16 %v2030, %v2029
  %v2059 = vpack.c.b16 %v2032, %v2031
  %v2060 = vpack.c.b16 %v2034, %v2033
  %v2061 = vpack.c.b16 %v2036, %v2035
  %v2062 = vpack.c.b16 %v2038, %v2037
  %v2063 = vpack.c.b16 %v2040, %v2039
  %v2064 = vpack.c.b16 %v2042, %v2041
  %v2065 = vpack.c.b16 %v2044, %v2043
  %v2066 = vpack.c.b16 %v2046, %v2045
  %v2067 = vpack.c.b16 %v2048, %v2047
  %v2068 = vpack.c.b16 %v2050, %v2049
  %v2069 = vpack.c.b16 %v2052, %v2051
  %v2070 = vpack.c.b16 %v2054, %v2053
  %2087 = vmatprep.subr.bf16.mxu0 0
  %2088 = vmatpush1.bf16.msra.mxu0 %v2055
  %2089 = vmatprep.subr.bf16.mxu0 0
  %2090 = vmatpush1.bf16.msra.mxu0 %v2056
  %2091 = vmatprep.subr.bf16.mxu0 0
  %2092 = vmatpush1.bf16.msra.mxu0 %v2057
  %2093 = vmatprep.subr.bf16.mxu0 0
  %2094 = vmatpush1.bf16.msra.mxu0 %v2058
  %2095 = vmatprep.subr.bf16.mxu0 0
  %2096 = vmatpush1.bf16.msra.mxu0 %v2059
  %2097 = vmatprep.subr.bf16.mxu0 0
  %2098 = vmatpush1.bf16.msra.mxu0 %v2060
  %2099 = vmatprep.subr.bf16.mxu0 0
  %2100 = vmatpush1.bf16.msra.mxu0 %v2061
  %2101 = vmatprep.subr.bf16.mxu0 0
  %2102 = vmatpush1.bf16.msra.mxu0 %v2062
  %2103 = vmatprep.subr.bf16.mxu0 0
  %2104 = vmatpush1.bf16.msra.mxu0 %v2063
  %2105 = vmatprep.subr.bf16.mxu0 0
  %2106 = vmatpush1.bf16.msra.mxu0 %v2064
  %2107 = vmatprep.subr.bf16.mxu0 0
  %2108 = vmatpush1.bf16.msra.mxu0 %v2065
  %2109 = vmatprep.subr.bf16.mxu0 0
  %2110 = vmatpush1.bf16.msra.mxu0 %v2066
  %2111 = vmatprep.subr.bf16.mxu0 0
  %2112 = vmatpush1.bf16.msra.mxu0 %v2067
  %2113 = vmatprep.subr.bf16.mxu0 0
  %2114 = vmatpush1.bf16.msra.mxu0 %v2068
  %2115 = vmatprep.subr.bf16.mxu0 0
  %2116 = vmatpush1.bf16.msra.mxu0 %v2069
  %2117 = vmatprep.subr.bf16.mxu0 0
  %2118 = vmatpush1.bf16.msra.mxu0 %v2070
  %2119 = vmatprep.mubr.bf16.mxu0 %v1949
  %2120 = vmatmul.mubr.bf16.gmra.mrb[0].mxu0 %v1948
  %v2121 = vpop.f32.mrb[0].mxu0
  %v2122 = vadd.f32 %v1989, %v2121
  %v2123 = vpop.f32.mrb[0].mxu0
  %v2124 = vpop.f32.mrb[0].mxu0
  %v2125 = vadd.f32 %v1989, %v2124
  %v2126 = vpop.f32.mrb[0].mxu0
  %2127 = vmatprep.mubr.bf16.mxu0 %v1951
  %2128 = vmatmul.mubr.bf16.gmra.mrb[0].mxu0 %v1950
  %v2129 = vpop.f32.mrb[0].mxu0
  %v2130 = vadd.f32 %v1989, %v2129
  %v2131 = vpop.f32.mrb[0].mxu0
  %v2132 = vpop.f32.mrb[0].mxu0
  %v2133 = vadd.f32 %v1989, %v2132
  %v2134 = vpop.f32.mrb[0].mxu0
  %2135 = vdwg.mxu0
  %2136 = vst [vmem:[%s7] sm:$0xff] %v2122
  %2137 = vst [vmem:[%s7 + $0x8] sm:$0xff] %v2125
  %2138 = vst [vmem:[%s7 + $0x10] sm:$0xff] %v2130
  %2139 = vst [vmem:[%s7 + $0x18] sm:$0xff] %v2133
  // Predicated region
  $region30: #{_lambda_.7} parent=0 // pred_check
    _
  $region31: #{_lambda_.7} parent=0 // pred_check_branch
    %2141 = sbr.rel (0) target = $region33
  $region32: #{_lambda_.7} parent=0 // pred_region
    _
  $region33: #{_lambda_.7} parent=0 // pred_fallthru
    _
  // Predicated region
  $region34: #{_lambda_.7} parent=0 // pred_check
    _
  $region35: #{_lambda_.7} parent=0 // pred_check_branch
    %2143 = sbr.rel (0) target = $region37
  $region36: #{_lambda_.7} parent=0 // pred_region
    _
  $region37: #{_lambda_.7} parent=0 // pred_fallthru
    _

</llo_original>
